<compile_context>
chip_gen: v7x
topology: tpu7x:2x2x1
jax: 0.10.0
libtpu: 0.0.40
codegen_flags: <defaults>
</compile_context>

<pallas_src>
import functools

import jax
import jax.numpy as jnp
import numpy as np
from jax import lax
from jax.experimental import pallas as pl
from jax.experimental.pallas import tpu as pltpu

_INV_SQRT2 = 0.7071067811865476

# chunk j (channels [j*c:(j+1)*c]) is processed by module shift{j+1}
_CHUNK_SHIFTS = ((1, 1), (-1, 1), (-1, -1), (1, -1))   # shift1..shift4
# xshift = cat([shift2(x2), shift4(x4), shift1(x1), shift3(x3)], dim=1)
_CAT_CHUNKS = (1, 3, 0, 2)                             # out chunk o <- chunk _CAT_CHUNKS[o]


def _erf_poly(z):
    """Abramowitz&Stegun 7.1.26 erf (max abs err 1.5e-7): mul/add + one EUP exp."""
    az = jnp.abs(z)
    t = 1.0 / (1.0 + 0.3275911 * az)
    poly = t * (0.254829592 + t * (-0.284496736 + t * (1.421413741
              + t * (-1.453152027 + t * 1.061405429))))
    e = 1.0 - poly * jnp.exp(-az * az)
    return jnp.where(z < 0, -e, e)


def _gelu_kernel(x):          # exact (erf) GELU via the polynomial above
    return 0.5 * x * (1.0 + _erf_poly(x * _INV_SQRT2))


def _gelu_ref(x):             # reference uses XLA's erf
    return 0.5 * x * (1.0 + lax.erf(x * _INV_SQRT2))


# ----------------------------------------------------------------------------
# Pallas kernel: BT images per grid step, flat lane-dense (BT*H, W*C) layout
# ----------------------------------------------------------------------------

def _dcms_kernel(x_ref, red_ref, bcast_ref, n1w_ref, n1b_ref, presel_ref,
                 btap_ref, bbias_ref, bpw_hi_ref, bpw_lo_ref, bpwb_ref,
                 c5t_ref, c5b_ref, n2w_ref, n2b_ref,
                 ltap_ref, lbias_ref, lpw_hi_ref, lpw_lo_ref, lpwb_ref,
                 o_ref, *, C, H, BT):
    f32 = jnp.float32
    WC = x_ref.shape[2]
    R = BT * H
    x = x_ref[...].reshape(R, WC)                      # (R, W*C) lane dense, f32

    # row-validity masks for +-1 row shifts (zero fill; per image when BT > 1)
    row = lax.broadcasted_iota(jnp.int32, (R, WC), 0)
    if BT > 1:
        row = row % H                                  # zero the wrap between images
    rm_pos = (row >= 1).astype(f32)                    # rows valid after a +1 row shift
    rm_neg = (row <= H - 2).astype(f32)                # rows valid after a -1 row shift

    def roll_lanes(v, s_pix):                          # shift by s_pix pixels along W (lanes)
        if s_pix == 0:
            return v
        return pltpu.roll(v, (s_pix * C) % WC, 1)

    def roll_rows(v, r):                               # shift by r rows (sublanes)
        if r == 0:
            return v
        return pltpu.roll(v, r % v.shape[0], 0)

    def sdot(a, b_hi_ref, b_lo_ref=None):
        # f32-accurate matmul out of 2-3 native bf16 MXU passes (~precision HIGH,
        # which Mosaic does not expose); replaces the old 6-pass HIGHEST dots.
        a_hi = a.astype(jnp.bfloat16)
        a_lo = (a - a_hi.astype(f32)).astype(jnp.bfloat16)
        b_hi = b_hi_ref[...]
        out = jnp.dot(a_hi, b_hi, preferred_element_type=f32)
        out = out + jnp.dot(a_lo, b_hi, preferred_element_type=f32)
        if b_lo_ref is not None:
            out = out + jnp.dot(a_hi, b_lo_ref[...], preferred_element_type=f32)
        return out

    def layer_norm(v, w, b):
        # channels_first LayerNorm; per-pixel channel moments via one stacked
        # reduce matmul (factored (WC,W) operator) + one stacked broadcast.
        m = sdot(jnp.concatenate([v, v * v], axis=0), red_ref)      # (2R, W)
        u, ex2 = m[:R], m[R:]
        inv = 1.0 / jnp.sqrt(ex2 - u * u + 1e-6)
        bb = sdot(jnp.concatenate([u, inv], axis=0), bcast_ref)     # (2R, WC)
        return (v - bb[:R]) * bb[R:] * w + b

    def dw3x3(v, taps_ref, bias_ref):
        # depthwise 3x3, padding=1; taps (9, W*C) already carry the per-lane
        # weight with the column (W-direction) zero-pad mask folded in.
        # Row rolls hoisted once (2 masked rolls); lane rolls per tap.
        taps = taps_ref[...]
        rows = {1: roll_rows(v, 1) * rm_pos, 0: v, -1: roll_rows(v, -1) * rm_neg}
        acc = None
        for di in range(3):
            base = rows[1 - di]
            for dj in range(3):
                k = di * 3 + dj
                t = roll_lanes(base, 1 - dj) * taps[k:k + 1]
                acc = t if acc is None else acc + t
        return acc + bias_ref[...]

    # ---- norm1 --------------------------------------------------------------
    xn = layer_norm(x, n1w_ref[...], n1b_ref[...])

    # ---- per-chunk spatial pre-shift (all 4 chunks at once, zero filled) -----
    presel = presel_ref[...]                           # (4, W*C) chunk + col-validity
    xsh = None
    for j in range(4):
        sh, sw = _CHUNK_SHIFTS[j]
        t = roll_rows(roll_lanes(xn, sw), sh)
        t = t * ((rm_pos if sh == 1 else rm_neg) * presel[j:j + 1])
        xsh = t if xsh is None else xsh + t

    # ---- 4 shift branches: depthwise 3x3 -> GELU -> fused block-diag 1x1 -----
    h = _gelu_kernel(dw3x3(xsh, btap_ref, bbias_ref))
    y = sdot(h, bpw_hi_ref, bpw_lo_ref) + bpwb_ref[...]

    # ---- conv5 (depthwise 3x3 on un-shifted features) + residual add ---------
    y = y + dw3x3(xn, c5t_ref, c5b_ref)

    # ---- channel shuffle folded into norm2 / ldw / lpw weights (no data move)
    y = layer_norm(y, n2w_ref[...], n2b_ref[...])
    y = _gelu_kernel(dw3x3(y, ltap_ref, lbias_ref))
    out = sdot(y, lpw_hi_ref, lpw_lo_ref) + lpwb_ref[...]

    o_ref[...] = out.reshape(BT, H, out.shape[-1]).astype(o_ref.dtype)


# ----------------------------------------------------------------------------
# wrapper
# ----------------------------------------------------------------------------

_WEIGHT_NAMES = ("red", "bcast", "n1_w", "n1_b", "presel",
                 "br_taps", "br_bias", "br_pw_hi", "br_pw_lo", "br_pw_b",
                 "c5_taps", "c5_bias", "n2_w", "n2_b",
                 "ldw_taps", "ldw_bias", "lpw_hi", "lpw_lo", "lpw_bias")


def dcms_block(x_nchw, kp, *, images_per_step=None):
    """Forward pass.  x_nchw: (B, dim_in, H, W) -> (B, dim_out, H, W)."""
    B, C, H, W = x_nchw.shape
    WC = W * C
    WDo = kp["lpw_bias"].shape[1]
    dim_out = WDo // W

    if images_per_step is None:
        # Batch images per step (amortize step overhead / fill MXU rows) but keep
        # >= 2 grid steps so both v7x TensorCores get work via "parallel".
        bt = max(1, B // 2)
        while B % bt:
            bt -= 1
    else:
        bt = images_per_step
    assert B % bt == 0, (B, bt)

    x = jnp.transpose(x_nchw, (0, 2, 3, 1)).reshape(B, H, WC).astype(jnp.float32)
    weights = tuple(kp[n] for n in _WEIGHT_NAMES)
    kern = functools.partial(_dcms_kernel, C=C, H=H, BT=bt)

    def _run(single_buffer_weights):
        def wspec(a):
            if single_buffer_weights:
                # constant index_map -> single buffer (halves weight VMEM)
                return pl.BlockSpec(a.shape, lambda b: (0, 0),
                                    pipeline_mode=pl.Buffered(1))
            return pl.BlockSpec(a.shape, lambda b: (0, 0))

        in_specs = [pl.BlockSpec((bt, H, WC), lambda b: (b, 0, 0))]
        in_specs += [wspec(a) for a in weights]

        return pl.pallas_call(
            kern,
            out_shape=jax.ShapeDtypeStruct((B, H, WDo), jnp.float32),
            grid_spec=pltpu.PrefetchScalarGridSpec(
                num_scalar_prefetch=0,
                grid=(B // bt,),
                in_specs=in_specs,
                out_specs=pl.BlockSpec((bt, H, WDo), lambda b: (b, 0, 0)),
            ),
            compiler_params=pltpu.CompilerParams(
                dimension_semantics=("parallel",),
                vmem_limit_bytes=32 * 1024 * 1024,
            ),
        )(x, *weights)

    try:
        out = _run(True)
    except Exception:
        # pl.Buffered(1) not available/accepted on this jax/libtpu -> default
        # double-buffered weight specs (correctness identical).
        out = _run(False)

    return jnp.transpose(out.reshape(B, H, W, dim_out), (0, 3, 1, 2))


# ----------------------------------------------------------------------------
# deterministic parameter construction (PyTorch layouts) + host-side folding
# ----------------------------------------------------------------------------

def init_params(key, dim_in, dim_out):
    c = dim_in // 4
    keys = iter(jax.random.split(key, 48))

    def nrm(shape, scale=0.2):
        return np.asarray(scale * jax.random.normal(next(keys), shape),
                          dtype=np.float32)

    def dw9(w_torch):         # (Cc,1,3,3) -> (9, Cc), rows di*3+dj
        Cc = w_torch.shape[0]
        return np.reshape(w_torch, (Cc, 9)).T.copy()

    p = {
        "n1_w": np.ones(dim_in, np.float32) + nrm((dim_in,), 0.05),
        "n1_b": nrm((dim_in,), 0.05),
        "n2_w": np.ones(dim_in, np.float32) + nrm((dim_in,), 0.05),
        "n2_b": nrm((dim_in,), 0.05),
        "c5_w9": dw9(nrm((dim_in, 1, 3, 3))),
        "c5_b": nrm((dim_in,), 0.05),
        "ldw_w9": dw9(nrm((dim_in, 1, 3, 3))),
        "ldw_b": nrm((dim_in,), 0.05),
        "lpw_w": nrm((dim_out, dim_in, 1, 1))[:, :, 0, 0].T.copy(),  # (dim_in, dim_out)
        "lpw_b": nrm((dim_out,), 0.05),
    }
    for j in range(4):
        p["shift%d" % (j + 1)] = {
            "dw9": dw9(nrm((c, 1, 3, 3))),
            "dwb": nrm((c,), 0.05),
            "pw": nrm((c, c, 1, 1))[:, :, 0, 0].T.copy(),            # (in, out)
            "pwb": nrm((c,), 0.05),
        }
    return p


def fold_params(p, H, W):
    """Fold the PyTorch-layout params into flat-layout kernel arrays."""
    C = p["n1_w"].shape[0]
    c = C // 4
    dim_out = p["lpw_w"].shape[1]
    WC = W * C

    def tile_c(v):                                 # (C,) -> (1, W*C), index w*C+ch
        return np.tile(np.asarray(v, np.float32).reshape(1, -1), (1, W))

    def col_valid(s):                              # validity of a pixel-column shift s
        w = np.arange(W)
        return ((w - s >= 0) & (w - s <= W - 1)).astype(np.float32)

    def lane_mask(per_pixel, per_channel):         # -> (W*C,) at index w*C+ch
        return (np.asarray(per_pixel, np.float32)[:, None]
                * np.asarray(per_channel, np.float32)[None, :]).reshape(WC)

    def tiled_taps(w9_full):                       # (9, C) -> (9, W*C), col masks folded
        out = np.zeros((9, WC), np.float32)
        for di in range(3):
            for dj in range(3):
                out[di * 3 + dj] = lane_mask(col_valid(1 - dj), w9_full[di * 3 + dj])
        return out

    # factored per-pixel channel-mean operator (replaces the (W*C)^2 kron matrix)
    red = np.kron(np.eye(W, dtype=np.float32),
                  np.full((C, 1), 1.0 / C, np.float32))       # (WC, W)  entries 1/C
    bcast = np.kron(np.eye(W, dtype=np.float32),
                    np.ones((1, C), np.float32))              # (W, WC)  entries 1.0
    # note: 1/C and 1.0 are exactly representable in bf16 (C is a power of two)

    # per-chunk pre-shift selectors: chunk membership x column-shift validity
    presel = np.zeros((4, WC), np.float32)
    for j in range(4):
        ind = np.zeros(C, np.float32)
        ind[j * c:(j + 1) * c] = 1.0
        presel[j] = lane_mask(col_valid(_CHUNK_SHIFTS[j][1]), ind)

    # branch depthwise weights/bias laid out by original chunk position
    br_w9 = np.concatenate([p["shift%d" % (j + 1)]["dw9"] for j in range(4)], axis=1)
    br_b = np.concatenate([p["shift%d" % (j + 1)]["dwb"] for j in range(4)])

    # fused per-pixel 1x1 for all 4 branches, including the cat() reordering
    pix = np.zeros((C, C), np.float32)
    pwb = np.zeros(C, np.float32)
    for o, j in enumerate(_CAT_CHUNKS):
        mod = p["shift%d" % (j + 1)]
        pix[j * c:(j + 1) * c, o * c:(o + 1) * c] = mod["pw"]
        pwb[o * c:(o + 1) * c] = mod["pwb"]
    br_pw = np.kron(np.eye(W, dtype=np.float32), pix)

    # channel shuffle folded into norm2 / ldw / lpw (weights indexed by source ch)
    d = np.arange(C)
    perm_idx = (d % 2) * (C // 2) + d // 2         # shuffled[:, d] = y[:, perm_idx[d]]
    inv = np.argsort(perm_idx)
    n2_w_f, n2_b_f = p["n2_w"][inv], p["n2_b"][inv]
    ldw_w9_f, ldw_b_f = p["ldw_w9"][:, inv], p["ldw_b"][inv]
    lpw_w_f = p["lpw_w"][inv, :]
    lpw_mat = np.kron(np.eye(W, dtype=np.float32), lpw_w_f)   # (W*C, W*dim_out)

    def split_bf16(w):                             # f32 -> (hi, lo) bf16 pair
        w = jnp.asarray(w, jnp.float32)
        hi = w.astype(jnp.bfloat16)
        lo = (w - hi.astype(jnp.float32)).astype(jnp.bfloat16)
        return hi, lo

    br_pw_hi, br_pw_lo = split_bf16(br_pw)
    lpw_hi, lpw_lo = split_bf16(lpw_mat)
    f32 = lambda a: jnp.asarray(a, jnp.float32)

    return dict(
        red=jnp.asarray(red, jnp.bfloat16),
        bcast=jnp.asarray(bcast, jnp.bfloat16),
        n1_w=f32(tile_c(p["n1_w"])), n1_b=f32(tile_c(p["n1_b"])),
        presel=f32(presel),
        br_taps=f32(tiled_taps(br_w9)), br_bias=f32(tile_c(br_b)),
        br_pw_hi=br_pw_hi, br_pw_lo=br_pw_lo, br_pw_b=f32(tile_c(pwb)),
        c5_taps=f32(tiled_taps(p["c5_w9"])), c5_bias=f32(tile_c(p["c5_b"])),
        n2_w=f32(tile_c(n2_w_f)), n2_b=f32(tile_c(n2_b_f)),
        ldw_taps=f32(tiled_taps(ldw_w9_f)), ldw_bias=f32(tile_c(ldw_b_f)),
        lpw_hi=lpw_hi, lpw_lo=lpw_lo,
        lpw_bias=f32(np.tile(p["lpw_b"].reshape(1, dim_out), (1, W))),
    )


# ----------------------------------------------------------------------------
# pure-JAX reference (original semantics, incl. the explicit channel shuffle)
# ----------------------------------------------------------------------------

def _shift_zero(x, sh, sw):
    H, W, Cc = x.shape
    if sh > 0:
        x = jnp.concatenate([jnp.zeros((sh, W, Cc), x.dtype), x[:H - sh]], 0)
    elif sh < 0:
        x = jnp.concatenate([x[-sh:], jnp.zeros((-sh, W, Cc), x.dtype)], 0)
    if sw > 0:
        x = jnp.concatenate([jnp.zeros((H, sw, Cc), x.dtype), x[:, :W - sw]], 1)
    elif sw < 0:
        x = jnp.concatenate([x[:, -sw:], jnp.zeros((H, -sw, Cc), x.dtype)], 1)
    return x


def _dw_conv3x3_ref(x, w9, b):
    acc = jnp.zeros_like(x)
    for di in range(3):
        for dj in range(3):
            acc = acc + _shift_zero(x, 1 - di, 1 - dj) * w9[di * 3 + dj]
    return acc + b


def _cf_layernorm_ref(x, w, b, eps=1e-6):
    u = jnp.mean(x, -1, keepdims=True)
    s = jnp.mean((x - u) ** 2, -1, keepdims=True)
    return (x - u) / jnp.sqrt(s + eps) * w + b


def reference(x_nchw, p):
    x = jnp.transpose(x_nchw, (0, 2, 3, 1)).astype(jnp.float32)
    C = x.shape[-1]
    c = C // 4
    d = np.arange(C)
    perm_idx = (d % 2) * (C // 2) + d // 2
    PREC = lax.Precision.HIGHEST

    def per_image(xi):
        H, W, _ = xi.shape
        xn = _cf_layernorm_ref(xi, p["n1_w"], p["n1_b"])
        outs = []
        for j in _CAT_CHUNKS:                          # cat order: x2, x4, x1, x3
            mod = p["shift%d" % (j + 1)]
            sh, sw = _CHUNK_SHIFTS[j]
            xc = xn[..., j * c:(j + 1) * c]
            h = _dw_conv3x3_ref(_shift_zero(xc, sh, sw), mod["dw9"], mod["dwb"])
            h = _gelu_ref(h)
            h = (jnp.dot(h.reshape(H * W, c), mod["pw"], precision=PREC)
                 + mod["pwb"]).reshape(H, W, c)
            outs.append(h)
        y = jnp.concatenate(outs, -1) + _dw_conv3x3_ref(xn, p["c5_w9"], p["c5_b"])
        z = y[..., perm_idx]                           # channel shuffle
        z = _cf_layernorm_ref(z, p["n2_w"], p["n2_b"])
        z = _gelu_ref(_dw_conv3x3_ref(z, p["ldw_w9"], p["ldw_b"]))
        return (jnp.dot(z.reshape(H * W, C), p["lpw_w"], precision=PREC)
                + p["lpw_b"]).reshape(H, W, -1)

    return jnp.transpose(jax.vmap(per_image)(x), (0, 3, 1, 2))


# ----------------------------------------------------------------------------
# main
# ----------------------------------------------------------------------------

if __name__ == "__main__":
    B, dim_in, dim_out, H, W = 2, 16, 16, 16, 16

    key = jax.random.PRNGKey(0)
    kx, kp_key = jax.random.split(key)
    x = jax.random.normal(kx, (B, dim_in, H, W), dtype=jnp.float32)   # NCHW like PyTorch
    params = init_params(kp_key, dim_in, dim_out)
    kparams = fold_params(params, H, W)

    out = jax.block_until_ready(dcms_block(x, kparams))
    assert out.shape == (B, dim_out, H, W), out.shape

    ref = jax.block_until_ready(reference(x, params))
    err = float(jnp.max(jnp.abs(out - ref)))
    assert err < 1e-3, f"max abs error {err}"

    print("KERNEL_OK")
</pallas_src>

<mosaic_0001>
module attributes {stable_mosaic.version = 11 : i64} {
  func.func @_dcms_kernel(%arg0: i32, %arg1: memref<1x16x256xf32, #tpu.memory_space<vmem>>, %arg2: memref<256x16xbf16, #tpu.memory_space<vmem>>, %arg3: memref<16x256xbf16, #tpu.memory_space<vmem>>, %arg4: memref<1x256xf32, #tpu.memory_space<vmem>>, %arg5: memref<1x256xf32, #tpu.memory_space<vmem>>, %arg6: memref<4x256xf32, #tpu.memory_space<vmem>>, %arg7: memref<9x256xf32, #tpu.memory_space<vmem>>, %arg8: memref<1x256xf32, #tpu.memory_space<vmem>>, %arg9: memref<256x256xbf16, #tpu.memory_space<vmem>>, %arg10: memref<256x256xbf16, #tpu.memory_space<vmem>>, %arg11: memref<1x256xf32, #tpu.memory_space<vmem>>, %arg12: memref<9x256xf32, #tpu.memory_space<vmem>>, %arg13: memref<1x256xf32, #tpu.memory_space<vmem>>, %arg14: memref<1x256xf32, #tpu.memory_space<vmem>>, %arg15: memref<1x256xf32, #tpu.memory_space<vmem>>, %arg16: memref<9x256xf32, #tpu.memory_space<vmem>>, %arg17: memref<1x256xf32, #tpu.memory_space<vmem>>, %arg18: memref<256x256xbf16, #tpu.memory_space<vmem>>, %arg19: memref<256x256xbf16, #tpu.memory_space<vmem>>, %arg20: memref<1x256xf32, #tpu.memory_space<vmem>>, %arg21: memref<1x16x256xf32, #tpu.memory_space<vmem>>) attributes {dimension_semantics = [#tpu.dimension_semantics<parallel>], iteration_bounds = array<i64: 2>, scalar_prefetch = 0 : i64, scratch_operands = 0 : i64, tpu.core_type = #tpu.core_type<tc>, window_params = [{transform_indices = @transform_0, window_bounds = array<i64: 1, 16, 256>}, {pipeline_mode = #tpu.pipeline_mode<synchronous>, transform_indices = @transform_1, window_bounds = array<i64: 256, 16>}, {pipeline_mode = #tpu.pipeline_mode<synchronous>, transform_indices = @transform_2, window_bounds = array<i64: 16, 256>}, {pipeline_mode = #tpu.pipeline_mode<synchronous>, transform_indices = @transform_3, window_bounds = array<i64: 1, 256>}, {pipeline_mode = #tpu.pipeline_mode<synchronous>, transform_indices = @transform_4, window_bounds = array<i64: 1, 256>}, {pipeline_mode = #tpu.pipeline_mode<synchronous>, transform_indices = @transform_5, window_bounds = array<i64: 4, 256>}, {pipeline_mode = #tpu.pipeline_mode<synchronous>, transform_indices = @transform_6, window_bounds = array<i64: 9, 256>}, {pipeline_mode = #tpu.pipeline_mode<synchronous>, transform_indices = @transform_7, window_bounds = array<i64: 1, 256>}, {pipeline_mode = #tpu.pipeline_mode<synchronous>, transform_indices = @transform_8, window_bounds = array<i64: 256, 256>}, {pipeline_mode = #tpu.pipeline_mode<synchronous>, transform_indices = @transform_9, window_bounds = array<i64: 256, 256>}, {pipeline_mode = #tpu.pipeline_mode<synchronous>, transform_indices = @transform_10, window_bounds = array<i64: 1, 256>}, {pipeline_mode = #tpu.pipeline_mode<synchronous>, transform_indices = @transform_11, window_bounds = array<i64: 9, 256>}, {pipeline_mode = #tpu.pipeline_mode<synchronous>, transform_indices = @transform_12, window_bounds = array<i64: 1, 256>}, {pipeline_mode = #tpu.pipeline_mode<synchronous>, transform_indices = @transform_13, window_bounds = array<i64: 1, 256>}, {pipeline_mode = #tpu.pipeline_mode<synchronous>, transform_indices = @transform_14, window_bounds = array<i64: 1, 256>}, {pipeline_mode = #tpu.pipeline_mode<synchronous>, transform_indices = @transform_15, window_bounds = array<i64: 9, 256>}, {pipeline_mode = #tpu.pipeline_mode<synchronous>, transform_indices = @transform_16, window_bounds = array<i64: 1, 256>}, {pipeline_mode = #tpu.pipeline_mode<synchronous>, transform_indices = @transform_17, window_bounds = array<i64: 256, 256>}, {pipeline_mode = #tpu.pipeline_mode<synchronous>, transform_indices = @transform_18, window_bounds = array<i64: 256, 256>}, {pipeline_mode = #tpu.pipeline_mode<synchronous>, transform_indices = @transform_19, window_bounds = array<i64: 1, 256>}, {transform_indices = @transform_20, window_bounds = array<i64: 1, 16, 256>}]} {
    %c0 = arith.constant 0 : index
    %c0_0 = arith.constant 0 : index
    %c0_1 = arith.constant 0 : index
    %0 = vector.load %arg1[%c0, %c0_0, %c0_1] : memref<1x16x256xf32, #tpu.memory_space<vmem>>, vector<1x16x256xf32>
    %1 = vector.shape_cast %0 : vector<1x16x256xf32> to vector<16x256xf32>
    %2 = tpu.iota {dimensions = array<i32: 0>} : vector<16x256xi32>
    %c1_i32 = arith.constant 1 : i32
    %3 = vector.broadcast %c1_i32 : i32 to vector<16x256xi32>
    %4 = arith.cmpi sge, %2, %3 : vector<16x256xi32>
    %5 = arith.extui %4 : vector<16x256xi1> to vector<16x256xi32>
    %6 = arith.sitofp %5 : vector<16x256xi32> to vector<16x256xf32>
    %c14_i32 = arith.constant 14 : i32
    %7 = vector.broadcast %c14_i32 : i32 to vector<16x256xi32>
    %8 = arith.cmpi sle, %2, %7 : vector<16x256xi32>
    %9 = arith.extui %8 : vector<16x256xi1> to vector<16x256xi32>
    %10 = arith.sitofp %9 : vector<16x256xi32> to vector<16x256xf32>
    %c0_2 = arith.constant 0 : index
    %c0_3 = arith.constant 0 : index
    %11 = vector.load %arg4[%c0_2, %c0_3] : memref<1x256xf32, #tpu.memory_space<vmem>>, vector<1x256xf32>
    %c0_4 = arith.constant 0 : index
    %c0_5 = arith.constant 0 : index
    %12 = vector.load %arg5[%c0_4, %c0_5] : memref<1x256xf32, #tpu.memory_space<vmem>>, vector<1x256xf32>
    %13 = arith.mulf %1, %1 : vector<16x256xf32>
    %14 = tpu.concatenate %1, %13 in 0 : vector<16x256xf32>, vector<16x256xf32> -> vector<32x256xf32>
    %15 = arith.truncf %14 : vector<32x256xf32> to vector<32x256xbf16>
    %16 = arith.extf %15 : vector<32x256xbf16> to vector<32x256xf32>
    %17 = arith.subf %14, %16 : vector<32x256xf32>
    %18 = arith.truncf %17 : vector<32x256xf32> to vector<32x256xbf16>
    %c0_6 = arith.constant 0 : index
    %c0_7 = arith.constant 0 : index
    %19 = vector.load %arg2[%c0_6, %c0_7] : memref<256x16xbf16, #tpu.memory_space<vmem>>, vector<256x16xbf16>
    %cst = arith.constant dense<0.000000e+00> : vector<32x16xf32>
    %20 = tpu.matmul %15, %19, %cst {dimension_numbers = #tpu.dot_dimension_numbers<[1], [0], [0], [1], [0, 0, 1, 1], [], []>} : vector<32x256xbf16>, vector<256x16xbf16>, vector<32x16xf32> -> vector<32x16xf32>
    %cst_8 = arith.constant dense<0.000000e+00> : vector<32x16xf32>
    %21 = tpu.matmul %18, %19, %cst_8 {dimension_numbers = #tpu.dot_dimension_numbers<[1], [0], [0], [1], [0, 0, 1, 1], [], []>} : vector<32x256xbf16>, vector<256x16xbf16>, vector<32x16xf32> -> vector<32x16xf32>
    %22 = arith.addf %20, %21 : vector<32x16xf32>
    %23 = vector.extract_strided_slice %22 {offsets = [0, 0], sizes = [16, 16], strides = [1, 1]} : vector<32x16xf32> to vector<16x16xf32>
    %24 = vector.extract_strided_slice %22 {offsets = [16, 0], sizes = [16, 16], strides = [1, 1]} : vector<32x16xf32> to vector<16x16xf32>
    %25 = arith.mulf %23, %23 : vector<16x16xf32>
    %26 = arith.subf %24, %25 : vector<16x16xf32>
    %cst_9 = arith.constant 9.99999997E-7 : f32
    %27 = vector.broadcast %cst_9 : f32 to vector<16x16xf32>
    %28 = arith.addf %26, %27 : vector<16x16xf32>
    %29 = math.sqrt %28 : vector<16x16xf32>
    %cst_10 = arith.constant 1.000000e+00 : f32
    %30 = vector.broadcast %cst_10 : f32 to vector<16x16xf32>
    %31 = arith.divf %30, %29 : vector<16x16xf32>
    %32 = tpu.concatenate %23, %31 in 0 : vector<16x16xf32>, vector<16x16xf32> -> vector<32x16xf32>
    %33 = arith.truncf %32 : vector<32x16xf32> to vector<32x16xbf16>
    %34 = arith.extf %33 : vector<32x16xbf16> to vector<32x16xf32>
    %35 = arith.subf %32, %34 : vector<32x16xf32>
    %36 = arith.truncf %35 : vector<32x16xf32> to vector<32x16xbf16>
    %c0_11 = arith.constant 0 : index
    %c0_12 = arith.constant 0 : index
    %37 = vector.load %arg3[%c0_11, %c0_12] : memref<16x256xbf16, #tpu.memory_space<vmem>>, vector<16x256xbf16>
    %cst_13 = arith.constant dense<0.000000e+00> : vector<32x256xf32>
    %38 = tpu.matmul %33, %37, %cst_13 {dimension_numbers = #tpu.dot_dimension_numbers<[1], [0], [0], [1], [0, 0, 1, 1], [], []>} : vector<32x16xbf16>, vector<16x256xbf16>, vector<32x256xf32> -> vector<32x256xf32>
    %cst_14 = arith.constant dense<0.000000e+00> : vector<32x256xf32>
    %39 = tpu.matmul %36, %37, %cst_14 {dimension_numbers = #tpu.dot_dimension_numbers<[1], [0], [0], [1], [0, 0, 1, 1], [], []>} : vector<32x16xbf16>, vector<16x256xbf16>, vector<32x256xf32> -> vector<32x256xf32>
    %40 = arith.addf %38, %39 : vector<32x256xf32>
    %41 = vector.extract_strided_slice %40 {offsets = [0, 0], sizes = [16, 256], strides = [1, 1]} : vector<32x256xf32> to vector<16x256xf32>
    %42 = arith.subf %1, %41 : vector<16x256xf32>
    %43 = vector.extract_strided_slice %40 {offsets = [16, 0], sizes = [16, 256], strides = [1, 1]} : vector<32x256xf32> to vector<16x256xf32>
    %44 = arith.mulf %42, %43 : vector<16x256xf32>
    %45 = vector.broadcast %11 : vector<1x256xf32> to vector<16x256xf32>
    %46 = arith.mulf %44, %45 : vector<16x256xf32>
    %47 = vector.broadcast %12 : vector<1x256xf32> to vector<16x256xf32>
    %48 = arith.addf %46, %47 : vector<16x256xf32>
    %c0_15 = arith.constant 0 : index
    %c0_16 = arith.constant 0 : index
    %49 = vector.load %arg6[%c0_15, %c0_16] : memref<4x256xf32, #tpu.memory_space<vmem>>, vector<4x256xf32>
    %c16_i32 = arith.constant 16 : i32
    %50 = tpu.dynamic_rotate %48 by %c16_i32 dim 1 : vector<16x256xf32>, i32 -> vector<16x256xf32>
    %c1_i32_17 = arith.constant 1 : i32
    %51 = tpu.dynamic_rotate %50 by %c1_i32_17 dim 0 : vector<16x256xf32>, i32 -> vector<16x256xf32>
    %52 = vector.extract_strided_slice %49 {offsets = [0, 0], sizes = [1, 256], strides = [1, 1]} : vector<4x256xf32> to vector<1x256xf32>
    %53 = vector.broadcast %52 : vector<1x256xf32> to vector<16x256xf32>
    %54 = arith.mulf %6, %53 : vector<16x256xf32>
    %55 = arith.mulf %51, %54 : vector<16x256xf32>
    %c16_i32_18 = arith.constant 16 : i32
    %56 = tpu.dynamic_rotate %48 by %c16_i32_18 dim 1 : vector<16x256xf32>, i32 -> vector<16x256xf32>
    %c15_i32 = arith.constant 15 : i32
    %57 = tpu.dynamic_rotate %56 by %c15_i32 dim 0 : vector<16x256xf32>, i32 -> vector<16x256xf32>
    %58 = vector.extract_strided_slice %49 {offsets = [1, 0], sizes = [1, 256], strides = [1, 1]} : vector<4x256xf32> to vector<1x256xf32>
    %59 = vector.broadcast %58 : vector<1x256xf32> to vector<16x256xf32>
    %60 = arith.mulf %10, %59 : vector<16x256xf32>
    %61 = arith.mulf %57, %60 : vector<16x256xf32>
    %62 = arith.addf %55, %61 : vector<16x256xf32>
    %c240_i32 = arith.constant 240 : i32
    %63 = tpu.dynamic_rotate %48 by %c240_i32 dim 1 : vector<16x256xf32>, i32 -> vector<16x256xf32>
    %c15_i32_19 = arith.constant 15 : i32
    %64 = tpu.dynamic_rotate %63 by %c15_i32_19 dim 0 : vector<16x256xf32>, i32 -> vector<16x256xf32>
    %65 = vector.extract_strided_slice %49 {offsets = [2, 0], sizes = [1, 256], strides = [1, 1]} : vector<4x256xf32> to vector<1x256xf32>
    %66 = vector.broadcast %65 : vector<1x256xf32> to vector<16x256xf32>
    %67 = arith.mulf %10, %66 : vector<16x256xf32>
    %68 = arith.mulf %64, %67 : vector<16x256xf32>
    %69 = arith.addf %62, %68 : vector<16x256xf32>
    %c240_i32_20 = arith.constant 240 : i32
    %70 = tpu.dynamic_rotate %48 by %c240_i32_20 dim 1 : vector<16x256xf32>, i32 -> vector<16x256xf32>
    %c1_i32_21 = arith.constant 1 : i32
    %71 = tpu.dynamic_rotate %70 by %c1_i32_21 dim 0 : vector<16x256xf32>, i32 -> vector<16x256xf32>
    %72 = vector.extract_strided_slice %49 {offsets = [3, 0], sizes = [1, 256], strides = [1, 1]} : vector<4x256xf32> to vector<1x256xf32>
    %73 = vector.broadcast %72 : vector<1x256xf32> to vector<16x256xf32>
    %74 = arith.mulf %6, %73 : vector<16x256xf32>
    %75 = arith.mulf %71, %74 : vector<16x256xf32>
    %76 = arith.addf %69, %75 : vector<16x256xf32>
    %c0_22 = arith.constant 0 : index
    %c0_23 = arith.constant 0 : index
    %77 = vector.load %arg7[%c0_22, %c0_23] : memref<9x256xf32, #tpu.memory_space<vmem>>, vector<9x256xf32>
    %c1_i32_24 = arith.constant 1 : i32
    %78 = tpu.dynamic_rotate %76 by %c1_i32_24 dim 0 : vector<16x256xf32>, i32 -> vector<16x256xf32>
    %79 = arith.mulf %78, %6 : vector<16x256xf32>
    %c15_i32_25 = arith.constant 15 : i32
    %80 = tpu.dynamic_rotate %76 by %c15_i32_25 dim 0 : vector<16x256xf32>, i32 -> vector<16x256xf32>
    %81 = arith.mulf %80, %10 : vector<16x256xf32>
    %c16_i32_26 = arith.constant 16 : i32
    %82 = tpu.dynamic_rotate %79 by %c16_i32_26 dim 1 : vector<16x256xf32>, i32 -> vector<16x256xf32>
    %83 = vector.extract_strided_slice %77 {offsets = [0, 0], sizes = [1, 256], strides = [1, 1]} : vector<9x256xf32> to vector<1x256xf32>
    %84 = vector.broadcast %83 : vector<1x256xf32> to vector<16x256xf32>
    %85 = arith.mulf %82, %84 : vector<16x256xf32>
    %86 = vector.extract_strided_slice %77 {offsets = [1, 0], sizes = [1, 256], strides = [1, 1]} : vector<9x256xf32> to vector<1x256xf32>
    %87 = vector.broadcast %86 : vector<1x256xf32> to vector<16x256xf32>
    %88 = arith.mulf %79, %87 : vector<16x256xf32>
    %89 = arith.addf %85, %88 : vector<16x256xf32>
    %c240_i32_27 = arith.constant 240 : i32
    %90 = tpu.dynamic_rotate %79 by %c240_i32_27 dim 1 : vector<16x256xf32>, i32 -> vector<16x256xf32>
    %91 = vector.extract_strided_slice %77 {offsets = [2, 0], sizes = [1, 256], strides = [1, 1]} : vector<9x256xf32> to vector<1x256xf32>
    %92 = vector.broadcast %91 : vector<1x256xf32> to vector<16x256xf32>
    %93 = arith.mulf %90, %92 : vector<16x256xf32>
    %94 = arith.addf %89, %93 : vector<16x256xf32>
    %c16_i32_28 = arith.constant 16 : i32
    %95 = tpu.dynamic_rotate %76 by %c16_i32_28 dim 1 : vector<16x256xf32>, i32 -> vector<16x256xf32>
    %96 = vector.extract_strided_slice %77 {offsets = [3, 0], sizes = [1, 256], strides = [1, 1]} : vector<9x256xf32> to vector<1x256xf32>
    %97 = vector.broadcast %96 : vector<1x256xf32> to vector<16x256xf32>
    %98 = arith.mulf %95, %97 : vector<16x256xf32>
    %99 = arith.addf %94, %98 : vector<16x256xf32>
    %100 = vector.extract_strided_slice %77 {offsets = [4, 0], sizes = [1, 256], strides = [1, 1]} : vector<9x256xf32> to vector<1x256xf32>
    %101 = vector.broadcast %100 : vector<1x256xf32> to vector<16x256xf32>
    %102 = arith.mulf %76, %101 : vector<16x256xf32>
    %103 = arith.addf %99, %102 : vector<16x256xf32>
    %c240_i32_29 = arith.constant 240 : i32
    %104 = tpu.dynamic_rotate %76 by %c240_i32_29 dim 1 : vector<16x256xf32>, i32 -> vector<16x256xf32>
    %105 = vector.extract_strided_slice %77 {offsets = [5, 0], sizes = [1, 256], strides = [1, 1]} : vector<9x256xf32> to vector<1x256xf32>
    %106 = vector.broadcast %105 : vector<1x256xf32> to vector<16x256xf32>
    %107 = arith.mulf %104, %106 : vector<16x256xf32>
    %108 = arith.addf %103, %107 : vector<16x256xf32>
    %c16_i32_30 = arith.constant 16 : i32
    %109 = tpu.dynamic_rotate %81 by %c16_i32_30 dim 1 : vector<16x256xf32>, i32 -> vector<16x256xf32>
    %110 = vector.extract_strided_slice %77 {offsets = [6, 0], sizes = [1, 256], strides = [1, 1]} : vector<9x256xf32> to vector<1x256xf32>
    %111 = vector.broadcast %110 : vector<1x256xf32> to vector<16x256xf32>
    %112 = arith.mulf %109, %111 : vector<16x256xf32>
    %113 = arith.addf %108, %112 : vector<16x256xf32>
    %114 = vector.extract_strided_slice %77 {offsets = [7, 0], sizes = [1, 256], strides = [1, 1]} : vector<9x256xf32> to vector<1x256xf32>
    %115 = vector.broadcast %114 : vector<1x256xf32> to vector<16x256xf32>
    %116 = arith.mulf %81, %115 : vector<16x256xf32>
    %117 = arith.addf %113, %116 : vector<16x256xf32>
    %c240_i32_31 = arith.constant 240 : i32
    %118 = tpu.dynamic_rotate %81 by %c240_i32_31 dim 1 : vector<16x256xf32>, i32 -> vector<16x256xf32>
    %119 = vector.extract_strided_slice %77 {offsets = [8, 0], sizes = [1, 256], strides = [1, 1]} : vector<9x256xf32> to vector<1x256xf32>
    %120 = vector.broadcast %119 : vector<1x256xf32> to vector<16x256xf32>
    %121 = arith.mulf %118, %120 : vector<16x256xf32>
    %122 = arith.addf %117, %121 : vector<16x256xf32>
    %c0_32 = arith.constant 0 : index
    %c0_33 = arith.constant 0 : index
    %123 = vector.load %arg8[%c0_32, %c0_33] : memref<1x256xf32, #tpu.memory_space<vmem>>, vector<1x256xf32>
    %124 = vector.broadcast %123 : vector<1x256xf32> to vector<16x256xf32>
    %125 = arith.addf %122, %124 : vector<16x256xf32>
    %cst_34 = arith.constant 5.000000e-01 : f32
    %126 = vector.broadcast %cst_34 : f32 to vector<16x256xf32>
    %127 = arith.mulf %126, %125 : vector<16x256xf32>
    %cst_35 = arith.constant 0.707106769 : f32
    %128 = vector.broadcast %cst_35 : f32 to vector<16x256xf32>
    %129 = arith.mulf %125, %128 : vector<16x256xf32>
    %130 = math.absf %129 : vector<16x256xf32>
    %cst_36 = arith.constant 0.327591091 : f32
    %131 = vector.broadcast %cst_36 : f32 to vector<16x256xf32>
    %132 = arith.mulf %131, %130 : vector<16x256xf32>
    %cst_37 = arith.constant 1.000000e+00 : f32
    %133 = vector.broadcast %cst_37 : f32 to vector<16x256xf32>
    %134 = arith.addf %133, %132 : vector<16x256xf32>
    %cst_38 = arith.constant 1.000000e+00 : f32
    %135 = vector.broadcast %cst_38 : f32 to vector<16x256xf32>
    %136 = arith.divf %135, %134 : vector<16x256xf32>
    %cst_39 = arith.constant 1.06140542 : f32
    %137 = vector.broadcast %cst_39 : f32 to vector<16x256xf32>
    %138 = arith.mulf %136, %137 : vector<16x256xf32>
    %cst_40 = arith.constant -1.45315206 : f32
    %139 = vector.broadcast %cst_40 : f32 to vector<16x256xf32>
    %140 = arith.addf %139, %138 : vector<16x256xf32>
    %141 = arith.mulf %136, %140 : vector<16x256xf32>
    %cst_41 = arith.constant 1.42141378 : f32
    %142 = vector.broadcast %cst_41 : f32 to vector<16x256xf32>
    %143 = arith.addf %142, %141 : vector<16x256xf32>
    %144 = arith.mulf %136, %143 : vector<16x256xf32>
    %cst_42 = arith.constant -0.284496725 : f32
    %145 = vector.broadcast %cst_42 : f32 to vector<16x256xf32>
    %146 = arith.addf %145, %144 : vector<16x256xf32>
    %147 = arith.mulf %136, %146 : vector<16x256xf32>
    %cst_43 = arith.constant 0.254829586 : f32
    %148 = vector.broadcast %cst_43 : f32 to vector<16x256xf32>
    %149 = arith.addf %148, %147 : vector<16x256xf32>
    %150 = arith.mulf %136, %149 : vector<16x256xf32>
    %cst_44 = arith.constant 0.000000e+00 : f32
    %151 = vector.broadcast %cst_44 : f32 to vector<16x256xf32>
    %152 = arith.subf %151, %130 : vector<16x256xf32>
    %153 = arith.mulf %152, %130 : vector<16x256xf32>
    %154 = math.exp %153 : vector<16x256xf32>
    %155 = arith.mulf %150, %154 : vector<16x256xf32>
    %cst_45 = arith.constant 1.000000e+00 : f32
    %156 = vector.broadcast %cst_45 : f32 to vector<16x256xf32>
    %157 = arith.subf %156, %155 : vector<16x256xf32>
    %cst_46 = arith.constant 0.000000e+00 : f32
    %158 = vector.broadcast %cst_46 : f32 to vector<16x256xf32>
    %159 = arith.cmpf olt, %129, %158 : vector<16x256xf32>
    %cst_47 = arith.constant 0.000000e+00 : f32
    %160 = vector.broadcast %cst_47 : f32 to vector<16x256xf32>
    %161 = arith.subf %160, %157 : vector<16x256xf32>
    %162 = arith.select %159, %161, %157 : vector<16x256xi1>, vector<16x256xf32>
    %cst_48 = arith.constant 1.000000e+00 : f32
    %163 = vector.broadcast %cst_48 : f32 to vector<16x256xf32>
    %164 = arith.addf %163, %162 : vector<16x256xf32>
    %165 = arith.mulf %127, %164 : vector<16x256xf32>
    %166 = arith.truncf %165 : vector<16x256xf32> to vector<16x256xbf16>
    %167 = arith.extf %166 : vector<16x256xbf16> to vector<16x256xf32>
    %168 = arith.subf %165, %167 : vector<16x256xf32>
    %169 = arith.truncf %168 : vector<16x256xf32> to vector<16x256xbf16>
    %c0_49 = arith.constant 0 : index
    %c0_50 = arith.constant 0 : index
    %170 = vector.load %arg9[%c0_49, %c0_50] : memref<256x256xbf16, #tpu.memory_space<vmem>>, vector<256x256xbf16>
    %cst_51 = arith.constant dense<0.000000e+00> : vector<16x256xf32>
    %171 = tpu.matmul %166, %170, %cst_51 {dimension_numbers = #tpu.dot_dimension_numbers<[1], [0], [0], [1], [0, 0, 1, 1], [], []>} : vector<16x256xbf16>, vector<256x256xbf16>, vector<16x256xf32> -> vector<16x256xf32>
    %cst_52 = arith.constant dense<0.000000e+00> : vector<16x256xf32>
    %172 = tpu.matmul %169, %170, %cst_52 {dimension_numbers = #tpu.dot_dimension_numbers<[1], [0], [0], [1], [0, 0, 1, 1], [], []>} : vector<16x256xbf16>, vector<256x256xbf16>, vector<16x256xf32> -> vector<16x256xf32>
    %173 = arith.addf %171, %172 : vector<16x256xf32>
    %c0_53 = arith.constant 0 : index
    %c0_54 = arith.constant 0 : index
    %174 = vector.load %arg10[%c0_53, %c0_54] : memref<256x256xbf16, #tpu.memory_space<vmem>>, vector<256x256xbf16>
    %cst_55 = arith.constant dense<0.000000e+00> : vector<16x256xf32>
    %175 = tpu.matmul %166, %174, %cst_55 {dimension_numbers = #tpu.dot_dimension_numbers<[1], [0], [0], [1], [0, 0, 1, 1], [], []>} : vector<16x256xbf16>, vector<256x256xbf16>, vector<16x256xf32> -> vector<16x256xf32>
    %176 = arith.addf %173, %175 : vector<16x256xf32>
    %c0_56 = arith.constant 0 : index
    %c0_57 = arith.constant 0 : index
    %177 = vector.load %arg11[%c0_56, %c0_57] : memref<1x256xf32, #tpu.memory_space<vmem>>, vector<1x256xf32>
    %178 = vector.broadcast %177 : vector<1x256xf32> to vector<16x256xf32>
    %179 = arith.addf %176, %178 : vector<16x256xf32>
    %c0_58 = arith.constant 0 : index
    %c0_59 = arith.constant 0 : index
    %180 = vector.load %arg12[%c0_58, %c0_59] : memref<9x256xf32, #tpu.memory_space<vmem>>, vector<9x256xf32>
    %c1_i32_60 = arith.constant 1 : i32
    %181 = tpu.dynamic_rotate %48 by %c1_i32_60 dim 0 : vector<16x256xf32>, i32 -> vector<16x256xf32>
    %182 = arith.mulf %181, %6 : vector<16x256xf32>
    %c15_i32_61 = arith.constant 15 : i32
    %183 = tpu.dynamic_rotate %48 by %c15_i32_61 dim 0 : vector<16x256xf32>, i32 -> vector<16x256xf32>
    %184 = arith.mulf %183, %10 : vector<16x256xf32>
    %c16_i32_62 = arith.constant 16 : i32
    %185 = tpu.dynamic_rotate %182 by %c16_i32_62 dim 1 : vector<16x256xf32>, i32 -> vector<16x256xf32>
    %186 = vector.extract_strided_slice %180 {offsets = [0, 0], sizes = [1, 256], strides = [1, 1]} : vector<9x256xf32> to vector<1x256xf32>
    %187 = vector.broadcast %186 : vector<1x256xf32> to vector<16x256xf32>
    %188 = arith.mulf %185, %187 : vector<16x256xf32>
    %189 = vector.extract_strided_slice %180 {offsets = [1, 0], sizes = [1, 256], strides = [1, 1]} : vector<9x256xf32> to vector<1x256xf32>
    %190 = vector.broadcast %189 : vector<1x256xf32> to vector<16x256xf32>
    %191 = arith.mulf %182, %190 : vector<16x256xf32>
    %192 = arith.addf %188, %191 : vector<16x256xf32>
    %c240_i32_63 = arith.constant 240 : i32
    %193 = tpu.dynamic_rotate %182 by %c240_i32_63 dim 1 : vector<16x256xf32>, i32 -> vector<16x256xf32>
    %194 = vector.extract_strided_slice %180 {offsets = [2, 0], sizes = [1, 256], strides = [1, 1]} : vector<9x256xf32> to vector<1x256xf32>
    %195 = vector.broadcast %194 : vector<1x256xf32> to vector<16x256xf32>
    %196 = arith.mulf %193, %195 : vector<16x256xf32>
    %197 = arith.addf %192, %196 : vector<16x256xf32>
    %c16_i32_64 = arith.constant 16 : i32
    %198 = tpu.dynamic_rotate %48 by %c16_i32_64 dim 1 : vector<16x256xf32>, i32 -> vector<16x256xf32>
    %199 = vector.extract_strided_slice %180 {offsets = [3, 0], sizes = [1, 256], strides = [1, 1]} : vector<9x256xf32> to vector<1x256xf32>
    %200 = vector.broadcast %199 : vector<1x256xf32> to vector<16x256xf32>
    %201 = arith.mulf %198, %200 : vector<16x256xf32>
    %202 = arith.addf %197, %201 : vector<16x256xf32>
    %203 = vector.extract_strided_slice %180 {offsets = [4, 0], sizes = [1, 256], strides = [1, 1]} : vector<9x256xf32> to vector<1x256xf32>
    %204 = vector.broadcast %203 : vector<1x256xf32> to vector<16x256xf32>
    %205 = arith.mulf %48, %204 : vector<16x256xf32>
    %206 = arith.addf %202, %205 : vector<16x256xf32>
    %c240_i32_65 = arith.constant 240 : i32
    %207 = tpu.dynamic_rotate %48 by %c240_i32_65 dim 1 : vector<16x256xf32>, i32 -> vector<16x256xf32>
    %208 = vector.extract_strided_slice %180 {offsets = [5, 0], sizes = [1, 256], strides = [1, 1]} : vector<9x256xf32> to vector<1x256xf32>
    %209 = vector.broadcast %208 : vector<1x256xf32> to vector<16x256xf32>
    %210 = arith.mulf %207, %209 : vector<16x256xf32>
    %211 = arith.addf %206, %210 : vector<16x256xf32>
    %c16_i32_66 = arith.constant 16 : i32
    %212 = tpu.dynamic_rotate %184 by %c16_i32_66 dim 1 : vector<16x256xf32>, i32 -> vector<16x256xf32>
    %213 = vector.extract_strided_slice %180 {offsets = [6, 0], sizes = [1, 256], strides = [1, 1]} : vector<9x256xf32> to vector<1x256xf32>
    %214 = vector.broadcast %213 : vector<1x256xf32> to vector<16x256xf32>
    %215 = arith.mulf %212, %214 : vector<16x256xf32>
    %216 = arith.addf %211, %215 : vector<16x256xf32>
    %217 = vector.extract_strided_slice %180 {offsets = [7, 0], sizes = [1, 256], strides = [1, 1]} : vector<9x256xf32> to vector<1x256xf32>
    %218 = vector.broadcast %217 : vector<1x256xf32> to vector<16x256xf32>
    %219 = arith.mulf %184, %218 : vector<16x256xf32>
    %220 = arith.addf %216, %219 : vector<16x256xf32>
    %c240_i32_67 = arith.constant 240 : i32
    %221 = tpu.dynamic_rotate %184 by %c240_i32_67 dim 1 : vector<16x256xf32>, i32 -> vector<16x256xf32>
    %222 = vector.extract_strided_slice %180 {offsets = [8, 0], sizes = [1, 256], strides = [1, 1]} : vector<9x256xf32> to vector<1x256xf32>
    %223 = vector.broadcast %222 : vector<1x256xf32> to vector<16x256xf32>
    %224 = arith.mulf %221, %223 : vector<16x256xf32>
    %225 = arith.addf %220, %224 : vector<16x256xf32>
    %c0_68 = arith.constant 0 : index
    %c0_69 = arith.constant 0 : index
    %226 = vector.load %arg13[%c0_68, %c0_69] : memref<1x256xf32, #tpu.memory_space<vmem>>, vector<1x256xf32>
    %227 = vector.broadcast %226 : vector<1x256xf32> to vector<16x256xf32>
    %228 = arith.addf %225, %227 : vector<16x256xf32>
    %229 = arith.addf %179, %228 : vector<16x256xf32>
    %c0_70 = arith.constant 0 : index
    %c0_71 = arith.constant 0 : index
    %230 = vector.load %arg14[%c0_70, %c0_71] : memref<1x256xf32, #tpu.memory_space<vmem>>, vector<1x256xf32>
    %c0_72 = arith.constant 0 : index
    %c0_73 = arith.constant 0 : index
    %231 = vector.load %arg15[%c0_72, %c0_73] : memref<1x256xf32, #tpu.memory_space<vmem>>, vector<1x256xf32>
    %232 = arith.mulf %229, %229 : vector<16x256xf32>
    %233 = tpu.concatenate %229, %232 in 0 : vector<16x256xf32>, vector<16x256xf32> -> vector<32x256xf32>
    %234 = arith.truncf %233 : vector<32x256xf32> to vector<32x256xbf16>
    %235 = arith.extf %234 : vector<32x256xbf16> to vector<32x256xf32>
    %236 = arith.subf %233, %235 : vector<32x256xf32>
    %237 = arith.truncf %236 : vector<32x256xf32> to vector<32x256xbf16>
    %c0_74 = arith.constant 0 : index
    %c0_75 = arith.constant 0 : index
    %238 = vector.load %arg2[%c0_74, %c0_75] : memref<256x16xbf16, #tpu.memory_space<vmem>>, vector<256x16xbf16>
    %cst_76 = arith.constant dense<0.000000e+00> : vector<32x16xf32>
    %239 = tpu.matmul %234, %238, %cst_76 {dimension_numbers = #tpu.dot_dimension_numbers<[1], [0], [0], [1], [0, 0, 1, 1], [], []>} : vector<32x256xbf16>, vector<256x16xbf16>, vector<32x16xf32> -> vector<32x16xf32>
    %cst_77 = arith.constant dense<0.000000e+00> : vector<32x16xf32>
    %240 = tpu.matmul %237, %238, %cst_77 {dimension_numbers = #tpu.dot_dimension_numbers<[1], [0], [0], [1], [0, 0, 1, 1], [], []>} : vector<32x256xbf16>, vector<256x16xbf16>, vector<32x16xf32> -> vector<32x16xf32>
    %241 = arith.addf %239, %240 : vector<32x16xf32>
    %242 = vector.extract_strided_slice %241 {offsets = [0, 0], sizes = [16, 16], strides = [1, 1]} : vector<32x16xf32> to vector<16x16xf32>
    %243 = vector.extract_strided_slice %241 {offsets = [16, 0], sizes = [16, 16], strides = [1, 1]} : vector<32x16xf32> to vector<16x16xf32>
    %244 = arith.mulf %242, %242 : vector<16x16xf32>
    %245 = arith.subf %243, %244 : vector<16x16xf32>
    %cst_78 = arith.constant 9.99999997E-7 : f32
    %246 = vector.broadcast %cst_78 : f32 to vector<16x16xf32>
    %247 = arith.addf %245, %246 : vector<16x16xf32>
    %248 = math.sqrt %247 : vector<16x16xf32>
    %cst_79 = arith.constant 1.000000e+00 : f32
    %249 = vector.broadcast %cst_79 : f32 to vector<16x16xf32>
    %250 = arith.divf %249, %248 : vector<16x16xf32>
    %251 = tpu.concatenate %242, %250 in 0 : vector<16x16xf32>, vector<16x16xf32> -> vector<32x16xf32>
    %252 = arith.truncf %251 : vector<32x16xf32> to vector<32x16xbf16>
    %253 = arith.extf %252 : vector<32x16xbf16> to vector<32x16xf32>
    %254 = arith.subf %251, %253 : vector<32x16xf32>
    %255 = arith.truncf %254 : vector<32x16xf32> to vector<32x16xbf16>
    %c0_80 = arith.constant 0 : index
    %c0_81 = arith.constant 0 : index
    %256 = vector.load %arg3[%c0_80, %c0_81] : memref<16x256xbf16, #tpu.memory_space<vmem>>, vector<16x256xbf16>
    %cst_82 = arith.constant dense<0.000000e+00> : vector<32x256xf32>
    %257 = tpu.matmul %252, %256, %cst_82 {dimension_numbers = #tpu.dot_dimension_numbers<[1], [0], [0], [1], [0, 0, 1, 1], [], []>} : vector<32x16xbf16>, vector<16x256xbf16>, vector<32x256xf32> -> vector<32x256xf32>
    %cst_83 = arith.constant dense<0.000000e+00> : vector<32x256xf32>
    %258 = tpu.matmul %255, %256, %cst_83 {dimension_numbers = #tpu.dot_dimension_numbers<[1], [0], [0], [1], [0, 0, 1, 1], [], []>} : vector<32x16xbf16>, vector<16x256xbf16>, vector<32x256xf32> -> vector<32x256xf32>
    %259 = arith.addf %257, %258 : vector<32x256xf32>
    %260 = vector.extract_strided_slice %259 {offsets = [0, 0], sizes = [16, 256], strides = [1, 1]} : vector<32x256xf32> to vector<16x256xf32>
    %261 = arith.subf %229, %260 : vector<16x256xf32>
    %262 = vector.extract_strided_slice %259 {offsets = [16, 0], sizes = [16, 256], strides = [1, 1]} : vector<32x256xf32> to vector<16x256xf32>
    %263 = arith.mulf %261, %262 : vector<16x256xf32>
    %264 = vector.broadcast %230 : vector<1x256xf32> to vector<16x256xf32>
    %265 = arith.mulf %263, %264 : vector<16x256xf32>
    %266 = vector.broadcast %231 : vector<1x256xf32> to vector<16x256xf32>
    %267 = arith.addf %265, %266 : vector<16x256xf32>
    %c0_84 = arith.constant 0 : index
    %c0_85 = arith.constant 0 : index
    %268 = vector.load %arg16[%c0_84, %c0_85] : memref<9x256xf32, #tpu.memory_space<vmem>>, vector<9x256xf32>
    %c1_i32_86 = arith.constant 1 : i32
    %269 = tpu.dynamic_rotate %267 by %c1_i32_86 dim 0 : vector<16x256xf32>, i32 -> vector<16x256xf32>
    %270 = arith.mulf %269, %6 : vector<16x256xf32>
    %c15_i32_87 = arith.constant 15 : i32
    %271 = tpu.dynamic_rotate %267 by %c15_i32_87 dim 0 : vector<16x256xf32>, i32 -> vector<16x256xf32>
    %272 = arith.mulf %271, %10 : vector<16x256xf32>
    %c16_i32_88 = arith.constant 16 : i32
    %273 = tpu.dynamic_rotate %270 by %c16_i32_88 dim 1 : vector<16x256xf32>, i32 -> vector<16x256xf32>
    %274 = vector.extract_strided_slice %268 {offsets = [0, 0], sizes = [1, 256], strides = [1, 1]} : vector<9x256xf32> to vector<1x256xf32>
    %275 = vector.broadcast %274 : vector<1x256xf32> to vector<16x256xf32>
    %276 = arith.mulf %273, %275 : vector<16x256xf32>
    %277 = vector.extract_strided_slice %268 {offsets = [1, 0], sizes = [1, 256], strides = [1, 1]} : vector<9x256xf32> to vector<1x256xf32>
    %278 = vector.broadcast %277 : vector<1x256xf32> to vector<16x256xf32>
    %279 = arith.mulf %270, %278 : vector<16x256xf32>
    %280 = arith.addf %276, %279 : vector<16x256xf32>
    %c240_i32_89 = arith.constant 240 : i32
    %281 = tpu.dynamic_rotate %270 by %c240_i32_89 dim 1 : vector<16x256xf32>, i32 -> vector<16x256xf32>
    %282 = vector.extract_strided_slice %268 {offsets = [2, 0], sizes = [1, 256], strides = [1, 1]} : vector<9x256xf32> to vector<1x256xf32>
    %283 = vector.broadcast %282 : vector<1x256xf32> to vector<16x256xf32>
    %284 = arith.mulf %281, %283 : vector<16x256xf32>
    %285 = arith.addf %280, %284 : vector<16x256xf32>
    %c16_i32_90 = arith.constant 16 : i32
    %286 = tpu.dynamic_rotate %267 by %c16_i32_90 dim 1 : vector<16x256xf32>, i32 -> vector<16x256xf32>
    %287 = vector.extract_strided_slice %268 {offsets = [3, 0], sizes = [1, 256], strides = [1, 1]} : vector<9x256xf32> to vector<1x256xf32>
    %288 = vector.broadcast %287 : vector<1x256xf32> to vector<16x256xf32>
    %289 = arith.mulf %286, %288 : vector<16x256xf32>
    %290 = arith.addf %285, %289 : vector<16x256xf32>
    %291 = vector.extract_strided_slice %268 {offsets = [4, 0], sizes = [1, 256], strides = [1, 1]} : vector<9x256xf32> to vector<1x256xf32>
    %292 = vector.broadcast %291 : vector<1x256xf32> to vector<16x256xf32>
    %293 = arith.mulf %267, %292 : vector<16x256xf32>
    %294 = arith.addf %290, %293 : vector<16x256xf32>
    %c240_i32_91 = arith.constant 240 : i32
    %295 = tpu.dynamic_rotate %267 by %c240_i32_91 dim 1 : vector<16x256xf32>, i32 -> vector<16x256xf32>
    %296 = vector.extract_strided_slice %268 {offsets = [5, 0], sizes = [1, 256], strides = [1, 1]} : vector<9x256xf32> to vector<1x256xf32>
    %297 = vector.broadcast %296 : vector<1x256xf32> to vector<16x256xf32>
    %298 = arith.mulf %295, %297 : vector<16x256xf32>
    %299 = arith.addf %294, %298 : vector<16x256xf32>
    %c16_i32_92 = arith.constant 16 : i32
    %300 = tpu.dynamic_rotate %272 by %c16_i32_92 dim 1 : vector<16x256xf32>, i32 -> vector<16x256xf32>
    %301 = vector.extract_strided_slice %268 {offsets = [6, 0], sizes = [1, 256], strides = [1, 1]} : vector<9x256xf32> to vector<1x256xf32>
    %302 = vector.broadcast %301 : vector<1x256xf32> to vector<16x256xf32>
    %303 = arith.mulf %300, %302 : vector<16x256xf32>
    %304 = arith.addf %299, %303 : vector<16x256xf32>
    %305 = vector.extract_strided_slice %268 {offsets = [7, 0], sizes = [1, 256], strides = [1, 1]} : vector<9x256xf32> to vector<1x256xf32>
    %306 = vector.broadcast %305 : vector<1x256xf32> to vector<16x256xf32>
    %307 = arith.mulf %272, %306 : vector<16x256xf32>
    %308 = arith.addf %304, %307 : vector<16x256xf32>
    %c240_i32_93 = arith.constant 240 : i32
    %309 = tpu.dynamic_rotate %272 by %c240_i32_93 dim 1 : vector<16x256xf32>, i32 -> vector<16x256xf32>
    %310 = vector.extract_strided_slice %268 {offsets = [8, 0], sizes = [1, 256], strides = [1, 1]} : vector<9x256xf32> to vector<1x256xf32>
    %311 = vector.broadcast %310 : vector<1x256xf32> to vector<16x256xf32>
    %312 = arith.mulf %309, %311 : vector<16x256xf32>
    %313 = arith.addf %308, %312 : vector<16x256xf32>
    %c0_94 = arith.constant 0 : index
    %c0_95 = arith.constant 0 : index
    %314 = vector.load %arg17[%c0_94, %c0_95] : memref<1x256xf32, #tpu.memory_space<vmem>>, vector<1x256xf32>
    %315 = vector.broadcast %314 : vector<1x256xf32> to vector<16x256xf32>
    %316 = arith.addf %313, %315 : vector<16x256xf32>
    %cst_96 = arith.constant 5.000000e-01 : f32
    %317 = vector.broadcast %cst_96 : f32 to vector<16x256xf32>
    %318 = arith.mulf %317, %316 : vector<16x256xf32>
    %cst_97 = arith.constant 0.707106769 : f32
    %319 = vector.broadcast %cst_97 : f32 to vector<16x256xf32>
    %320 = arith.mulf %316, %319 : vector<16x256xf32>
    %321 = math.absf %320 : vector<16x256xf32>
    %cst_98 = arith.constant 0.327591091 : f32
    %322 = vector.broadcast %cst_98 : f32 to vector<16x256xf32>
    %323 = arith.mulf %322, %321 : vector<16x256xf32>
    %cst_99 = arith.constant 1.000000e+00 : f32
    %324 = vector.broadcast %cst_99 : f32 to vector<16x256xf32>
    %325 = arith.addf %324, %323 : vector<16x256xf32>
    %cst_100 = arith.constant 1.000000e+00 : f32
    %326 = vector.broadcast %cst_100 : f32 to vector<16x256xf32>
    %327 = arith.divf %326, %325 : vector<16x256xf32>
    %cst_101 = arith.constant 1.06140542 : f32
    %328 = vector.broadcast %cst_101 : f32 to vector<16x256xf32>
    %329 = arith.mulf %327, %328 : vector<16x256xf32>
    %cst_102 = arith.constant -1.45315206 : f32
    %330 = vector.broadcast %cst_102 : f32 to vector<16x256xf32>
    %331 = arith.addf %330, %329 : vector<16x256xf32>
    %332 = arith.mulf %327, %331 : vector<16x256xf32>
    %cst_103 = arith.constant 1.42141378 : f32
    %333 = vector.broadcast %cst_103 : f32 to vector<16x256xf32>
    %334 = arith.addf %333, %332 : vector<16x256xf32>
    %335 = arith.mulf %327, %334 : vector<16x256xf32>
    %cst_104 = arith.constant -0.284496725 : f32
    %336 = vector.broadcast %cst_104 : f32 to vector<16x256xf32>
    %337 = arith.addf %336, %335 : vector<16x256xf32>
    %338 = arith.mulf %327, %337 : vector<16x256xf32>
    %cst_105 = arith.constant 0.254829586 : f32
    %339 = vector.broadcast %cst_105 : f32 to vector<16x256xf32>
    %340 = arith.addf %339, %338 : vector<16x256xf32>
    %341 = arith.mulf %327, %340 : vector<16x256xf32>
    %cst_106 = arith.constant 0.000000e+00 : f32
    %342 = vector.broadcast %cst_106 : f32 to vector<16x256xf32>
    %343 = arith.subf %342, %321 : vector<16x256xf32>
    %344 = arith.mulf %343, %321 : vector<16x256xf32>
    %345 = math.exp %344 : vector<16x256xf32>
    %346 = arith.mulf %341, %345 : vector<16x256xf32>
    %cst_107 = arith.constant 1.000000e+00 : f32
    %347 = vector.broadcast %cst_107 : f32 to vector<16x256xf32>
    %348 = arith.subf %347, %346 : vector<16x256xf32>
    %cst_108 = arith.constant 0.000000e+00 : f32
    %349 = vector.broadcast %cst_108 : f32 to vector<16x256xf32>
    %350 = arith.cmpf olt, %320, %349 : vector<16x256xf32>
    %cst_109 = arith.constant 0.000000e+00 : f32
    %351 = vector.broadcast %cst_109 : f32 to vector<16x256xf32>
    %352 = arith.subf %351, %348 : vector<16x256xf32>
    %353 = arith.select %350, %352, %348 : vector<16x256xi1>, vector<16x256xf32>
    %cst_110 = arith.constant 1.000000e+00 : f32
    %354 = vector.broadcast %cst_110 : f32 to vector<16x256xf32>
    %355 = arith.addf %354, %353 : vector<16x256xf32>
    %356 = arith.mulf %318, %355 : vector<16x256xf32>
    %357 = arith.truncf %356 : vector<16x256xf32> to vector<16x256xbf16>
    %358 = arith.extf %357 : vector<16x256xbf16> to vector<16x256xf32>
    %359 = arith.subf %356, %358 : vector<16x256xf32>
    %360 = arith.truncf %359 : vector<16x256xf32> to vector<16x256xbf16>
    %c0_111 = arith.constant 0 : index
    %c0_112 = arith.constant 0 : index
    %361 = vector.load %arg18[%c0_111, %c0_112] : memref<256x256xbf16, #tpu.memory_space<vmem>>, vector<256x256xbf16>
    %cst_113 = arith.constant dense<0.000000e+00> : vector<16x256xf32>
    %362 = tpu.matmul %357, %361, %cst_113 {dimension_numbers = #tpu.dot_dimension_numbers<[1], [0], [0], [1], [0, 0, 1, 1], [], []>} : vector<16x256xbf16>, vector<256x256xbf16>, vector<16x256xf32> -> vector<16x256xf32>
    %cst_114 = arith.constant dense<0.000000e+00> : vector<16x256xf32>
    %363 = tpu.matmul %360, %361, %cst_114 {dimension_numbers = #tpu.dot_dimension_numbers<[1], [0], [0], [1], [0, 0, 1, 1], [], []>} : vector<16x256xbf16>, vector<256x256xbf16>, vector<16x256xf32> -> vector<16x256xf32>
    %364 = arith.addf %362, %363 : vector<16x256xf32>
    %c0_115 = arith.constant 0 : index
    %c0_116 = arith.constant 0 : index
    %365 = vector.load %arg19[%c0_115, %c0_116] : memref<256x256xbf16, #tpu.memory_space<vmem>>, vector<256x256xbf16>
    %cst_117 = arith.constant dense<0.000000e+00> : vector<16x256xf32>
    %366 = tpu.matmul %357, %365, %cst_117 {dimension_numbers = #tpu.dot_dimension_numbers<[1], [0], [0], [1], [0, 0, 1, 1], [], []>} : vector<16x256xbf16>, vector<256x256xbf16>, vector<16x256xf32> -> vector<16x256xf32>
    %367 = arith.addf %364, %366 : vector<16x256xf32>
    %c0_118 = arith.constant 0 : index
    %c0_119 = arith.constant 0 : index
    %368 = vector.load %arg20[%c0_118, %c0_119] : memref<1x256xf32, #tpu.memory_space<vmem>>, vector<1x256xf32>
    %369 = vector.broadcast %368 : vector<1x256xf32> to vector<16x256xf32>
    %370 = arith.addf %367, %369 : vector<16x256xf32>
    %371 = vector.shape_cast %370 : vector<16x256xf32> to vector<1x16x256xf32>
    %c0_120 = arith.constant 0 : index
    %c0_121 = arith.constant 0 : index
    %c0_122 = arith.constant 0 : index
    %372 = vector.load %arg21[%c0_120, %c0_121, %c0_122] : memref<1x16x256xf32, #tpu.memory_space<vmem>>, vector<1x16x256xf32>
    tpu.vector_store %arg21[%c0_120, %c0_121, %c0_122], %371 {strides = array<i32>} : memref<1x16x256xf32, #tpu.memory_space<vmem>>, vector<1x16x256xf32>,
    return
  }
  func.func @transform_0(%arg0: i32) -> (i32, i32, i32) {
    %c0_i32 = arith.constant 0 : i32
    %c0_i32_0 = arith.constant 0 : i32
    %c0_i32_1 = arith.constant 0 : i32
    return %arg0, %c0_i32, %c0_i32_0 : i32, i32, i32
  }
  func.func @transform_1(%arg0: i32) -> (i32, i32) {
    %c0_i32 = arith.constant 0 : i32
    %c0_i32_0 = arith.constant 0 : i32
    %c0_i32_1 = arith.constant 0 : i32
    return %c0_i32, %c0_i32_0 : i32, i32
  }
  func.func @transform_2(%arg0: i32) -> (i32, i32) {
    %c0_i32 = arith.constant 0 : i32
    %c0_i32_0 = arith.constant 0 : i32
    %c0_i32_1 = arith.constant 0 : i32
    return %c0_i32, %c0_i32_0 : i32, i32
  }
  func.func @transform_3(%arg0: i32) -> (i32, i32) {
    %c0_i32 = arith.constant 0 : i32
    %c0_i32_0 = arith.constant 0 : i32
    %c0_i32_1 = arith.constant 0 : i32
    return %c0_i32, %c0_i32_0 : i32, i32
  }
  func.func @transform_4(%arg0: i32) -> (i32, i32) {
    %c0_i32 = arith.constant 0 : i32
    %c0_i32_0 = arith.constant 0 : i32
    %c0_i32_1 = arith.constant 0 : i32
    return %c0_i32, %c0_i32_0 : i32, i32
  }
  func.func @transform_5(%arg0: i32) -> (i32, i32) {
    %c0_i32 = arith.constant 0 : i32
    %c0_i32_0 = arith.constant 0 : i32
    %c0_i32_1 = arith.constant 0 : i32
    return %c0_i32, %c0_i32_0 : i32, i32
  }
  func.func @transform_6(%arg0: i32) -> (i32, i32) {
    %c0_i32 = arith.constant 0 : i32
    %c0_i32_0 = arith.constant 0 : i32
    %c0_i32_1 = arith.constant 0 : i32
    return %c0_i32, %c0_i32_0 : i32, i32
  }
  func.func @transform_7(%arg0: i32) -> (i32, i32) {
    %c0_i32 = arith.constant 0 : i32
    %c0_i32_0 = arith.constant 0 : i32
    %c0_i32_1 = arith.constant 0 : i32
    return %c0_i32, %c0_i32_0 : i32, i32
  }
  func.func @transform_8(%arg0: i32) -> (i32, i32) {
    %c0_i32 = arith.constant 0 : i32
    %c0_i32_0 = arith.constant 0 : i32
    %c0_i32_1 = arith.constant 0 : i32
    return %c0_i32, %c0_i32_0 : i32, i32
  }
  func.func @transform_9(%arg0: i32) -> (i32, i32) {
    %c0_i32 = arith.constant 0 : i32
    %c0_i32_0 = arith.constant 0 : i32
    %c0_i32_1 = arith.constant 0 : i32
    return %c0_i32, %c0_i32_0 : i32, i32
  }
  func.func @transform_10(%arg0: i32) -> (i32, i32) {
    %c0_i32 = arith.constant 0 : i32
    %c0_i32_0 = arith.constant 0 : i32
    %c0_i32_1 = arith.constant 0 : i32
    return %c0_i32, %c0_i32_0 : i32, i32
  }
  func.func @transform_11(%arg0: i32) -> (i32, i32) {
    %c0_i32 = arith.constant 0 : i32
    %c0_i32_0 = arith.constant 0 : i32
    %c0_i32_1 = arith.constant 0 : i32
    return %c0_i32, %c0_i32_0 : i32, i32
  }
  func.func @transform_12(%arg0: i32) -> (i32, i32) {
    %c0_i32 = arith.constant 0 : i32
    %c0_i32_0 = arith.constant 0 : i32
    %c0_i32_1 = arith.constant 0 : i32
    return %c0_i32, %c0_i32_0 : i32, i32
  }
  func.func @transform_13(%arg0: i32) -> (i32, i32) {
    %c0_i32 = arith.constant 0 : i32
    %c0_i32_0 = arith.constant 0 : i32
    %c0_i32_1 = arith.constant 0 : i32
    return %c0_i32, %c0_i32_0 : i32, i32
  }
  func.func @transform_14(%arg0: i32) -> (i32, i32) {
    %c0_i32 = arith.constant 0 : i32
    %c0_i32_0 = arith.constant 0 : i32
    %c0_i32_1 = arith.constant 0 : i32
    return %c0_i32, %c0_i32_0 : i32, i32
  }
  func.func @transform_15(%arg0: i32) -> (i32, i32) {
    %c0_i32 = arith.constant 0 : i32
    %c0_i32_0 = arith.constant 0 : i32
    %c0_i32_1 = arith.constant 0 : i32
    return %c0_i32, %c0_i32_0 : i32, i32
  }
  func.func @transform_16(%arg0: i32) -> (i32, i32) {
    %c0_i32 = arith.constant 0 : i32
    %c0_i32_0 = arith.constant 0 : i32
    %c0_i32_1 = arith.constant 0 : i32
    return %c0_i32, %c0_i32_0 : i32, i32
  }
  func.func @transform_17(%arg0: i32) -> (i32, i32) {
    %c0_i32 = arith.constant 0 : i32
    %c0_i32_0 = arith.constant 0 : i32
    %c0_i32_1 = arith.constant 0 : i32
    return %c0_i32, %c0_i32_0 : i32, i32
  }
  func.func @transform_18(%arg0: i32) -> (i32, i32) {
    %c0_i32 = arith.constant 0 : i32
    %c0_i32_0 = arith.constant 0 : i32
    %c0_i32_1 = arith.constant 0 : i32
    return %c0_i32, %c0_i32_0 : i32, i32
  }
  func.func @transform_19(%arg0: i32) -> (i32, i32) {
    %c0_i32 = arith.constant 0 : i32
    %c0_i32_0 = arith.constant 0 : i32
    %c0_i32_1 = arith.constant 0 : i32
    return %c0_i32, %c0_i32_0 : i32, i32
  }
  func.func @transform_20(%arg0: i32) -> (i32, i32, i32) {
    %c0_i32 = arith.constant 0 : i32
    %c0_i32_0 = arith.constant 0 : i32
    %c0_i32_1 = arith.constant 0 : i32
    return %arg0, %c0_i32, %c0_i32_0 : i32, i32, i32
  }
}

module attributes {stable_mosaic.version = 11 : i64} {
  func.func @_dcms_kernel(%arg0: i32, %arg1: memref<1x16x256xf32, #tpu.memory_space<vmem>>, %arg2: memref<256x16xbf16, #tpu.memory_space<vmem>>, %arg3: memref<16x256xbf16, #tpu.memory_space<vmem>>, %arg4: memref<1x256xf32, #tpu.memory_space<vmem>>, %arg5: memref<1x256xf32, #tpu.memory_space<vmem>>, %arg6: memref<4x256xf32, #tpu.memory_space<vmem>>, %arg7: memref<9x256xf32, #tpu.memory_space<vmem>>, %arg8: memref<1x256xf32, #tpu.memory_space<vmem>>, %arg9: memref<256x256xbf16, #tpu.memory_space<vmem>>, %arg10: memref<256x256xbf16, #tpu.memory_space<vmem>>, %arg11: memref<1x256xf32, #tpu.memory_space<vmem>>, %arg12: memref<9x256xf32, #tpu.memory_space<vmem>>, %arg13: memref<1x256xf32, #tpu.memory_space<vmem>>, %arg14: memref<1x256xf32, #tpu.memory_space<vmem>>, %arg15: memref<1x256xf32, #tpu.memory_space<vmem>>, %arg16: memref<9x256xf32, #tpu.memory_space<vmem>>, %arg17: memref<1x256xf32, #tpu.memory_space<vmem>>, %arg18: memref<256x256xbf16, #tpu.memory_space<vmem>>, %arg19: memref<256x256xbf16, #tpu.memory_space<vmem>>, %arg20: memref<1x256xf32, #tpu.memory_space<vmem>>, %arg21: memref<1x16x256xf32, #tpu.memory_space<vmem>>) attributes {dimension_semantics = [#tpu.dimension_semantics<parallel>], iteration_bounds = array<i64: 2>, scalar_prefetch = 0 : i64, scratch_operands = 0 : i64, tpu.core_type = #tpu.core_type<tc>, window_params = [{transform_indices = @transform_0, window_bounds = array<i64: 1, 16, 256>}, {pipeline_mode = #tpu.pipeline_mode<synchronous>, transform_indices = @transform_1, window_bounds = array<i64: 256, 16>}, {pipeline_mode = #tpu.pipeline_mode<synchronous>, transform_indices = @transform_2, window_bounds = array<i64: 16, 256>}, {pipeline_mode = #tpu.pipeline_mode<synchronous>, transform_indices = @transform_3, window_bounds = array<i64: 1, 256>}, {pipeline_mode = #tpu.pipeline_mode<synchronous>, transform_indices = @transform_4, window_bounds = array<i64: 1, 256>}, {pipeline_mode = #tpu.pipeline_mode<synchronous>, transform_indices = @transform_5, window_bounds = array<i64: 4, 256>}, {pipeline_mode = #tpu.pipeline_mode<synchronous>, transform_indices = @transform_6, window_bounds = array<i64: 9, 256>}, {pipeline_mode = #tpu.pipeline_mode<synchronous>, transform_indices = @transform_7, window_bounds = array<i64: 1, 256>}, {pipeline_mode = #tpu.pipeline_mode<synchronous>, transform_indices = @transform_8, window_bounds = array<i64: 256, 256>}, {pipeline_mode = #tpu.pipeline_mode<synchronous>, transform_indices = @transform_9, window_bounds = array<i64: 256, 256>}, {pipeline_mode = #tpu.pipeline_mode<synchronous>, transform_indices = @transform_10, window_bounds = array<i64: 1, 256>}, {pipeline_mode = #tpu.pipeline_mode<synchronous>, transform_indices = @transform_11, window_bounds = array<i64: 9, 256>}, {pipeline_mode = #tpu.pipeline_mode<synchronous>, transform_indices = @transform_12, window_bounds = array<i64: 1, 256>}, {pipeline_mode = #tpu.pipeline_mode<synchronous>, transform_indices = @transform_13, window_bounds = array<i64: 1, 256>}, {pipeline_mode = #tpu.pipeline_mode<synchronous>, transform_indices = @transform_14, window_bounds = array<i64: 1, 256>}, {pipeline_mode = #tpu.pipeline_mode<synchronous>, transform_indices = @transform_15, window_bounds = array<i64: 9, 256>}, {pipeline_mode = #tpu.pipeline_mode<synchronous>, transform_indices = @transform_16, window_bounds = array<i64: 1, 256>}, {pipeline_mode = #tpu.pipeline_mode<synchronous>, transform_indices = @transform_17, window_bounds = array<i64: 256, 256>}, {pipeline_mode = #tpu.pipeline_mode<synchronous>, transform_indices = @transform_18, window_bounds = array<i64: 256, 256>}, {pipeline_mode = #tpu.pipeline_mode<synchronous>, transform_indices = @transform_19, window_bounds = array<i64: 1, 256>}, {transform_indices = @transform_20, window_bounds = array<i64: 1, 16, 256>}]} {
    %c0 = arith.constant 0 : index
    %c0_0 = arith.constant 0 : index
    %c0_1 = arith.constant 0 : index
    %0 = vector.load %arg1[%c0, %c0_0, %c0_1] : memref<1x16x256xf32, #tpu.memory_space<vmem>>, vector<1x16x256xf32>
    %1 = vector.shape_cast %0 : vector<1x16x256xf32> to vector<16x256xf32>
    %2 = tpu.iota {dimensions = array<i32: 0>} : vector<16x256xi32>
    %c1_i32 = arith.constant 1 : i32
    %3 = vector.broadcast %c1_i32 : i32 to vector<16x256xi32>
    %4 = arith.cmpi sge, %2, %3 : vector<16x256xi32>
    %5 = arith.extui %4 : vector<16x256xi1> to vector<16x256xi32>
    %6 = arith.sitofp %5 : vector<16x256xi32> to vector<16x256xf32>
    %c14_i32 = arith.constant 14 : i32
    %7 = vector.broadcast %c14_i32 : i32 to vector<16x256xi32>
    %8 = arith.cmpi sle, %2, %7 : vector<16x256xi32>
    %9 = arith.extui %8 : vector<16x256xi1> to vector<16x256xi32>
    %10 = arith.sitofp %9 : vector<16x256xi32> to vector<16x256xf32>
    %c0_2 = arith.constant 0 : index
    %c0_3 = arith.constant 0 : index
    %11 = vector.load %arg4[%c0_2, %c0_3] : memref<1x256xf32, #tpu.memory_space<vmem>>, vector<1x256xf32>
    %c0_4 = arith.constant 0 : index
    %c0_5 = arith.constant 0 : index
    %12 = vector.load %arg5[%c0_4, %c0_5] : memref<1x256xf32, #tpu.memory_space<vmem>>, vector<1x256xf32>
    %13 = arith.mulf %1, %1 : vector<16x256xf32>
    %14 = tpu.concatenate %1, %13 in 0 : vector<16x256xf32>, vector<16x256xf32> -> vector<32x256xf32>
    %15 = arith.truncf %14 : vector<32x256xf32> to vector<32x256xbf16>
    %16 = arith.extf %15 : vector<32x256xbf16> to vector<32x256xf32>
    %17 = arith.subf %14, %16 : vector<32x256xf32>
    %18 = arith.truncf %17 : vector<32x256xf32> to vector<32x256xbf16>
    %c0_6 = arith.constant 0 : index
    %c0_7 = arith.constant 0 : index
    %19 = vector.load %arg2[%c0_6, %c0_7] : memref<256x16xbf16, #tpu.memory_space<vmem>>, vector<256x16xbf16>
    %cst = arith.constant dense<0.000000e+00> : vector<32x16xf32>
    %20 = tpu.matmul %15, %19, %cst {dimension_numbers = #tpu.dot_dimension_numbers<[1], [0], [0], [1], [0, 0, 1, 1], [], []>} : vector<32x256xbf16>, vector<256x16xbf16>, vector<32x16xf32> -> vector<32x16xf32>
    %cst_8 = arith.constant dense<0.000000e+00> : vector<32x16xf32>
    %21 = tpu.matmul %18, %19, %cst_8 {dimension_numbers = #tpu.dot_dimension_numbers<[1], [0], [0], [1], [0, 0, 1, 1], [], []>} : vector<32x256xbf16>, vector<256x16xbf16>, vector<32x16xf32> -> vector<32x16xf32>
    %22 = arith.addf %20, %21 : vector<32x16xf32>
    %23 = vector.extract_strided_slice %22 {offsets = [0, 0], sizes = [16, 16], strides = [1, 1]} : vector<32x16xf32> to vector<16x16xf32>
    %24 = vector.extract_strided_slice %22 {offsets = [16, 0], sizes = [16, 16], strides = [1, 1]} : vector<32x16xf32> to vector<16x16xf32>
    %25 = arith.mulf %23, %23 : vector<16x16xf32>
    %26 = arith.subf %24, %25 : vector<16x16xf32>
    %cst_9 = arith.constant 9.99999997E-7 : f32
    %27 = vector.broadcast %cst_9 : f32 to vector<16x16xf32>
    %28 = arith.addf %26, %27 : vector<16x16xf32>
    %29 = math.sqrt %28 : vector<16x16xf32>
    %cst_10 = arith.constant 1.000000e+00 : f32
    %30 = vector.broadcast %cst_10 : f32 to vector<16x16xf32>
    %31 = arith.divf %30, %29 : vector<16x16xf32>
    %32 = tpu.concatenate %23, %31 in 0 : vector<16x16xf32>, vector<16x16xf32> -> vector<32x16xf32>
    %33 = arith.truncf %32 : vector<32x16xf32> to vector<32x16xbf16>
    %34 = arith.extf %33 : vector<32x16xbf16> to vector<32x16xf32>
    %35 = arith.subf %32, %34 : vector<32x16xf32>
    %36 = arith.truncf %35 : vector<32x16xf32> to vector<32x16xbf16>
    %c0_11 = arith.constant 0 : index
    %c0_12 = arith.constant 0 : index
    %37 = vector.load %arg3[%c0_11, %c0_12] : memref<16x256xbf16, #tpu.memory_space<vmem>>, vector<16x256xbf16>
    %cst_13 = arith.constant dense<0.000000e+00> : vector<32x256xf32>
    %38 = tpu.matmul %33, %37, %cst_13 {dimension_numbers = #tpu.dot_dimension_numbers<[1], [0], [0], [1], [0, 0, 1, 1], [], []>} : vector<32x16xbf16>, vector<16x256xbf16>, vector<32x256xf32> -> vector<32x256xf32>
    %cst_14 = arith.constant dense<0.000000e+00> : vector<32x256xf32>
    %39 = tpu.matmul %36, %37, %cst_14 {dimension_numbers = #tpu.dot_dimension_numbers<[1], [0], [0], [1], [0, 0, 1, 1], [], []>} : vector<32x16xbf16>, vector<16x256xbf16>, vector<32x256xf32> -> vector<32x256xf32>
    %40 = arith.addf %38, %39 : vector<32x256xf32>
    %41 = vector.extract_strided_slice %40 {offsets = [0, 0], sizes = [16, 256], strides = [1, 1]} : vector<32x256xf32> to vector<16x256xf32>
    %42 = arith.subf %1, %41 : vector<16x256xf32>
    %43 = vector.extract_strided_slice %40 {offsets = [16, 0], sizes = [16, 256], strides = [1, 1]} : vector<32x256xf32> to vector<16x256xf32>
    %44 = arith.mulf %42, %43 : vector<16x256xf32>
    %45 = vector.broadcast %11 : vector<1x256xf32> to vector<16x256xf32>
    %46 = arith.mulf %44, %45 : vector<16x256xf32>
    %47 = vector.broadcast %12 : vector<1x256xf32> to vector<16x256xf32>
    %48 = arith.addf %46, %47 : vector<16x256xf32>
    %c0_15 = arith.constant 0 : index
    %c0_16 = arith.constant 0 : index
    %49 = vector.load %arg6[%c0_15, %c0_16] : memref<4x256xf32, #tpu.memory_space<vmem>>, vector<4x256xf32>
    %c16_i32 = arith.constant 16 : i32
    %50 = tpu.dynamic_rotate %48 by %c16_i32 dim 1 : vector<16x256xf32>, i32 -> vector<16x256xf32>
    %c1_i32_17 = arith.constant 1 : i32
    %51 = tpu.dynamic_rotate %50 by %c1_i32_17 dim 0 : vector<16x256xf32>, i32 -> vector<16x256xf32>
    %52 = vector.extract_strided_slice %49 {offsets = [0, 0], sizes = [1, 256], strides = [1, 1]} : vector<4x256xf32> to vector<1x256xf32>
    %53 = vector.broadcast %52 : vector<1x256xf32> to vector<16x256xf32>
    %54 = arith.mulf %6, %53 : vector<16x256xf32>
    %55 = arith.mulf %51, %54 : vector<16x256xf32>
    %c16_i32_18 = arith.constant 16 : i32
    %56 = tpu.dynamic_rotate %48 by %c16_i32_18 dim 1 : vector<16x256xf32>, i32 -> vector<16x256xf32>
    %c15_i32 = arith.constant 15 : i32
    %57 = tpu.dynamic_rotate %56 by %c15_i32 dim 0 : vector<16x256xf32>, i32 -> vector<16x256xf32>
    %58 = vector.extract_strided_slice %49 {offsets = [1, 0], sizes = [1, 256], strides = [1, 1]} : vector<4x256xf32> to vector<1x256xf32>
    %59 = vector.broadcast %58 : vector<1x256xf32> to vector<16x256xf32>
    %60 = arith.mulf %10, %59 : vector<16x256xf32>
    %61 = arith.mulf %57, %60 : vector<16x256xf32>
    %62 = arith.addf %55, %61 : vector<16x256xf32>
    %c240_i32 = arith.constant 240 : i32
    %63 = tpu.dynamic_rotate %48 by %c240_i32 dim 1 : vector<16x256xf32>, i32 -> vector<16x256xf32>
    %c15_i32_19 = arith.constant 15 : i32
    %64 = tpu.dynamic_rotate %63 by %c15_i32_19 dim 0 : vector<16x256xf32>, i32 -> vector<16x256xf32>
    %65 = vector.extract_strided_slice %49 {offsets = [2, 0], sizes = [1, 256], strides = [1, 1]} : vector<4x256xf32> to vector<1x256xf32>
    %66 = vector.broadcast %65 : vector<1x256xf32> to vector<16x256xf32>
    %67 = arith.mulf %10, %66 : vector<16x256xf32>
    %68 = arith.mulf %64, %67 : vector<16x256xf32>
    %69 = arith.addf %62, %68 : vector<16x256xf32>
    %c240_i32_20 = arith.constant 240 : i32
    %70 = tpu.dynamic_rotate %48 by %c240_i32_20 dim 1 : vector<16x256xf32>, i32 -> vector<16x256xf32>
    %c1_i32_21 = arith.constant 1 : i32
    %71 = tpu.dynamic_rotate %70 by %c1_i32_21 dim 0 : vector<16x256xf32>, i32 -> vector<16x256xf32>
    %72 = vector.extract_strided_slice %49 {offsets = [3, 0], sizes = [1, 256], strides = [1, 1]} : vector<4x256xf32> to vector<1x256xf32>
    %73 = vector.broadcast %72 : vector<1x256xf32> to vector<16x256xf32>
    %74 = arith.mulf %6, %73 : vector<16x256xf32>
    %75 = arith.mulf %71, %74 : vector<16x256xf32>
    %76 = arith.addf %69, %75 : vector<16x256xf32>
    %c0_22 = arith.constant 0 : index
    %c0_23 = arith.constant 0 : index
    %77 = vector.load %arg7[%c0_22, %c0_23] : memref<9x256xf32, #tpu.memory_space<vmem>>, vector<9x256xf32>
    %c1_i32_24 = arith.constant 1 : i32
    %78 = tpu.dynamic_rotate %76 by %c1_i32_24 dim 0 : vector<16x256xf32>, i32 -> vector<16x256xf32>
    %79 = arith.mulf %78, %6 : vector<16x256xf32>
    %c15_i32_25 = arith.constant 15 : i32
    %80 = tpu.dynamic_rotate %76 by %c15_i32_25 dim 0 : vector<16x256xf32>, i32 -> vector<16x256xf32>
    %81 = arith.mulf %80, %10 : vector<16x256xf32>
    %c16_i32_26 = arith.constant 16 : i32
    %82 = tpu.dynamic_rotate %79 by %c16_i32_26 dim 1 : vector<16x256xf32>, i32 -> vector<16x256xf32>
    %83 = vector.extract_strided_slice %77 {offsets = [0, 0], sizes = [1, 256], strides = [1, 1]} : vector<9x256xf32> to vector<1x256xf32>
    %84 = vector.broadcast %83 : vector<1x256xf32> to vector<16x256xf32>
    %85 = arith.mulf %82, %84 : vector<16x256xf32>
    %86 = vector.extract_strided_slice %77 {offsets = [1, 0], sizes = [1, 256], strides = [1, 1]} : vector<9x256xf32> to vector<1x256xf32>
    %87 = vector.broadcast %86 : vector<1x256xf32> to vector<16x256xf32>
    %88 = arith.mulf %79, %87 : vector<16x256xf32>
    %89 = arith.addf %85, %88 : vector<16x256xf32>
    %c240_i32_27 = arith.constant 240 : i32
    %90 = tpu.dynamic_rotate %79 by %c240_i32_27 dim 1 : vector<16x256xf32>, i32 -> vector<16x256xf32>
    %91 = vector.extract_strided_slice %77 {offsets = [2, 0], sizes = [1, 256], strides = [1, 1]} : vector<9x256xf32> to vector<1x256xf32>
    %92 = vector.broadcast %91 : vector<1x256xf32> to vector<16x256xf32>
    %93 = arith.mulf %90, %92 : vector<16x256xf32>
    %94 = arith.addf %89, %93 : vector<16x256xf32>
    %c16_i32_28 = arith.constant 16 : i32
    %95 = tpu.dynamic_rotate %76 by %c16_i32_28 dim 1 : vector<16x256xf32>, i32 -> vector<16x256xf32>
    %96 = vector.extract_strided_slice %77 {offsets = [3, 0], sizes = [1, 256], strides = [1, 1]} : vector<9x256xf32> to vector<1x256xf32>
    %97 = vector.broadcast %96 : vector<1x256xf32> to vector<16x256xf32>
    %98 = arith.mulf %95, %97 : vector<16x256xf32>
    %99 = arith.addf %94, %98 : vector<16x256xf32>
    %100 = vector.extract_strided_slice %77 {offsets = [4, 0], sizes = [1, 256], strides = [1, 1]} : vector<9x256xf32> to vector<1x256xf32>
    %101 = vector.broadcast %100 : vector<1x256xf32> to vector<16x256xf32>
    %102 = arith.mulf %76, %101 : vector<16x256xf32>
    %103 = arith.addf %99, %102 : vector<16x256xf32>
    %c240_i32_29 = arith.constant 240 : i32
    %104 = tpu.dynamic_rotate %76 by %c240_i32_29 dim 1 : vector<16x256xf32>, i32 -> vector<16x256xf32>
    %105 = vector.extract_strided_slice %77 {offsets = [5, 0], sizes = [1, 256], strides = [1, 1]} : vector<9x256xf32> to vector<1x256xf32>
    %106 = vector.broadcast %105 : vector<1x256xf32> to vector<16x256xf32>
    %107 = arith.mulf %104, %106 : vector<16x256xf32>
    %108 = arith.addf %103, %107 : vector<16x256xf32>
    %c16_i32_30 = arith.constant 16 : i32
    %109 = tpu.dynamic_rotate %81 by %c16_i32_30 dim 1 : vector<16x256xf32>, i32 -> vector<16x256xf32>
    %110 = vector.extract_strided_slice %77 {offsets = [6, 0], sizes = [1, 256], strides = [1, 1]} : vector<9x256xf32> to vector<1x256xf32>
    %111 = vector.broadcast %110 : vector<1x256xf32> to vector<16x256xf32>
    %112 = arith.mulf %109, %111 : vector<16x256xf32>
    %113 = arith.addf %108, %112 : vector<16x256xf32>
    %114 = vector.extract_strided_slice %77 {offsets = [7, 0], sizes = [1, 256], strides = [1, 1]} : vector<9x256xf32> to vector<1x256xf32>
    %115 = vector.broadcast %114 : vector<1x256xf32> to vector<16x256xf32>
    %116 = arith.mulf %81, %115 : vector<16x256xf32>
    %117 = arith.addf %113, %116 : vector<16x256xf32>
    %c240_i32_31 = arith.constant 240 : i32
    %118 = tpu.dynamic_rotate %81 by %c240_i32_31 dim 1 : vector<16x256xf32>, i32 -> vector<16x256xf32>
    %119 = vector.extract_strided_slice %77 {offsets = [8, 0], sizes = [1, 256], strides = [1, 1]} : vector<9x256xf32> to vector<1x256xf32>
    %120 = vector.broadcast %119 : vector<1x256xf32> to vector<16x256xf32>
    %121 = arith.mulf %118, %120 : vector<16x256xf32>
    %122 = arith.addf %117, %121 : vector<16x256xf32>
    %c0_32 = arith.constant 0 : index
    %c0_33 = arith.constant 0 : index
    %123 = vector.load %arg8[%c0_32, %c0_33] : memref<1x256xf32, #tpu.memory_space<vmem>>, vector<1x256xf32>
    %124 = vector.broadcast %123 : vector<1x256xf32> to vector<16x256xf32>
    %125 = arith.addf %122, %124 : vector<16x256xf32>
    %cst_34 = arith.constant 5.000000e-01 : f32
    %126 = vector.broadcast %cst_34 : f32 to vector<16x256xf32>
    %127 = arith.mulf %126, %125 : vector<16x256xf32>
    %cst_35 = arith.constant 0.707106769 : f32
    %128 = vector.broadcast %cst_35 : f32 to vector<16x256xf32>
    %129 = arith.mulf %125, %128 : vector<16x256xf32>
    %130 = math.absf %129 : vector<16x256xf32>
    %cst_36 = arith.constant 0.327591091 : f32
    %131 = vector.broadcast %cst_36 : f32 to vector<16x256xf32>
    %132 = arith.mulf %131, %130 : vector<16x256xf32>
    %cst_37 = arith.constant 1.000000e+00 : f32
    %133 = vector.broadcast %cst_37 : f32 to vector<16x256xf32>
    %134 = arith.addf %133, %132 : vector<16x256xf32>
    %cst_38 = arith.constant 1.000000e+00 : f32
    %135 = vector.broadcast %cst_38 : f32 to vector<16x256xf32>
    %136 = arith.divf %135, %134 : vector<16x256xf32>
    %cst_39 = arith.constant 1.06140542 : f32
    %137 = vector.broadcast %cst_39 : f32 to vector<16x256xf32>
    %138 = arith.mulf %136, %137 : vector<16x256xf32>
    %cst_40 = arith.constant -1.45315206 : f32
    %139 = vector.broadcast %cst_40 : f32 to vector<16x256xf32>
    %140 = arith.addf %139, %138 : vector<16x256xf32>
    %141 = arith.mulf %136, %140 : vector<16x256xf32>
    %cst_41 = arith.constant 1.42141378 : f32
    %142 = vector.broadcast %cst_41 : f32 to vector<16x256xf32>
    %143 = arith.addf %142, %141 : vector<16x256xf32>
    %144 = arith.mulf %136, %143 : vector<16x256xf32>
    %cst_42 = arith.constant -0.284496725 : f32
    %145 = vector.broadcast %cst_42 : f32 to vector<16x256xf32>
    %146 = arith.addf %145, %144 : vector<16x256xf32>
    %147 = arith.mulf %136, %146 : vector<16x256xf32>
    %cst_43 = arith.constant 0.254829586 : f32
    %148 = vector.broadcast %cst_43 : f32 to vector<16x256xf32>
    %149 = arith.addf %148, %147 : vector<16x256xf32>
    %150 = arith.mulf %136, %149 : vector<16x256xf32>
    %cst_44 = arith.constant 0.000000e+00 : f32
    %151 = vector.broadcast %cst_44 : f32 to vector<16x256xf32>
    %152 = arith.subf %151, %130 : vector<16x256xf32>
    %153 = arith.mulf %152, %130 : vector<16x256xf32>
    %154 = math.exp %153 : vector<16x256xf32>
    %155 = arith.mulf %150, %154 : vector<16x256xf32>
    %cst_45 = arith.constant 1.000000e+00 : f32
    %156 = vector.broadcast %cst_45 : f32 to vector<16x256xf32>
    %157 = arith.subf %156, %155 : vector<16x256xf32>
    %cst_46 = arith.constant 0.000000e+00 : f32
    %158 = vector.broadcast %cst_46 : f32 to vector<16x256xf32>
    %159 = arith.cmpf olt, %129, %158 : vector<16x256xf32>
    %cst_47 = arith.constant 0.000000e+00 : f32
    %160 = vector.broadcast %cst_47 : f32 to vector<16x256xf32>
    %161 = arith.subf %160, %157 : vector<16x256xf32>
    %162 = arith.select %159, %161, %157 : vector<16x256xi1>, vector<16x256xf32>
    %cst_48 = arith.constant 1.000000e+00 : f32
    %163 = vector.broadcast %cst_48 : f32 to vector<16x256xf32>
    %164 = arith.addf %163, %162 : vector<16x256xf32>
    %165 = arith.mulf %127, %164 : vector<16x256xf32>
    %166 = arith.truncf %165 : vector<16x256xf32> to vector<16x256xbf16>
    %167 = arith.extf %166 : vector<16x256xbf16> to vector<16x256xf32>
    %168 = arith.subf %165, %167 : vector<16x256xf32>
    %169 = arith.truncf %168 : vector<16x256xf32> to vector<16x256xbf16>
    %c0_49 = arith.constant 0 : index
    %c0_50 = arith.constant 0 : index
    %170 = vector.load %arg9[%c0_49, %c0_50] : memref<256x256xbf16, #tpu.memory_space<vmem>>, vector<256x256xbf16>
    %cst_51 = arith.constant dense<0.000000e+00> : vector<16x256xf32>
    %171 = tpu.matmul %166, %170, %cst_51 {dimension_numbers = #tpu.dot_dimension_numbers<[1], [0], [0], [1], [0, 0, 1, 1], [], []>} : vector<16x256xbf16>, vector<256x256xbf16>, vector<16x256xf32> -> vector<16x256xf32>
    %cst_52 = arith.constant dense<0.000000e+00> : vector<16x256xf32>
    %172 = tpu.matmul %169, %170, %cst_52 {dimension_numbers = #tpu.dot_dimension_numbers<[1], [0], [0], [1], [0, 0, 1, 1], [], []>} : vector<16x256xbf16>, vector<256x256xbf16>, vector<16x256xf32> -> vector<16x256xf32>
    %173 = arith.addf %171, %172 : vector<16x256xf32>
    %c0_53 = arith.constant 0 : index
    %c0_54 = arith.constant 0 : index
    %174 = vector.load %arg10[%c0_53, %c0_54] : memref<256x256xbf16, #tpu.memory_space<vmem>>, vector<256x256xbf16>
    %cst_55 = arith.constant dense<0.000000e+00> : vector<16x256xf32>
    %175 = tpu.matmul %166, %174, %cst_55 {dimension_numbers = #tpu.dot_dimension_numbers<[1], [0], [0], [1], [0, 0, 1, 1], [], []>} : vector<16x256xbf16>, vector<256x256xbf16>, vector<16x256xf32> -> vector<16x256xf32>
    %176 = arith.addf %173, %175 : vector<16x256xf32>
    %c0_56 = arith.constant 0 : index
    %c0_57 = arith.constant 0 : index
    %177 = vector.load %arg11[%c0_56, %c0_57] : memref<1x256xf32, #tpu.memory_space<vmem>>, vector<1x256xf32>
    %178 = vector.broadcast %177 : vector<1x256xf32> to vector<16x256xf32>
    %179 = arith.addf %176, %178 : vector<16x256xf32>
    %c0_58 = arith.constant 0 : index
    %c0_59 = arith.constant 0 : index
    %180 = vector.load %arg12[%c0_58, %c0_59] : memref<9x256xf32, #tpu.memory_space<vmem>>, vector<9x256xf32>
    %c1_i32_60 = arith.constant 1 : i32
    %181 = tpu.dynamic_rotate %48 by %c1_i32_60 dim 0 : vector<16x256xf32>, i32 -> vector<16x256xf32>
    %182 = arith.mulf %181, %6 : vector<16x256xf32>
    %c15_i32_61 = arith.constant 15 : i32
    %183 = tpu.dynamic_rotate %48 by %c15_i32_61 dim 0 : vector<16x256xf32>, i32 -> vector<16x256xf32>
    %184 = arith.mulf %183, %10 : vector<16x256xf32>
    %c16_i32_62 = arith.constant 16 : i32
    %185 = tpu.dynamic_rotate %182 by %c16_i32_62 dim 1 : vector<16x256xf32>, i32 -> vector<16x256xf32>
    %186 = vector.extract_strided_slice %180 {offsets = [0, 0], sizes = [1, 256], strides = [1, 1]} : vector<9x256xf32> to vector<1x256xf32>
    %187 = vector.broadcast %186 : vector<1x256xf32> to vector<16x256xf32>
    %188 = arith.mulf %185, %187 : vector<16x256xf32>
    %189 = vector.extract_strided_slice %180 {offsets = [1, 0], sizes = [1, 256], strides = [1, 1]} : vector<9x256xf32> to vector<1x256xf32>
    %190 = vector.broadcast %189 : vector<1x256xf32> to vector<16x256xf32>
    %191 = arith.mulf %182, %190 : vector<16x256xf32>
    %192 = arith.addf %188, %191 : vector<16x256xf32>
    %c240_i32_63 = arith.constant 240 : i32
    %193 = tpu.dynamic_rotate %182 by %c240_i32_63 dim 1 : vector<16x256xf32>, i32 -> vector<16x256xf32>
    %194 = vector.extract_strided_slice %180 {offsets = [2, 0], sizes = [1, 256], strides = [1, 1]} : vector<9x256xf32> to vector<1x256xf32>
    %195 = vector.broadcast %194 : vector<1x256xf32> to vector<16x256xf32>
    %196 = arith.mulf %193, %195 : vector<16x256xf32>
    %197 = arith.addf %192, %196 : vector<16x256xf32>
    %c16_i32_64 = arith.constant 16 : i32
    %198 = tpu.dynamic_rotate %48 by %c16_i32_64 dim 1 : vector<16x256xf32>, i32 -> vector<16x256xf32>
    %199 = vector.extract_strided_slice %180 {offsets = [3, 0], sizes = [1, 256], strides = [1, 1]} : vector<9x256xf32> to vector<1x256xf32>
    %200 = vector.broadcast %199 : vector<1x256xf32> to vector<16x256xf32>
    %201 = arith.mulf %198, %200 : vector<16x256xf32>
    %202 = arith.addf %197, %201 : vector<16x256xf32>
    %203 = vector.extract_strided_slice %180 {offsets = [4, 0], sizes = [1, 256], strides = [1, 1]} : vector<9x256xf32> to vector<1x256xf32>
    %204 = vector.broadcast %203 : vector<1x256xf32> to vector<16x256xf32>
    %205 = arith.mulf %48, %204 : vector<16x256xf32>
    %206 = arith.addf %202, %205 : vector<16x256xf32>
    %c240_i32_65 = arith.constant 240 : i32
    %207 = tpu.dynamic_rotate %48 by %c240_i32_65 dim 1 : vector<16x256xf32>, i32 -> vector<16x256xf32>
    %208 = vector.extract_strided_slice %180 {offsets = [5, 0], sizes = [1, 256], strides = [1, 1]} : vector<9x256xf32> to vector<1x256xf32>
    %209 = vector.broadcast %208 : vector<1x256xf32> to vector<16x256xf32>
    %210 = arith.mulf %207, %209 : vector<16x256xf32>
    %211 = arith.addf %206, %210 : vector<16x256xf32>
    %c16_i32_66 = arith.constant 16 : i32
    %212 = tpu.dynamic_rotate %184 by %c16_i32_66 dim 1 : vector<16x256xf32>, i32 -> vector<16x256xf32>
    %213 = vector.extract_strided_slice %180 {offsets = [6, 0], sizes = [1, 256], strides = [1, 1]} : vector<9x256xf32> to vector<1x256xf32>
    %214 = vector.broadcast %213 : vector<1x256xf32> to vector<16x256xf32>
    %215 = arith.mulf %212, %214 : vector<16x256xf32>
    %216 = arith.addf %211, %215 : vector<16x256xf32>
    %217 = vector.extract_strided_slice %180 {offsets = [7, 0], sizes = [1, 256], strides = [1, 1]} : vector<9x256xf32> to vector<1x256xf32>
    %218 = vector.broadcast %217 : vector<1x256xf32> to vector<16x256xf32>
    %219 = arith.mulf %184, %218 : vector<16x256xf32>
    %220 = arith.addf %216, %219 : vector<16x256xf32>
    %c240_i32_67 = arith.constant 240 : i32
    %221 = tpu.dynamic_rotate %184 by %c240_i32_67 dim 1 : vector<16x256xf32>, i32 -> vector<16x256xf32>
    %222 = vector.extract_strided_slice %180 {offsets = [8, 0], sizes = [1, 256], strides = [1, 1]} : vector<9x256xf32> to vector<1x256xf32>
    %223 = vector.broadcast %222 : vector<1x256xf32> to vector<16x256xf32>
    %224 = arith.mulf %221, %223 : vector<16x256xf32>
    %225 = arith.addf %220, %224 : vector<16x256xf32>
    %c0_68 = arith.constant 0 : index
    %c0_69 = arith.constant 0 : index
    %226 = vector.load %arg13[%c0_68, %c0_69] : memref<1x256xf32, #tpu.memory_space<vmem>>, vector<1x256xf32>
    %227 = vector.broadcast %226 : vector<1x256xf32> to vector<16x256xf32>
    %228 = arith.addf %225, %227 : vector<16x256xf32>
    %229 = arith.addf %179, %228 : vector<16x256xf32>
    %c0_70 = arith.constant 0 : index
    %c0_71 = arith.constant 0 : index
    %230 = vector.load %arg14[%c0_70, %c0_71] : memref<1x256xf32, #tpu.memory_space<vmem>>, vector<1x256xf32>
    %c0_72 = arith.constant 0 : index
    %c0_73 = arith.constant 0 : index
    %231 = vector.load %arg15[%c0_72, %c0_73] : memref<1x256xf32, #tpu.memory_space<vmem>>, vector<1x256xf32>
    %232 = arith.mulf %229, %229 : vector<16x256xf32>
    %233 = tpu.concatenate %229, %232 in 0 : vector<16x256xf32>, vector<16x256xf32> -> vector<32x256xf32>
    %234 = arith.truncf %233 : vector<32x256xf32> to vector<32x256xbf16>
    %235 = arith.extf %234 : vector<32x256xbf16> to vector<32x256xf32>
    %236 = arith.subf %233, %235 : vector<32x256xf32>
    %237 = arith.truncf %236 : vector<32x256xf32> to vector<32x256xbf16>
    %c0_74 = arith.constant 0 : index
    %c0_75 = arith.constant 0 : index
    %238 = vector.load %arg2[%c0_74, %c0_75] : memref<256x16xbf16, #tpu.memory_space<vmem>>, vector<256x16xbf16>
    %cst_76 = arith.constant dense<0.000000e+00> : vector<32x16xf32>
    %239 = tpu.matmul %234, %238, %cst_76 {dimension_numbers = #tpu.dot_dimension_numbers<[1], [0], [0], [1], [0, 0, 1, 1], [], []>} : vector<32x256xbf16>, vector<256x16xbf16>, vector<32x16xf32> -> vector<32x16xf32>
    %cst_77 = arith.constant dense<0.000000e+00> : vector<32x16xf32>
    %240 = tpu.matmul %237, %238, %cst_77 {dimension_numbers = #tpu.dot_dimension_numbers<[1], [0], [0], [1], [0, 0, 1, 1], [], []>} : vector<32x256xbf16>, vector<256x16xbf16>, vector<32x16xf32> -> vector<32x16xf32>
    %241 = arith.addf %239, %240 : vector<32x16xf32>
    %242 = vector.extract_strided_slice %241 {offsets = [0, 0], sizes = [16, 16], strides = [1, 1]} : vector<32x16xf32> to vector<16x16xf32>
    %243 = vector.extract_strided_slice %241 {offsets = [16, 0], sizes = [16, 16], strides = [1, 1]} : vector<32x16xf32> to vector<16x16xf32>
    %244 = arith.mulf %242, %242 : vector<16x16xf32>
    %245 = arith.subf %243, %244 : vector<16x16xf32>
    %cst_78 = arith.constant 9.99999997E-7 : f32
    %246 = vector.broadcast %cst_78 : f32 to vector<16x16xf32>
    %247 = arith.addf %245, %246 : vector<16x16xf32>
    %248 = math.sqrt %247 : vector<16x16xf32>
    %cst_79 = arith.constant 1.000000e+00 : f32
    %249 = vector.broadcast %cst_79 : f32 to vector<16x16xf32>
    %250 = arith.divf %249, %248 : vector<16x16xf32>
    %251 = tpu.concatenate %242, %250 in 0 : vector<16x16xf32>, vector<16x16xf32> -> vector<32x16xf32>
    %252 = arith.truncf %251 : vector<32x16xf32> to vector<32x16xbf16>
    %253 = arith.extf %252 : vector<32x16xbf16> to vector<32x16xf32>
    %254 = arith.subf %251, %253 : vector<32x16xf32>
    %255 = arith.truncf %254 : vector<32x16xf32> to vector<32x16xbf16>
    %c0_80 = arith.constant 0 : index
    %c0_81 = arith.constant 0 : index
    %256 = vector.load %arg3[%c0_80, %c0_81] : memref<16x256xbf16, #tpu.memory_space<vmem>>, vector<16x256xbf16>
    %cst_82 = arith.constant dense<0.000000e+00> : vector<32x256xf32>
    %257 = tpu.matmul %252, %256, %cst_82 {dimension_numbers = #tpu.dot_dimension_numbers<[1], [0], [0], [1], [0, 0, 1, 1], [], []>} : vector<32x16xbf16>, vector<16x256xbf16>, vector<32x256xf32> -> vector<32x256xf32>
    %cst_83 = arith.constant dense<0.000000e+00> : vector<32x256xf32>
    %258 = tpu.matmul %255, %256, %cst_83 {dimension_numbers = #tpu.dot_dimension_numbers<[1], [0], [0], [1], [0, 0, 1, 1], [], []>} : vector<32x16xbf16>, vector<16x256xbf16>, vector<32x256xf32> -> vector<32x256xf32>
    %259 = arith.addf %257, %258 : vector<32x256xf32>
    %260 = vector.extract_strided_slice %259 {offsets = [0, 0], sizes = [16, 256], strides = [1, 1]} : vector<32x256xf32> to vector<16x256xf32>
    %261 = arith.subf %229, %260 : vector<16x256xf32>
    %262 = vector.extract_strided_slice %259 {offsets = [16, 0], sizes = [16, 256], strides = [1, 1]} : vector<32x256xf32> to vector<16x256xf32>
    %263 = arith.mulf %261, %262 : vector<16x256xf32>
    %264 = vector.broadcast %230 : vector<1x256xf32> to vector<16x256xf32>
    %265 = arith.mulf %263, %264 : vector<16x256xf32>
    %266 = vector.broadcast %231 : vector<1x256xf32> to vector<16x256xf32>
    %267 = arith.addf %265, %266 : vector<16x256xf32>
    %c0_84 = arith.constant 0 : index
    %c0_85 = arith.constant 0 : index
    %268 = vector.load %arg16[%c0_84, %c0_85] : memref<9x256xf32, #tpu.memory_space<vmem>>, vector<9x256xf32>
    %c1_i32_86 = arith.constant 1 : i32
    %269 = tpu.dynamic_rotate %267 by %c1_i32_86 dim 0 : vector<16x256xf32>, i32 -> vector<16x256xf32>
    %270 = arith.mulf %269, %6 : vector<16x256xf32>
    %c15_i32_87 = arith.constant 15 : i32
    %271 = tpu.dynamic_rotate %267 by %c15_i32_87 dim 0 : vector<16x256xf32>, i32 -> vector<16x256xf32>
    %272 = arith.mulf %271, %10 : vector<16x256xf32>
    %c16_i32_88 = arith.constant 16 : i32
    %273 = tpu.dynamic_rotate %270 by %c16_i32_88 dim 1 : vector<16x256xf32>, i32 -> vector<16x256xf32>
    %274 = vector.extract_strided_slice %268 {offsets = [0, 0], sizes = [1, 256], strides = [1, 1]} : vector<9x256xf32> to vector<1x256xf32>
    %275 = vector.broadcast %274 : vector<1x256xf32> to vector<16x256xf32>
    %276 = arith.mulf %273, %275 : vector<16x256xf32>
    %277 = vector.extract_strided_slice %268 {offsets = [1, 0], sizes = [1, 256], strides = [1, 1]} : vector<9x256xf32> to vector<1x256xf32>
    %278 = vector.broadcast %277 : vector<1x256xf32> to vector<16x256xf32>
    %279 = arith.mulf %270, %278 : vector<16x256xf32>
    %280 = arith.addf %276, %279 : vector<16x256xf32>
    %c240_i32_89 = arith.constant 240 : i32
    %281 = tpu.dynamic_rotate %270 by %c240_i32_89 dim 1 : vector<16x256xf32>, i32 -> vector<16x256xf32>
    %282 = vector.extract_strided_slice %268 {offsets = [2, 0], sizes = [1, 256], strides = [1, 1]} : vector<9x256xf32> to vector<1x256xf32>
    %283 = vector.broadcast %282 : vector<1x256xf32> to vector<16x256xf32>
    %284 = arith.mulf %281, %283 : vector<16x256xf32>
    %285 = arith.addf %280, %284 : vector<16x256xf32>
    %c16_i32_90 = arith.constant 16 : i32
    %286 = tpu.dynamic_rotate %267 by %c16_i32_90 dim 1 : vector<16x256xf32>, i32 -> vector<16x256xf32>
    %287 = vector.extract_strided_slice %268 {offsets = [3, 0], sizes = [1, 256], strides = [1, 1]} : vector<9x256xf32> to vector<1x256xf32>
    %288 = vector.broadcast %287 : vector<1x256xf32> to vector<16x256xf32>
    %289 = arith.mulf %286, %288 : vector<16x256xf32>
    %290 = arith.addf %285, %289 : vector<16x256xf32>
    %291 = vector.extract_strided_slice %268 {offsets = [4, 0], sizes = [1, 256], strides = [1, 1]} : vector<9x256xf32> to vector<1x256xf32>
    %292 = vector.broadcast %291 : vector<1x256xf32> to vector<16x256xf32>
    %293 = arith.mulf %267, %292 : vector<16x256xf32>
    %294 = arith.addf %290, %293 : vector<16x256xf32>
    %c240_i32_91 = arith.constant 240 : i32
    %295 = tpu.dynamic_rotate %267 by %c240_i32_91 dim 1 : vector<16x256xf32>, i32 -> vector<16x256xf32>
    %296 = vector.extract_strided_slice %268 {offsets = [5, 0], sizes = [1, 256], strides = [1, 1]} : vector<9x256xf32> to vector<1x256xf32>
    %297 = vector.broadcast %296 : vector<1x256xf32> to vector<16x256xf32>
    %298 = arith.mulf %295, %297 : vector<16x256xf32>
    %299 = arith.addf %294, %298 : vector<16x256xf32>
    %c16_i32_92 = arith.constant 16 : i32
    %300 = tpu.dynamic_rotate %272 by %c16_i32_92 dim 1 : vector<16x256xf32>, i32 -> vector<16x256xf32>
    %301 = vector.extract_strided_slice %268 {offsets = [6, 0], sizes = [1, 256], strides = [1, 1]} : vector<9x256xf32> to vector<1x256xf32>
    %302 = vector.broadcast %301 : vector<1x256xf32> to vector<16x256xf32>
    %303 = arith.mulf %300, %302 : vector<16x256xf32>
    %304 = arith.addf %299, %303 : vector<16x256xf32>
    %305 = vector.extract_strided_slice %268 {offsets = [7, 0], sizes = [1, 256], strides = [1, 1]} : vector<9x256xf32> to vector<1x256xf32>
    %306 = vector.broadcast %305 : vector<1x256xf32> to vector<16x256xf32>
    %307 = arith.mulf %272, %306 : vector<16x256xf32>
    %308 = arith.addf %304, %307 : vector<16x256xf32>
    %c240_i32_93 = arith.constant 240 : i32
    %309 = tpu.dynamic_rotate %272 by %c240_i32_93 dim 1 : vector<16x256xf32>, i32 -> vector<16x256xf32>
    %310 = vector.extract_strided_slice %268 {offsets = [8, 0], sizes = [1, 256], strides = [1, 1]} : vector<9x256xf32> to vector<1x256xf32>
    %311 = vector.broadcast %310 : vector<1x256xf32> to vector<16x256xf32>
    %312 = arith.mulf %309, %311 : vector<16x256xf32>
    %313 = arith.addf %308, %312 : vector<16x256xf32>
    %c0_94 = arith.constant 0 : index
    %c0_95 = arith.constant 0 : index
    %314 = vector.load %arg17[%c0_94, %c0_95] : memref<1x256xf32, #tpu.memory_space<vmem>>, vector<1x256xf32>
    %315 = vector.broadcast %314 : vector<1x256xf32> to vector<16x256xf32>
    %316 = arith.addf %313, %315 : vector<16x256xf32>
    %cst_96 = arith.constant 5.000000e-01 : f32
    %317 = vector.broadcast %cst_96 : f32 to vector<16x256xf32>
    %318 = arith.mulf %317, %316 : vector<16x256xf32>
    %cst_97 = arith.constant 0.707106769 : f32
    %319 = vector.broadcast %cst_97 : f32 to vector<16x256xf32>
    %320 = arith.mulf %316, %319 : vector<16x256xf32>
    %321 = math.absf %320 : vector<16x256xf32>
    %cst_98 = arith.constant 0.327591091 : f32
    %322 = vector.broadcast %cst_98 : f32 to vector<16x256xf32>
    %323 = arith.mulf %322, %321 : vector<16x256xf32>
    %cst_99 = arith.constant 1.000000e+00 : f32
    %324 = vector.broadcast %cst_99 : f32 to vector<16x256xf32>
    %325 = arith.addf %324, %323 : vector<16x256xf32>
    %cst_100 = arith.constant 1.000000e+00 : f32
    %326 = vector.broadcast %cst_100 : f32 to vector<16x256xf32>
    %327 = arith.divf %326, %325 : vector<16x256xf32>
    %cst_101 = arith.constant 1.06140542 : f32
    %328 = vector.broadcast %cst_101 : f32 to vector<16x256xf32>
    %329 = arith.mulf %327, %328 : vector<16x256xf32>
    %cst_102 = arith.constant -1.45315206 : f32
    %330 = vector.broadcast %cst_102 : f32 to vector<16x256xf32>
    %331 = arith.addf %330, %329 : vector<16x256xf32>
    %332 = arith.mulf %327, %331 : vector<16x256xf32>
    %cst_103 = arith.constant 1.42141378 : f32
    %333 = vector.broadcast %cst_103 : f32 to vector<16x256xf32>
    %334 = arith.addf %333, %332 : vector<16x256xf32>
    %335 = arith.mulf %327, %334 : vector<16x256xf32>
    %cst_104 = arith.constant -0.284496725 : f32
    %336 = vector.broadcast %cst_104 : f32 to vector<16x256xf32>
    %337 = arith.addf %336, %335 : vector<16x256xf32>
    %338 = arith.mulf %327, %337 : vector<16x256xf32>
    %cst_105 = arith.constant 0.254829586 : f32
    %339 = vector.broadcast %cst_105 : f32 to vector<16x256xf32>
    %340 = arith.addf %339, %338 : vector<16x256xf32>
    %341 = arith.mulf %327, %340 : vector<16x256xf32>
    %cst_106 = arith.constant 0.000000e+00 : f32
    %342 = vector.broadcast %cst_106 : f32 to vector<16x256xf32>
    %343 = arith.subf %342, %321 : vector<16x256xf32>
    %344 = arith.mulf %343, %321 : vector<16x256xf32>
    %345 = math.exp %344 : vector<16x256xf32>
    %346 = arith.mulf %341, %345 : vector<16x256xf32>
    %cst_107 = arith.constant 1.000000e+00 : f32
    %347 = vector.broadcast %cst_107 : f32 to vector<16x256xf32>
    %348 = arith.subf %347, %346 : vector<16x256xf32>
    %cst_108 = arith.constant 0.000000e+00 : f32
    %349 = vector.broadcast %cst_108 : f32 to vector<16x256xf32>
    %350 = arith.cmpf olt, %320, %349 : vector<16x256xf32>
    %cst_109 = arith.constant 0.000000e+00 : f32
    %351 = vector.broadcast %cst_109 : f32 to vector<16x256xf32>
    %352 = arith.subf %351, %348 : vector<16x256xf32>
    %353 = arith.select %350, %352, %348 : vector<16x256xi1>, vector<16x256xf32>
    %cst_110 = arith.constant 1.000000e+00 : f32
    %354 = vector.broadcast %cst_110 : f32 to vector<16x256xf32>
    %355 = arith.addf %354, %353 : vector<16x256xf32>
    %356 = arith.mulf %318, %355 : vector<16x256xf32>
    %357 = arith.truncf %356 : vector<16x256xf32> to vector<16x256xbf16>
    %358 = arith.extf %357 : vector<16x256xbf16> to vector<16x256xf32>
    %359 = arith.subf %356, %358 : vector<16x256xf32>
    %360 = arith.truncf %359 : vector<16x256xf32> to vector<16x256xbf16>
    %c0_111 = arith.constant 0 : index
    %c0_112 = arith.constant 0 : index
    %361 = vector.load %arg18[%c0_111, %c0_112] : memref<256x256xbf16, #tpu.memory_space<vmem>>, vector<256x256xbf16>
    %cst_113 = arith.constant dense<0.000000e+00> : vector<16x256xf32>
    %362 = tpu.matmul %357, %361, %cst_113 {dimension_numbers = #tpu.dot_dimension_numbers<[1], [0], [0], [1], [0, 0, 1, 1], [], []>} : vector<16x256xbf16>, vector<256x256xbf16>, vector<16x256xf32> -> vector<16x256xf32>
    %cst_114 = arith.constant dense<0.000000e+00> : vector<16x256xf32>
    %363 = tpu.matmul %360, %361, %cst_114 {dimension_numbers = #tpu.dot_dimension_numbers<[1], [0], [0], [1], [0, 0, 1, 1], [], []>} : vector<16x256xbf16>, vector<256x256xbf16>, vector<16x256xf32> -> vector<16x256xf32>
    %364 = arith.addf %362, %363 : vector<16x256xf32>
    %c0_115 = arith.constant 0 : index
    %c0_116 = arith.constant 0 : index
    %365 = vector.load %arg19[%c0_115, %c0_116] : memref<256x256xbf16, #tpu.memory_space<vmem>>, vector<256x256xbf16>
    %cst_117 = arith.constant dense<0.000000e+00> : vector<16x256xf32>
    %366 = tpu.matmul %357, %365, %cst_117 {dimension_numbers = #tpu.dot_dimension_numbers<[1], [0], [0], [1], [0, 0, 1, 1], [], []>} : vector<16x256xbf16>, vector<256x256xbf16>, vector<16x256xf32> -> vector<16x256xf32>
    %367 = arith.addf %364, %366 : vector<16x256xf32>
    %c0_118 = arith.constant 0 : index
    %c0_119 = arith.constant 0 : index
    %368 = vector.load %arg20[%c0_118, %c0_119] : memref<1x256xf32, #tpu.memory_space<vmem>>, vector<1x256xf32>
    %369 = vector.broadcast %368 : vector<1x256xf32> to vector<16x256xf32>
    %370 = arith.addf %367, %369 : vector<16x256xf32>
    %371 = vector.shape_cast %370 : vector<16x256xf32> to vector<1x16x256xf32>
    %c0_120 = arith.constant 0 : index
    %c0_121 = arith.constant 0 : index
    %c0_122 = arith.constant 0 : index
    %372 = vector.load %arg21[%c0_120, %c0_121, %c0_122] : memref<1x16x256xf32, #tpu.memory_space<vmem>>, vector<1x16x256xf32>
    tpu.vector_store %arg21[%c0_120, %c0_121, %c0_122], %371 {strides = array<i32>} : memref<1x16x256xf32, #tpu.memory_space<vmem>>, vector<1x16x256xf32>,
    return
  }
  func.func @transform_0(%arg0: i32) -> (i32, i32, i32) {
    %c0_i32 = arith.constant 0 : i32
    %c0_i32_0 = arith.constant 0 : i32
    %c0_i32_1 = arith.constant 0 : i32
    return %arg0, %c0_i32, %c0_i32_0 : i32, i32, i32
  }
  func.func @transform_1(%arg0: i32) -> (i32, i32) {
    %c0_i32 = arith.constant 0 : i32
    %c0_i32_0 = arith.constant 0 : i32
    %c0_i32_1 = arith.constant 0 : i32
    return %c0_i32, %c0_i32_0 : i32, i32
  }
  func.func @transform_2(%arg0: i32) -> (i32, i32) {
    %c0_i32 = arith.constant 0 : i32
    %c0_i32_0 = arith.constant 0 : i32
    %c0_i32_1 = arith.constant 0 : i32
    return %c0_i32, %c0_i32_0 : i32, i32
  }
  func.func @transform_3(%arg0: i32) -> (i32, i32) {
    %c0_i32 = arith.constant 0 : i32
    %c0_i32_0 = arith.constant 0 : i32
    %c0_i32_1 = arith.constant 0 : i32
    return %c0_i32, %c0_i32_0 : i32, i32
  }
  func.func @transform_4(%arg0: i32) -> (i32, i32) {
    %c0_i32 = arith.constant 0 : i32
    %c0_i32_0 = arith.constant 0 : i32
    %c0_i32_1 = arith.constant 0 : i32
    return %c0_i32, %c0_i32_0 : i32, i32
  }
  func.func @transform_5(%arg0: i32) -> (i32, i32) {
    %c0_i32 = arith.constant 0 : i32
    %c0_i32_0 = arith.constant 0 : i32
    %c0_i32_1 = arith.constant 0 : i32
    return %c0_i32, %c0_i32_0 : i32, i32
  }
  func.func @transform_6(%arg0: i32) -> (i32, i32) {
    %c0_i32 = arith.constant 0 : i32
    %c0_i32_0 = arith.constant 0 : i32
    %c0_i32_1 = arith.constant 0 : i32
    return %c0_i32, %c0_i32_0 : i32, i32
  }
  func.func @transform_7(%arg0: i32) -> (i32, i32) {
    %c0_i32 = arith.constant 0 : i32
    %c0_i32_0 = arith.constant 0 : i32
    %c0_i32_1 = arith.constant 0 : i32
    return %c0_i32, %c0_i32_0 : i32, i32
  }
  func.func @transform_8(%arg0: i32) -> (i32, i32) {
    %c0_i32 = arith.constant 0 : i32
    %c0_i32_0 = arith.constant 0 : i32
    %c0_i32_1 = arith.constant 0 : i32
    return %c0_i32, %c0_i32_0 : i32, i32
  }
  func.func @transform_9(%arg0: i32) -> (i32, i32) {
    %c0_i32 = arith.constant 0 : i32
    %c0_i32_0 = arith.constant 0 : i32
    %c0_i32_1 = arith.constant 0 : i32
    return %c0_i32, %c0_i32_0 : i32, i32
  }
  func.func @transform_10(%arg0: i32) -> (i32, i32) {
    %c0_i32 = arith.constant 0 : i32
    %c0_i32_0 = arith.constant 0 : i32
    %c0_i32_1 = arith.constant 0 : i32
    return %c0_i32, %c0_i32_0 : i32, i32
  }
  func.func @transform_11(%arg0: i32) -> (i32, i32) {
    %c0_i32 = arith.constant 0 : i32
    %c0_i32_0 = arith.constant 0 : i32
    %c0_i32_1 = arith.constant 0 : i32
    return %c0_i32, %c0_i32_0 : i32, i32
  }
  func.func @transform_12(%arg0: i32) -> (i32, i32) {
    %c0_i32 = arith.constant 0 : i32
    %c0_i32_0 = arith.constant 0 : i32
    %c0_i32_1 = arith.constant 0 : i32
    return %c0_i32, %c0_i32_0 : i32, i32
  }
  func.func @transform_13(%arg0: i32) -> (i32, i32) {
    %c0_i32 = arith.constant 0 : i32
    %c0_i32_0 = arith.constant 0 : i32
    %c0_i32_1 = arith.constant 0 : i32
    return %c0_i32, %c0_i32_0 : i32, i32
  }
  func.func @transform_14(%arg0: i32) -> (i32, i32) {
    %c0_i32 = arith.constant 0 : i32
    %c0_i32_0 = arith.constant 0 : i32
    %c0_i32_1 = arith.constant 0 : i32
    return %c0_i32, %c0_i32_0 : i32, i32
  }
  func.func @transform_15(%arg0: i32) -> (i32, i32) {
    %c0_i32 = arith.constant 0 : i32
    %c0_i32_0 = arith.constant 0 : i32
    %c0_i32_1 = arith.constant 0 : i32
    return %c0_i32, %c0_i32_0 : i32, i32
  }
  func.func @transform_16(%arg0: i32) -> (i32, i32) {
    %c0_i32 = arith.constant 0 : i32
    %c0_i32_0 = arith.constant 0 : i32
    %c0_i32_1 = arith.constant 0 : i32
    return %c0_i32, %c0_i32_0 : i32, i32
  }
  func.func @transform_17(%arg0: i32) -> (i32, i32) {
    %c0_i32 = arith.constant 0 : i32
    %c0_i32_0 = arith.constant 0 : i32
    %c0_i32_1 = arith.constant 0 : i32
    return %c0_i32, %c0_i32_0 : i32, i32
  }
  func.func @transform_18(%arg0: i32) -> (i32, i32) {
    %c0_i32 = arith.constant 0 : i32
    %c0_i32_0 = arith.constant 0 : i32
    %c0_i32_1 = arith.constant 0 : i32
    return %c0_i32, %c0_i32_0 : i32, i32
  }
  func.func @transform_19(%arg0: i32) -> (i32, i32) {
    %c0_i32 = arith.constant 0 : i32
    %c0_i32_0 = arith.constant 0 : i32
    %c0_i32_1 = arith.constant 0 : i32
    return %c0_i32, %c0_i32_0 : i32, i32
  }
  func.func @transform_20(%arg0: i32) -> (i32, i32, i32) {
    %c0_i32 = arith.constant 0 : i32
    %c0_i32_0 = arith.constant 0 : i32
    %c0_i32_1 = arith.constant 0 : i32
    return %arg0, %c0_i32, %c0_i32_0 : i32, i32, i32
  }
}

</mosaic_0001>

<llo_original>
// kernel: tpu_custom_call.1
$region0: #{tpu_custom_call.1}
  #allocation0 [shape = 'u32[]', space=smem, size = 0x4, offset = 0x4, fixed_abs, tag = 'smem constant byte address 0x4 - core index']
  #allocation1 [shape = 'u32[144,128]{1,0:T(1,128)}', space=vmem, size = 0x12000, scoped, tag = 'internal scratch']
  %s0 = inlined_call_operand.vmem [shape: f32[2,16,256], index: 0, kind: input, shape index: {}]
  %s1 = inlined_call_operand.vmem [shape: bf16[256,16], index: 1, kind: input, shape index: {}]
  %s2 = inlined_call_operand.hbm [shape: bf16[16,256], index: 2, kind: input, shape index: {}]
  %s3 = inlined_call_operand.vmem [shape: f32[1,256], index: 3, kind: input, shape index: {}]
  %s4 = inlined_call_operand.hbm [shape: f32[1,256], index: 4, kind: input, shape index: {}]
  %s5 = inlined_call_operand.hbm [shape: f32[4,256], index: 5, kind: input, shape index: {}]
  %s6 = inlined_call_operand.vmem [shape: f32[9,256], index: 6, kind: input, shape index: {}]
  %s7 = inlined_call_operand.vmem [shape: f32[1,256], index: 7, kind: input, shape index: {}]
  %s8 = inlined_call_operand.hbm [shape: bf16[256,256], index: 8, kind: input, shape index: {}]
  %s9 = inlined_call_operand.hbm [shape: bf16[256,256], index: 9, kind: input, shape index: {}]
  %s10 = inlined_call_operand.vmem [shape: f32[1,256], index: 10, kind: input, shape index: {}]
  %s11 = inlined_call_operand.vmem [shape: f32[9,256], index: 11, kind: input, shape index: {}]
  %s12 = inlined_call_operand.vmem [shape: f32[1,256], index: 12, kind: input, shape index: {}]
  %s13 = inlined_call_operand.vmem [shape: f32[1,256], index: 13, kind: input, shape index: {}]
  %s14 = inlined_call_operand.vmem [shape: f32[1,256], index: 14, kind: input, shape index: {}]
  %s15 = inlined_call_operand.vmem [shape: f32[9,256], index: 15, kind: input, shape index: {}]
  %s16 = inlined_call_operand.vmem [shape: f32[1,256], index: 16, kind: input, shape index: {}]
  %s17 = inlined_call_operand.hbm [shape: bf16[256,256], index: 17, kind: input, shape index: {}]
  %s18 = inlined_call_operand.hbm [shape: bf16[256,256], index: 18, kind: input, shape index: {}]
  %s19 = inlined_call_operand.vmem [shape: f32[1,256], index: 19, kind: input, shape index: {}]
  %s20 = inlined_call_operand.hbm [shape: f32[2,16,256], index: 20, kind: output, shape index: {}]
  %s21 = sld [smem:[#allocation0]]
  $region141: #{tpu_custom_call.1} parent=0
    _
  %s23 = ssub.s32 1, %s21
  %s24 = scalar_select 0, %s23, %s21
  $region1: #{tpu_custom_call.1} parent=0
    #allocation2 [shape = 'u8[8192]{0}', space=vmem, size = 0x2000, scoped, tag = 'input window, operand 2, single buffered']
    #allocation3 [shape = 's32[2]{0}', space=sflag, size = 0x8, scoped, tag = 'scoped memory for tpu_custom_call.1']
    #allocation4 [shape = 's32[2]{0}', space=sflag, size = 0x8, scoped, tag = 'scoped memory for tpu_custom_call.1']
    #allocation5 [shape = 'u8[1024]{0}', space=vmem, size = 0x400, scoped, tag = 'input window, operand 4, single buffered']
    #allocation6 [shape = 's32[1]{0}', space=sflag, size = 0x4, scoped, tag = 'scoped memory for tpu_custom_call.1']
    #allocation7 [shape = 'u8[4096]{0}', space=vmem, size = 0x1000, scoped, tag = 'input window, operand 5, single buffered']
    #allocation8 [shape = 'u8[131072]{0}', space=vmem, size = 0x20000, scoped, tag = 'input window, operand 8, single buffered']
    #allocation9 [shape = 's32[1]{0}', space=sflag, size = 0x4, scoped, tag = 'scoped memory for tpu_custom_call.1']
    #allocation10 [shape = 'u8[131072]{0}', space=vmem, size = 0x20000, scoped, tag = 'input window, operand 9, single buffered']
    #allocation11 [shape = 'u8[131072]{0}', space=vmem, size = 0x20000, scoped, tag = 'input window, operand 17, single buffered']
    #allocation12 [shape = 's32[1]{0}', space=sflag, size = 0x4, scoped, tag = 'scoped memory for tpu_custom_call.1']
    #allocation13 [shape = 'u8[131072]{0}', space=vmem, size = 0x20000, scoped, tag = 'input window, operand 18, single buffered']
    #allocation14 [shape = 'u8[32768]{0}', space=vmem, size = 0x8000, scoped, tag = 'output window, operand 0']
    %25 = vsyncpa [#allocation3], 0
    %26 = vsyncpa [#allocation6], 0
    %27 = vsyncpa [#allocation9], 0
    %28 = vsyncpa [#allocation12], 0
    %29 = vsyncpa [#allocation4], 0
    %s30 = scalar_lea.sflag [#allocation4], 1
    %31 = vsyncpa %s30, 0
    loop: start=0, step=1, limit=4
    $region2: #{tpu_custom_call.1} parent=1 // loop_pre_header
      _
    $region3: #{tpu_custom_call.1} parent=1 // loop_header
      %s33 = sphi 0, %s37
      %p34 = scmp.ge.s32.totalorder %s33, 4
      %s43 = sphi 0, %s45
      %s46 = sphi 0, %s43
      %s47 = sphi 0, %s46
      %s63 = sphi 0, %s47
      %s67 = sphi 0, %s67
      %s69 = sphi 0, %s67
      %s70 = sphi 0, %s69
      %s84 = sphi 0, %s70
      %s88 = sphi 0, %s88
      %s90 = sphi 0, %s88
      %s91 = sphi 0, %s90
      %s105 = sphi 0, %s91
      %s109 = sphi 0, %s109
      %s111 = sphi 0, %s109
      %s112 = sphi 0, %s111
      %s126 = sphi 0, %s112
      %s130 = sphi 0, %s130
      %s132 = sphi 0, %s130
      %s133 = sphi 0, %s132
      %s147 = sphi 0, %s133
      %s151 = sphi 0, %s151
      %s153 = sphi 0, %s151
      %s154 = sphi 0, %s153
      %s168 = sphi 0, %s154
      %s172 = sphi 0, %s172
      %s174 = sphi 0, %s172
      %s175 = sphi 0, %s174
      %s189 = sphi 0, %s175
      %s193 = sphi 0, %s193
      %s195 = sphi 0, %s193
      %s196 = sphi 0, %s195
      %s210 = sphi 0, %s196
      %s214 = sphi 0, %s214
      %s216 = sphi 0, %s214
      %s217 = sphi 0, %s216
      %s231 = sphi 0, %s217
      %s235 = sphi 0, %s235
      %s237 = sphi 0, %s235
      %s238 = sphi 0, %s237
      %s252 = sphi 0, %s238
      %s256 = sphi 0, %s256
      %s258 = sphi 0, %s256
      %s259 = sphi 0, %s258
      %s273 = sphi 0, %s259
      %s277 = sphi 0, %s277
      %s279 = sphi 0, %s277
      %s280 = sphi 0, %s279
      %s294 = sphi 0, %s280
      %s298 = sphi 0, %s298
      %s300 = sphi 0, %s298
      %s301 = sphi 0, %s300
      %s315 = sphi 0, %s301
      %s319 = sphi 0, %s319
      %s321 = sphi 0, %s319
      %s322 = sphi 0, %s321
      %s336 = sphi 0, %s322
      %s340 = sphi 0, %s340
      %s342 = sphi 0, %s340
      %s343 = sphi 0, %s342
      %s357 = sphi 0, %s343
      %s361 = sphi 0, %s361
      %s363 = sphi 0, %s361
      %s364 = sphi 0, %s363
      %s378 = sphi 0, %s364
      %s382 = sphi 0, %s382
      %s384 = sphi 0, %s382
      %s385 = sphi 0, %s384
      %s399 = sphi 0, %s385
      %s403 = sphi 0, %s403
      %s405 = sphi 0, %s403
      %s406 = sphi 0, %s405
      %s420 = sphi 0, %s406
      %s424 = sphi 0, %s424
      %s426 = sphi 0, %s424
      %s427 = sphi 0, %s426
      %s441 = sphi 0, %s427
      %s445 = sphi 0, %s445
      %s447 = sphi 0, %s445
      %s448 = sphi 0, %s447
      %s462 = sphi 0, %s448
      %s468 = sphi 0, %s470
      %s471 = sphi 0, %s468
      %s472 = sphi 0, %s471
      %s488 = sphi 0, %s472
    $region4: #{tpu_custom_call.1} parent=1 // loop_header_branch
      %36 = sbr.rel (%p34) target = $region8
    $region5: #{tpu_custom_call.1} parent=1 // loop_body
      %s38 = ssub.s32 %s33, 1
      %s39 = ssub.s32 %s33, 2
      %s40 = sadd.s32 %s33, 1
      %s41 = ssub.s32 %s33, %s40
      %p42 = scmp.eq.s32.totalorder %s41, 0
      %s44 = sadd.s32 %s43, 1
      %s45 = scalar_select %p42, %s43, %s44
      %p48 = pneg %p42
      %p49 = scmp.eq.s32.totalorder %s33, 1
      %p50 = por %p48, %p49
      %p51 = scmp.ne.s32.totalorder %s43, %s46
      %p52 = scmp.eq.s32.totalorder %s33, 0
      %p53 = por %p51, %p52
      %p54 = scmp.ne.s32.totalorder %s43, %s46
      %p55 = scmp.eq.s32.totalorder %s38, 1
      %p56 = por %p54, %p55
      %p57 = scmp.ne.s32.totalorder %s46, %s47
      %p58 = scmp.eq.s32.totalorder %s38, 0
      %p59 = por %p57, %p58
      %p60 = scmp.ne.s32.totalorder %s46, %s47
      %p61 = scmp.eq.s32.totalorder %s39, 1
      %p62 = por %p60, %p61
      %p64 = scmp.ne.s32.totalorder %s47, %s63
      %p65 = scmp.eq.s32.totalorder %s39, 0
      %p66 = por %p64, %p65
      %s68 = sadd.s32 %s67, 1
      %p71 = scmp.eq.s32.totalorder %s33, 1
      %p72 = scmp.ne.s32.totalorder %s67, %s69
      %p73 = scmp.eq.s32.totalorder %s33, 0
      %p74 = por %p72, %p73
      %p75 = scmp.ne.s32.totalorder %s67, %s69
      %p76 = scmp.eq.s32.totalorder %s38, 1
      %p77 = por %p75, %p76
      %p78 = scmp.ne.s32.totalorder %s69, %s70
      %p79 = scmp.eq.s32.totalorder %s38, 0
      %p80 = por %p78, %p79
      %p81 = scmp.ne.s32.totalorder %s69, %s70
      %p82 = scmp.eq.s32.totalorder %s39, 1
      %p83 = por %p81, %p82
      %p85 = scmp.ne.s32.totalorder %s70, %s84
      %p86 = scmp.eq.s32.totalorder %s39, 0
      %p87 = por %p85, %p86
      %s89 = sadd.s32 %s88, 1
      %p92 = scmp.eq.s32.totalorder %s33, 1
      %p93 = scmp.ne.s32.totalorder %s88, %s90
      %p94 = scmp.eq.s32.totalorder %s33, 0
      %p95 = por %p93, %p94
      %p96 = scmp.ne.s32.totalorder %s88, %s90
      %p97 = scmp.eq.s32.totalorder %s38, 1
      %p98 = por %p96, %p97
      %p99 = scmp.ne.s32.totalorder %s90, %s91
      %p100 = scmp.eq.s32.totalorder %s38, 0
      %p101 = por %p99, %p100
      %p102 = scmp.ne.s32.totalorder %s90, %s91
      %p103 = scmp.eq.s32.totalorder %s39, 1
      %p104 = por %p102, %p103
      %p106 = scmp.ne.s32.totalorder %s91, %s105
      %p107 = scmp.eq.s32.totalorder %s39, 0
      %p108 = por %p106, %p107
      %s110 = sadd.s32 %s109, 1
      %p113 = scmp.eq.s32.totalorder %s33, 1
      %p114 = scmp.ne.s32.totalorder %s109, %s111
      %p115 = scmp.eq.s32.totalorder %s33, 0
      %p116 = por %p114, %p115
      %p117 = scmp.ne.s32.totalorder %s109, %s111
      %p118 = scmp.eq.s32.totalorder %s38, 1
      %p119 = por %p117, %p118
      %p120 = scmp.ne.s32.totalorder %s111, %s112
      %p121 = scmp.eq.s32.totalorder %s38, 0
      %p122 = por %p120, %p121
      %p123 = scmp.ne.s32.totalorder %s111, %s112
      %p124 = scmp.eq.s32.totalorder %s39, 1
      %p125 = por %p123, %p124
      %p127 = scmp.ne.s32.totalorder %s112, %s126
      %p128 = scmp.eq.s32.totalorder %s39, 0
      %p129 = por %p127, %p128
      %s131 = sadd.s32 %s130, 1
      %p134 = scmp.eq.s32.totalorder %s33, 1
      %p135 = scmp.ne.s32.totalorder %s130, %s132
      %p136 = scmp.eq.s32.totalorder %s33, 0
      %p137 = por %p135, %p136
      %p138 = scmp.ne.s32.totalorder %s130, %s132
      %p139 = scmp.eq.s32.totalorder %s38, 1
      %p140 = por %p138, %p139
      %p141 = scmp.ne.s32.totalorder %s132, %s133
      %p142 = scmp.eq.s32.totalorder %s38, 0
      %p143 = por %p141, %p142
      %p144 = scmp.ne.s32.totalorder %s132, %s133
      %p145 = scmp.eq.s32.totalorder %s39, 1
      %p146 = por %p144, %p145
      %p148 = scmp.ne.s32.totalorder %s133, %s147
      %p149 = scmp.eq.s32.totalorder %s39, 0
      %p150 = por %p148, %p149
      %s152 = sadd.s32 %s151, 1
      %p155 = scmp.eq.s32.totalorder %s33, 1
      %p156 = scmp.ne.s32.totalorder %s151, %s153
      %p157 = scmp.eq.s32.totalorder %s33, 0
      %p158 = por %p156, %p157
      %p159 = scmp.ne.s32.totalorder %s151, %s153
      %p160 = scmp.eq.s32.totalorder %s38, 1
      %p161 = por %p159, %p160
      %p162 = scmp.ne.s32.totalorder %s153, %s154
      %p163 = scmp.eq.s32.totalorder %s38, 0
      %p164 = por %p162, %p163
      %p165 = scmp.ne.s32.totalorder %s153, %s154
      %p166 = scmp.eq.s32.totalorder %s39, 1
      %p167 = por %p165, %p166
      %p169 = scmp.ne.s32.totalorder %s154, %s168
      %p170 = scmp.eq.s32.totalorder %s39, 0
      %p171 = por %p169, %p170
      %s173 = sadd.s32 %s172, 1
      %p176 = scmp.eq.s32.totalorder %s33, 1
      %p177 = scmp.ne.s32.totalorder %s172, %s174
      %p178 = scmp.eq.s32.totalorder %s33, 0
      %p179 = por %p177, %p178
      %p180 = scmp.ne.s32.totalorder %s172, %s174
      %p181 = scmp.eq.s32.totalorder %s38, 1
      %p182 = por %p180, %p181
      %p183 = scmp.ne.s32.totalorder %s174, %s175
      %p184 = scmp.eq.s32.totalorder %s38, 0
      %p185 = por %p183, %p184
      %p186 = scmp.ne.s32.totalorder %s174, %s175
      %p187 = scmp.eq.s32.totalorder %s39, 1
      %p188 = por %p186, %p187
      %p190 = scmp.ne.s32.totalorder %s175, %s189
      %p191 = scmp.eq.s32.totalorder %s39, 0
      %p192 = por %p190, %p191
      %s194 = sadd.s32 %s193, 1
      %p197 = scmp.eq.s32.totalorder %s33, 1
      %p198 = scmp.ne.s32.totalorder %s193, %s195
      %p199 = scmp.eq.s32.totalorder %s33, 0
      %p200 = por %p198, %p199
      %p201 = scmp.ne.s32.totalorder %s193, %s195
      %p202 = scmp.eq.s32.totalorder %s38, 1
      %p203 = por %p201, %p202
      %p204 = scmp.ne.s32.totalorder %s195, %s196
      %p205 = scmp.eq.s32.totalorder %s38, 0
      %p206 = por %p204, %p205
      %p207 = scmp.ne.s32.totalorder %s195, %s196
      %p208 = scmp.eq.s32.totalorder %s39, 1
      %p209 = por %p207, %p208
      %p211 = scmp.ne.s32.totalorder %s196, %s210
      %p212 = scmp.eq.s32.totalorder %s39, 0
      %p213 = por %p211, %p212
      %s215 = sadd.s32 %s214, 1
      %p218 = scmp.eq.s32.totalorder %s33, 1
      %p219 = scmp.ne.s32.totalorder %s214, %s216
      %p220 = scmp.eq.s32.totalorder %s33, 0
      %p221 = por %p219, %p220
      %p222 = scmp.ne.s32.totalorder %s214, %s216
      %p223 = scmp.eq.s32.totalorder %s38, 1
      %p224 = por %p222, %p223
      %p225 = scmp.ne.s32.totalorder %s216, %s217
      %p226 = scmp.eq.s32.totalorder %s38, 0
      %p227 = por %p225, %p226
      %p228 = scmp.ne.s32.totalorder %s216, %s217
      %p229 = scmp.eq.s32.totalorder %s39, 1
      %p230 = por %p228, %p229
      %p232 = scmp.ne.s32.totalorder %s217, %s231
      %p233 = scmp.eq.s32.totalorder %s39, 0
      %p234 = por %p232, %p233
      %s236 = sadd.s32 %s235, 1
      %p239 = scmp.eq.s32.totalorder %s33, 1
      %p240 = scmp.ne.s32.totalorder %s235, %s237
      %p241 = scmp.eq.s32.totalorder %s33, 0
      %p242 = por %p240, %p241
      %p243 = scmp.ne.s32.totalorder %s235, %s237
      %p244 = scmp.eq.s32.totalorder %s38, 1
      %p245 = por %p243, %p244
      %p246 = scmp.ne.s32.totalorder %s237, %s238
      %p247 = scmp.eq.s32.totalorder %s38, 0
      %p248 = por %p246, %p247
      %p249 = scmp.ne.s32.totalorder %s237, %s238
      %p250 = scmp.eq.s32.totalorder %s39, 1
      %p251 = por %p249, %p250
      %p253 = scmp.ne.s32.totalorder %s238, %s252
      %p254 = scmp.eq.s32.totalorder %s39, 0
      %p255 = por %p253, %p254
      %s257 = sadd.s32 %s256, 1
      %p260 = scmp.eq.s32.totalorder %s33, 1
      %p261 = scmp.ne.s32.totalorder %s256, %s258
      %p262 = scmp.eq.s32.totalorder %s33, 0
      %p263 = por %p261, %p262
      %p264 = scmp.ne.s32.totalorder %s256, %s258
      %p265 = scmp.eq.s32.totalorder %s38, 1
      %p266 = por %p264, %p265
      %p267 = scmp.ne.s32.totalorder %s258, %s259
      %p268 = scmp.eq.s32.totalorder %s38, 0
      %p269 = por %p267, %p268
      %p270 = scmp.ne.s32.totalorder %s258, %s259
      %p271 = scmp.eq.s32.totalorder %s39, 1
      %p272 = por %p270, %p271
      %p274 = scmp.ne.s32.totalorder %s259, %s273
      %p275 = scmp.eq.s32.totalorder %s39, 0
      %p276 = por %p274, %p275
      %s278 = sadd.s32 %s277, 1
      %p281 = scmp.eq.s32.totalorder %s33, 1
      %p282 = scmp.ne.s32.totalorder %s277, %s279
      %p283 = scmp.eq.s32.totalorder %s33, 0
      %p284 = por %p282, %p283
      %p285 = scmp.ne.s32.totalorder %s277, %s279
      %p286 = scmp.eq.s32.totalorder %s38, 1
      %p287 = por %p285, %p286
      %p288 = scmp.ne.s32.totalorder %s279, %s280
      %p289 = scmp.eq.s32.totalorder %s38, 0
      %p290 = por %p288, %p289
      %p291 = scmp.ne.s32.totalorder %s279, %s280
      %p292 = scmp.eq.s32.totalorder %s39, 1
      %p293 = por %p291, %p292
      %p295 = scmp.ne.s32.totalorder %s280, %s294
      %p296 = scmp.eq.s32.totalorder %s39, 0
      %p297 = por %p295, %p296
      %s299 = sadd.s32 %s298, 1
      %p302 = scmp.eq.s32.totalorder %s33, 1
      %p303 = scmp.ne.s32.totalorder %s298, %s300
      %p304 = scmp.eq.s32.totalorder %s33, 0
      %p305 = por %p303, %p304
      %p306 = scmp.ne.s32.totalorder %s298, %s300
      %p307 = scmp.eq.s32.totalorder %s38, 1
      %p308 = por %p306, %p307
      %p309 = scmp.ne.s32.totalorder %s300, %s301
      %p310 = scmp.eq.s32.totalorder %s38, 0
      %p311 = por %p309, %p310
      %p312 = scmp.ne.s32.totalorder %s300, %s301
      %p313 = scmp.eq.s32.totalorder %s39, 1
      %p314 = por %p312, %p313
      %p316 = scmp.ne.s32.totalorder %s301, %s315
      %p317 = scmp.eq.s32.totalorder %s39, 0
      %p318 = por %p316, %p317
      %s320 = sadd.s32 %s319, 1
      %p323 = scmp.eq.s32.totalorder %s33, 1
      %p324 = scmp.ne.s32.totalorder %s319, %s321
      %p325 = scmp.eq.s32.totalorder %s33, 0
      %p326 = por %p324, %p325
      %p327 = scmp.ne.s32.totalorder %s319, %s321
      %p328 = scmp.eq.s32.totalorder %s38, 1
      %p329 = por %p327, %p328
      %p330 = scmp.ne.s32.totalorder %s321, %s322
      %p331 = scmp.eq.s32.totalorder %s38, 0
      %p332 = por %p330, %p331
      %p333 = scmp.ne.s32.totalorder %s321, %s322
      %p334 = scmp.eq.s32.totalorder %s39, 1
      %p335 = por %p333, %p334
      %p337 = scmp.ne.s32.totalorder %s322, %s336
      %p338 = scmp.eq.s32.totalorder %s39, 0
      %p339 = por %p337, %p338
      %s341 = sadd.s32 %s340, 1
      %p344 = scmp.eq.s32.totalorder %s33, 1
      %p345 = scmp.ne.s32.totalorder %s340, %s342
      %p346 = scmp.eq.s32.totalorder %s33, 0
      %p347 = por %p345, %p346
      %p348 = scmp.ne.s32.totalorder %s340, %s342
      %p349 = scmp.eq.s32.totalorder %s38, 1
      %p350 = por %p348, %p349
      %p351 = scmp.ne.s32.totalorder %s342, %s343
      %p352 = scmp.eq.s32.totalorder %s38, 0
      %p353 = por %p351, %p352
      %p354 = scmp.ne.s32.totalorder %s342, %s343
      %p355 = scmp.eq.s32.totalorder %s39, 1
      %p356 = por %p354, %p355
      %p358 = scmp.ne.s32.totalorder %s343, %s357
      %p359 = scmp.eq.s32.totalorder %s39, 0
      %p360 = por %p358, %p359
      %s362 = sadd.s32 %s361, 1
      %p365 = scmp.eq.s32.totalorder %s33, 1
      %p366 = scmp.ne.s32.totalorder %s361, %s363
      %p367 = scmp.eq.s32.totalorder %s33, 0
      %p368 = por %p366, %p367
      %p369 = scmp.ne.s32.totalorder %s361, %s363
      %p370 = scmp.eq.s32.totalorder %s38, 1
      %p371 = por %p369, %p370
      %p372 = scmp.ne.s32.totalorder %s363, %s364
      %p373 = scmp.eq.s32.totalorder %s38, 0
      %p374 = por %p372, %p373
      %p375 = scmp.ne.s32.totalorder %s363, %s364
      %p376 = scmp.eq.s32.totalorder %s39, 1
      %p377 = por %p375, %p376
      %p379 = scmp.ne.s32.totalorder %s364, %s378
      %p380 = scmp.eq.s32.totalorder %s39, 0
      %p381 = por %p379, %p380
      %s383 = sadd.s32 %s382, 1
      %p386 = scmp.eq.s32.totalorder %s33, 1
      %p387 = scmp.ne.s32.totalorder %s382, %s384
      %p388 = scmp.eq.s32.totalorder %s33, 0
      %p389 = por %p387, %p388
      %p390 = scmp.ne.s32.totalorder %s382, %s384
      %p391 = scmp.eq.s32.totalorder %s38, 1
      %p392 = por %p390, %p391
      %p393 = scmp.ne.s32.totalorder %s384, %s385
      %p394 = scmp.eq.s32.totalorder %s38, 0
      %p395 = por %p393, %p394
      %p396 = scmp.ne.s32.totalorder %s384, %s385
      %p397 = scmp.eq.s32.totalorder %s39, 1
      %p398 = por %p396, %p397
      %p400 = scmp.ne.s32.totalorder %s385, %s399
      %p401 = scmp.eq.s32.totalorder %s39, 0
      %p402 = por %p400, %p401
      %s404 = sadd.s32 %s403, 1
      %p407 = scmp.eq.s32.totalorder %s33, 1
      %p408 = scmp.ne.s32.totalorder %s403, %s405
      %p409 = scmp.eq.s32.totalorder %s33, 0
      %p410 = por %p408, %p409
      %p411 = scmp.ne.s32.totalorder %s403, %s405
      %p412 = scmp.eq.s32.totalorder %s38, 1
      %p413 = por %p411, %p412
      %p414 = scmp.ne.s32.totalorder %s405, %s406
      %p415 = scmp.eq.s32.totalorder %s38, 0
      %p416 = por %p414, %p415
      %p417 = scmp.ne.s32.totalorder %s405, %s406
      %p418 = scmp.eq.s32.totalorder %s39, 1
      %p419 = por %p417, %p418
      %p421 = scmp.ne.s32.totalorder %s406, %s420
      %p422 = scmp.eq.s32.totalorder %s39, 0
      %p423 = por %p421, %p422
      %s425 = sadd.s32 %s424, 1
      %p428 = scmp.eq.s32.totalorder %s33, 1
      %p429 = scmp.ne.s32.totalorder %s424, %s426
      %p430 = scmp.eq.s32.totalorder %s33, 0
      %p431 = por %p429, %p430
      %p432 = scmp.ne.s32.totalorder %s424, %s426
      %p433 = scmp.eq.s32.totalorder %s38, 1
      %p434 = por %p432, %p433
      %p435 = scmp.ne.s32.totalorder %s426, %s427
      %p436 = scmp.eq.s32.totalorder %s38, 0
      %p437 = por %p435, %p436
      %p438 = scmp.ne.s32.totalorder %s426, %s427
      %p439 = scmp.eq.s32.totalorder %s39, 1
      %p440 = por %p438, %p439
      %p442 = scmp.ne.s32.totalorder %s427, %s441
      %p443 = scmp.eq.s32.totalorder %s39, 0
      %p444 = por %p442, %p443
      %s446 = sadd.s32 %s445, 1
      %p449 = scmp.eq.s32.totalorder %s33, 1
      %p450 = scmp.ne.s32.totalorder %s445, %s447
      %p451 = scmp.eq.s32.totalorder %s33, 0
      %p452 = por %p450, %p451
      %p453 = scmp.ne.s32.totalorder %s445, %s447
      %p454 = scmp.eq.s32.totalorder %s38, 1
      %p455 = por %p453, %p454
      %p456 = scmp.ne.s32.totalorder %s447, %s448
      %p457 = scmp.eq.s32.totalorder %s38, 0
      %p458 = por %p456, %p457
      %p459 = scmp.ne.s32.totalorder %s447, %s448
      %p460 = scmp.eq.s32.totalorder %s39, 1
      %p461 = por %p459, %p460
      %p463 = scmp.ne.s32.totalorder %s448, %s462
      %p464 = scmp.eq.s32.totalorder %s39, 0
      %p465 = por %p463, %p464
      %s466 = ssub.s32 %s33, %s40
      %p467 = scmp.eq.s32.totalorder %s466, 0
      %s469 = sadd.s32 %s468, 1
      %s470 = scalar_select %p467, %s468, %s469
      %p473 = pneg %p467
      %p474 = scmp.eq.s32.totalorder %s33, 1
      %p475 = por %p473, %p474
      %p476 = scmp.ne.s32.totalorder %s468, %s471
      %p477 = scmp.eq.s32.totalorder %s33, 0
      %p478 = por %p476, %p477
      %p479 = scmp.ne.s32.totalorder %s468, %s471
      %p480 = scmp.eq.s32.totalorder %s38, 1
      %p481 = por %p479, %p480
      %p482 = scmp.ne.s32.totalorder %s471, %s472
      %p483 = scmp.eq.s32.totalorder %s38, 0
      %p484 = por %p482, %p483
      %p485 = scmp.ne.s32.totalorder %s471, %s472
      %p486 = scmp.eq.s32.totalorder %s39, 1
      %p487 = por %p485, %p486
      %p489 = scmp.ne.s32.totalorder %s472, %s488
      %p490 = scmp.eq.s32.totalorder %s39, 0
      %p491 = por %p489, %p490
      %p492 = scmp.le.s32.totalorder 1, %s33
      %p493 = scmp.lt.s32.totalorder %s33, 3
      %p494 = pnand %p492, %p493
      %p495 = pneg %p494
      // Predicated region
      $region9: #{tpu_custom_call.1} parent=5 // pred_check
        _
      $region10: #{tpu_custom_call.1} parent=5 // pred_check_branch
        %497 = sbr.rel (%p494) target = $region12
      $region11: #{tpu_custom_call.1} parent=5 // pred_region
        %s498 = ssub.s32 %s33, 1
        // Predicated region
        $region13: #{tpu_custom_call.1} parent=11 // pred_check
          %p499 = pneg %p80
        $region14: #{tpu_custom_call.1} parent=11 // pred_check_branch
          %501 = sbr.rel (%p499) target = $region16
        $region15: #{tpu_custom_call.1} parent=11 // pred_region
          _
        $region16: #{tpu_custom_call.1} parent=11 // pred_fallthru
          _
        // Predicated region
        $region17: #{tpu_custom_call.1} parent=11 // pred_check
          %p502 = pneg %p101
        $region18: #{tpu_custom_call.1} parent=11 // pred_check_branch
          %504 = sbr.rel (%p502) target = $region20
        $region19: #{tpu_custom_call.1} parent=11 // pred_region
          %s506 = ssub.s32 256, 256
          %507 = vsyncadd [#allocation3], %s506
          %s508 = sshll.u32 [#allocation2], 4
          %s509 = int_to_ptr.vmem [resolvable:$true] %s508
          %514 = dma.hbm_to_vmem [thread:$0]  %s2, 256, %s509, [#allocation3], 128, 128, 8
        $region20: #{tpu_custom_call.1} parent=11 // pred_fallthru
          _
        // Predicated region
        $region21: #{tpu_custom_call.1} parent=11 // pred_check
          %p515 = pneg %p122
        $region22: #{tpu_custom_call.1} parent=11 // pred_check_branch
          %517 = sbr.rel (%p515) target = $region24
        $region23: #{tpu_custom_call.1} parent=11 // pred_region
          _
        $region24: #{tpu_custom_call.1} parent=11 // pred_fallthru
          _
        // Predicated region
        $region25: #{tpu_custom_call.1} parent=11 // pred_check
          %p518 = pneg %p143
        $region26: #{tpu_custom_call.1} parent=11 // pred_check_branch
          %520 = sbr.rel (%p518) target = $region28
        $region27: #{tpu_custom_call.1} parent=11 // pred_region
          %s522 = ssub.s32 32, 32
          %523 = vsyncadd [#allocation6], %s522
          %s525 = sshll.u32 [#allocation5], 4
          %s526 = int_to_ptr.vmem [resolvable:$true] %s525
          %528 = dma.hbm_to_vmem [thread:$0]  %s4, 32, %s526, [#allocation6]
        $region28: #{tpu_custom_call.1} parent=11 // pred_fallthru
          _
        // Predicated region
        $region29: #{tpu_custom_call.1} parent=11 // pred_check
          %p529 = pneg %p164
        $region30: #{tpu_custom_call.1} parent=11 // pred_check_branch
          %531 = sbr.rel (%p529) target = $region32
        $region31: #{tpu_custom_call.1} parent=11 // pred_region
          %s533 = ssub.s32 128, 128
          %534 = vsyncadd [#allocation6], %s533
          %s536 = sshll.u32 [#allocation7], 4
          %s537 = int_to_ptr.vmem [resolvable:$true] %s536
          %539 = dma.hbm_to_vmem [thread:$0]  %s5, 128, %s537, [#allocation6]
        $region32: #{tpu_custom_call.1} parent=11 // pred_fallthru
          _
        // Predicated region
        $region33: #{tpu_custom_call.1} parent=11 // pred_check
          %p540 = pneg %p185
        $region34: #{tpu_custom_call.1} parent=11 // pred_check_branch
          %542 = sbr.rel (%p540) target = $region36
        $region35: #{tpu_custom_call.1} parent=11 // pred_region
          _
        $region36: #{tpu_custom_call.1} parent=11 // pred_fallthru
          _
        // Predicated region
        $region37: #{tpu_custom_call.1} parent=11 // pred_check
          %p543 = pneg %p206
        $region38: #{tpu_custom_call.1} parent=11 // pred_check_branch
          %545 = sbr.rel (%p543) target = $region40
        $region39: #{tpu_custom_call.1} parent=11 // pred_region
          _
        $region40: #{tpu_custom_call.1} parent=11 // pred_fallthru
          _
        // Predicated region
        $region41: #{tpu_custom_call.1} parent=11 // pred_check
          %p546 = pneg %p227
        $region42: #{tpu_custom_call.1} parent=11 // pred_check_branch
          %548 = sbr.rel (%p546) target = $region44
        $region43: #{tpu_custom_call.1} parent=11 // pred_region
          %s550 = ssub.s32 4096, 4096
          %551 = vsyncadd [#allocation9], %s550
          %s552 = sshll.u32 [#allocation8], 4
          %s553 = int_to_ptr.vmem [resolvable:$true] %s552
          %558 = dma.hbm_to_vmem [thread:$0]  %s8, 4096, %s553, [#allocation9], 128, 128, 8
        $region44: #{tpu_custom_call.1} parent=11 // pred_fallthru
          _
        // Predicated region
        $region45: #{tpu_custom_call.1} parent=11 // pred_check
          %p559 = pneg %p248
        $region46: #{tpu_custom_call.1} parent=11 // pred_check_branch
          %561 = sbr.rel (%p559) target = $region48
        $region47: #{tpu_custom_call.1} parent=11 // pred_region
          %s563 = ssub.s32 4096, 4096
          %564 = vsyncadd [#allocation9], %s563
          %s565 = sshll.u32 [#allocation10], 4
          %s566 = int_to_ptr.vmem [resolvable:$true] %s565
          %571 = dma.hbm_to_vmem [thread:$0]  %s9, 4096, %s566, [#allocation9], 128, 128, 8
        $region48: #{tpu_custom_call.1} parent=11 // pred_fallthru
          _
        // Predicated region
        $region49: #{tpu_custom_call.1} parent=11 // pred_check
          %p572 = pneg %p269
        $region50: #{tpu_custom_call.1} parent=11 // pred_check_branch
          %574 = sbr.rel (%p572) target = $region52
        $region51: #{tpu_custom_call.1} parent=11 // pred_region
          _
        $region52: #{tpu_custom_call.1} parent=11 // pred_fallthru
          _
        // Predicated region
        $region53: #{tpu_custom_call.1} parent=11 // pred_check
          %p575 = pneg %p290
        $region54: #{tpu_custom_call.1} parent=11 // pred_check_branch
          %577 = sbr.rel (%p575) target = $region56
        $region55: #{tpu_custom_call.1} parent=11 // pred_region
          _
        $region56: #{tpu_custom_call.1} parent=11 // pred_fallthru
          _
        // Predicated region
        $region57: #{tpu_custom_call.1} parent=11 // pred_check
          %p578 = pneg %p311
        $region58: #{tpu_custom_call.1} parent=11 // pred_check_branch
          %580 = sbr.rel (%p578) target = $region60
        $region59: #{tpu_custom_call.1} parent=11 // pred_region
          _
        $region60: #{tpu_custom_call.1} parent=11 // pred_fallthru
          _
        // Predicated region
        $region61: #{tpu_custom_call.1} parent=11 // pred_check
          %p581 = pneg %p332
        $region62: #{tpu_custom_call.1} parent=11 // pred_check_branch
          %583 = sbr.rel (%p581) target = $region64
        $region63: #{tpu_custom_call.1} parent=11 // pred_region
          _
        $region64: #{tpu_custom_call.1} parent=11 // pred_fallthru
          _
        // Predicated region
        $region65: #{tpu_custom_call.1} parent=11 // pred_check
          %p584 = pneg %p353
        $region66: #{tpu_custom_call.1} parent=11 // pred_check_branch
          %586 = sbr.rel (%p584) target = $region68
        $region67: #{tpu_custom_call.1} parent=11 // pred_region
          _
        $region68: #{tpu_custom_call.1} parent=11 // pred_fallthru
          _
        // Predicated region
        $region69: #{tpu_custom_call.1} parent=11 // pred_check
          %p587 = pneg %p374
        $region70: #{tpu_custom_call.1} parent=11 // pred_check_branch
          %589 = sbr.rel (%p587) target = $region72
        $region71: #{tpu_custom_call.1} parent=11 // pred_region
          _
        $region72: #{tpu_custom_call.1} parent=11 // pred_fallthru
          _
        // Predicated region
        $region73: #{tpu_custom_call.1} parent=11 // pred_check
          %p590 = pneg %p395
        $region74: #{tpu_custom_call.1} parent=11 // pred_check_branch
          %592 = sbr.rel (%p590) target = $region76
        $region75: #{tpu_custom_call.1} parent=11 // pred_region
          _
        $region76: #{tpu_custom_call.1} parent=11 // pred_fallthru
          _
        // Predicated region
        $region77: #{tpu_custom_call.1} parent=11 // pred_check
          %p593 = pneg %p416
        $region78: #{tpu_custom_call.1} parent=11 // pred_check_branch
          %595 = sbr.rel (%p593) target = $region80
        $region79: #{tpu_custom_call.1} parent=11 // pred_region
          %s597 = ssub.s32 4096, 4096
          %598 = vsyncadd [#allocation12], %s597
          %s599 = sshll.u32 [#allocation11], 4
          %s600 = int_to_ptr.vmem [resolvable:$true] %s599
          %605 = dma.hbm_to_vmem [thread:$0]  %s17, 4096, %s600, [#allocation12], 128, 128, 8
        $region80: #{tpu_custom_call.1} parent=11 // pred_fallthru
          _
        // Predicated region
        $region81: #{tpu_custom_call.1} parent=11 // pred_check
          %p606 = pneg %p437
        $region82: #{tpu_custom_call.1} parent=11 // pred_check_branch
          %608 = sbr.rel (%p606) target = $region84
        $region83: #{tpu_custom_call.1} parent=11 // pred_region
          %s610 = ssub.s32 4096, 4096
          %611 = vsyncadd [#allocation12], %s610
          %s612 = sshll.u32 [#allocation13], 4
          %s613 = int_to_ptr.vmem [resolvable:$true] %s612
          %618 = dma.hbm_to_vmem [thread:$0]  %s18, 4096, %s613, [#allocation12], 128, 128, 8
        $region84: #{tpu_custom_call.1} parent=11 // pred_fallthru
          _
        // Predicated region
        $region85: #{tpu_custom_call.1} parent=11 // pred_check
          %p619 = pneg %p458
        $region86: #{tpu_custom_call.1} parent=11 // pred_check_branch
          %621 = sbr.rel (%p619) target = $region88
        $region87: #{tpu_custom_call.1} parent=11 // pred_region
          _
        $region88: #{tpu_custom_call.1} parent=11 // pred_fallthru
          _
      $region12: #{tpu_custom_call.1} parent=5 // pred_fallthru
        _
      %p622 = scmp.lt.s32.totalorder %s33, 2
      // Predicated region
      $region89: #{tpu_custom_call.1} parent=5 // pred_check
        %p623 = pneg %p622
      $region90: #{tpu_custom_call.1} parent=5 // pred_check_branch
        %625 = sbr.rel (%p623) target = $region92
      $region91: #{tpu_custom_call.1} parent=5 // pred_region
        // Predicated region
        $region93: #{tpu_custom_call.1} parent=91 // pred_check
          %p626 = pneg %p53
        $region94: #{tpu_custom_call.1} parent=91 // pred_check_branch
          %628 = sbr.rel (%p626) target = $region96
        $region95: #{tpu_custom_call.1} parent=91 // pred_region
          %p629 = scmp.lt.s32.totalorder %s33, 1
          %s630 = scalar_select %p629, %s33, 1
          %s631 = smul.addr %s630, 4
          %s632 = smul.addr %s631, 8
          %s633 = scalar_lea.vmem %s0, %s632
        $region96: #{tpu_custom_call.1} parent=91 // pred_fallthru
          _
      $region92: #{tpu_custom_call.1} parent=5 // pred_fallthru
        _
      %p634 = scmp.le.s32.totalorder 1, %s33
      %p635 = scmp.lt.s32.totalorder %s33, 3
      %p636 = pnand %p634, %p635
      %p637 = pneg %p636
      // Predicated region
      $region97: #{tpu_custom_call.1} parent=5 // pred_check
        _
      $region98: #{tpu_custom_call.1} parent=5 // pred_check_branch
        %639 = sbr.rel (%p636) target = $region100
      $region99: #{tpu_custom_call.1} parent=5 // pred_region
        %s640 = ssub.s32 %s33, 1
        // Predicated region
        $region101: #{tpu_custom_call.1} parent=99 // pred_check
          %p641 = pneg %p101
        $region102: #{tpu_custom_call.1} parent=99 // pred_check_branch
          %643 = sbr.rel (%p641) target = $region104
        $region103: #{tpu_custom_call.1} parent=99 // pred_region
          %644 = dma.done [#allocation3], 256
        $region104: #{tpu_custom_call.1} parent=99 // pred_fallthru
          _
        // Predicated region
        $region105: #{tpu_custom_call.1} parent=99 // pred_check
          %p645 = pneg %p143
        $region106: #{tpu_custom_call.1} parent=99 // pred_check_branch
          %647 = sbr.rel (%p645) target = $region108
        $region107: #{tpu_custom_call.1} parent=99 // pred_region
          %648 = dma.done [#allocation6], 32
        $region108: #{tpu_custom_call.1} parent=99 // pred_fallthru
          _
        // Predicated region
        $region109: #{tpu_custom_call.1} parent=99 // pred_check
          %p649 = pneg %p164
        $region110: #{tpu_custom_call.1} parent=99 // pred_check_branch
          %651 = sbr.rel (%p649) target = $region112
        $region111: #{tpu_custom_call.1} parent=99 // pred_region
          %652 = dma.done [#allocation6], 128
        $region112: #{tpu_custom_call.1} parent=99 // pred_fallthru
          _
        // Predicated region
        $region113: #{tpu_custom_call.1} parent=99 // pred_check
          %p653 = pneg %p227
        $region114: #{tpu_custom_call.1} parent=99 // pred_check_branch
          %655 = sbr.rel (%p653) target = $region116
        $region115: #{tpu_custom_call.1} parent=99 // pred_region
          %656 = dma.done [#allocation9], 4096
        $region116: #{tpu_custom_call.1} parent=99 // pred_fallthru
          _
        // Predicated region
        $region117: #{tpu_custom_call.1} parent=99 // pred_check
          %p657 = pneg %p248
        $region118: #{tpu_custom_call.1} parent=99 // pred_check_branch
          %659 = sbr.rel (%p657) target = $region120
        $region119: #{tpu_custom_call.1} parent=99 // pred_region
          %660 = dma.done [#allocation9], 4096
        $region120: #{tpu_custom_call.1} parent=99 // pred_fallthru
          _
        // Predicated region
        $region121: #{tpu_custom_call.1} parent=99 // pred_check
          %p661 = pneg %p416
        $region122: #{tpu_custom_call.1} parent=99 // pred_check_branch
          %663 = sbr.rel (%p661) target = $region124
        $region123: #{tpu_custom_call.1} parent=99 // pred_region
          %664 = dma.done [#allocation12], 4096
        $region124: #{tpu_custom_call.1} parent=99 // pred_fallthru
          _
        // Predicated region
        $region125: #{tpu_custom_call.1} parent=99 // pred_check
          %p665 = pneg %p437
        $region126: #{tpu_custom_call.1} parent=99 // pred_check_branch
          %667 = sbr.rel (%p665) target = $region128
        $region127: #{tpu_custom_call.1} parent=99 // pred_region
          %668 = dma.done [#allocation12], 4096
        $region128: #{tpu_custom_call.1} parent=99 // pred_fallthru
          _
        %p669 = scmp.lt.s32.totalorder %s38, 1
        %s670 = scalar_select %p669, %s38, 1
        %s671 = smul.addr %s670, 4
        %s672 = smul.addr %s671, 8
        %s673 = scalar_lea.vmem %s0, %s672
        %p674 = pneg %p59
        %p675 = pneg %p56
        %p676 = pneg %p80
        %p677 = pneg %p77
        %p678 = pneg %p101
        %p679 = pneg %p98
        %p680 = pneg %p122
        %p681 = pneg %p119
        %p682 = pneg %p143
        %p683 = pneg %p140
        %p684 = pneg %p164
        %p685 = pneg %p161
        %p686 = pneg %p185
        %p687 = pneg %p182
        %p688 = pneg %p206
        %p689 = pneg %p203
        %p690 = pneg %p227
        %p691 = pneg %p224
        %p692 = pneg %p248
        %p693 = pneg %p245
        %p694 = pneg %p269
        %p695 = pneg %p266
        %p696 = pneg %p290
        %p697 = pneg %p287
        %p698 = pneg %p311
        %p699 = pneg %p308
        %p700 = pneg %p332
        %p701 = pneg %p329
        %p702 = pneg %p353
        %p703 = pneg %p350
        %p704 = pneg %p374
        %p705 = pneg %p371
        %p706 = pneg %p395
        %p707 = pneg %p392
        %p708 = pneg %p416
        %p709 = pneg %p413
        %p710 = pneg %p437
        %p711 = pneg %p434
        %p712 = pneg %p458
        %p713 = pneg %p455
        %p714 = pneg %p484
        %p715 = pneg %p481
        %s716 = sand.u32 %s471, 1
        %s717 = scalar_lea.sflag [#allocation4], %s716
        %s718 = sand.u32 %s471, 1
        %s719 = smul.addr %s718, 32
        %s720 = scalar_lea.vmem [#allocation14], %s719
        %p721 = scmp.lt.s32.totalorder %s38, 1
        %s722 = scalar_select %p721, %s38, 1
        %s723 = smul.addr %s722, 4
        %s724 = smul.addr %s723, 8
        %s725 = scalar_lea.vmem %s0, %s724
        %v727 = vld [vmem:[%s725] sm:$0xff]
        %v728 = vld [vmem:[%s725 + $0x8] sm:$0xff]
        %v729 = vld [vmem:[%s725 + $0x10] sm:$0xff]
        %v730 = vld [vmem:[%s725 + $0x18] sm:$0xff]
        %v731 = vlaneseq
        %v732 = vshrl.u32 %v731, 7
        %v733 = vadd.s32 %v732, 8
        %vm734 = vcmp.ge.s32.totalorder %v732, 1
        %vm735 = vcmp.ge.s32.totalorder %v733, 1
        %v736 = vsel %vm734, 1, 0
        %v737 = vsel %vm735, 1, 0
        %v738 = vcvt.s32.f32 %v736
        %v739 = vcvt.s32.f32 %v737
        %vm740 = vcmp.le.s32.totalorder %v732, 14
        %vm741 = vcmp.le.s32.totalorder %v733, 14
        %v742 = vsel %vm740, 1, 0
        %v743 = vsel %vm741, 1, 0
        %v744 = vcvt.s32.f32 %v742
        %v745 = vcvt.s32.f32 %v743
        %v746 = vld [vmem:[%s3] sm:$0x3]
        %v747 = vld [vmem:[#allocation5] sm:$0x3]
        %v748 = vmul.f32 %v727, %v727
        %v749 = vmul.f32 %v728, %v728
        %v750 = vmul.f32 %v729, %v729
        %v751 = vmul.f32 %v730, %v730
        %v752 = vpack.c.bf16 %v729, %v727
        %v753 = vpack.c.bf16 %v730, %v728
        %v754 = vpack.c.bf16 %v750, %v748
        %v755 = vpack.c.bf16 %v751, %v749
        %v756 = vunpack.c.l.bf16 %v752
        %v757 = vunpack.c.l.bf16 %v753
        %v758 = vunpack.c.h.bf16 %v752
        %v759 = vunpack.c.h.bf16 %v753
        %v760 = vunpack.c.l.bf16 %v754
        %v761 = vunpack.c.l.bf16 %v755
        %v762 = vunpack.c.h.bf16 %v754
        %v763 = vunpack.c.h.bf16 %v755
        %v764 = vsub.f32 %v727, %v756
        %v765 = vsub.f32 %v728, %v757
        %v766 = vsub.f32 %v729, %v758
        %v767 = vsub.f32 %v730, %v759
        %v768 = vsub.f32 %v748, %v760
        %v769 = vsub.f32 %v749, %v761
        %v770 = vsub.f32 %v750, %v762
        %v771 = vsub.f32 %v751, %v763
        %v772 = vpack.c.bf16 %v766, %v764
        %v773 = vpack.c.bf16 %v767, %v765
        %v774 = vpack.c.bf16 %v770, %v768
        %v775 = vpack.c.bf16 %v771, %v769
        %v776 = vld [vmem:[%s1] sm:$0xf]
        %v777 = vld [vmem:[%s1 + $0x4] sm:$0xf]
        %v778 = vld [vmem:[%s1 + $0x8] sm:$0xf]
        %v779 = vld [vmem:[%s1 + $0xc] sm:$0xf]
        %v780 = vld [vmem:[%s1 + $0x10] sm:$0xf]
        %v781 = vld [vmem:[%s1 + $0x14] sm:$0xf]
        %v782 = vld [vmem:[%s1 + $0x18] sm:$0xf]
        %v783 = vld [vmem:[%s1 + $0x1c] sm:$0xf]
        %v784 = vld [vmem:[%s1 + $0x20] sm:$0xf]
        %v785 = vld [vmem:[%s1 + $0x24] sm:$0xf]
        %v786 = vld [vmem:[%s1 + $0x28] sm:$0xf]
        %v787 = vld [vmem:[%s1 + $0x2c] sm:$0xf]
        %v788 = vld [vmem:[%s1 + $0x30] sm:$0xf]
        %v789 = vld [vmem:[%s1 + $0x34] sm:$0xf]
        %v790 = vld [vmem:[%s1 + $0x38] sm:$0xf]
        %v791 = vld [vmem:[%s1 + $0x3c] sm:$0xf]
        %v792 = vld [vmem:[%s1 + $0x40] sm:$0xf]
        %v793 = vld [vmem:[%s1 + $0x44] sm:$0xf]
        %v794 = vld [vmem:[%s1 + $0x48] sm:$0xf]
        %v795 = vld [vmem:[%s1 + $0x4c] sm:$0xf]
        %v796 = vld [vmem:[%s1 + $0x50] sm:$0xf]
        %v797 = vld [vmem:[%s1 + $0x54] sm:$0xf]
        %v798 = vld [vmem:[%s1 + $0x58] sm:$0xf]
        %v799 = vld [vmem:[%s1 + $0x5c] sm:$0xf]
        %v800 = vld [vmem:[%s1 + $0x60] sm:$0xf]
        %v801 = vld [vmem:[%s1 + $0x64] sm:$0xf]
        %v802 = vld [vmem:[%s1 + $0x68] sm:$0xf]
        %v803 = vld [vmem:[%s1 + $0x6c] sm:$0xf]
        %v804 = vld [vmem:[%s1 + $0x70] sm:$0xf]
        %v805 = vld [vmem:[%s1 + $0x74] sm:$0xf]
        %v806 = vld [vmem:[%s1 + $0x78] sm:$0xf]
        %v807 = vld [vmem:[%s1 + $0x7c] sm:$0xf]
        %v840 = vunpack.c.l.b16 %v776
        %v841 = vunpack.c.l.b16 %v777
        %v842 = vunpack.c.l.b16 %v778
        %v843 = vunpack.c.l.b16 %v779
        %v844 = vunpack.c.l.b16 %v780
        %v845 = vunpack.c.l.b16 %v781
        %v846 = vunpack.c.l.b16 %v782
        %v847 = vunpack.c.l.b16 %v783
        %v848 = vunpack.c.l.b16 %v784
        %v849 = vunpack.c.l.b16 %v785
        %v850 = vunpack.c.l.b16 %v786
        %v851 = vunpack.c.l.b16 %v787
        %v852 = vunpack.c.l.b16 %v788
        %v853 = vunpack.c.l.b16 %v789
        %v854 = vunpack.c.l.b16 %v790
        %v855 = vunpack.c.l.b16 %v791
        %v856 = vunpack.c.l.b16 %v792
        %v857 = vunpack.c.l.b16 %v793
        %v858 = vunpack.c.l.b16 %v794
        %v859 = vunpack.c.l.b16 %v795
        %v860 = vunpack.c.l.b16 %v796
        %v861 = vunpack.c.l.b16 %v797
        %v862 = vunpack.c.l.b16 %v798
        %v863 = vunpack.c.l.b16 %v799
        %v864 = vunpack.c.l.b16 %v800
        %v865 = vunpack.c.l.b16 %v801
        %v866 = vunpack.c.l.b16 %v802
        %v867 = vunpack.c.l.b16 %v803
        %v868 = vunpack.c.l.b16 %v804
        %v869 = vunpack.c.l.b16 %v805
        %v870 = vunpack.c.l.b16 %v806
        %v871 = vunpack.c.l.b16 %v807
        %v872 = vpack.c.b16 %v841, %v840
        %v873 = vpack.c.b16 %v843, %v842
        %v874 = vpack.c.b16 %v845, %v844
        %v875 = vpack.c.b16 %v847, %v846
        %v876 = vpack.c.b16 %v849, %v848
        %v877 = vpack.c.b16 %v851, %v850
        %v878 = vpack.c.b16 %v853, %v852
        %v879 = vpack.c.b16 %v855, %v854
        %v880 = vpack.c.b16 %v857, %v856
        %v881 = vpack.c.b16 %v859, %v858
        %v882 = vpack.c.b16 %v861, %v860
        %v883 = vpack.c.b16 %v863, %v862
        %v884 = vpack.c.b16 %v865, %v864
        %v885 = vpack.c.b16 %v867, %v866
        %v886 = vpack.c.b16 %v869, %v868
        %v887 = vpack.c.b16 %v871, %v870
        %904 = vmatprep.subr.bf16.mxu0 0
        %905 = vmatpush1.bf16.msra.mxu0 %v872
        %906 = vmatprep.subr.bf16.mxu0 0
        %907 = vmatpush1.bf16.msra.mxu0 %v873
        %908 = vmatprep.subr.bf16.mxu0 0
        %909 = vmatpush1.bf16.msra.mxu0 %v874
        %910 = vmatprep.subr.bf16.mxu0 0
        %911 = vmatpush1.bf16.msra.mxu0 %v875
        %912 = vmatprep.subr.bf16.mxu0 0
        %913 = vmatpush1.bf16.msra.mxu0 %v876
        %914 = vmatprep.subr.bf16.mxu0 0
        %915 = vmatpush1.bf16.msra.mxu0 %v877
        %916 = vmatprep.subr.bf16.mxu0 0
        %917 = vmatpush1.bf16.msra.mxu0 %v878
        %918 = vmatprep.subr.bf16.mxu0 0
        %919 = vmatpush1.bf16.msra.mxu0 %v879
        %920 = vmatprep.subr.bf16.mxu0 0
        %921 = vmatpush1.bf16.msra.mxu0 %v880
        %922 = vmatprep.subr.bf16.mxu0 0
        %923 = vmatpush1.bf16.msra.mxu0 %v881
        %924 = vmatprep.subr.bf16.mxu0 0
        %925 = vmatpush1.bf16.msra.mxu0 %v882
        %926 = vmatprep.subr.bf16.mxu0 0
        %927 = vmatpush1.bf16.msra.mxu0 %v883
        %928 = vmatprep.subr.bf16.mxu0 0
        %929 = vmatpush1.bf16.msra.mxu0 %v884
        %930 = vmatprep.subr.bf16.mxu0 0
        %931 = vmatpush1.bf16.msra.mxu0 %v885
        %932 = vmatprep.subr.bf16.mxu0 0
        %933 = vmatpush1.bf16.msra.mxu0 %v886
        %934 = vmatprep.subr.bf16.mxu0 0
        %935 = vmatpush1.bf16.msra.mxu0 %v887
        %936 = vmatprep.mubr.bf16.mxu0 %v773
        %937 = vmatmul.mubr.bf16.gmra.mrb[0].mxu0 %v772
        %v938 = vpop.f32.mrb[0].mxu0
        %v939 = vadd.f32 0.0, %v938
        %v940 = vpop.f32.mrb[0].mxu0
        %v941 = vpop.f32.mrb[0].mxu0
        %v942 = vadd.f32 0.0, %v941
        %v943 = vpop.f32.mrb[0].mxu0
        %944 = vmatprep.mubr.bf16.mxu0 %v775
        %945 = vmatmul.mubr.bf16.gmra.mrb[0].mxu0 %v774
        %v946 = vpop.f32.mrb[0].mxu0
        %v947 = vadd.f32 0.0, %v946
        %v948 = vpop.f32.mrb[0].mxu0
        %v949 = vpop.f32.mrb[0].mxu0
        %v950 = vadd.f32 0.0, %v949
        %v951 = vpop.f32.mrb[0].mxu0
        %952 = vdwg.mxu0
        %953 = vmatprep.subr.bf16.mxu0 0
        %954 = vmatpush1.bf16.msra.mxu0 %v872
        %955 = vmatprep.subr.bf16.mxu0 0
        %956 = vmatpush1.bf16.msra.mxu0 %v873
        %957 = vmatprep.subr.bf16.mxu0 0
        %958 = vmatpush1.bf16.msra.mxu0 %v874
        %959 = vmatprep.subr.bf16.mxu0 0
        %960 = vmatpush1.bf16.msra.mxu0 %v875
        %961 = vmatprep.subr.bf16.mxu0 0
        %962 = vmatpush1.bf16.msra.mxu0 %v876
        %963 = vmatprep.subr.bf16.mxu0 0
        %964 = vmatpush1.bf16.msra.mxu0 %v877
        %965 = vmatprep.subr.bf16.mxu0 0
        %966 = vmatpush1.bf16.msra.mxu0 %v878
        %967 = vmatprep.subr.bf16.mxu0 0
        %968 = vmatpush1.bf16.msra.mxu0 %v879
        %969 = vmatprep.subr.bf16.mxu0 0
        %970 = vmatpush1.bf16.msra.mxu0 %v880
        %971 = vmatprep.subr.bf16.mxu0 0
        %972 = vmatpush1.bf16.msra.mxu0 %v881
        %973 = vmatprep.subr.bf16.mxu0 0
        %974 = vmatpush1.bf16.msra.mxu0 %v882
        %975 = vmatprep.subr.bf16.mxu0 0
        %976 = vmatpush1.bf16.msra.mxu0 %v883
        %977 = vmatprep.subr.bf16.mxu0 0
        %978 = vmatpush1.bf16.msra.mxu0 %v884
        %979 = vmatprep.subr.bf16.mxu0 0
        %980 = vmatpush1.bf16.msra.mxu0 %v885
        %981 = vmatprep.subr.bf16.mxu0 0
        %982 = vmatpush1.bf16.msra.mxu0 %v886
        %983 = vmatprep.subr.bf16.mxu0 0
        %984 = vmatpush1.bf16.msra.mxu0 %v887
        %985 = vmatprep.mubr.bf16.mxu0 %v753
        %986 = vmatmul.mubr.bf16.gmra.mrb[0].mxu0 %v752
        %v987 = vpop.f32.mrb[0].mxu0
        %v988 = vadd.f32 %v939, %v987
        %v989 = vpop.f32.mrb[0].mxu0
        %v990 = vpop.f32.mrb[0].mxu0
        %v991 = vadd.f32 %v942, %v990
        %v992 = vpop.f32.mrb[0].mxu0
        %993 = vmatprep.mubr.bf16.mxu0 %v755
        %994 = vmatmul.mubr.bf16.gmra.mrb[0].mxu0 %v754
        %v995 = vpop.f32.mrb[0].mxu0
        %v996 = vadd.f32 %v947, %v995
        %v997 = vpop.f32.mrb[0].mxu0
        %v998 = vpop.f32.mrb[0].mxu0
        %v999 = vadd.f32 %v950, %v998
        %v1000 = vpop.f32.mrb[0].mxu0
        %1001 = vdwg.mxu0
        %v1002 = vmul.f32 %v988, %v988
        %v1003 = vmul.f32 %v991, %v991
        %v1004 = vsub.f32 %v996, %v1002
        %v1005 = vsub.f32 %v999, %v1003
        %v1006 = vadd.f32 %v1004, 1e-06
        %v1007 = vadd.f32 %v1005, 1e-06
        %v1008 = vrsqrt.pop %v1006
        %v1009 = vmul.f32 %v1006, %v1008
        %vm1010 = vcmp.eq.f32.partialorder %v1006, inf
        %v1011 = vsel %vm1010, %v1006, %v1009
        %vm1012 = vcmp.eq.f32.partialorder %v1006, 0.0
        %v1013 = vand.u32 %v1006, 2147483648
        %v1014 = vsel %vm1012, %v1013, %v1011
        %v1015 = vrsqrt.pop %v1007
        %v1016 = vmul.f32 %v1007, %v1015
        %vm1017 = vcmp.eq.f32.partialorder %v1007, inf
        %v1018 = vsel %vm1017, %v1007, %v1016
        %vm1019 = vcmp.eq.f32.partialorder %v1007, 0.0
        %v1020 = vand.u32 %v1007, 2147483648
        %v1021 = vsel %vm1019, %v1020, %v1018
        %v1022 = vrcp.pop %v1014
        %v1023 = vmul.f32 1.0, %v1022
        %v1024 = vrcp.pop %v1021
        %v1025 = vmul.f32 1.0, %v1024
        %v1026 = vpack.c.bf16 %v991, %v988
        %v1027 = vpack.c.bf16 %v1025, %v1023
        %v1028 = vunpack.c.l.bf16 %v1026
        %v1029 = vunpack.c.h.bf16 %v1026
        %v1030 = vunpack.c.l.bf16 %v1027
        %v1031 = vunpack.c.h.bf16 %v1027
        %v1032 = vsub.f32 %v988, %v1028
        %v1033 = vsub.f32 %v991, %v1029
        %v1034 = vsub.f32 %v1023, %v1030
        %v1035 = vsub.f32 %v1025, %v1031
        %v1036 = vpack.c.bf16 %v1033, %v1032
        %v1037 = vpack.c.bf16 %v1035, %v1034
        %v1038 = vld [vmem:[#allocation2] sm:$0xff]
        %v1039 = vld [vmem:[#allocation2 + $0x8] sm:$0xff]
        %v1042 = vunpack.c.l.b16 %v1038
        %v1043 = vunpack.c.h.b16 %v1038
        %v1044 = vunpack.c.l.b16 %v1039
        %v1045 = vunpack.c.h.b16 %v1039
        %v1046 = vpack.c.b16 %v1044, %v1042
        %v1047 = vpack.c.b16 %v1045, %v1043
        %vm1050 = vcmask 130048
        %v1052 = vsel %vm1050, %v1036, 0
        %v1055 = vsel %vm1050, %v1037, 0
        %1057 = vmatprep.subr.bf16.mxu0 %v1047
        %1058 = vmatpush1.bf16.msra.mxu0 %v1046
        %1059 = vmatprep.subr.bf16.mxu0 0
        %1060 = vmatpush1.bf16.msra.mxu0 0
        %1061 = vmatprep.subr.bf16.mxu0 0
        %1062 = vmatpush1.bf16.msra.mxu0 0
        %1063 = vmatprep.subr.bf16.mxu0 0
        %1064 = vmatpush1.bf16.msra.mxu0 0
        %1065 = vmatprep.subr.bf16.mxu0 0
        %1066 = vmatpush1.bf16.msra.mxu0 0
        %1067 = vmatprep.subr.bf16.mxu0 0
        %1068 = vmatpush1.bf16.msra.mxu0 0
        %1069 = vmatprep.subr.bf16.mxu0 0
        %1070 = vmatpush1.bf16.msra.mxu0 0
        %1071 = vmatprep.subr.bf16.mxu0 0
        %1072 = vmatpush1.bf16.msra.mxu0 0
        %1073 = vmatprep.subr.bf16.mxu0 0
        %1074 = vmatpush1.bf16.msra.mxu0 0
        %1075 = vmatprep.subr.bf16.mxu0 0
        %1076 = vmatpush1.bf16.msra.mxu0 0
        %1077 = vmatprep.subr.bf16.mxu0 0
        %1078 = vmatpush1.bf16.msra.mxu0 0
        %1079 = vmatprep.subr.bf16.mxu0 0
        %1080 = vmatpush1.bf16.msra.mxu0 0
        %1081 = vmatprep.subr.bf16.mxu0 0
        %1082 = vmatpush1.bf16.msra.mxu0 0
        %1083 = vmatprep.subr.bf16.mxu0 0
        %1084 = vmatpush1.bf16.msra.mxu0 0
        %1085 = vmatprep.subr.bf16.mxu0 0
        %1086 = vmatpush1.bf16.msra.mxu0 0
        %1087 = vmatprep.subr.bf16.mxu0 0
        %1088 = vmatpush1.bf16.msra.mxu0 0
        %1089 = vmatprep.mubr.bf16.mxu0 0
        %1090 = vmatmul.mubr.bf16.gmra.mrb[0].mxu0 %v1052
        %v1091 = vpop.f32.mrb[0].mxu0
        %v1092 = vadd.f32 0.0, %v1091
        %v1093 = vpop.f32.mrb[0].mxu0
        %v1094 = vadd.f32 0.0, %v1093
        %v1095 = vpop.f32.mrb[0].mxu0
        %v1096 = vadd.f32 0.0, %v1095
        %v1097 = vpop.f32.mrb[0].mxu0
        %v1098 = vadd.f32 0.0, %v1097
        %1099 = vmatprep.mubr.bf16.mxu0 0
        %1100 = vmatmul.mubr.bf16.gmra.mrb[0].mxu0 %v1055
        %v1101 = vpop.f32.mrb[0].mxu0
        %v1102 = vadd.f32 0.0, %v1101
        %v1103 = vpop.f32.mrb[0].mxu0
        %v1104 = vadd.f32 0.0, %v1103
        %v1105 = vpop.f32.mrb[0].mxu0
        %v1106 = vadd.f32 0.0, %v1105
        %v1107 = vpop.f32.mrb[0].mxu0
        %v1108 = vadd.f32 0.0, %v1107
        %1109 = vdwg.mxu0
        %v1111 = vsel %vm1050, %v1026, 0
        %v1114 = vsel %vm1050, %v1027, 0
        %1116 = vmatprep.subr.bf16.mxu0 %v1047
        %1117 = vmatpush1.bf16.msra.mxu0 %v1046
        %1118 = vmatprep.subr.bf16.mxu0 0
        %1119 = vmatpush1.bf16.msra.mxu0 0
        %1120 = vmatprep.subr.bf16.mxu0 0
        %1121 = vmatpush1.bf16.msra.mxu0 0
        %1122 = vmatprep.subr.bf16.mxu0 0
        %1123 = vmatpush1.bf16.msra.mxu0 0
        %1124 = vmatprep.subr.bf16.mxu0 0
        %1125 = vmatpush1.bf16.msra.mxu0 0
        %1126 = vmatprep.subr.bf16.mxu0 0
        %1127 = vmatpush1.bf16.msra.mxu0 0
        %1128 = vmatprep.subr.bf16.mxu0 0
        %1129 = vmatpush1.bf16.msra.mxu0 0
        %1130 = vmatprep.subr.bf16.mxu0 0
        %1131 = vmatpush1.bf16.msra.mxu0 0
        %1132 = vmatprep.subr.bf16.mxu0 0
        %1133 = vmatpush1.bf16.msra.mxu0 0
        %1134 = vmatprep.subr.bf16.mxu0 0
        %1135 = vmatpush1.bf16.msra.mxu0 0
        %1136 = vmatprep.subr.bf16.mxu0 0
        %1137 = vmatpush1.bf16.msra.mxu0 0
        %1138 = vmatprep.subr.bf16.mxu0 0
        %1139 = vmatpush1.bf16.msra.mxu0 0
        %1140 = vmatprep.subr.bf16.mxu0 0
        %1141 = vmatpush1.bf16.msra.mxu0 0
        %1142 = vmatprep.subr.bf16.mxu0 0
        %1143 = vmatpush1.bf16.msra.mxu0 0
        %1144 = vmatprep.subr.bf16.mxu0 0
        %1145 = vmatpush1.bf16.msra.mxu0 0
        %1146 = vmatprep.subr.bf16.mxu0 0
        %1147 = vmatpush1.bf16.msra.mxu0 0
        %1148 = vmatprep.mubr.bf16.mxu0 0
        %1149 = vmatmul.mubr.bf16.gmra.mrb[0].mxu0 %v1111
        %v1150 = vpop.f32.mrb[0].mxu0
        %v1151 = vadd.f32 %v1092, %v1150
        %v1152 = vpop.f32.mrb[0].mxu0
        %v1153 = vadd.f32 %v1094, %v1152
        %v1154 = vpop.f32.mrb[0].mxu0
        %v1155 = vadd.f32 %v1096, %v1154
        %v1156 = vpop.f32.mrb[0].mxu0
        %v1157 = vadd.f32 %v1098, %v1156
        %1158 = vmatprep.mubr.bf16.mxu0 0
        %1159 = vmatmul.mubr.bf16.gmra.mrb[0].mxu0 %v1114
        %v1160 = vpop.f32.mrb[0].mxu0
        %v1161 = vadd.f32 %v1102, %v1160
        %v1162 = vpop.f32.mrb[0].mxu0
        %v1163 = vadd.f32 %v1104, %v1162
        %v1164 = vpop.f32.mrb[0].mxu0
        %v1165 = vadd.f32 %v1106, %v1164
        %v1166 = vpop.f32.mrb[0].mxu0
        %v1167 = vadd.f32 %v1108, %v1166
        %1168 = vdwg.mxu0
        %v1169 = vsub.f32 %v727, %v1151
        %v1170 = vsub.f32 %v728, %v1153
        %v1171 = vsub.f32 %v729, %v1155
        %v1172 = vsub.f32 %v730, %v1157
        %v1173 = vmul.f32 %v1169, %v1161
        %v1174 = vmul.f32 %v1170, %v1163
        %v1175 = vmul.f32 %v1171, %v1165
        %v1176 = vmul.f32 %v1172, %v1167
        %v1178 = vlaneseq
        %v1179 = vshrl.u32 %v1178, 7
        %v1180 = vsub.s32 0, %v1179
        %v1181 = vrot.slane %v746, %v1180
        %v1182 = vlaneseq
        %v1183 = vshrl.u32 %v1182, 7
        %v1184 = vsub.s32 1, %v1183
        %v1185 = vrot.slane %v746, %v1184
        %v1188 = vmul.f32 %v1173, %v1181
        %v1189 = vmul.f32 %v1174, %v1185
        %v1190 = vmul.f32 %v1175, %v1181
        %v1191 = vmul.f32 %v1176, %v1185
        %v1193 = vlaneseq
        %v1194 = vshrl.u32 %v1193, 7
        %v1195 = vsub.s32 0, %v1194
        %v1196 = vrot.slane %v747, %v1195
        %v1197 = vlaneseq
        %v1198 = vshrl.u32 %v1197, 7
        %v1199 = vsub.s32 1, %v1198
        %v1200 = vrot.slane %v747, %v1199
        %v1203 = vadd.f32 %v1188, %v1196
        %v1204 = vadd.f32 %v1189, %v1200
        %v1205 = vadd.f32 %v1190, %v1196
        %v1206 = vadd.f32 %v1191, %v1200
        %v1207 = vld [vmem:[#allocation7] sm:$0xff]
        %1208 = vrot.lane.b32.xlu0 %v1203, 16
        %v1209 = vpop.permute.xlu0 %1208
        %1210 = vrot.lane.b32.xlu0 %v1205, 16
        %v1211 = vpop.permute.xlu0 %1210
        %1212 = vrot.lane.b32.xlu0 %v1204, 16
        %v1213 = vpop.permute.xlu0 %1212
        %1214 = vrot.lane.b32.xlu0 %v1206, 16
        %v1215 = vpop.permute.xlu0 %1214
        %v1216 = vlaneseq
        %v1217 = vand.u32 %v1216, 127
        %vm1218 = vcmp.lt.s32.totalorder %v1217, 16
        %v1219 = vsel %vm1218, %v1209, %v1213
        %v1220 = vsel %vm1218, %v1211, %v1215
        %v1221 = vsel %vm1218, %v1213, %v1209
        %v1222 = vsel %vm1218, %v1215, %v1211
        %v1223 = vrot.slane %v1221, 7
        %v1224 = vrot.slane %v1219, 7
        %v1225 = vrot.slane %v1222, 7
        %v1226 = vrot.slane %v1220, 7
        %vm1227 = vcmp.lt.s32.totalorder %v732, 1
        %v1228 = vsel %vm1227, %v1223, %v1225
        %v1229 = vsel %vm1227, %v1224, %v1226
        %v1230 = vsel %vm1227, %v1225, %v1223
        %v1231 = vsel %vm1227, %v1226, %v1224
        %v1233 = vlaneseq
        %v1234 = vshrl.u32 %v1233, 7
        %v1235 = vsub.s32 0, %v1234
        %v1236 = vrot.slane %v1207, %v1235
        %v1237 = vlaneseq
        %v1238 = vshrl.u32 %v1237, 7
        %v1239 = vsub.s32 4, %v1238
        %v1240 = vrot.slane %v1207, %v1239
        %v1243 = vlaneseq
        %v1244 = vshrl.u32 %v1243, 7
        %v1245 = vsub.s32 0, %v1244
        %v1246 = vrot.slane %v1236, %v1245
        %v1247 = vlaneseq
        %v1248 = vshrl.u32 %v1247, 7
        %v1249 = vsub.s32 0, %v1248
        %v1250 = vrot.slane %v1240, %v1249
        %v1251 = vmul.f32 %v738, %v1246
        %v1252 = vmul.f32 %v738, %v1250
        %v1253 = vmul.f32 %v739, %v1246
        %v1254 = vmul.f32 %v739, %v1250
        %v1255 = vmul.f32 %v1230, %v1251
        %v1256 = vmul.f32 %v1231, %v1252
        %v1257 = vmul.f32 %v1228, %v1253
        %v1258 = vmul.f32 %v1229, %v1254
        %v1259 = vrot.slane %v1221, 1
        %v1260 = vrot.slane %v1219, 1
        %v1261 = vrot.slane %v1222, 1
        %v1262 = vrot.slane %v1220, 1
        %vm1263 = vcmp.lt.s32.totalorder %v732, 7
        %v1264 = vsel %vm1263, %v1259, %v1261
        %v1265 = vsel %vm1263, %v1260, %v1262
        %v1266 = vsel %vm1263, %v1261, %v1259
        %v1267 = vsel %vm1263, %v1262, %v1260
        %v1268 = vlaneseq
        %v1269 = vshrl.u32 %v1268, 7
        %v1270 = vsub.s32 1, %v1269
        %v1271 = vrot.slane %v1207, %v1270
        %v1272 = vlaneseq
        %v1273 = vshrl.u32 %v1272, 7
        %v1274 = vsub.s32 5, %v1273
        %v1275 = vrot.slane %v1207, %v1274
        %v1278 = vlaneseq
        %v1279 = vshrl.u32 %v1278, 7
        %v1280 = vsub.s32 1, %v1279
        %v1281 = vrot.slane %v1271, %v1280
        %v1282 = vlaneseq
        %v1283 = vshrl.u32 %v1282, 7
        %v1284 = vsub.s32 1, %v1283
        %v1285 = vrot.slane %v1275, %v1284
        %v1286 = vmul.f32 %v744, %v1281
        %v1287 = vmul.f32 %v744, %v1285
        %v1288 = vmul.f32 %v745, %v1281
        %v1289 = vmul.f32 %v745, %v1285
        %v1290 = vmul.f32 %v1264, %v1286
        %v1291 = vmul.f32 %v1265, %v1287
        %v1292 = vmul.f32 %v1266, %v1288
        %v1293 = vmul.f32 %v1267, %v1289
        %v1294 = vadd.f32 %v1255, %v1290
        %v1295 = vadd.f32 %v1256, %v1291
        %v1296 = vadd.f32 %v1257, %v1292
        %v1297 = vadd.f32 %v1258, %v1293
        %1298 = vrot.lane.b32.xlu0 %v1203, 112
        %v1299 = vpop.permute.xlu0 %1298
        %1300 = vrot.lane.b32.xlu0 %v1205, 112
        %v1301 = vpop.permute.xlu0 %1300
        %1302 = vrot.lane.b32.xlu0 %v1204, 112
        %v1303 = vpop.permute.xlu0 %1302
        %1304 = vrot.lane.b32.xlu0 %v1206, 112
        %v1305 = vpop.permute.xlu0 %1304
        %vm1306 = vcmp.lt.s32.totalorder %v1217, 112
        %v1307 = vsel %vm1306, %v1299, %v1303
        %v1308 = vsel %vm1306, %v1301, %v1305
        %v1309 = vsel %vm1306, %v1303, %v1299
        %v1310 = vsel %vm1306, %v1305, %v1301
        %v1311 = vrot.slane %v1307, 1
        %v1312 = vrot.slane %v1309, 1
        %v1313 = vrot.slane %v1308, 1
        %v1314 = vrot.slane %v1310, 1
        %v1315 = vsel %vm1263, %v1311, %v1313
        %v1316 = vsel %vm1263, %v1312, %v1314
        %v1317 = vsel %vm1263, %v1313, %v1311
        %v1318 = vsel %vm1263, %v1314, %v1312
        %v1319 = vlaneseq
        %v1320 = vshrl.u32 %v1319, 7
        %v1321 = vsub.s32 2, %v1320
        %v1322 = vrot.slane %v1207, %v1321
        %v1323 = vlaneseq
        %v1324 = vshrl.u32 %v1323, 7
        %v1325 = vsub.s32 6, %v1324
        %v1326 = vrot.slane %v1207, %v1325
        %v1329 = vlaneseq
        %v1330 = vshrl.u32 %v1329, 7
        %v1331 = vsub.s32 2, %v1330
        %v1332 = vrot.slane %v1322, %v1331
        %v1333 = vlaneseq
        %v1334 = vshrl.u32 %v1333, 7
        %v1335 = vsub.s32 2, %v1334
        %v1336 = vrot.slane %v1326, %v1335
        %v1337 = vmul.f32 %v744, %v1332
        %v1338 = vmul.f32 %v744, %v1336
        %v1339 = vmul.f32 %v745, %v1332
        %v1340 = vmul.f32 %v745, %v1336
        %v1341 = vmul.f32 %v1315, %v1337
        %v1342 = vmul.f32 %v1316, %v1338
        %v1343 = vmul.f32 %v1317, %v1339
        %v1344 = vmul.f32 %v1318, %v1340
        %v1345 = vadd.f32 %v1294, %v1341
        %v1346 = vadd.f32 %v1295, %v1342
        %v1347 = vadd.f32 %v1296, %v1343
        %v1348 = vadd.f32 %v1297, %v1344
        %v1349 = vrot.slane %v1307, 7
        %v1350 = vrot.slane %v1309, 7
        %v1351 = vrot.slane %v1308, 7
        %v1352 = vrot.slane %v1310, 7
        %v1353 = vsel %vm1227, %v1349, %v1351
        %v1354 = vsel %vm1227, %v1350, %v1352
        %v1355 = vsel %vm1227, %v1351, %v1349
        %v1356 = vsel %vm1227, %v1352, %v1350
        %v1357 = vlaneseq
        %v1358 = vshrl.u32 %v1357, 7
        %v1359 = vsub.s32 3, %v1358
        %v1360 = vrot.slane %v1207, %v1359
        %v1361 = vlaneseq
        %v1362 = vshrl.u32 %v1361, 7
        %v1363 = vsub.s32 7, %v1362
        %v1364 = vrot.slane %v1207, %v1363
        %v1367 = vlaneseq
        %v1368 = vshrl.u32 %v1367, 7
        %v1369 = vsub.s32 3, %v1368
        %v1370 = vrot.slane %v1360, %v1369
        %v1371 = vlaneseq
        %v1372 = vshrl.u32 %v1371, 7
        %v1373 = vsub.s32 3, %v1372
        %v1374 = vrot.slane %v1364, %v1373
        %v1375 = vmul.f32 %v738, %v1370
        %v1376 = vmul.f32 %v738, %v1374
        %v1377 = vmul.f32 %v739, %v1370
        %v1378 = vmul.f32 %v739, %v1374
        %v1379 = vmul.f32 %v1355, %v1375
        %v1380 = vmul.f32 %v1356, %v1376
        %v1381 = vmul.f32 %v1353, %v1377
        %v1382 = vmul.f32 %v1354, %v1378
        %v1383 = vadd.f32 %v1345, %v1379
        %v1384 = vadd.f32 %v1346, %v1380
        %v1385 = vadd.f32 %v1347, %v1381
        %v1386 = vadd.f32 %v1348, %v1382
        %v1387 = vld [vmem:[%s6] sm:$0xff]
        %v1388 = vld [vmem:[%s6 + $0x8] sm:$0xff]
        %v1389 = vld [vmem:[%s6 + $0x10] sm:$0x1]
        %v1390 = vld [vmem:[%s6 + $0x18] sm:$0x1]
        %v1391 = vrot.slane %v1383, 7
        %v1392 = vrot.slane %v1384, 7
        %v1393 = vrot.slane %v1385, 7
        %v1394 = vrot.slane %v1386, 7
        %v1395 = vsel %vm1227, %v1391, %v1393
        %v1396 = vsel %vm1227, %v1392, %v1394
        %v1397 = vsel %vm1227, %v1393, %v1391
        %v1398 = vsel %vm1227, %v1394, %v1392
        %v1399 = vmul.f32 %v1397, %v738
        %v1400 = vmul.f32 %v1398, %v738
        %v1401 = vmul.f32 %v1395, %v739
        %v1402 = vmul.f32 %v1396, %v739
        %v1403 = vrot.slane %v1383, 1
        %v1404 = vrot.slane %v1384, 1
        %v1405 = vrot.slane %v1385, 1
        %v1406 = vrot.slane %v1386, 1
        %v1407 = vsel %vm1263, %v1403, %v1405
        %v1408 = vsel %vm1263, %v1404, %v1406
        %v1409 = vsel %vm1263, %v1405, %v1403
        %v1410 = vsel %vm1263, %v1406, %v1404
        %v1411 = vmul.f32 %v1407, %v744
        %v1412 = vmul.f32 %v1408, %v744
        %v1413 = vmul.f32 %v1409, %v745
        %v1414 = vmul.f32 %v1410, %v745
        %1415 = vrot.lane.b32.xlu0 %v1399, 16
        %v1416 = vpop.permute.xlu0 %1415
        %1417 = vrot.lane.b32.xlu0 %v1401, 16
        %v1418 = vpop.permute.xlu0 %1417
        %1419 = vrot.lane.b32.xlu0 %v1400, 16
        %v1420 = vpop.permute.xlu0 %1419
        %1421 = vrot.lane.b32.xlu0 %v1402, 16
        %v1422 = vpop.permute.xlu0 %1421
        %v1423 = vsel %vm1218, %v1416, %v1420
        %v1424 = vsel %vm1218, %v1418, %v1422
        %v1425 = vsel %vm1218, %v1420, %v1416
        %v1426 = vsel %vm1218, %v1422, %v1418
        %v1427 = vlaneseq
        %v1428 = vshrl.u32 %v1427, 7
        %v1429 = vsub.s32 0, %v1428
        %v1430 = vrot.slane %v1387, %v1429
        %v1431 = vlaneseq
        %v1432 = vshrl.u32 %v1431, 7
        %v1433 = vsub.s32 0, %v1432
        %v1434 = vrot.slane %v1388, %v1433
        %v1435 = vmul.f32 %v1425, %v1430
        %v1436 = vmul.f32 %v1423, %v1434
        %v1437 = vmul.f32 %v1426, %v1430
        %v1438 = vmul.f32 %v1424, %v1434
        %v1439 = vlaneseq
        %v1440 = vshrl.u32 %v1439, 7
        %v1441 = vsub.s32 1, %v1440
        %v1442 = vrot.slane %v1387, %v1441
        %v1443 = vlaneseq
        %v1444 = vshrl.u32 %v1443, 7
        %v1445 = vsub.s32 1, %v1444
        %v1446 = vrot.slane %v1388, %v1445
        %v1447 = vmul.f32 %v1399, %v1442
        %v1448 = vmul.f32 %v1400, %v1446
        %v1449 = vmul.f32 %v1401, %v1442
        %v1450 = vmul.f32 %v1402, %v1446
        %v1451 = vadd.f32 %v1435, %v1447
        %v1452 = vadd.f32 %v1436, %v1448
        %v1453 = vadd.f32 %v1437, %v1449
        %v1454 = vadd.f32 %v1438, %v1450
        %1455 = vrot.lane.b32.xlu0 %v1399, 112
        %v1456 = vpop.permute.xlu0 %1455
        %1457 = vrot.lane.b32.xlu0 %v1401, 112
        %v1458 = vpop.permute.xlu0 %1457
        %1459 = vrot.lane.b32.xlu0 %v1400, 112
        %v1460 = vpop.permute.xlu0 %1459
        %1461 = vrot.lane.b32.xlu0 %v1402, 112
        %v1462 = vpop.permute.xlu0 %1461
        %v1463 = vsel %vm1306, %v1456, %v1460
        %v1464 = vsel %vm1306, %v1458, %v1462
        %v1465 = vsel %vm1306, %v1460, %v1456
        %v1466 = vsel %vm1306, %v1462, %v1458
        %v1467 = vlaneseq
        %v1468 = vshrl.u32 %v1467, 7
        %v1469 = vsub.s32 2, %v1468
        %v1470 = vrot.slane %v1387, %v1469
        %v1471 = vlaneseq
        %v1472 = vshrl.u32 %v1471, 7
        %v1473 = vsub.s32 2, %v1472
        %v1474 = vrot.slane %v1388, %v1473
        %v1475 = vmul.f32 %v1463, %v1470
        %v1476 = vmul.f32 %v1465, %v1474
        %v1477 = vmul.f32 %v1464, %v1470
        %v1478 = vmul.f32 %v1466, %v1474
        %v1479 = vadd.f32 %v1451, %v1475
        %v1480 = vadd.f32 %v1452, %v1476
        %v1481 = vadd.f32 %v1453, %v1477
        %v1482 = vadd.f32 %v1454, %v1478
        %1483 = vrot.lane.b32.xlu0 %v1383, 16
        %v1484 = vpop.permute.xlu0 %1483
        %1485 = vrot.lane.b32.xlu0 %v1385, 16
        %v1486 = vpop.permute.xlu0 %1485
        %1487 = vrot.lane.b32.xlu0 %v1384, 16
        %v1488 = vpop.permute.xlu0 %1487
        %1489 = vrot.lane.b32.xlu0 %v1386, 16
        %v1490 = vpop.permute.xlu0 %1489
        %v1491 = vsel %vm1218, %v1484, %v1488
        %v1492 = vsel %vm1218, %v1486, %v1490
        %v1493 = vsel %vm1218, %v1488, %v1484
        %v1494 = vsel %vm1218, %v1490, %v1486
        %v1495 = vlaneseq
        %v1496 = vshrl.u32 %v1495, 7
        %v1497 = vsub.s32 3, %v1496
        %v1498 = vrot.slane %v1387, %v1497
        %v1499 = vlaneseq
        %v1500 = vshrl.u32 %v1499, 7
        %v1501 = vsub.s32 3, %v1500
        %v1502 = vrot.slane %v1388, %v1501
        %v1503 = vmul.f32 %v1493, %v1498
        %v1504 = vmul.f32 %v1491, %v1502
        %v1505 = vmul.f32 %v1494, %v1498
        %v1506 = vmul.f32 %v1492, %v1502
        %v1507 = vadd.f32 %v1479, %v1503
        %v1508 = vadd.f32 %v1480, %v1504
        %v1509 = vadd.f32 %v1481, %v1505
        %v1510 = vadd.f32 %v1482, %v1506
        %v1511 = vlaneseq
        %v1512 = vshrl.u32 %v1511, 7
        %v1513 = vsub.s32 4, %v1512
        %v1514 = vrot.slane %v1387, %v1513
        %v1515 = vlaneseq
        %v1516 = vshrl.u32 %v1515, 7
        %v1517 = vsub.s32 4, %v1516
        %v1518 = vrot.slane %v1388, %v1517
        %v1519 = vmul.f32 %v1383, %v1514
        %v1520 = vmul.f32 %v1384, %v1518
        %v1521 = vmul.f32 %v1385, %v1514
        %v1522 = vmul.f32 %v1386, %v1518
        %v1523 = vadd.f32 %v1507, %v1519
        %v1524 = vadd.f32 %v1508, %v1520
        %v1525 = vadd.f32 %v1509, %v1521
        %v1526 = vadd.f32 %v1510, %v1522
        %1527 = vrot.lane.b32.xlu0 %v1383, 112
        %v1528 = vpop.permute.xlu0 %1527
        %1529 = vrot.lane.b32.xlu0 %v1385, 112
        %v1530 = vpop.permute.xlu0 %1529
        %1531 = vrot.lane.b32.xlu0 %v1384, 112
        %v1532 = vpop.permute.xlu0 %1531
        %1533 = vrot.lane.b32.xlu0 %v1386, 112
        %v1534 = vpop.permute.xlu0 %1533
        %v1535 = vsel %vm1306, %v1528, %v1532
        %v1536 = vsel %vm1306, %v1530, %v1534
        %v1537 = vsel %vm1306, %v1532, %v1528
        %v1538 = vsel %vm1306, %v1534, %v1530
        %v1539 = vlaneseq
        %v1540 = vshrl.u32 %v1539, 7
        %v1541 = vsub.s32 5, %v1540
        %v1542 = vrot.slane %v1387, %v1541
        %v1543 = vlaneseq
        %v1544 = vshrl.u32 %v1543, 7
        %v1545 = vsub.s32 5, %v1544
        %v1546 = vrot.slane %v1388, %v1545
        %v1547 = vmul.f32 %v1535, %v1542
        %v1548 = vmul.f32 %v1537, %v1546
        %v1549 = vmul.f32 %v1536, %v1542
        %v1550 = vmul.f32 %v1538, %v1546
        %v1551 = vadd.f32 %v1523, %v1547
        %v1552 = vadd.f32 %v1524, %v1548
        %v1553 = vadd.f32 %v1525, %v1549
        %v1554 = vadd.f32 %v1526, %v1550
        %1555 = vrot.lane.b32.xlu0 %v1411, 16
        %v1556 = vpop.permute.xlu0 %1555
        %1557 = vrot.lane.b32.xlu0 %v1413, 16
        %v1558 = vpop.permute.xlu0 %1557
        %1559 = vrot.lane.b32.xlu0 %v1412, 16
        %v1560 = vpop.permute.xlu0 %1559
        %1561 = vrot.lane.b32.xlu0 %v1414, 16
        %v1562 = vpop.permute.xlu0 %1561
        %v1563 = vsel %vm1218, %v1556, %v1560
        %v1564 = vsel %vm1218, %v1558, %v1562
        %v1565 = vsel %vm1218, %v1560, %v1556
        %v1566 = vsel %vm1218, %v1562, %v1558
        %v1567 = vlaneseq
        %v1568 = vshrl.u32 %v1567, 7
        %v1569 = vsub.s32 6, %v1568
        %v1570 = vrot.slane %v1387, %v1569
        %v1571 = vlaneseq
        %v1572 = vshrl.u32 %v1571, 7
        %v1573 = vsub.s32 6, %v1572
        %v1574 = vrot.slane %v1388, %v1573
        %v1575 = vmul.f32 %v1565, %v1570
        %v1576 = vmul.f32 %v1563, %v1574
        %v1577 = vmul.f32 %v1566, %v1570
        %v1578 = vmul.f32 %v1564, %v1574
        %v1579 = vadd.f32 %v1551, %v1575
        %v1580 = vadd.f32 %v1552, %v1576
        %v1581 = vadd.f32 %v1553, %v1577
        %v1582 = vadd.f32 %v1554, %v1578
        %v1583 = vlaneseq
        %v1584 = vshrl.u32 %v1583, 7
        %v1585 = vsub.s32 7, %v1584
        %v1586 = vrot.slane %v1387, %v1585
        %v1587 = vlaneseq
        %v1588 = vshrl.u32 %v1587, 7
        %v1589 = vsub.s32 7, %v1588
        %v1590 = vrot.slane %v1388, %v1589
        %v1591 = vmul.f32 %v1411, %v1586
        %v1592 = vmul.f32 %v1412, %v1590
        %v1593 = vmul.f32 %v1413, %v1586
        %v1594 = vmul.f32 %v1414, %v1590
        %v1595 = vadd.f32 %v1579, %v1591
        %v1596 = vadd.f32 %v1580, %v1592
        %v1597 = vadd.f32 %v1581, %v1593
        %v1598 = vadd.f32 %v1582, %v1594
        %1599 = vrot.lane.b32.xlu0 %v1411, 112
        %v1600 = vpop.permute.xlu0 %1599
        %1601 = vrot.lane.b32.xlu0 %v1413, 112
        %v1602 = vpop.permute.xlu0 %1601
        %1603 = vrot.lane.b32.xlu0 %v1412, 112
        %v1604 = vpop.permute.xlu0 %1603
        %1605 = vrot.lane.b32.xlu0 %v1414, 112
        %v1606 = vpop.permute.xlu0 %1605
        %v1607 = vsel %vm1306, %v1600, %v1604
        %v1608 = vsel %vm1306, %v1602, %v1606
        %v1609 = vsel %vm1306, %v1604, %v1600
        %v1610 = vsel %vm1306, %v1606, %v1602
        %v1611 = vlaneseq
        %v1612 = vshrl.u32 %v1611, 7
        %v1613 = vsub.s32 0, %v1612
        %v1614 = vrot.slane %v1389, %v1613
        %v1615 = vlaneseq
        %v1616 = vshrl.u32 %v1615, 7
        %v1617 = vsub.s32 0, %v1616
        %v1618 = vrot.slane %v1390, %v1617
        %v1619 = vmul.f32 %v1607, %v1614
        %v1620 = vmul.f32 %v1609, %v1618
        %v1621 = vmul.f32 %v1608, %v1614
        %v1622 = vmul.f32 %v1610, %v1618
        %v1623 = vadd.f32 %v1595, %v1619
        %v1624 = vadd.f32 %v1596, %v1620
        %v1625 = vadd.f32 %v1597, %v1621
        %v1626 = vadd.f32 %v1598, %v1622
        %v1627 = vld [vmem:[%s7] sm:$0x3]
        %v1629 = vlaneseq
        %v1630 = vshrl.u32 %v1629, 7
        %v1631 = vsub.s32 0, %v1630
        %v1632 = vrot.slane %v1627, %v1631
        %v1633 = vlaneseq
        %v1634 = vshrl.u32 %v1633, 7
        %v1635 = vsub.s32 1, %v1634
        %v1636 = vrot.slane %v1627, %v1635
        %v1639 = vadd.f32 %v1623, %v1632
        %v1640 = vadd.f32 %v1624, %v1636
        %v1641 = vadd.f32 %v1625, %v1632
        %v1642 = vadd.f32 %v1626, %v1636
        %v1643 = vmul.f32 %v1639, 0.5
        %v1644 = vmul.f32 %v1640, 0.5
        %v1645 = vmul.f32 %v1641, 0.5
        %v1646 = vmul.f32 %v1642, 0.5
        %v1647 = vmul.f32 %v1639, 0.70710677
        %v1648 = vmul.f32 %v1640, 0.70710677
        %v1649 = vmul.f32 %v1641, 0.70710677
        %v1650 = vmul.f32 %v1642, 0.70710677
        %v1651 = vand.u32 2147483647, %v1647
        %v1652 = vand.u32 2147483647, %v1648
        %v1653 = vand.u32 2147483647, %v1649
        %v1654 = vand.u32 2147483647, %v1650
        %v1655 = vmul.f32 %v1651, 0.3275911
        %v1656 = vmul.f32 %v1652, 0.3275911
        %v1657 = vmul.f32 %v1653, 0.3275911
        %v1658 = vmul.f32 %v1654, 0.3275911
        %v1659 = vadd.f32 %v1655, 1.0
        %v1660 = vadd.f32 %v1656, 1.0
        %v1661 = vadd.f32 %v1657, 1.0
        %v1662 = vadd.f32 %v1658, 1.0
        %v1663 = vrcp.pop %v1659
        %v1664 = vmul.f32 1.0, %v1663
        %v1665 = vrcp.pop %v1660
        %v1666 = vmul.f32 1.0, %v1665
        %v1667 = vrcp.pop %v1661
        %v1668 = vmul.f32 1.0, %v1667
        %v1669 = vrcp.pop %v1662
        %v1670 = vmul.f32 1.0, %v1669
        %v1671 = vmul.f32 %v1664, 1.0614054
        %v1672 = vmul.f32 %v1666, 1.0614054
        %v1673 = vmul.f32 %v1668, 1.0614054
        %v1674 = vmul.f32 %v1670, 1.0614054
        %v1675 = vadd.f32 %v1671, -1.4531521
        %v1676 = vadd.f32 %v1672, -1.4531521
        %v1677 = vadd.f32 %v1673, -1.4531521
        %v1678 = vadd.f32 %v1674, -1.4531521
        %v1679 = vmul.f32 %v1664, %v1675
        %v1680 = vmul.f32 %v1666, %v1676
        %v1681 = vmul.f32 %v1668, %v1677
        %v1682 = vmul.f32 %v1670, %v1678
        %v1683 = vadd.f32 %v1679, 1.4214138
        %v1684 = vadd.f32 %v1680, 1.4214138
        %v1685 = vadd.f32 %v1681, 1.4214138
        %v1686 = vadd.f32 %v1682, 1.4214138
        %v1687 = vmul.f32 %v1664, %v1683
        %v1688 = vmul.f32 %v1666, %v1684
        %v1689 = vmul.f32 %v1668, %v1685
        %v1690 = vmul.f32 %v1670, %v1686
        %v1691 = vadd.f32 %v1687, -0.28449672
        %v1692 = vadd.f32 %v1688, -0.28449672
        %v1693 = vadd.f32 %v1689, -0.28449672
        %v1694 = vadd.f32 %v1690, -0.28449672
        %v1695 = vmul.f32 %v1664, %v1691
        %v1696 = vmul.f32 %v1666, %v1692
        %v1697 = vmul.f32 %v1668, %v1693
        %v1698 = vmul.f32 %v1670, %v1694
        %v1699 = vadd.f32 %v1695, 0.2548296
        %v1700 = vadd.f32 %v1696, 0.2548296
        %v1701 = vadd.f32 %v1697, 0.2548296
        %v1702 = vadd.f32 %v1698, 0.2548296
        %v1703 = vmul.f32 %v1664, %v1699
        %v1704 = vmul.f32 %v1666, %v1700
        %v1705 = vmul.f32 %v1668, %v1701
        %v1706 = vmul.f32 %v1670, %v1702
        %v1707 = vsub.f32 0.0, %v1651
        %v1708 = vsub.f32 0.0, %v1652
        %v1709 = vsub.f32 0.0, %v1653
        %v1710 = vsub.f32 0.0, %v1654
        %v1711 = vmul.f32 %v1707, %v1651
        %v1712 = vmul.f32 %v1708, %v1652
        %v1713 = vmul.f32 %v1709, %v1653
        %v1714 = vmul.f32 %v1710, %v1654
        %v1715 = vmul.f32 %v1711, 1.442695
        %v1716 = vpow.pop %v1715
        %v1717 = vmul.f32 %v1712, 1.442695
        %v1718 = vpow.pop %v1717
        %v1719 = vmul.f32 %v1713, 1.442695
        %v1720 = vpow.pop %v1719
        %v1721 = vmul.f32 %v1714, 1.442695
        %v1722 = vpow.pop %v1721
        %v1723 = vmul.f32 %v1703, %v1716
        %v1724 = vmul.f32 %v1704, %v1718
        %v1725 = vmul.f32 %v1705, %v1720
        %v1726 = vmul.f32 %v1706, %v1722
        %v1727 = vsub.f32 1.0, %v1723
        %v1728 = vsub.f32 1.0, %v1724
        %v1729 = vsub.f32 1.0, %v1725
        %v1730 = vsub.f32 1.0, %v1726
        %vm1731 = vcmp.lt.f32.partialorder %v1647, 0.0
        %vm1732 = vcmp.lt.f32.partialorder %v1648, 0.0
        %vm1733 = vcmp.lt.f32.partialorder %v1649, 0.0
        %vm1734 = vcmp.lt.f32.partialorder %v1650, 0.0
        %v1735 = vsub.f32 0.0, %v1727
        %v1736 = vsub.f32 0.0, %v1728
        %v1737 = vsub.f32 0.0, %v1729
        %v1738 = vsub.f32 0.0, %v1730
        %v1739 = vsel %vm1731, %v1735, %v1727
        %v1740 = vsel %vm1732, %v1736, %v1728
        %v1741 = vsel %vm1733, %v1737, %v1729
        %v1742 = vsel %vm1734, %v1738, %v1730
        %v1743 = vadd.f32 %v1739, 1.0
        %v1744 = vadd.f32 %v1740, 1.0
        %v1745 = vadd.f32 %v1741, 1.0
        %v1746 = vadd.f32 %v1742, 1.0
        %v1747 = vmul.f32 %v1643, %v1743
        %v1748 = vmul.f32 %v1644, %v1744
        %v1749 = vmul.f32 %v1645, %v1745
        %v1750 = vmul.f32 %v1646, %v1746
        %v1751 = vpack.c.bf16 %v1749, %v1747
        %v1752 = vpack.c.bf16 %v1750, %v1748
        %v1753 = vunpack.c.l.bf16 %v1751
        %v1754 = vunpack.c.l.bf16 %v1752
        %v1755 = vunpack.c.h.bf16 %v1751
        %v1756 = vunpack.c.h.bf16 %v1752
        %v1757 = vsub.f32 %v1747, %v1753
        %v1758 = vsub.f32 %v1748, %v1754
        %v1759 = vsub.f32 %v1749, %v1755
        %v1760 = vsub.f32 %v1750, %v1756
        %v1761 = vpack.c.bf16 %v1759, %v1757
        %v1762 = vpack.c.bf16 %v1760, %v1758
        %v1763 = vld [vmem:[#allocation8] sm:$0xff]
        %v1764 = vld [vmem:[#allocation8 + $0x8] sm:$0xff]
        %v1765 = vld [vmem:[#allocation8 + $0x10] sm:$0xff]
        %v1766 = vld [vmem:[#allocation8 + $0x18] sm:$0xff]
        %v1767 = vld [vmem:[#allocation8 + $0x20] sm:$0xff]
        %v1768 = vld [vmem:[#allocation8 + $0x28] sm:$0xff]
        %v1769 = vld [vmem:[#allocation8 + $0x30] sm:$0xff]
        %v1770 = vld [vmem:[#allocation8 + $0x38] sm:$0xff]
        %v1771 = vld [vmem:[#allocation8 + $0x40] sm:$0xff]
        %v1772 = vld [vmem:[#allocation8 + $0x48] sm:$0xff]
        %v1773 = vld [vmem:[#allocation8 + $0x50] sm:$0xff]
        %v1774 = vld [vmem:[#allocation8 + $0x58] sm:$0xff]
        %v1775 = vld [vmem:[#allocation8 + $0x60] sm:$0xff]
        %v1776 = vld [vmem:[#allocation8 + $0x68] sm:$0xff]
        %v1777 = vld [vmem:[#allocation8 + $0x70] sm:$0xff]
        %v1778 = vld [vmem:[#allocation8 + $0x78] sm:$0xff]
        %v1779 = vld [vmem:[#allocation8 + $0x80] sm:$0xff]
        %v1780 = vld [vmem:[#allocation8 + $0x88] sm:$0xff]
        %v1781 = vld [vmem:[#allocation8 + $0x90] sm:$0xff]
        %v1782 = vld [vmem:[#allocation8 + $0x98] sm:$0xff]
        %v1783 = vld [vmem:[#allocation8 + $0xa0] sm:$0xff]
        %v1784 = vld [vmem:[#allocation8 + $0xa8] sm:$0xff]
        %v1785 = vld [vmem:[#allocation8 + $0xb0] sm:$0xff]
        %v1786 = vld [vmem:[#allocation8 + $0xb8] sm:$0xff]
        %v1787 = vld [vmem:[#allocation8 + $0xc0] sm:$0xff]
        %v1788 = vld [vmem:[#allocation8 + $0xc8] sm:$0xff]
        %v1789 = vld [vmem:[#allocation8 + $0xd0] sm:$0xff]
        %v1790 = vld [vmem:[#allocation8 + $0xd8] sm:$0xff]
        %v1791 = vld [vmem:[#allocation8 + $0xe0] sm:$0xff]
        %v1792 = vld [vmem:[#allocation8 + $0xe8] sm:$0xff]
        %v1793 = vld [vmem:[#allocation8 + $0xf0] sm:$0xff]
        %v1794 = vld [vmem:[#allocation8 + $0xf8] sm:$0xff]
        %v1827 = vunpack.c.l.b16 %v1763
        %v1828 = vunpack.c.h.b16 %v1763
        %v1829 = vunpack.c.l.b16 %v1764
        %v1830 = vunpack.c.h.b16 %v1764
        %v1831 = vunpack.c.l.b16 %v1765
        %v1832 = vunpack.c.h.b16 %v1765
        %v1833 = vunpack.c.l.b16 %v1766
        %v1834 = vunpack.c.h.b16 %v1766
        %v1835 = vunpack.c.l.b16 %v1767
        %v1836 = vunpack.c.h.b16 %v1767
        %v1837 = vunpack.c.l.b16 %v1768
        %v1838 = vunpack.c.h.b16 %v1768
        %v1839 = vunpack.c.l.b16 %v1769
        %v1840 = vunpack.c.h.b16 %v1769
        %v1841 = vunpack.c.l.b16 %v1770
        %v1842 = vunpack.c.h.b16 %v1770
        %v1843 = vunpack.c.l.b16 %v1771
        %v1844 = vunpack.c.h.b16 %v1771
        %v1845 = vunpack.c.l.b16 %v1772
        %v1846 = vunpack.c.h.b16 %v1772
        %v1847 = vunpack.c.l.b16 %v1773
        %v1848 = vunpack.c.h.b16 %v1773
        %v1849 = vunpack.c.l.b16 %v1774
        %v1850 = vunpack.c.h.b16 %v1774
        %v1851 = vunpack.c.l.b16 %v1775
        %v1852 = vunpack.c.h.b16 %v1775
        %v1853 = vunpack.c.l.b16 %v1776
        %v1854 = vunpack.c.h.b16 %v1776
        %v1855 = vunpack.c.l.b16 %v1777
        %v1856 = vunpack.c.h.b16 %v1777
        %v1857 = vunpack.c.l.b16 %v1778
        %v1858 = vunpack.c.h.b16 %v1778
        %v1859 = vunpack.c.l.b16 %v1779
        %v1860 = vunpack.c.h.b16 %v1779
        %v1861 = vunpack.c.l.b16 %v1780
        %v1862 = vunpack.c.h.b16 %v1780
        %v1863 = vunpack.c.l.b16 %v1781
        %v1864 = vunpack.c.h.b16 %v1781
        %v1865 = vunpack.c.l.b16 %v1782
        %v1866 = vunpack.c.h.b16 %v1782
        %v1867 = vunpack.c.l.b16 %v1783
        %v1868 = vunpack.c.h.b16 %v1783
        %v1869 = vunpack.c.l.b16 %v1784
        %v1870 = vunpack.c.h.b16 %v1784
        %v1871 = vunpack.c.l.b16 %v1785
        %v1872 = vunpack.c.h.b16 %v1785
        %v1873 = vunpack.c.l.b16 %v1786
        %v1874 = vunpack.c.h.b16 %v1786
        %v1875 = vunpack.c.l.b16 %v1787
        %v1876 = vunpack.c.h.b16 %v1787
        %v1877 = vunpack.c.l.b16 %v1788
        %v1878 = vunpack.c.h.b16 %v1788
        %v1879 = vunpack.c.l.b16 %v1789
        %v1880 = vunpack.c.h.b16 %v1789
        %v1881 = vunpack.c.l.b16 %v1790
        %v1882 = vunpack.c.h.b16 %v1790
        %v1883 = vunpack.c.l.b16 %v1791
        %v1884 = vunpack.c.h.b16 %v1791
        %v1885 = vunpack.c.l.b16 %v1792
        %v1886 = vunpack.c.h.b16 %v1792
        %v1887 = vunpack.c.l.b16 %v1793
        %v1888 = vunpack.c.h.b16 %v1793
        %v1889 = vunpack.c.l.b16 %v1794
        %v1890 = vunpack.c.h.b16 %v1794
        %v1891 = vpack.c.b16 %v1829, %v1827
        %v1892 = vpack.c.b16 %v1830, %v1828
        %v1893 = vpack.c.b16 %v1833, %v1831
        %v1894 = vpack.c.b16 %v1834, %v1832
        %v1895 = vpack.c.b16 %v1837, %v1835
        %v1896 = vpack.c.b16 %v1838, %v1836
        %v1897 = vpack.c.b16 %v1841, %v1839
        %v1898 = vpack.c.b16 %v1842, %v1840
        %v1899 = vpack.c.b16 %v1845, %v1843
        %v1900 = vpack.c.b16 %v1846, %v1844
        %v1901 = vpack.c.b16 %v1849, %v1847
        %v1902 = vpack.c.b16 %v1850, %v1848
        %v1903 = vpack.c.b16 %v1853, %v1851
        %v1904 = vpack.c.b16 %v1854, %v1852
        %v1905 = vpack.c.b16 %v1857, %v1855
        %v1906 = vpack.c.b16 %v1858, %v1856
        %v1907 = vpack.c.b16 %v1861, %v1859
        %v1908 = vpack.c.b16 %v1862, %v1860
        %v1909 = vpack.c.b16 %v1865, %v1863
        %v1910 = vpack.c.b16 %v1866, %v1864
        %v1911 = vpack.c.b16 %v1869, %v1867
        %v1912 = vpack.c.b16 %v1870, %v1868
        %v1913 = vpack.c.b16 %v1873, %v1871
        %v1914 = vpack.c.b16 %v1874, %v1872
        %v1915 = vpack.c.b16 %v1877, %v1875
        %v1916 = vpack.c.b16 %v1878, %v1876
        %v1917 = vpack.c.b16 %v1881, %v1879
        %v1918 = vpack.c.b16 %v1882, %v1880
        %v1919 = vpack.c.b16 %v1885, %v1883
        %v1920 = vpack.c.b16 %v1886, %v1884
        %v1921 = vpack.c.b16 %v1889, %v1887
        %v1922 = vpack.c.b16 %v1890, %v1888
        %1955 = vmatprep.subr.bf16.mxu0 %v1892
        %1956 = vmatpush1.bf16.msra.mxu0 %v1891
        %1957 = vmatprep.subr.bf16.mxu0 %v1894
        %1958 = vmatpush1.bf16.msra.mxu0 %v1893
        %1959 = vmatprep.subr.bf16.mxu0 %v1896
        %1960 = vmatpush1.bf16.msra.mxu0 %v1895
        %1961 = vmatprep.subr.bf16.mxu0 %v1898
        %1962 = vmatpush1.bf16.msra.mxu0 %v1897
        %1963 = vmatprep.subr.bf16.mxu0 %v1900
        %1964 = vmatpush1.bf16.msra.mxu0 %v1899
        %1965 = vmatprep.subr.bf16.mxu0 %v1902
        %1966 = vmatpush1.bf16.msra.mxu0 %v1901
        %1967 = vmatprep.subr.bf16.mxu0 %v1904
        %1968 = vmatpush1.bf16.msra.mxu0 %v1903
        %1969 = vmatprep.subr.bf16.mxu0 %v1906
        %1970 = vmatpush1.bf16.msra.mxu0 %v1905
        %1971 = vmatprep.subr.bf16.mxu0 %v1908
        %1972 = vmatpush1.bf16.msra.mxu0 %v1907
        %1973 = vmatprep.subr.bf16.mxu0 %v1910
        %1974 = vmatpush1.bf16.msra.mxu0 %v1909
        %1975 = vmatprep.subr.bf16.mxu0 %v1912
        %1976 = vmatpush1.bf16.msra.mxu0 %v1911
        %1977 = vmatprep.subr.bf16.mxu0 %v1914
        %1978 = vmatpush1.bf16.msra.mxu0 %v1913
        %1979 = vmatprep.subr.bf16.mxu0 %v1916
        %1980 = vmatpush1.bf16.msra.mxu0 %v1915
        %1981 = vmatprep.subr.bf16.mxu0 %v1918
        %1982 = vmatpush1.bf16.msra.mxu0 %v1917
        %1983 = vmatprep.subr.bf16.mxu0 %v1920
        %1984 = vmatpush1.bf16.msra.mxu0 %v1919
        %1985 = vmatprep.subr.bf16.mxu0 %v1922
        %1986 = vmatpush1.bf16.msra.mxu0 %v1921
        %1987 = vmatprep.mubr.bf16.mxu0 %v1762
        %1988 = vmatmul.mubr.bf16.gmra.mrb[0].mxu0 %v1761
        %v1989 = vpop.f32.mrb[0].mxu0
        %v1990 = vadd.f32 0.0, %v1989
        %v1991 = vpop.f32.mrb[0].mxu0
        %v1992 = vadd.f32 0.0, %v1991
        %v1993 = vpop.f32.mrb[0].mxu0
        %v1994 = vadd.f32 0.0, %v1993
        %v1995 = vpop.f32.mrb[0].mxu0
        %v1996 = vadd.f32 0.0, %v1995
        %1997 = vdwg.mxu0
        %1998 = vmatprep.subr.bf16.mxu0 %v1892
        %1999 = vmatpush1.bf16.msra.mxu0 %v1891
        %2000 = vmatprep.subr.bf16.mxu0 %v1894
        %2001 = vmatpush1.bf16.msra.mxu0 %v1893
        %2002 = vmatprep.subr.bf16.mxu0 %v1896
        %2003 = vmatpush1.bf16.msra.mxu0 %v1895
        %2004 = vmatprep.subr.bf16.mxu0 %v1898
        %2005 = vmatpush1.bf16.msra.mxu0 %v1897
        %2006 = vmatprep.subr.bf16.mxu0 %v1900
        %2007 = vmatpush1.bf16.msra.mxu0 %v1899
        %2008 = vmatprep.subr.bf16.mxu0 %v1902
        %2009 = vmatpush1.bf16.msra.mxu0 %v1901
        %2010 = vmatprep.subr.bf16.mxu0 %v1904
        %2011 = vmatpush1.bf16.msra.mxu0 %v1903
        %2012 = vmatprep.subr.bf16.mxu0 %v1906
        %2013 = vmatpush1.bf16.msra.mxu0 %v1905
        %2014 = vmatprep.subr.bf16.mxu0 %v1908
        %2015 = vmatpush1.bf16.msra.mxu0 %v1907
        %2016 = vmatprep.subr.bf16.mxu0 %v1910
        %2017 = vmatpush1.bf16.msra.mxu0 %v1909
        %2018 = vmatprep.subr.bf16.mxu0 %v1912
        %2019 = vmatpush1.bf16.msra.mxu0 %v1911
        %2020 = vmatprep.subr.bf16.mxu0 %v1914
        %2021 = vmatpush1.bf16.msra.mxu0 %v1913
        %2022 = vmatprep.subr.bf16.mxu0 %v1916
        %2023 = vmatpush1.bf16.msra.mxu0 %v1915
        %2024 = vmatprep.subr.bf16.mxu0 %v1918
        %2025 = vmatpush1.bf16.msra.mxu0 %v1917
        %2026 = vmatprep.subr.bf16.mxu0 %v1920
        %2027 = vmatpush1.bf16.msra.mxu0 %v1919
        %2028 = vmatprep.subr.bf16.mxu0 %v1922
        %2029 = vmatpush1.bf16.msra.mxu0 %v1921
        %2030 = vmatprep.mubr.bf16.mxu0 %v1752
        %2031 = vmatmul.mubr.bf16.gmra.mrb[0].mxu0 %v1751
        %v2032 = vpop.f32.mrb[0].mxu0
        %v2033 = vadd.f32 %v1990, %v2032
        %v2034 = vpop.f32.mrb[0].mxu0
        %v2035 = vadd.f32 %v1992, %v2034
        %v2036 = vpop.f32.mrb[0].mxu0
        %v2037 = vadd.f32 %v1994, %v2036
        %v2038 = vpop.f32.mrb[0].mxu0
        %v2039 = vadd.f32 %v1996, %v2038
        %2040 = vdwg.mxu0
        %v2041 = vld [vmem:[#allocation10] sm:$0xff]
        %v2042 = vld [vmem:[#allocation10 + $0x8] sm:$0xff]
        %v2043 = vld [vmem:[#allocation10 + $0x10] sm:$0xff]
        %v2044 = vld [vmem:[#allocation10 + $0x18] sm:$0xff]
        %v2045 = vld [vmem:[#allocation10 + $0x20] sm:$0xff]
        %v2046 = vld [vmem:[#allocation10 + $0x28] sm:$0xff]
        %v2047 = vld [vmem:[#allocation10 + $0x30] sm:$0xff]
        %v2048 = vld [vmem:[#allocation10 + $0x38] sm:$0xff]
        %v2049 = vld [vmem:[#allocation10 + $0x40] sm:$0xff]
        %v2050 = vld [vmem:[#allocation10 + $0x48] sm:$0xff]
        %v2051 = vld [vmem:[#allocation10 + $0x50] sm:$0xff]
        %v2052 = vld [vmem:[#allocation10 + $0x58] sm:$0xff]
        %v2053 = vld [vmem:[#allocation10 + $0x60] sm:$0xff]
        %v2054 = vld [vmem:[#allocation10 + $0x68] sm:$0xff]
        %v2055 = vld [vmem:[#allocation10 + $0x70] sm:$0xff]
        %v2056 = vld [vmem:[#allocation10 + $0x78] sm:$0xff]
        %v2057 = vld [vmem:[#allocation10 + $0x80] sm:$0xff]
        %v2058 = vld [vmem:[#allocation10 + $0x88] sm:$0xff]
        %v2059 = vld [vmem:[#allocation10 + $0x90] sm:$0xff]
        %v2060 = vld [vmem:[#allocation10 + $0x98] sm:$0xff]
        %v2061 = vld [vmem:[#allocation10 + $0xa0] sm:$0xff]
        %v2062 = vld [vmem:[#allocation10 + $0xa8] sm:$0xff]
        %v2063 = vld [vmem:[#allocation10 + $0xb0] sm:$0xff]
        %v2064 = vld [vmem:[#allocation10 + $0xb8] sm:$0xff]
        %v2065 = vld [vmem:[#allocation10 + $0xc0] sm:$0xff]
        %v2066 = vld [vmem:[#allocation10 + $0xc8] sm:$0xff]
        %v2067 = vld [vmem:[#allocation10 + $0xd0] sm:$0xff]
        %v2068 = vld [vmem:[#allocation10 + $0xd8] sm:$0xff]
        %v2069 = vld [vmem:[#allocation10 + $0xe0] sm:$0xff]
        %v2070 = vld [vmem:[#allocation10 + $0xe8] sm:$0xff]
        %v2071 = vld [vmem:[#allocation10 + $0xf0] sm:$0xff]
        %v2072 = vld [vmem:[#allocation10 + $0xf8] sm:$0xff]
        %v2105 = vunpack.c.l.b16 %v2041
        %v2106 = vunpack.c.h.b16 %v2041
        %v2107 = vunpack.c.l.b16 %v2042
        %v2108 = vunpack.c.h.b16 %v2042
        %v2109 = vunpack.c.l.b16 %v2043
        %v2110 = vunpack.c.h.b16 %v2043
        %v2111 = vunpack.c.l.b16 %v2044
        %v2112 = vunpack.c.h.b16 %v2044
        %v2113 = vunpack.c.l.b16 %v2045
        %v2114 = vunpack.c.h.b16 %v2045
        %v2115 = vunpack.c.l.b16 %v2046
        %v2116 = vunpack.c.h.b16 %v2046
        %v2117 = vunpack.c.l.b16 %v2047
        %v2118 = vunpack.c.h.b16 %v2047
        %v2119 = vunpack.c.l.b16 %v2048
        %v2120 = vunpack.c.h.b16 %v2048
        %v2121 = vunpack.c.l.b16 %v2049
        %v2122 = vunpack.c.h.b16 %v2049
        %v2123 = vunpack.c.l.b16 %v2050
        %v2124 = vunpack.c.h.b16 %v2050
        %v2125 = vunpack.c.l.b16 %v2051
        %v2126 = vunpack.c.h.b16 %v2051
        %v2127 = vunpack.c.l.b16 %v2052
        %v2128 = vunpack.c.h.b16 %v2052
        %v2129 = vunpack.c.l.b16 %v2053
        %v2130 = vunpack.c.h.b16 %v2053
        %v2131 = vunpack.c.l.b16 %v2054
        %v2132 = vunpack.c.h.b16 %v2054
        %v2133 = vunpack.c.l.b16 %v2055
        %v2134 = vunpack.c.h.b16 %v2055
        %v2135 = vunpack.c.l.b16 %v2056
        %v2136 = vunpack.c.h.b16 %v2056
        %v2137 = vunpack.c.l.b16 %v2057
        %v2138 = vunpack.c.h.b16 %v2057
        %v2139 = vunpack.c.l.b16 %v2058
        %v2140 = vunpack.c.h.b16 %v2058
        %v2141 = vunpack.c.l.b16 %v2059
        %v2142 = vunpack.c.h.b16 %v2059
        %v2143 = vunpack.c.l.b16 %v2060
        %v2144 = vunpack.c.h.b16 %v2060
        %v2145 = vunpack.c.l.b16 %v2061
        %v2146 = vunpack.c.h.b16 %v2061
        %v2147 = vunpack.c.l.b16 %v2062
        %v2148 = vunpack.c.h.b16 %v2062
        %v2149 = vunpack.c.l.b16 %v2063
        %v2150 = vunpack.c.h.b16 %v2063
        %v2151 = vunpack.c.l.b16 %v2064
        %v2152 = vunpack.c.h.b16 %v2064
        %v2153 = vunpack.c.l.b16 %v2065
        %v2154 = vunpack.c.h.b16 %v2065
        %v2155 = vunpack.c.l.b16 %v2066
        %v2156 = vunpack.c.h.b16 %v2066
        %v2157 = vunpack.c.l.b16 %v2067
        %v2158 = vunpack.c.h.b16 %v2067
        %v2159 = vunpack.c.l.b16 %v2068
        %v2160 = vunpack.c.h.b16 %v2068
        %v2161 = vunpack.c.l.b16 %v2069
        %v2162 = vunpack.c.h.b16 %v2069
        %v2163 = vunpack.c.l.b16 %v2070
        %v2164 = vunpack.c.h.b16 %v2070
        %v2165 = vunpack.c.l.b16 %v2071
        %v2166 = vunpack.c.h.b16 %v2071
        %v2167 = vunpack.c.l.b16 %v2072
        %v2168 = vunpack.c.h.b16 %v2072
        %v2169 = vpack.c.b16 %v2107, %v2105
        %v2170 = vpack.c.b16 %v2108, %v2106
        %v2171 = vpack.c.b16 %v2111, %v2109
        %v2172 = vpack.c.b16 %v2112, %v2110
        %v2173 = vpack.c.b16 %v2115, %v2113
        %v2174 = vpack.c.b16 %v2116, %v2114
        %v2175 = vpack.c.b16 %v2119, %v2117
        %v2176 = vpack.c.b16 %v2120, %v2118
        %v2177 = vpack.c.b16 %v2123, %v2121
        %v2178 = vpack.c.b16 %v2124, %v2122
        %v2179 = vpack.c.b16 %v2127, %v2125
        %v2180 = vpack.c.b16 %v2128, %v2126
        %v2181 = vpack.c.b16 %v2131, %v2129
        %v2182 = vpack.c.b16 %v2132, %v2130
        %v2183 = vpack.c.b16 %v2135, %v2133
        %v2184 = vpack.c.b16 %v2136, %v2134
        %v2185 = vpack.c.b16 %v2139, %v2137
        %v2186 = vpack.c.b16 %v2140, %v2138
        %v2187 = vpack.c.b16 %v2143, %v2141
        %v2188 = vpack.c.b16 %v2144, %v2142
        %v2189 = vpack.c.b16 %v2147, %v2145
        %v2190 = vpack.c.b16 %v2148, %v2146
        %v2191 = vpack.c.b16 %v2151, %v2149
        %v2192 = vpack.c.b16 %v2152, %v2150
        %v2193 = vpack.c.b16 %v2155, %v2153
        %v2194 = vpack.c.b16 %v2156, %v2154
        %v2195 = vpack.c.b16 %v2159, %v2157
        %v2196 = vpack.c.b16 %v2160, %v2158
        %v2197 = vpack.c.b16 %v2163, %v2161
        %v2198 = vpack.c.b16 %v2164, %v2162
        %v2199 = vpack.c.b16 %v2167, %v2165
        %v2200 = vpack.c.b16 %v2168, %v2166
        %2233 = vmatprep.subr.bf16.mxu0 %v2170
        %2234 = vmatpush1.bf16.msra.mxu0 %v2169
        %2235 = vmatprep.subr.bf16.mxu0 %v2172
        %2236 = vmatpush1.bf16.msra.mxu0 %v2171
        %2237 = vmatprep.subr.bf16.mxu0 %v2174
        %2238 = vmatpush1.bf16.msra.mxu0 %v2173
        %2239 = vmatprep.subr.bf16.mxu0 %v2176
        %2240 = vmatpush1.bf16.msra.mxu0 %v2175
        %2241 = vmatprep.subr.bf16.mxu0 %v2178
        %2242 = vmatpush1.bf16.msra.mxu0 %v2177
        %2243 = vmatprep.subr.bf16.mxu0 %v2180
        %2244 = vmatpush1.bf16.msra.mxu0 %v2179
        %2245 = vmatprep.subr.bf16.mxu0 %v2182
        %2246 = vmatpush1.bf16.msra.mxu0 %v2181
        %2247 = vmatprep.subr.bf16.mxu0 %v2184
        %2248 = vmatpush1.bf16.msra.mxu0 %v2183
        %2249 = vmatprep.subr.bf16.mxu0 %v2186
        %2250 = vmatpush1.bf16.msra.mxu0 %v2185
        %2251 = vmatprep.subr.bf16.mxu0 %v2188
        %2252 = vmatpush1.bf16.msra.mxu0 %v2187
        %2253 = vmatprep.subr.bf16.mxu0 %v2190
        %2254 = vmatpush1.bf16.msra.mxu0 %v2189
        %2255 = vmatprep.subr.bf16.mxu0 %v2192
        %2256 = vmatpush1.bf16.msra.mxu0 %v2191
        %2257 = vmatprep.subr.bf16.mxu0 %v2194
        %2258 = vmatpush1.bf16.msra.mxu0 %v2193
        %2259 = vmatprep.subr.bf16.mxu0 %v2196
        %2260 = vmatpush1.bf16.msra.mxu0 %v2195
        %2261 = vmatprep.subr.bf16.mxu0 %v2198
        %2262 = vmatpush1.bf16.msra.mxu0 %v2197
        %2263 = vmatprep.subr.bf16.mxu0 %v2200
        %2264 = vmatpush1.bf16.msra.mxu0 %v2199
        %2265 = vmatprep.mubr.bf16.mxu0 %v1752
        %2266 = vmatmul.mubr.bf16.gmra.mrb[0].mxu0 %v1751
        %v2267 = vpop.f32.mrb[0].mxu0
        %v2268 = vadd.f32 0.0, %v2267
        %v2269 = vpop.f32.mrb[0].mxu0
        %v2270 = vadd.f32 0.0, %v2269
        %v2271 = vpop.f32.mrb[0].mxu0
        %v2272 = vadd.f32 0.0, %v2271
        %v2273 = vpop.f32.mrb[0].mxu0
        %v2274 = vadd.f32 0.0, %v2273
        %2275 = vdwg.mxu0
        %v2276 = vadd.f32 %v2033, %v2268
        %v2277 = vadd.f32 %v2035, %v2270
        %v2278 = vadd.f32 %v2037, %v2272
        %v2279 = vadd.f32 %v2039, %v2274
        %v2280 = vld [vmem:[%s10] sm:$0x3]
        %v2282 = vlaneseq
        %v2283 = vshrl.u32 %v2282, 7
        %v2284 = vsub.s32 0, %v2283
        %v2285 = vrot.slane %v2280, %v2284
        %v2286 = vlaneseq
        %v2287 = vshrl.u32 %v2286, 7
        %v2288 = vsub.s32 1, %v2287
        %v2289 = vrot.slane %v2280, %v2288
        %v2292 = vadd.f32 %v2276, %v2285
        %v2293 = vadd.f32 %v2277, %v2289
        %v2294 = vadd.f32 %v2278, %v2285
        %v2295 = vadd.f32 %v2279, %v2289
        %v2296 = vld [vmem:[%s11] sm:$0xff]
        %v2297 = vld [vmem:[%s11 + $0x8] sm:$0xff]
        %v2298 = vld [vmem:[%s11 + $0x10] sm:$0x1]
        %v2299 = vld [vmem:[%s11 + $0x18] sm:$0x1]
        %v2300 = vrot.slane %v1203, 7
        %v2301 = vrot.slane %v1204, 7
        %v2302 = vrot.slane %v1205, 7
        %v2303 = vrot.slane %v1206, 7
        %v2304 = vsel %vm1227, %v2300, %v2302
        %v2305 = vsel %vm1227, %v2301, %v2303
        %v2306 = vsel %vm1227, %v2302, %v2300
        %v2307 = vsel %vm1227, %v2303, %v2301
        %v2308 = vmul.f32 %v2306, %v738
        %v2309 = vmul.f32 %v2307, %v738
        %v2310 = vmul.f32 %v2304, %v739
        %v2311 = vmul.f32 %v2305, %v739
        %v2312 = vrot.slane %v1203, 1
        %v2313 = vrot.slane %v1204, 1
        %v2314 = vrot.slane %v1205, 1
        %v2315 = vrot.slane %v1206, 1
        %v2316 = vsel %vm1263, %v2312, %v2314
        %v2317 = vsel %vm1263, %v2313, %v2315
        %v2318 = vsel %vm1263, %v2314, %v2312
        %v2319 = vsel %vm1263, %v2315, %v2313
        %v2320 = vmul.f32 %v2316, %v744
        %v2321 = vmul.f32 %v2317, %v744
        %v2322 = vmul.f32 %v2318, %v745
        %v2323 = vmul.f32 %v2319, %v745
        %2324 = vrot.lane.b32.xlu0 %v2308, 16
        %v2325 = vpop.permute.xlu0 %2324
        %2326 = vrot.lane.b32.xlu0 %v2310, 16
        %v2327 = vpop.permute.xlu0 %2326
        %2328 = vrot.lane.b32.xlu0 %v2309, 16
        %v2329 = vpop.permute.xlu0 %2328
        %2330 = vrot.lane.b32.xlu0 %v2311, 16
        %v2331 = vpop.permute.xlu0 %2330
        %v2332 = vsel %vm1218, %v2325, %v2329
        %v2333 = vsel %vm1218, %v2327, %v2331
        %v2334 = vsel %vm1218, %v2329, %v2325
        %v2335 = vsel %vm1218, %v2331, %v2327
        %v2336 = vlaneseq
        %v2337 = vshrl.u32 %v2336, 7
        %v2338 = vsub.s32 0, %v2337
        %v2339 = vrot.slane %v2296, %v2338
        %v2340 = vlaneseq
        %v2341 = vshrl.u32 %v2340, 7
        %v2342 = vsub.s32 0, %v2341
        %v2343 = vrot.slane %v2297, %v2342
        %v2344 = vmul.f32 %v2334, %v2339
        %v2345 = vmul.f32 %v2332, %v2343
        %v2346 = vmul.f32 %v2335, %v2339
        %v2347 = vmul.f32 %v2333, %v2343
        %v2348 = vlaneseq
        %v2349 = vshrl.u32 %v2348, 7
        %v2350 = vsub.s32 1, %v2349
        %v2351 = vrot.slane %v2296, %v2350
        %v2352 = vlaneseq
        %v2353 = vshrl.u32 %v2352, 7
        %v2354 = vsub.s32 1, %v2353
        %v2355 = vrot.slane %v2297, %v2354
        %v2356 = vmul.f32 %v2308, %v2351
        %v2357 = vmul.f32 %v2309, %v2355
        %v2358 = vmul.f32 %v2310, %v2351
        %v2359 = vmul.f32 %v2311, %v2355
        %v2360 = vadd.f32 %v2344, %v2356
        %v2361 = vadd.f32 %v2345, %v2357
        %v2362 = vadd.f32 %v2346, %v2358
        %v2363 = vadd.f32 %v2347, %v2359
        %2364 = vrot.lane.b32.xlu0 %v2308, 112
        %v2365 = vpop.permute.xlu0 %2364
        %2366 = vrot.lane.b32.xlu0 %v2310, 112
        %v2367 = vpop.permute.xlu0 %2366
        %2368 = vrot.lane.b32.xlu0 %v2309, 112
        %v2369 = vpop.permute.xlu0 %2368
        %2370 = vrot.lane.b32.xlu0 %v2311, 112
        %v2371 = vpop.permute.xlu0 %2370
        %v2372 = vsel %vm1306, %v2365, %v2369
        %v2373 = vsel %vm1306, %v2367, %v2371
        %v2374 = vsel %vm1306, %v2369, %v2365
        %v2375 = vsel %vm1306, %v2371, %v2367
        %v2376 = vlaneseq
        %v2377 = vshrl.u32 %v2376, 7
        %v2378 = vsub.s32 2, %v2377
        %v2379 = vrot.slane %v2296, %v2378
        %v2380 = vlaneseq
        %v2381 = vshrl.u32 %v2380, 7
        %v2382 = vsub.s32 2, %v2381
        %v2383 = vrot.slane %v2297, %v2382
        %v2384 = vmul.f32 %v2372, %v2379
        %v2385 = vmul.f32 %v2374, %v2383
        %v2386 = vmul.f32 %v2373, %v2379
        %v2387 = vmul.f32 %v2375, %v2383
        %v2388 = vadd.f32 %v2360, %v2384
        %v2389 = vadd.f32 %v2361, %v2385
        %v2390 = vadd.f32 %v2362, %v2386
        %v2391 = vadd.f32 %v2363, %v2387
        %v2392 = vlaneseq
        %v2393 = vshrl.u32 %v2392, 7
        %v2394 = vsub.s32 3, %v2393
        %v2395 = vrot.slane %v2296, %v2394
        %v2396 = vlaneseq
        %v2397 = vshrl.u32 %v2396, 7
        %v2398 = vsub.s32 3, %v2397
        %v2399 = vrot.slane %v2297, %v2398
        %v2400 = vmul.f32 %v1221, %v2395
        %v2401 = vmul.f32 %v1219, %v2399
        %v2402 = vmul.f32 %v1222, %v2395
        %v2403 = vmul.f32 %v1220, %v2399
        %v2404 = vadd.f32 %v2388, %v2400
        %v2405 = vadd.f32 %v2389, %v2401
        %v2406 = vadd.f32 %v2390, %v2402
        %v2407 = vadd.f32 %v2391, %v2403
        %v2408 = vlaneseq
        %v2409 = vshrl.u32 %v2408, 7
        %v2410 = vsub.s32 4, %v2409
        %v2411 = vrot.slane %v2296, %v2410
        %v2412 = vlaneseq
        %v2413 = vshrl.u32 %v2412, 7
        %v2414 = vsub.s32 4, %v2413
        %v2415 = vrot.slane %v2297, %v2414
        %v2416 = vmul.f32 %v1203, %v2411
        %v2417 = vmul.f32 %v1204, %v2415
        %v2418 = vmul.f32 %v1205, %v2411
        %v2419 = vmul.f32 %v1206, %v2415
        %v2420 = vadd.f32 %v2404, %v2416
        %v2421 = vadd.f32 %v2405, %v2417
        %v2422 = vadd.f32 %v2406, %v2418
        %v2423 = vadd.f32 %v2407, %v2419
        %v2424 = vlaneseq
        %v2425 = vshrl.u32 %v2424, 7
        %v2426 = vsub.s32 5, %v2425
        %v2427 = vrot.slane %v2296, %v2426
        %v2428 = vlaneseq
        %v2429 = vshrl.u32 %v2428, 7
        %v2430 = vsub.s32 5, %v2429
        %v2431 = vrot.slane %v2297, %v2430
        %v2432 = vmul.f32 %v1307, %v2427
        %v2433 = vmul.f32 %v1309, %v2431
        %v2434 = vmul.f32 %v1308, %v2427
        %v2435 = vmul.f32 %v1310, %v2431
        %v2436 = vadd.f32 %v2420, %v2432
        %v2437 = vadd.f32 %v2421, %v2433
        %v2438 = vadd.f32 %v2422, %v2434
        %v2439 = vadd.f32 %v2423, %v2435
        %2440 = vrot.lane.b32.xlu0 %v2320, 16
        %v2441 = vpop.permute.xlu0 %2440
        %2442 = vrot.lane.b32.xlu0 %v2322, 16
        %v2443 = vpop.permute.xlu0 %2442
        %2444 = vrot.lane.b32.xlu0 %v2321, 16
        %v2445 = vpop.permute.xlu0 %2444
        %2446 = vrot.lane.b32.xlu0 %v2323, 16
        %v2447 = vpop.permute.xlu0 %2446
        %v2448 = vsel %vm1218, %v2441, %v2445
        %v2449 = vsel %vm1218, %v2443, %v2447
        %v2450 = vsel %vm1218, %v2445, %v2441
        %v2451 = vsel %vm1218, %v2447, %v2443
        %v2452 = vlaneseq
        %v2453 = vshrl.u32 %v2452, 7
        %v2454 = vsub.s32 6, %v2453
        %v2455 = vrot.slane %v2296, %v2454
        %v2456 = vlaneseq
        %v2457 = vshrl.u32 %v2456, 7
        %v2458 = vsub.s32 6, %v2457
        %v2459 = vrot.slane %v2297, %v2458
        %v2460 = vmul.f32 %v2450, %v2455
        %v2461 = vmul.f32 %v2448, %v2459
        %v2462 = vmul.f32 %v2451, %v2455
        %v2463 = vmul.f32 %v2449, %v2459
        %v2464 = vadd.f32 %v2436, %v2460
        %v2465 = vadd.f32 %v2437, %v2461
        %v2466 = vadd.f32 %v2438, %v2462
        %v2467 = vadd.f32 %v2439, %v2463
        %v2468 = vlaneseq
        %v2469 = vshrl.u32 %v2468, 7
        %v2470 = vsub.s32 7, %v2469
        %v2471 = vrot.slane %v2296, %v2470
        %v2472 = vlaneseq
        %v2473 = vshrl.u32 %v2472, 7
        %v2474 = vsub.s32 7, %v2473
        %v2475 = vrot.slane %v2297, %v2474
        %v2476 = vmul.f32 %v2320, %v2471
        %v2477 = vmul.f32 %v2321, %v2475
        %v2478 = vmul.f32 %v2322, %v2471
        %v2479 = vmul.f32 %v2323, %v2475
        %v2480 = vadd.f32 %v2464, %v2476
        %v2481 = vadd.f32 %v2465, %v2477
        %v2482 = vadd.f32 %v2466, %v2478
        %v2483 = vadd.f32 %v2467, %v2479
        %2484 = vrot.lane.b32.xlu0 %v2320, 112
        %v2485 = vpop.permute.xlu0 %2484
        %2486 = vrot.lane.b32.xlu0 %v2322, 112
        %v2487 = vpop.permute.xlu0 %2486
        %2488 = vrot.lane.b32.xlu0 %v2321, 112
        %v2489 = vpop.permute.xlu0 %2488
        %2490 = vrot.lane.b32.xlu0 %v2323, 112
        %v2491 = vpop.permute.xlu0 %2490
        %v2492 = vsel %vm1306, %v2485, %v2489
        %v2493 = vsel %vm1306, %v2487, %v2491
        %v2494 = vsel %vm1306, %v2489, %v2485
        %v2495 = vsel %vm1306, %v2491, %v2487
        %v2496 = vlaneseq
        %v2497 = vshrl.u32 %v2496, 7
        %v2498 = vsub.s32 0, %v2497
        %v2499 = vrot.slane %v2298, %v2498
        %v2500 = vlaneseq
        %v2501 = vshrl.u32 %v2500, 7
        %v2502 = vsub.s32 0, %v2501
        %v2503 = vrot.slane %v2299, %v2502
        %v2504 = vmul.f32 %v2492, %v2499
        %v2505 = vmul.f32 %v2494, %v2503
        %v2506 = vmul.f32 %v2493, %v2499
        %v2507 = vmul.f32 %v2495, %v2503
        %v2508 = vadd.f32 %v2480, %v2504
        %v2509 = vadd.f32 %v2481, %v2505
        %v2510 = vadd.f32 %v2482, %v2506
        %v2511 = vadd.f32 %v2483, %v2507
        %v2512 = vld [vmem:[%s12] sm:$0x3]
        %v2514 = vlaneseq
        %v2515 = vshrl.u32 %v2514, 7
        %v2516 = vsub.s32 0, %v2515
        %v2517 = vrot.slane %v2512, %v2516
        %v2518 = vlaneseq
        %v2519 = vshrl.u32 %v2518, 7
        %v2520 = vsub.s32 1, %v2519
        %v2521 = vrot.slane %v2512, %v2520
        %v2524 = vadd.f32 %v2508, %v2517
        %v2525 = vadd.f32 %v2509, %v2521
        %v2526 = vadd.f32 %v2510, %v2517
        %v2527 = vadd.f32 %v2511, %v2521
        %v2528 = vadd.f32 %v2292, %v2524
        %v2529 = vadd.f32 %v2293, %v2525
        %v2530 = vadd.f32 %v2294, %v2526
        %v2531 = vadd.f32 %v2295, %v2527
        %v2532 = vld [vmem:[%s13] sm:$0x3]
        %v2533 = vld [vmem:[%s14] sm:$0x3]
        %v2534 = vmul.f32 %v2528, %v2528
        %v2535 = vmul.f32 %v2529, %v2529
        %v2536 = vmul.f32 %v2530, %v2530
        %v2537 = vmul.f32 %v2531, %v2531
        %v2538 = vpack.c.bf16 %v2530, %v2528
        %v2539 = vpack.c.bf16 %v2531, %v2529
        %v2540 = vpack.c.bf16 %v2536, %v2534
        %v2541 = vpack.c.bf16 %v2537, %v2535
        %v2542 = vunpack.c.l.bf16 %v2538
        %v2543 = vunpack.c.l.bf16 %v2539
        %v2544 = vunpack.c.h.bf16 %v2538
        %v2545 = vunpack.c.h.bf16 %v2539
        %v2546 = vunpack.c.l.bf16 %v2540
        %v2547 = vunpack.c.l.bf16 %v2541
        %v2548 = vunpack.c.h.bf16 %v2540
        %v2549 = vunpack.c.h.bf16 %v2541
        %v2550 = vsub.f32 %v2528, %v2542
        %v2551 = vsub.f32 %v2529, %v2543
        %v2552 = vsub.f32 %v2530, %v2544
        %v2553 = vsub.f32 %v2531, %v2545
        %v2554 = vsub.f32 %v2534, %v2546
        %v2555 = vsub.f32 %v2535, %v2547
        %v2556 = vsub.f32 %v2536, %v2548
        %v2557 = vsub.f32 %v2537, %v2549
        %v2558 = vpack.c.bf16 %v2552, %v2550
        %v2559 = vpack.c.bf16 %v2553, %v2551
        %v2560 = vpack.c.bf16 %v2556, %v2554
        %v2561 = vpack.c.bf16 %v2557, %v2555
        %2562 = vmatprep.subr.bf16.mxu0 0
        %2563 = vmatpush1.bf16.msra.mxu0 %v872
        %2564 = vmatprep.subr.bf16.mxu0 0
        %2565 = vmatpush1.bf16.msra.mxu0 %v873
        %2566 = vmatprep.subr.bf16.mxu0 0
        %2567 = vmatpush1.bf16.msra.mxu0 %v874
        %2568 = vmatprep.subr.bf16.mxu0 0
        %2569 = vmatpush1.bf16.msra.mxu0 %v875
        %2570 = vmatprep.subr.bf16.mxu0 0
        %2571 = vmatpush1.bf16.msra.mxu0 %v876
        %2572 = vmatprep.subr.bf16.mxu0 0
        %2573 = vmatpush1.bf16.msra.mxu0 %v877
        %2574 = vmatprep.subr.bf16.mxu0 0
        %2575 = vmatpush1.bf16.msra.mxu0 %v878
        %2576 = vmatprep.subr.bf16.mxu0 0
        %2577 = vmatpush1.bf16.msra.mxu0 %v879
        %2578 = vmatprep.subr.bf16.mxu0 0
        %2579 = vmatpush1.bf16.msra.mxu0 %v880
        %2580 = vmatprep.subr.bf16.mxu0 0
        %2581 = vmatpush1.bf16.msra.mxu0 %v881
        %2582 = vmatprep.subr.bf16.mxu0 0
        %2583 = vmatpush1.bf16.msra.mxu0 %v882
        %2584 = vmatprep.subr.bf16.mxu0 0
        %2585 = vmatpush1.bf16.msra.mxu0 %v883
        %2586 = vmatprep.subr.bf16.mxu0 0
        %2587 = vmatpush1.bf16.msra.mxu0 %v884
        %2588 = vmatprep.subr.bf16.mxu0 0
        %2589 = vmatpush1.bf16.msra.mxu0 %v885
        %2590 = vmatprep.subr.bf16.mxu0 0
        %2591 = vmatpush1.bf16.msra.mxu0 %v886
        %2592 = vmatprep.subr.bf16.mxu0 0
        %2593 = vmatpush1.bf16.msra.mxu0 %v887
        %2594 = vmatprep.mubr.bf16.mxu0 %v2559
        %2595 = vmatmul.mubr.bf16.gmra.mrb[0].mxu0 %v2558
        %v2596 = vpop.f32.mrb[0].mxu0
        %v2597 = vadd.f32 0.0, %v2596
        %v2598 = vpop.f32.mrb[0].mxu0
        %v2599 = vpop.f32.mrb[0].mxu0
        %v2600 = vadd.f32 0.0, %v2599
        %v2601 = vpop.f32.mrb[0].mxu0
        %2602 = vmatprep.mubr.bf16.mxu0 %v2561
        %2603 = vmatmul.mubr.bf16.gmra.mrb[0].mxu0 %v2560
        %v2604 = vpop.f32.mrb[0].mxu0
        %v2605 = vadd.f32 0.0, %v2604
        %v2606 = vpop.f32.mrb[0].mxu0
        %v2607 = vpop.f32.mrb[0].mxu0
        %v2608 = vadd.f32 0.0, %v2607
        %v2609 = vpop.f32.mrb[0].mxu0
        %2610 = vdwg.mxu0
        %2611 = vmatprep.subr.bf16.mxu0 0
        %2612 = vmatpush1.bf16.msra.mxu0 %v872
        %2613 = vmatprep.subr.bf16.mxu0 0
        %2614 = vmatpush1.bf16.msra.mxu0 %v873
        %2615 = vmatprep.subr.bf16.mxu0 0
        %2616 = vmatpush1.bf16.msra.mxu0 %v874
        %2617 = vmatprep.subr.bf16.mxu0 0
        %2618 = vmatpush1.bf16.msra.mxu0 %v875
        %2619 = vmatprep.subr.bf16.mxu0 0
        %2620 = vmatpush1.bf16.msra.mxu0 %v876
        %2621 = vmatprep.subr.bf16.mxu0 0
        %2622 = vmatpush1.bf16.msra.mxu0 %v877
        %2623 = vmatprep.subr.bf16.mxu0 0
        %2624 = vmatpush1.bf16.msra.mxu0 %v878
        %2625 = vmatprep.subr.bf16.mxu0 0
        %2626 = vmatpush1.bf16.msra.mxu0 %v879
        %2627 = vmatprep.subr.bf16.mxu0 0
        %2628 = vmatpush1.bf16.msra.mxu0 %v880
        %2629 = vmatprep.subr.bf16.mxu0 0
        %2630 = vmatpush1.bf16.msra.mxu0 %v881
        %2631 = vmatprep.subr.bf16.mxu0 0
        %2632 = vmatpush1.bf16.msra.mxu0 %v882
        %2633 = vmatprep.subr.bf16.mxu0 0
        %2634 = vmatpush1.bf16.msra.mxu0 %v883
        %2635 = vmatprep.subr.bf16.mxu0 0
        %2636 = vmatpush1.bf16.msra.mxu0 %v884
        %2637 = vmatprep.subr.bf16.mxu0 0
        %2638 = vmatpush1.bf16.msra.mxu0 %v885
        %2639 = vmatprep.subr.bf16.mxu0 0
        %2640 = vmatpush1.bf16.msra.mxu0 %v886
        %2641 = vmatprep.subr.bf16.mxu0 0
        %2642 = vmatpush1.bf16.msra.mxu0 %v887
        %2643 = vmatprep.mubr.bf16.mxu0 %v2539
        %2644 = vmatmul.mubr.bf16.gmra.mrb[0].mxu0 %v2538
        %v2645 = vpop.f32.mrb[0].mxu0
        %v2646 = vadd.f32 %v2597, %v2645
        %v2647 = vpop.f32.mrb[0].mxu0
        %v2648 = vpop.f32.mrb[0].mxu0
        %v2649 = vadd.f32 %v2600, %v2648
        %v2650 = vpop.f32.mrb[0].mxu0
        %2651 = vmatprep.mubr.bf16.mxu0 %v2541
        %2652 = vmatmul.mubr.bf16.gmra.mrb[0].mxu0 %v2540
        %v2653 = vpop.f32.mrb[0].mxu0
        %v2654 = vadd.f32 %v2605, %v2653
        %v2655 = vpop.f32.mrb[0].mxu0
        %v2656 = vpop.f32.mrb[0].mxu0
        %v2657 = vadd.f32 %v2608, %v2656
        %v2658 = vpop.f32.mrb[0].mxu0
        %2659 = vdwg.mxu0
        %v2660 = vmul.f32 %v2646, %v2646
        %v2661 = vmul.f32 %v2649, %v2649
        %v2662 = vsub.f32 %v2654, %v2660
        %v2663 = vsub.f32 %v2657, %v2661
        %v2664 = vadd.f32 %v2662, 1e-06
        %v2665 = vadd.f32 %v2663, 1e-06
        %v2666 = vrsqrt.pop %v2664
        %v2667 = vmul.f32 %v2664, %v2666
        %vm2668 = vcmp.eq.f32.partialorder %v2664, inf
        %v2669 = vsel %vm2668, %v2664, %v2667
        %vm2670 = vcmp.eq.f32.partialorder %v2664, 0.0
        %v2671 = vand.u32 %v2664, 2147483648
        %v2672 = vsel %vm2670, %v2671, %v2669
        %v2673 = vrsqrt.pop %v2665
        %v2674 = vmul.f32 %v2665, %v2673
        %vm2675 = vcmp.eq.f32.partialorder %v2665, inf
        %v2676 = vsel %vm2675, %v2665, %v2674
        %vm2677 = vcmp.eq.f32.partialorder %v2665, 0.0
        %v2678 = vand.u32 %v2665, 2147483648
        %v2679 = vsel %vm2677, %v2678, %v2676
        %v2680 = vrcp.pop %v2672
        %v2681 = vmul.f32 1.0, %v2680
        %v2682 = vrcp.pop %v2679
        %v2683 = vmul.f32 1.0, %v2682
        %v2684 = vpack.c.bf16 %v2649, %v2646
        %v2685 = vpack.c.bf16 %v2683, %v2681
        %v2686 = vunpack.c.l.bf16 %v2684
        %v2687 = vunpack.c.h.bf16 %v2684
        %v2688 = vunpack.c.l.bf16 %v2685
        %v2689 = vunpack.c.h.bf16 %v2685
        %v2690 = vsub.f32 %v2646, %v2686
        %v2691 = vsub.f32 %v2649, %v2687
        %v2692 = vsub.f32 %v2681, %v2688
        %v2693 = vsub.f32 %v2683, %v2689
        %v2694 = vpack.c.bf16 %v2691, %v2690
        %v2695 = vpack.c.bf16 %v2693, %v2692
        %v2697 = vsel %vm1050, %v2694, 0
        %v2700 = vsel %vm1050, %v2695, 0
        %2702 = vmatprep.subr.bf16.mxu0 %v1047
        %2703 = vmatpush1.bf16.msra.mxu0 %v1046
        %2704 = vmatprep.subr.bf16.mxu0 0
        %2705 = vmatpush1.bf16.msra.mxu0 0
        %2706 = vmatprep.subr.bf16.mxu0 0
        %2707 = vmatpush1.bf16.msra.mxu0 0
        %2708 = vmatprep.subr.bf16.mxu0 0
        %2709 = vmatpush1.bf16.msra.mxu0 0
        %2710 = vmatprep.subr.bf16.mxu0 0
        %2711 = vmatpush1.bf16.msra.mxu0 0
        %2712 = vmatprep.subr.bf16.mxu0 0
        %2713 = vmatpush1.bf16.msra.mxu0 0
        %2714 = vmatprep.subr.bf16.mxu0 0
        %2715 = vmatpush1.bf16.msra.mxu0 0
        %2716 = vmatprep.subr.bf16.mxu0 0
        %2717 = vmatpush1.bf16.msra.mxu0 0
        %2718 = vmatprep.subr.bf16.mxu0 0
        %2719 = vmatpush1.bf16.msra.mxu0 0
        %2720 = vmatprep.subr.bf16.mxu0 0
        %2721 = vmatpush1.bf16.msra.mxu0 0
        %2722 = vmatprep.subr.bf16.mxu0 0
        %2723 = vmatpush1.bf16.msra.mxu0 0
        %2724 = vmatprep.subr.bf16.mxu0 0
        %2725 = vmatpush1.bf16.msra.mxu0 0
        %2726 = vmatprep.subr.bf16.mxu0 0
        %2727 = vmatpush1.bf16.msra.mxu0 0
        %2728 = vmatprep.subr.bf16.mxu0 0
        %2729 = vmatpush1.bf16.msra.mxu0 0
        %2730 = vmatprep.subr.bf16.mxu0 0
        %2731 = vmatpush1.bf16.msra.mxu0 0
        %2732 = vmatprep.subr.bf16.mxu0 0
        %2733 = vmatpush1.bf16.msra.mxu0 0
        %2734 = vmatprep.mubr.bf16.mxu0 0
        %2735 = vmatmul.mubr.bf16.gmra.mrb[0].mxu0 %v2697
        %v2736 = vpop.f32.mrb[0].mxu0
        %v2737 = vadd.f32 0.0, %v2736
        %v2738 = vpop.f32.mrb[0].mxu0
        %v2739 = vadd.f32 0.0, %v2738
        %v2740 = vpop.f32.mrb[0].mxu0
        %v2741 = vadd.f32 0.0, %v2740
        %v2742 = vpop.f32.mrb[0].mxu0
        %v2743 = vadd.f32 0.0, %v2742
        %2744 = vmatprep.mubr.bf16.mxu0 0
        %2745 = vmatmul.mubr.bf16.gmra.mrb[0].mxu0 %v2700
        %v2746 = vpop.f32.mrb[0].mxu0
        %v2747 = vadd.f32 0.0, %v2746
        %v2748 = vpop.f32.mrb[0].mxu0
        %v2749 = vadd.f32 0.0, %v2748
        %v2750 = vpop.f32.mrb[0].mxu0
        %v2751 = vadd.f32 0.0, %v2750
        %v2752 = vpop.f32.mrb[0].mxu0
        %v2753 = vadd.f32 0.0, %v2752
        %2754 = vdwg.mxu0
        %v2756 = vsel %vm1050, %v2684, 0
        %v2759 = vsel %vm1050, %v2685, 0
        %2761 = vmatprep.subr.bf16.mxu0 %v1047
        %2762 = vmatpush1.bf16.msra.mxu0 %v1046
        %2763 = vmatprep.subr.bf16.mxu0 0
        %2764 = vmatpush1.bf16.msra.mxu0 0
        %2765 = vmatprep.subr.bf16.mxu0 0
        %2766 = vmatpush1.bf16.msra.mxu0 0
        %2767 = vmatprep.subr.bf16.mxu0 0
        %2768 = vmatpush1.bf16.msra.mxu0 0
        %2769 = vmatprep.subr.bf16.mxu0 0
        %2770 = vmatpush1.bf16.msra.mxu0 0
        %2771 = vmatprep.subr.bf16.mxu0 0
        %2772 = vmatpush1.bf16.msra.mxu0 0
        %2773 = vmatprep.subr.bf16.mxu0 0
        %2774 = vmatpush1.bf16.msra.mxu0 0
        %2775 = vmatprep.subr.bf16.mxu0 0
        %2776 = vmatpush1.bf16.msra.mxu0 0
        %2777 = vmatprep.subr.bf16.mxu0 0
        %2778 = vmatpush1.bf16.msra.mxu0 0
        %2779 = vmatprep.subr.bf16.mxu0 0
        %2780 = vmatpush1.bf16.msra.mxu0 0
        %2781 = vmatprep.subr.bf16.mxu0 0
        %2782 = vmatpush1.bf16.msra.mxu0 0
        %2783 = vmatprep.subr.bf16.mxu0 0
        %2784 = vmatpush1.bf16.msra.mxu0 0
        %2785 = vmatprep.subr.bf16.mxu0 0
        %2786 = vmatpush1.bf16.msra.mxu0 0
        %2787 = vmatprep.subr.bf16.mxu0 0
        %2788 = vmatpush1.bf16.msra.mxu0 0
        %2789 = vmatprep.subr.bf16.mxu0 0
        %2790 = vmatpush1.bf16.msra.mxu0 0
        %2791 = vmatprep.subr.bf16.mxu0 0
        %2792 = vmatpush1.bf16.msra.mxu0 0
        %2793 = vmatprep.mubr.bf16.mxu0 0
        %2794 = vmatmul.mubr.bf16.gmra.mrb[0].mxu0 %v2756
        %v2795 = vpop.f32.mrb[0].mxu0
        %v2796 = vadd.f32 %v2737, %v2795
        %v2797 = vpop.f32.mrb[0].mxu0
        %v2798 = vadd.f32 %v2739, %v2797
        %v2799 = vpop.f32.mrb[0].mxu0
        %v2800 = vadd.f32 %v2741, %v2799
        %v2801 = vpop.f32.mrb[0].mxu0
        %v2802 = vadd.f32 %v2743, %v2801
        %2803 = vmatprep.mubr.bf16.mxu0 0
        %2804 = vmatmul.mubr.bf16.gmra.mrb[0].mxu0 %v2759
        %v2805 = vpop.f32.mrb[0].mxu0
        %v2806 = vadd.f32 %v2747, %v2805
        %v2807 = vpop.f32.mrb[0].mxu0
        %v2808 = vadd.f32 %v2749, %v2807
        %v2809 = vpop.f32.mrb[0].mxu0
        %v2810 = vadd.f32 %v2751, %v2809
        %v2811 = vpop.f32.mrb[0].mxu0
        %v2812 = vadd.f32 %v2753, %v2811
        %2813 = vdwg.mxu0
        %v2814 = vsub.f32 %v2528, %v2796
        %v2815 = vsub.f32 %v2529, %v2798
        %v2816 = vsub.f32 %v2530, %v2800
        %v2817 = vsub.f32 %v2531, %v2802
        %v2818 = vmul.f32 %v2814, %v2806
        %v2819 = vmul.f32 %v2815, %v2808
        %v2820 = vmul.f32 %v2816, %v2810
        %v2821 = vmul.f32 %v2817, %v2812
        %v2823 = vlaneseq
        %v2824 = vshrl.u32 %v2823, 7
        %v2825 = vsub.s32 0, %v2824
        %v2826 = vrot.slane %v2532, %v2825
        %v2827 = vlaneseq
        %v2828 = vshrl.u32 %v2827, 7
        %v2829 = vsub.s32 1, %v2828
        %v2830 = vrot.slane %v2532, %v2829
        %v2833 = vmul.f32 %v2818, %v2826
        %v2834 = vmul.f32 %v2819, %v2830
        %v2835 = vmul.f32 %v2820, %v2826
        %v2836 = vmul.f32 %v2821, %v2830
        %v2838 = vlaneseq
        %v2839 = vshrl.u32 %v2838, 7
        %v2840 = vsub.s32 0, %v2839
        %v2841 = vrot.slane %v2533, %v2840
        %v2842 = vlaneseq
        %v2843 = vshrl.u32 %v2842, 7
        %v2844 = vsub.s32 1, %v2843
        %v2845 = vrot.slane %v2533, %v2844
        %v2848 = vadd.f32 %v2833, %v2841
        %v2849 = vadd.f32 %v2834, %v2845
        %v2850 = vadd.f32 %v2835, %v2841
        %v2851 = vadd.f32 %v2836, %v2845
        %v2852 = vld [vmem:[%s15] sm:$0xff]
        %v2853 = vld [vmem:[%s15 + $0x8] sm:$0xff]
        %v2854 = vld [vmem:[%s15 + $0x10] sm:$0x1]
        %v2855 = vld [vmem:[%s15 + $0x18] sm:$0x1]
        %v2856 = vrot.slane %v2848, 7
        %v2857 = vrot.slane %v2849, 7
        %v2858 = vrot.slane %v2850, 7
        %v2859 = vrot.slane %v2851, 7
        %v2860 = vsel %vm1227, %v2856, %v2858
        %v2861 = vsel %vm1227, %v2857, %v2859
        %v2862 = vsel %vm1227, %v2858, %v2856
        %v2863 = vsel %vm1227, %v2859, %v2857
        %v2864 = vmul.f32 %v2862, %v738
        %v2865 = vmul.f32 %v2863, %v738
        %v2866 = vmul.f32 %v2860, %v739
        %v2867 = vmul.f32 %v2861, %v739
        %v2868 = vrot.slane %v2848, 1
        %v2869 = vrot.slane %v2849, 1
        %v2870 = vrot.slane %v2850, 1
        %v2871 = vrot.slane %v2851, 1
        %v2872 = vsel %vm1263, %v2868, %v2870
        %v2873 = vsel %vm1263, %v2869, %v2871
        %v2874 = vsel %vm1263, %v2870, %v2868
        %v2875 = vsel %vm1263, %v2871, %v2869
        %v2876 = vmul.f32 %v2872, %v744
        %v2877 = vmul.f32 %v2873, %v744
        %v2878 = vmul.f32 %v2874, %v745
        %v2879 = vmul.f32 %v2875, %v745
        %2880 = vrot.lane.b32.xlu0 %v2864, 16
        %v2881 = vpop.permute.xlu0 %2880
        %2882 = vrot.lane.b32.xlu0 %v2866, 16
        %v2883 = vpop.permute.xlu0 %2882
        %2884 = vrot.lane.b32.xlu0 %v2865, 16
        %v2885 = vpop.permute.xlu0 %2884
        %2886 = vrot.lane.b32.xlu0 %v2867, 16
        %v2887 = vpop.permute.xlu0 %2886
        %v2888 = vsel %vm1218, %v2881, %v2885
        %v2889 = vsel %vm1218, %v2883, %v2887
        %v2890 = vsel %vm1218, %v2885, %v2881
        %v2891 = vsel %vm1218, %v2887, %v2883
        %v2892 = vlaneseq
        %v2893 = vshrl.u32 %v2892, 7
        %v2894 = vsub.s32 0, %v2893
        %v2895 = vrot.slane %v2852, %v2894
        %v2896 = vlaneseq
        %v2897 = vshrl.u32 %v2896, 7
        %v2898 = vsub.s32 0, %v2897
        %v2899 = vrot.slane %v2853, %v2898
        %v2900 = vmul.f32 %v2890, %v2895
        %v2901 = vmul.f32 %v2888, %v2899
        %v2902 = vmul.f32 %v2891, %v2895
        %v2903 = vmul.f32 %v2889, %v2899
        %v2904 = vlaneseq
        %v2905 = vshrl.u32 %v2904, 7
        %v2906 = vsub.s32 1, %v2905
        %v2907 = vrot.slane %v2852, %v2906
        %v2908 = vlaneseq
        %v2909 = vshrl.u32 %v2908, 7
        %v2910 = vsub.s32 1, %v2909
        %v2911 = vrot.slane %v2853, %v2910
        %v2912 = vmul.f32 %v2864, %v2907
        %v2913 = vmul.f32 %v2865, %v2911
        %v2914 = vmul.f32 %v2866, %v2907
        %v2915 = vmul.f32 %v2867, %v2911
        %v2916 = vadd.f32 %v2900, %v2912
        %v2917 = vadd.f32 %v2901, %v2913
        %v2918 = vadd.f32 %v2902, %v2914
        %v2919 = vadd.f32 %v2903, %v2915
        %2920 = vrot.lane.b32.xlu0 %v2864, 112
        %v2921 = vpop.permute.xlu0 %2920
        %2922 = vrot.lane.b32.xlu0 %v2866, 112
        %v2923 = vpop.permute.xlu0 %2922
        %2924 = vrot.lane.b32.xlu0 %v2865, 112
        %v2925 = vpop.permute.xlu0 %2924
        %2926 = vrot.lane.b32.xlu0 %v2867, 112
        %v2927 = vpop.permute.xlu0 %2926
        %v2928 = vsel %vm1306, %v2921, %v2925
        %v2929 = vsel %vm1306, %v2923, %v2927
        %v2930 = vsel %vm1306, %v2925, %v2921
        %v2931 = vsel %vm1306, %v2927, %v2923
        %v2932 = vlaneseq
        %v2933 = vshrl.u32 %v2932, 7
        %v2934 = vsub.s32 2, %v2933
        %v2935 = vrot.slane %v2852, %v2934
        %v2936 = vlaneseq
        %v2937 = vshrl.u32 %v2936, 7
        %v2938 = vsub.s32 2, %v2937
        %v2939 = vrot.slane %v2853, %v2938
        %v2940 = vmul.f32 %v2928, %v2935
        %v2941 = vmul.f32 %v2930, %v2939
        %v2942 = vmul.f32 %v2929, %v2935
        %v2943 = vmul.f32 %v2931, %v2939
        %v2944 = vadd.f32 %v2916, %v2940
        %v2945 = vadd.f32 %v2917, %v2941
        %v2946 = vadd.f32 %v2918, %v2942
        %v2947 = vadd.f32 %v2919, %v2943
        %2948 = vrot.lane.b32.xlu0 %v2848, 16
        %v2949 = vpop.permute.xlu0 %2948
        %2950 = vrot.lane.b32.xlu0 %v2850, 16
        %v2951 = vpop.permute.xlu0 %2950
        %2952 = vrot.lane.b32.xlu0 %v2849, 16
        %v2953 = vpop.permute.xlu0 %2952
        %2954 = vrot.lane.b32.xlu0 %v2851, 16
        %v2955 = vpop.permute.xlu0 %2954
        %v2956 = vsel %vm1218, %v2949, %v2953
        %v2957 = vsel %vm1218, %v2951, %v2955
        %v2958 = vsel %vm1218, %v2953, %v2949
        %v2959 = vsel %vm1218, %v2955, %v2951
        %v2960 = vlaneseq
        %v2961 = vshrl.u32 %v2960, 7
        %v2962 = vsub.s32 3, %v2961
        %v2963 = vrot.slane %v2852, %v2962
        %v2964 = vlaneseq
        %v2965 = vshrl.u32 %v2964, 7
        %v2966 = vsub.s32 3, %v2965
        %v2967 = vrot.slane %v2853, %v2966
        %v2968 = vmul.f32 %v2958, %v2963
        %v2969 = vmul.f32 %v2956, %v2967
        %v2970 = vmul.f32 %v2959, %v2963
        %v2971 = vmul.f32 %v2957, %v2967
        %v2972 = vadd.f32 %v2944, %v2968
        %v2973 = vadd.f32 %v2945, %v2969
        %v2974 = vadd.f32 %v2946, %v2970
        %v2975 = vadd.f32 %v2947, %v2971
        %v2976 = vlaneseq
        %v2977 = vshrl.u32 %v2976, 7
        %v2978 = vsub.s32 4, %v2977
        %v2979 = vrot.slane %v2852, %v2978
        %v2980 = vlaneseq
        %v2981 = vshrl.u32 %v2980, 7
        %v2982 = vsub.s32 4, %v2981
        %v2983 = vrot.slane %v2853, %v2982
        %v2984 = vmul.f32 %v2848, %v2979
        %v2985 = vmul.f32 %v2849, %v2983
        %v2986 = vmul.f32 %v2850, %v2979
        %v2987 = vmul.f32 %v2851, %v2983
        %v2988 = vadd.f32 %v2972, %v2984
        %v2989 = vadd.f32 %v2973, %v2985
        %v2990 = vadd.f32 %v2974, %v2986
        %v2991 = vadd.f32 %v2975, %v2987
        %2992 = vrot.lane.b32.xlu0 %v2848, 112
        %v2993 = vpop.permute.xlu0 %2992
        %2994 = vrot.lane.b32.xlu0 %v2850, 112
        %v2995 = vpop.permute.xlu0 %2994
        %2996 = vrot.lane.b32.xlu0 %v2849, 112
        %v2997 = vpop.permute.xlu0 %2996
        %2998 = vrot.lane.b32.xlu0 %v2851, 112
        %v2999 = vpop.permute.xlu0 %2998
        %v3000 = vsel %vm1306, %v2993, %v2997
        %v3001 = vsel %vm1306, %v2995, %v2999
        %v3002 = vsel %vm1306, %v2997, %v2993
        %v3003 = vsel %vm1306, %v2999, %v2995
        %v3004 = vlaneseq
        %v3005 = vshrl.u32 %v3004, 7
        %v3006 = vsub.s32 5, %v3005
        %v3007 = vrot.slane %v2852, %v3006
        %v3008 = vlaneseq
        %v3009 = vshrl.u32 %v3008, 7
        %v3010 = vsub.s32 5, %v3009
        %v3011 = vrot.slane %v2853, %v3010
        %v3012 = vmul.f32 %v3000, %v3007
        %v3013 = vmul.f32 %v3002, %v3011
        %v3014 = vmul.f32 %v3001, %v3007
        %v3015 = vmul.f32 %v3003, %v3011
        %v3016 = vadd.f32 %v2988, %v3012
        %v3017 = vadd.f32 %v2989, %v3013
        %v3018 = vadd.f32 %v2990, %v3014
        %v3019 = vadd.f32 %v2991, %v3015
        %3020 = vrot.lane.b32.xlu0 %v2876, 16
        %v3021 = vpop.permute.xlu0 %3020
        %3022 = vrot.lane.b32.xlu0 %v2878, 16
        %v3023 = vpop.permute.xlu0 %3022
        %3024 = vrot.lane.b32.xlu0 %v2877, 16
        %v3025 = vpop.permute.xlu0 %3024
        %3026 = vrot.lane.b32.xlu0 %v2879, 16
        %v3027 = vpop.permute.xlu0 %3026
        %v3028 = vsel %vm1218, %v3021, %v3025
        %v3029 = vsel %vm1218, %v3023, %v3027
        %v3030 = vsel %vm1218, %v3025, %v3021
        %v3031 = vsel %vm1218, %v3027, %v3023
        %v3032 = vlaneseq
        %v3033 = vshrl.u32 %v3032, 7
        %v3034 = vsub.s32 6, %v3033
        %v3035 = vrot.slane %v2852, %v3034
        %v3036 = vlaneseq
        %v3037 = vshrl.u32 %v3036, 7
        %v3038 = vsub.s32 6, %v3037
        %v3039 = vrot.slane %v2853, %v3038
        %v3040 = vmul.f32 %v3030, %v3035
        %v3041 = vmul.f32 %v3028, %v3039
        %v3042 = vmul.f32 %v3031, %v3035
        %v3043 = vmul.f32 %v3029, %v3039
        %v3044 = vadd.f32 %v3016, %v3040
        %v3045 = vadd.f32 %v3017, %v3041
        %v3046 = vadd.f32 %v3018, %v3042
        %v3047 = vadd.f32 %v3019, %v3043
        %v3048 = vlaneseq
        %v3049 = vshrl.u32 %v3048, 7
        %v3050 = vsub.s32 7, %v3049
        %v3051 = vrot.slane %v2852, %v3050
        %v3052 = vlaneseq
        %v3053 = vshrl.u32 %v3052, 7
        %v3054 = vsub.s32 7, %v3053
        %v3055 = vrot.slane %v2853, %v3054
        %v3056 = vmul.f32 %v2876, %v3051
        %v3057 = vmul.f32 %v2877, %v3055
        %v3058 = vmul.f32 %v2878, %v3051
        %v3059 = vmul.f32 %v2879, %v3055
        %v3060 = vadd.f32 %v3044, %v3056
        %v3061 = vadd.f32 %v3045, %v3057
        %v3062 = vadd.f32 %v3046, %v3058
        %v3063 = vadd.f32 %v3047, %v3059
        %3064 = vrot.lane.b32.xlu0 %v2876, 112
        %v3065 = vpop.permute.xlu0 %3064
        %3066 = vrot.lane.b32.xlu0 %v2878, 112
        %v3067 = vpop.permute.xlu0 %3066
        %3068 = vrot.lane.b32.xlu0 %v2877, 112
        %v3069 = vpop.permute.xlu0 %3068
        %3070 = vrot.lane.b32.xlu0 %v2879, 112
        %v3071 = vpop.permute.xlu0 %3070
        %v3072 = vsel %vm1306, %v3065, %v3069
        %v3073 = vsel %vm1306, %v3067, %v3071
        %v3074 = vsel %vm1306, %v3069, %v3065
        %v3075 = vsel %vm1306, %v3071, %v3067
        %v3076 = vlaneseq
        %v3077 = vshrl.u32 %v3076, 7
        %v3078 = vsub.s32 0, %v3077
        %v3079 = vrot.slane %v2854, %v3078
        %v3080 = vlaneseq
        %v3081 = vshrl.u32 %v3080, 7
        %v3082 = vsub.s32 0, %v3081
        %v3083 = vrot.slane %v2855, %v3082
        %v3084 = vmul.f32 %v3072, %v3079
        %v3085 = vmul.f32 %v3074, %v3083
        %v3086 = vmul.f32 %v3073, %v3079
        %v3087 = vmul.f32 %v3075, %v3083
        %v3088 = vadd.f32 %v3060, %v3084
        %v3089 = vadd.f32 %v3061, %v3085
        %v3090 = vadd.f32 %v3062, %v3086
        %v3091 = vadd.f32 %v3063, %v3087
        %v3092 = vld [vmem:[%s16] sm:$0x3]
        %v3094 = vlaneseq
        %v3095 = vshrl.u32 %v3094, 7
        %v3096 = vsub.s32 0, %v3095
        %v3097 = vrot.slane %v3092, %v3096
        %v3098 = vlaneseq
        %v3099 = vshrl.u32 %v3098, 7
        %v3100 = vsub.s32 1, %v3099
        %v3101 = vrot.slane %v3092, %v3100
        %v3104 = vadd.f32 %v3088, %v3097
        %v3105 = vadd.f32 %v3089, %v3101
        %v3106 = vadd.f32 %v3090, %v3097
        %v3107 = vadd.f32 %v3091, %v3101
        %v3108 = vmul.f32 %v3104, 0.5
        %v3109 = vmul.f32 %v3105, 0.5
        %v3110 = vmul.f32 %v3106, 0.5
        %v3111 = vmul.f32 %v3107, 0.5
        %v3112 = vmul.f32 %v3104, 0.70710677
        %v3113 = vmul.f32 %v3105, 0.70710677
        %v3114 = vmul.f32 %v3106, 0.70710677
        %v3115 = vmul.f32 %v3107, 0.70710677
        %v3116 = vand.u32 2147483647, %v3112
        %v3117 = vand.u32 2147483647, %v3113
        %v3118 = vand.u32 2147483647, %v3114
        %v3119 = vand.u32 2147483647, %v3115
        %v3120 = vmul.f32 %v3116, 0.3275911
        %v3121 = vmul.f32 %v3117, 0.3275911
        %v3122 = vmul.f32 %v3118, 0.3275911
        %v3123 = vmul.f32 %v3119, 0.3275911
        %v3124 = vadd.f32 %v3120, 1.0
        %v3125 = vadd.f32 %v3121, 1.0
        %v3126 = vadd.f32 %v3122, 1.0
        %v3127 = vadd.f32 %v3123, 1.0
        %v3128 = vrcp.pop %v3124
        %v3129 = vmul.f32 1.0, %v3128
        %v3130 = vrcp.pop %v3125
        %v3131 = vmul.f32 1.0, %v3130
        %v3132 = vrcp.pop %v3126
        %v3133 = vmul.f32 1.0, %v3132
        %v3134 = vrcp.pop %v3127
        %v3135 = vmul.f32 1.0, %v3134
        %v3136 = vmul.f32 %v3129, 1.0614054
        %v3137 = vmul.f32 %v3131, 1.0614054
        %v3138 = vmul.f32 %v3133, 1.0614054
        %v3139 = vmul.f32 %v3135, 1.0614054
        %v3140 = vadd.f32 %v3136, -1.4531521
        %v3141 = vadd.f32 %v3137, -1.4531521
        %v3142 = vadd.f32 %v3138, -1.4531521
        %v3143 = vadd.f32 %v3139, -1.4531521
        %v3144 = vmul.f32 %v3129, %v3140
        %v3145 = vmul.f32 %v3131, %v3141
        %v3146 = vmul.f32 %v3133, %v3142
        %v3147 = vmul.f32 %v3135, %v3143
        %v3148 = vadd.f32 %v3144, 1.4214138
        %v3149 = vadd.f32 %v3145, 1.4214138
        %v3150 = vadd.f32 %v3146, 1.4214138
        %v3151 = vadd.f32 %v3147, 1.4214138
        %v3152 = vmul.f32 %v3129, %v3148
        %v3153 = vmul.f32 %v3131, %v3149
        %v3154 = vmul.f32 %v3133, %v3150
        %v3155 = vmul.f32 %v3135, %v3151
        %v3156 = vadd.f32 %v3152, -0.28449672
        %v3157 = vadd.f32 %v3153, -0.28449672
        %v3158 = vadd.f32 %v3154, -0.28449672
        %v3159 = vadd.f32 %v3155, -0.28449672
        %v3160 = vmul.f32 %v3129, %v3156
        %v3161 = vmul.f32 %v3131, %v3157
        %v3162 = vmul.f32 %v3133, %v3158
        %v3163 = vmul.f32 %v3135, %v3159
        %v3164 = vadd.f32 %v3160, 0.2548296
        %v3165 = vadd.f32 %v3161, 0.2548296
        %v3166 = vadd.f32 %v3162, 0.2548296
        %v3167 = vadd.f32 %v3163, 0.2548296
        %v3168 = vmul.f32 %v3129, %v3164
        %v3169 = vmul.f32 %v3131, %v3165
        %v3170 = vmul.f32 %v3133, %v3166
        %v3171 = vmul.f32 %v3135, %v3167
        %v3172 = vsub.f32 0.0, %v3116
        %v3173 = vsub.f32 0.0, %v3117
        %v3174 = vsub.f32 0.0, %v3118
        %v3175 = vsub.f32 0.0, %v3119
        %v3176 = vmul.f32 %v3172, %v3116
        %v3177 = vmul.f32 %v3173, %v3117
        %v3178 = vmul.f32 %v3174, %v3118
        %v3179 = vmul.f32 %v3175, %v3119
        %v3180 = vmul.f32 %v3176, 1.442695
        %v3181 = vpow.pop %v3180
        %v3182 = vmul.f32 %v3177, 1.442695
        %v3183 = vpow.pop %v3182
        %v3184 = vmul.f32 %v3178, 1.442695
        %v3185 = vpow.pop %v3184
        %v3186 = vmul.f32 %v3179, 1.442695
        %v3187 = vpow.pop %v3186
        %v3188 = vmul.f32 %v3168, %v3181
        %v3189 = vmul.f32 %v3169, %v3183
        %v3190 = vmul.f32 %v3170, %v3185
        %v3191 = vmul.f32 %v3171, %v3187
        %v3192 = vsub.f32 1.0, %v3188
        %v3193 = vsub.f32 1.0, %v3189
        %v3194 = vsub.f32 1.0, %v3190
        %v3195 = vsub.f32 1.0, %v3191
        %vm3196 = vcmp.lt.f32.partialorder %v3112, 0.0
        %vm3197 = vcmp.lt.f32.partialorder %v3113, 0.0
        %vm3198 = vcmp.lt.f32.partialorder %v3114, 0.0
        %vm3199 = vcmp.lt.f32.partialorder %v3115, 0.0
        %v3200 = vsub.f32 0.0, %v3192
        %v3201 = vsub.f32 0.0, %v3193
        %v3202 = vsub.f32 0.0, %v3194
        %v3203 = vsub.f32 0.0, %v3195
        %v3204 = vsel %vm3196, %v3200, %v3192
        %v3205 = vsel %vm3197, %v3201, %v3193
        %v3206 = vsel %vm3198, %v3202, %v3194
        %v3207 = vsel %vm3199, %v3203, %v3195
        %v3208 = vadd.f32 %v3204, 1.0
        %v3209 = vadd.f32 %v3205, 1.0
        %v3210 = vadd.f32 %v3206, 1.0
        %v3211 = vadd.f32 %v3207, 1.0
        %v3212 = vmul.f32 %v3108, %v3208
        %v3213 = vmul.f32 %v3109, %v3209
        %v3214 = vmul.f32 %v3110, %v3210
        %v3215 = vmul.f32 %v3111, %v3211
        %v3216 = vpack.c.bf16 %v3214, %v3212
        %v3217 = vpack.c.bf16 %v3215, %v3213
        %v3218 = vunpack.c.l.bf16 %v3216
        %v3219 = vunpack.c.l.bf16 %v3217
        %v3220 = vunpack.c.h.bf16 %v3216
        %v3221 = vunpack.c.h.bf16 %v3217
        %v3222 = vsub.f32 %v3212, %v3218
        %v3223 = vsub.f32 %v3213, %v3219
        %v3224 = vsub.f32 %v3214, %v3220
        %v3225 = vsub.f32 %v3215, %v3221
        %v3226 = vpack.c.bf16 %v3224, %v3222
        %v3227 = vpack.c.bf16 %v3225, %v3223
        %v3228 = vld [vmem:[#allocation11] sm:$0xff]
        %v3229 = vld [vmem:[#allocation11 + $0x8] sm:$0xff]
        %v3230 = vld [vmem:[#allocation11 + $0x10] sm:$0xff]
        %v3231 = vld [vmem:[#allocation11 + $0x18] sm:$0xff]
        %v3232 = vld [vmem:[#allocation11 + $0x20] sm:$0xff]
        %v3233 = vld [vmem:[#allocation11 + $0x28] sm:$0xff]
        %v3234 = vld [vmem:[#allocation11 + $0x30] sm:$0xff]
        %v3235 = vld [vmem:[#allocation11 + $0x38] sm:$0xff]
        %v3236 = vld [vmem:[#allocation11 + $0x40] sm:$0xff]
        %v3237 = vld [vmem:[#allocation11 + $0x48] sm:$0xff]
        %v3238 = vld [vmem:[#allocation11 + $0x50] sm:$0xff]
        %v3239 = vld [vmem:[#allocation11 + $0x58] sm:$0xff]
        %v3240 = vld [vmem:[#allocation11 + $0x60] sm:$0xff]
        %v3241 = vld [vmem:[#allocation11 + $0x68] sm:$0xff]
        %v3242 = vld [vmem:[#allocation11 + $0x70] sm:$0xff]
        %v3243 = vld [vmem:[#allocation11 + $0x78] sm:$0xff]
        %v3244 = vld [vmem:[#allocation11 + $0x80] sm:$0xff]
        %v3245 = vld [vmem:[#allocation11 + $0x88] sm:$0xff]
        %v3246 = vld [vmem:[#allocation11 + $0x90] sm:$0xff]
        %v3247 = vld [vmem:[#allocation11 + $0x98] sm:$0xff]
        %v3248 = vld [vmem:[#allocation11 + $0xa0] sm:$0xff]
        %v3249 = vld [vmem:[#allocation11 + $0xa8] sm:$0xff]
        %v3250 = vld [vmem:[#allocation11 + $0xb0] sm:$0xff]
        %v3251 = vld [vmem:[#allocation11 + $0xb8] sm:$0xff]
        %v3252 = vld [vmem:[#allocation11 + $0xc0] sm:$0xff]
        %v3253 = vld [vmem:[#allocation11 + $0xc8] sm:$0xff]
        %v3254 = vld [vmem:[#allocation11 + $0xd0] sm:$0xff]
        %v3255 = vld [vmem:[#allocation11 + $0xd8] sm:$0xff]
        %v3256 = vld [vmem:[#allocation11 + $0xe0] sm:$0xff]
        %v3257 = vld [vmem:[#allocation11 + $0xe8] sm:$0xff]
        %v3258 = vld [vmem:[#allocation11 + $0xf0] sm:$0xff]
        %v3259 = vld [vmem:[#allocation11 + $0xf8] sm:$0xff]
        %v3292 = vunpack.c.l.b16 %v3228
        %v3293 = vunpack.c.h.b16 %v3228
        %v3294 = vunpack.c.l.b16 %v3229
        %v3295 = vunpack.c.h.b16 %v3229
        %v3296 = vunpack.c.l.b16 %v3230
        %v3297 = vunpack.c.h.b16 %v3230
        %v3298 = vunpack.c.l.b16 %v3231
        %v3299 = vunpack.c.h.b16 %v3231
        %v3300 = vunpack.c.l.b16 %v3232
        %v3301 = vunpack.c.h.b16 %v3232
        %v3302 = vunpack.c.l.b16 %v3233
        %v3303 = vunpack.c.h.b16 %v3233
        %v3304 = vunpack.c.l.b16 %v3234
        %v3305 = vunpack.c.h.b16 %v3234
        %v3306 = vunpack.c.l.b16 %v3235
        %v3307 = vunpack.c.h.b16 %v3235
        %v3308 = vunpack.c.l.b16 %v3236
        %v3309 = vunpack.c.h.b16 %v3236
        %v3310 = vunpack.c.l.b16 %v3237
        %v3311 = vunpack.c.h.b16 %v3237
        %v3312 = vunpack.c.l.b16 %v3238
        %v3313 = vunpack.c.h.b16 %v3238
        %v3314 = vunpack.c.l.b16 %v3239
        %v3315 = vunpack.c.h.b16 %v3239
        %v3316 = vunpack.c.l.b16 %v3240
        %v3317 = vunpack.c.h.b16 %v3240
        %v3318 = vunpack.c.l.b16 %v3241
        %v3319 = vunpack.c.h.b16 %v3241
        %v3320 = vunpack.c.l.b16 %v3242
        %v3321 = vunpack.c.h.b16 %v3242
        %v3322 = vunpack.c.l.b16 %v3243
        %v3323 = vunpack.c.h.b16 %v3243
        %v3324 = vunpack.c.l.b16 %v3244
        %v3325 = vunpack.c.h.b16 %v3244
        %v3326 = vunpack.c.l.b16 %v3245
        %v3327 = vunpack.c.h.b16 %v3245
        %v3328 = vunpack.c.l.b16 %v3246
        %v3329 = vunpack.c.h.b16 %v3246
        %v3330 = vunpack.c.l.b16 %v3247
        %v3331 = vunpack.c.h.b16 %v3247
        %v3332 = vunpack.c.l.b16 %v3248
        %v3333 = vunpack.c.h.b16 %v3248
        %v3334 = vunpack.c.l.b16 %v3249
        %v3335 = vunpack.c.h.b16 %v3249
        %v3336 = vunpack.c.l.b16 %v3250
        %v3337 = vunpack.c.h.b16 %v3250
        %v3338 = vunpack.c.l.b16 %v3251
        %v3339 = vunpack.c.h.b16 %v3251
        %v3340 = vunpack.c.l.b16 %v3252
        %v3341 = vunpack.c.h.b16 %v3252
        %v3342 = vunpack.c.l.b16 %v3253
        %v3343 = vunpack.c.h.b16 %v3253
        %v3344 = vunpack.c.l.b16 %v3254
        %v3345 = vunpack.c.h.b16 %v3254
        %v3346 = vunpack.c.l.b16 %v3255
        %v3347 = vunpack.c.h.b16 %v3255
        %v3348 = vunpack.c.l.b16 %v3256
        %v3349 = vunpack.c.h.b16 %v3256
        %v3350 = vunpack.c.l.b16 %v3257
        %v3351 = vunpack.c.h.b16 %v3257
        %v3352 = vunpack.c.l.b16 %v3258
        %v3353 = vunpack.c.h.b16 %v3258
        %v3354 = vunpack.c.l.b16 %v3259
        %v3355 = vunpack.c.h.b16 %v3259
        %v3356 = vpack.c.b16 %v3294, %v3292
        %v3357 = vpack.c.b16 %v3295, %v3293
        %v3358 = vpack.c.b16 %v3298, %v3296
        %v3359 = vpack.c.b16 %v3299, %v3297
        %v3360 = vpack.c.b16 %v3302, %v3300
        %v3361 = vpack.c.b16 %v3303, %v3301
        %v3362 = vpack.c.b16 %v3306, %v3304
        %v3363 = vpack.c.b16 %v3307, %v3305
        %v3364 = vpack.c.b16 %v3310, %v3308
        %v3365 = vpack.c.b16 %v3311, %v3309
        %v3366 = vpack.c.b16 %v3314, %v3312
        %v3367 = vpack.c.b16 %v3315, %v3313
        %v3368 = vpack.c.b16 %v3318, %v3316
        %v3369 = vpack.c.b16 %v3319, %v3317
        %v3370 = vpack.c.b16 %v3322, %v3320
        %v3371 = vpack.c.b16 %v3323, %v3321
        %v3372 = vpack.c.b16 %v3326, %v3324
        %v3373 = vpack.c.b16 %v3327, %v3325
        %v3374 = vpack.c.b16 %v3330, %v3328
        %v3375 = vpack.c.b16 %v3331, %v3329
        %v3376 = vpack.c.b16 %v3334, %v3332
        %v3377 = vpack.c.b16 %v3335, %v3333
        %v3378 = vpack.c.b16 %v3338, %v3336
        %v3379 = vpack.c.b16 %v3339, %v3337
        %v3380 = vpack.c.b16 %v3342, %v3340
        %v3381 = vpack.c.b16 %v3343, %v3341
        %v3382 = vpack.c.b16 %v3346, %v3344
        %v3383 = vpack.c.b16 %v3347, %v3345
        %v3384 = vpack.c.b16 %v3350, %v3348
        %v3385 = vpack.c.b16 %v3351, %v3349
        %v3386 = vpack.c.b16 %v3354, %v3352
        %v3387 = vpack.c.b16 %v3355, %v3353
        %3420 = vmatprep.subr.bf16.mxu0 %v3357
        %3421 = vmatpush1.bf16.msra.mxu0 %v3356
        %3422 = vmatprep.subr.bf16.mxu0 %v3359
        %3423 = vmatpush1.bf16.msra.mxu0 %v3358
        %3424 = vmatprep.subr.bf16.mxu0 %v3361
        %3425 = vmatpush1.bf16.msra.mxu0 %v3360
        %3426 = vmatprep.subr.bf16.mxu0 %v3363
        %3427 = vmatpush1.bf16.msra.mxu0 %v3362
        %3428 = vmatprep.subr.bf16.mxu0 %v3365
        %3429 = vmatpush1.bf16.msra.mxu0 %v3364
        %3430 = vmatprep.subr.bf16.mxu0 %v3367
        %3431 = vmatpush1.bf16.msra.mxu0 %v3366
        %3432 = vmatprep.subr.bf16.mxu0 %v3369
        %3433 = vmatpush1.bf16.msra.mxu0 %v3368
        %3434 = vmatprep.subr.bf16.mxu0 %v3371
        %3435 = vmatpush1.bf16.msra.mxu0 %v3370
        %3436 = vmatprep.subr.bf16.mxu0 %v3373
        %3437 = vmatpush1.bf16.msra.mxu0 %v3372
        %3438 = vmatprep.subr.bf16.mxu0 %v3375
        %3439 = vmatpush1.bf16.msra.mxu0 %v3374
        %3440 = vmatprep.subr.bf16.mxu0 %v3377
        %3441 = vmatpush1.bf16.msra.mxu0 %v3376
        %3442 = vmatprep.subr.bf16.mxu0 %v3379
        %3443 = vmatpush1.bf16.msra.mxu0 %v3378
        %3444 = vmatprep.subr.bf16.mxu0 %v3381
        %3445 = vmatpush1.bf16.msra.mxu0 %v3380
        %3446 = vmatprep.subr.bf16.mxu0 %v3383
        %3447 = vmatpush1.bf16.msra.mxu0 %v3382
        %3448 = vmatprep.subr.bf16.mxu0 %v3385
        %3449 = vmatpush1.bf16.msra.mxu0 %v3384
        %3450 = vmatprep.subr.bf16.mxu0 %v3387
        %3451 = vmatpush1.bf16.msra.mxu0 %v3386
        %3452 = vmatprep.mubr.bf16.mxu0 %v3227
        %3453 = vmatmul.mubr.bf16.gmra.mrb[0].mxu0 %v3226
        %v3454 = vpop.f32.mrb[0].mxu0
        %v3455 = vadd.f32 0.0, %v3454
        %v3456 = vpop.f32.mrb[0].mxu0
        %v3457 = vadd.f32 0.0, %v3456
        %v3458 = vpop.f32.mrb[0].mxu0
        %v3459 = vadd.f32 0.0, %v3458
        %v3460 = vpop.f32.mrb[0].mxu0
        %v3461 = vadd.f32 0.0, %v3460
        %3462 = vdwg.mxu0
        %3463 = vmatprep.subr.bf16.mxu0 %v3357
        %3464 = vmatpush1.bf16.msra.mxu0 %v3356
        %3465 = vmatprep.subr.bf16.mxu0 %v3359
        %3466 = vmatpush1.bf16.msra.mxu0 %v3358
        %3467 = vmatprep.subr.bf16.mxu0 %v3361
        %3468 = vmatpush1.bf16.msra.mxu0 %v3360
        %3469 = vmatprep.subr.bf16.mxu0 %v3363
        %3470 = vmatpush1.bf16.msra.mxu0 %v3362
        %3471 = vmatprep.subr.bf16.mxu0 %v3365
        %3472 = vmatpush1.bf16.msra.mxu0 %v3364
        %3473 = vmatprep.subr.bf16.mxu0 %v3367
        %3474 = vmatpush1.bf16.msra.mxu0 %v3366
        %3475 = vmatprep.subr.bf16.mxu0 %v3369
        %3476 = vmatpush1.bf16.msra.mxu0 %v3368
        %3477 = vmatprep.subr.bf16.mxu0 %v3371
        %3478 = vmatpush1.bf16.msra.mxu0 %v3370
        %3479 = vmatprep.subr.bf16.mxu0 %v3373
        %3480 = vmatpush1.bf16.msra.mxu0 %v3372
        %3481 = vmatprep.subr.bf16.mxu0 %v3375
        %3482 = vmatpush1.bf16.msra.mxu0 %v3374
        %3483 = vmatprep.subr.bf16.mxu0 %v3377
        %3484 = vmatpush1.bf16.msra.mxu0 %v3376
        %3485 = vmatprep.subr.bf16.mxu0 %v3379
        %3486 = vmatpush1.bf16.msra.mxu0 %v3378
        %3487 = vmatprep.subr.bf16.mxu0 %v3381
        %3488 = vmatpush1.bf16.msra.mxu0 %v3380
        %3489 = vmatprep.subr.bf16.mxu0 %v3383
        %3490 = vmatpush1.bf16.msra.mxu0 %v3382
        %3491 = vmatprep.subr.bf16.mxu0 %v3385
        %3492 = vmatpush1.bf16.msra.mxu0 %v3384
        %3493 = vmatprep.subr.bf16.mxu0 %v3387
        %3494 = vmatpush1.bf16.msra.mxu0 %v3386
        %3495 = vmatprep.mubr.bf16.mxu0 %v3217
        %3496 = vmatmul.mubr.bf16.gmra.mrb[0].mxu0 %v3216
        %v3497 = vpop.f32.mrb[0].mxu0
        %v3498 = vadd.f32 %v3455, %v3497
        %v3499 = vpop.f32.mrb[0].mxu0
        %v3500 = vadd.f32 %v3457, %v3499
        %v3501 = vpop.f32.mrb[0].mxu0
        %v3502 = vadd.f32 %v3459, %v3501
        %v3503 = vpop.f32.mrb[0].mxu0
        %v3504 = vadd.f32 %v3461, %v3503
        %3505 = vdwg.mxu0
        %v3506 = vld [vmem:[#allocation13] sm:$0xff]
        %v3507 = vld [vmem:[#allocation13 + $0x8] sm:$0xff]
        %v3508 = vld [vmem:[#allocation13 + $0x10] sm:$0xff]
        %v3509 = vld [vmem:[#allocation13 + $0x18] sm:$0xff]
        %v3510 = vld [vmem:[#allocation13 + $0x20] sm:$0xff]
        %v3511 = vld [vmem:[#allocation13 + $0x28] sm:$0xff]
        %v3512 = vld [vmem:[#allocation13 + $0x30] sm:$0xff]
        %v3513 = vld [vmem:[#allocation13 + $0x38] sm:$0xff]
        %v3514 = vld [vmem:[#allocation13 + $0x40] sm:$0xff]
        %v3515 = vld [vmem:[#allocation13 + $0x48] sm:$0xff]
        %v3516 = vld [vmem:[#allocation13 + $0x50] sm:$0xff]
        %v3517 = vld [vmem:[#allocation13 + $0x58] sm:$0xff]
        %v3518 = vld [vmem:[#allocation13 + $0x60] sm:$0xff]
        %v3519 = vld [vmem:[#allocation13 + $0x68] sm:$0xff]
        %v3520 = vld [vmem:[#allocation13 + $0x70] sm:$0xff]
        %v3521 = vld [vmem:[#allocation13 + $0x78] sm:$0xff]
        %v3522 = vld [vmem:[#allocation13 + $0x80] sm:$0xff]
        %v3523 = vld [vmem:[#allocation13 + $0x88] sm:$0xff]
        %v3524 = vld [vmem:[#allocation13 + $0x90] sm:$0xff]
        %v3525 = vld [vmem:[#allocation13 + $0x98] sm:$0xff]
        %v3526 = vld [vmem:[#allocation13 + $0xa0] sm:$0xff]
        %v3527 = vld [vmem:[#allocation13 + $0xa8] sm:$0xff]
        %v3528 = vld [vmem:[#allocation13 + $0xb0] sm:$0xff]
        %v3529 = vld [vmem:[#allocation13 + $0xb8] sm:$0xff]
        %v3530 = vld [vmem:[#allocation13 + $0xc0] sm:$0xff]
        %v3531 = vld [vmem:[#allocation13 + $0xc8] sm:$0xff]
        %v3532 = vld [vmem:[#allocation13 + $0xd0] sm:$0xff]
        %v3533 = vld [vmem:[#allocation13 + $0xd8] sm:$0xff]
        %v3534 = vld [vmem:[#allocation13 + $0xe0] sm:$0xff]
        %v3535 = vld [vmem:[#allocation13 + $0xe8] sm:$0xff]
        %v3536 = vld [vmem:[#allocation13 + $0xf0] sm:$0xff]
        %v3537 = vld [vmem:[#allocation13 + $0xf8] sm:$0xff]
        %v3570 = vunpack.c.l.b16 %v3506
        %v3571 = vunpack.c.h.b16 %v3506
        %v3572 = vunpack.c.l.b16 %v3507
        %v3573 = vunpack.c.h.b16 %v3507
        %v3574 = vunpack.c.l.b16 %v3508
        %v3575 = vunpack.c.h.b16 %v3508
        %v3576 = vunpack.c.l.b16 %v3509
        %v3577 = vunpack.c.h.b16 %v3509
        %v3578 = vunpack.c.l.b16 %v3510
        %v3579 = vunpack.c.h.b16 %v3510
        %v3580 = vunpack.c.l.b16 %v3511
        %v3581 = vunpack.c.h.b16 %v3511
        %v3582 = vunpack.c.l.b16 %v3512
        %v3583 = vunpack.c.h.b16 %v3512
        %v3584 = vunpack.c.l.b16 %v3513
        %v3585 = vunpack.c.h.b16 %v3513
        %v3586 = vunpack.c.l.b16 %v3514
        %v3587 = vunpack.c.h.b16 %v3514
        %v3588 = vunpack.c.l.b16 %v3515
        %v3589 = vunpack.c.h.b16 %v3515
        %v3590 = vunpack.c.l.b16 %v3516
        %v3591 = vunpack.c.h.b16 %v3516
        %v3592 = vunpack.c.l.b16 %v3517
        %v3593 = vunpack.c.h.b16 %v3517
        %v3594 = vunpack.c.l.b16 %v3518
        %v3595 = vunpack.c.h.b16 %v3518
        %v3596 = vunpack.c.l.b16 %v3519
        %v3597 = vunpack.c.h.b16 %v3519
        %v3598 = vunpack.c.l.b16 %v3520
        %v3599 = vunpack.c.h.b16 %v3520
        %v3600 = vunpack.c.l.b16 %v3521
        %v3601 = vunpack.c.h.b16 %v3521
        %v3602 = vunpack.c.l.b16 %v3522
        %v3603 = vunpack.c.h.b16 %v3522
        %v3604 = vunpack.c.l.b16 %v3523
        %v3605 = vunpack.c.h.b16 %v3523
        %v3606 = vunpack.c.l.b16 %v3524
        %v3607 = vunpack.c.h.b16 %v3524
        %v3608 = vunpack.c.l.b16 %v3525
        %v3609 = vunpack.c.h.b16 %v3525
        %v3610 = vunpack.c.l.b16 %v3526
        %v3611 = vunpack.c.h.b16 %v3526
        %v3612 = vunpack.c.l.b16 %v3527
        %v3613 = vunpack.c.h.b16 %v3527
        %v3614 = vunpack.c.l.b16 %v3528
        %v3615 = vunpack.c.h.b16 %v3528
        %v3616 = vunpack.c.l.b16 %v3529
        %v3617 = vunpack.c.h.b16 %v3529
        %v3618 = vunpack.c.l.b16 %v3530
        %v3619 = vunpack.c.h.b16 %v3530
        %v3620 = vunpack.c.l.b16 %v3531
        %v3621 = vunpack.c.h.b16 %v3531
        %v3622 = vunpack.c.l.b16 %v3532
        %v3623 = vunpack.c.h.b16 %v3532
        %v3624 = vunpack.c.l.b16 %v3533
        %v3625 = vunpack.c.h.b16 %v3533
        %v3626 = vunpack.c.l.b16 %v3534
        %v3627 = vunpack.c.h.b16 %v3534
        %v3628 = vunpack.c.l.b16 %v3535
        %v3629 = vunpack.c.h.b16 %v3535
        %v3630 = vunpack.c.l.b16 %v3536
        %v3631 = vunpack.c.h.b16 %v3536
        %v3632 = vunpack.c.l.b16 %v3537
        %v3633 = vunpack.c.h.b16 %v3537
        %v3634 = vpack.c.b16 %v3572, %v3570
        %v3635 = vpack.c.b16 %v3573, %v3571
        %v3636 = vpack.c.b16 %v3576, %v3574
        %v3637 = vpack.c.b16 %v3577, %v3575
        %v3638 = vpack.c.b16 %v3580, %v3578
        %v3639 = vpack.c.b16 %v3581, %v3579
        %v3640 = vpack.c.b16 %v3584, %v3582
        %v3641 = vpack.c.b16 %v3585, %v3583
        %v3642 = vpack.c.b16 %v3588, %v3586
        %v3643 = vpack.c.b16 %v3589, %v3587
        %v3644 = vpack.c.b16 %v3592, %v3590
        %v3645 = vpack.c.b16 %v3593, %v3591
        %v3646 = vpack.c.b16 %v3596, %v3594
        %v3647 = vpack.c.b16 %v3597, %v3595
        %v3648 = vpack.c.b16 %v3600, %v3598
        %v3649 = vpack.c.b16 %v3601, %v3599
        %v3650 = vpack.c.b16 %v3604, %v3602
        %v3651 = vpack.c.b16 %v3605, %v3603
        %v3652 = vpack.c.b16 %v3608, %v3606
        %v3653 = vpack.c.b16 %v3609, %v3607
        %v3654 = vpack.c.b16 %v3612, %v3610
        %v3655 = vpack.c.b16 %v3613, %v3611
        %v3656 = vpack.c.b16 %v3616, %v3614
        %v3657 = vpack.c.b16 %v3617, %v3615
        %v3658 = vpack.c.b16 %v3620, %v3618
        %v3659 = vpack.c.b16 %v3621, %v3619
        %v3660 = vpack.c.b16 %v3624, %v3622
        %v3661 = vpack.c.b16 %v3625, %v3623
        %v3662 = vpack.c.b16 %v3628, %v3626
        %v3663 = vpack.c.b16 %v3629, %v3627
        %v3664 = vpack.c.b16 %v3632, %v3630
        %v3665 = vpack.c.b16 %v3633, %v3631
        %3698 = vmatprep.subr.bf16.mxu0 %v3635
        %3699 = vmatpush1.bf16.msra.mxu0 %v3634
        %3700 = vmatprep.subr.bf16.mxu0 %v3637
        %3701 = vmatpush1.bf16.msra.mxu0 %v3636
        %3702 = vmatprep.subr.bf16.mxu0 %v3639
        %3703 = vmatpush1.bf16.msra.mxu0 %v3638
        %3704 = vmatprep.subr.bf16.mxu0 %v3641
        %3705 = vmatpush1.bf16.msra.mxu0 %v3640
        %3706 = vmatprep.subr.bf16.mxu0 %v3643
        %3707 = vmatpush1.bf16.msra.mxu0 %v3642
        %3708 = vmatprep.subr.bf16.mxu0 %v3645
        %3709 = vmatpush1.bf16.msra.mxu0 %v3644
        %3710 = vmatprep.subr.bf16.mxu0 %v3647
        %3711 = vmatpush1.bf16.msra.mxu0 %v3646
        %3712 = vmatprep.subr.bf16.mxu0 %v3649
        %3713 = vmatpush1.bf16.msra.mxu0 %v3648
        %3714 = vmatprep.subr.bf16.mxu0 %v3651
        %3715 = vmatpush1.bf16.msra.mxu0 %v3650
        %3716 = vmatprep.subr.bf16.mxu0 %v3653
        %3717 = vmatpush1.bf16.msra.mxu0 %v3652
        %3718 = vmatprep.subr.bf16.mxu0 %v3655
        %3719 = vmatpush1.bf16.msra.mxu0 %v3654
        %3720 = vmatprep.subr.bf16.mxu0 %v3657
        %3721 = vmatpush1.bf16.msra.mxu0 %v3656
        %3722 = vmatprep.subr.bf16.mxu0 %v3659
        %3723 = vmatpush1.bf16.msra.mxu0 %v3658
        %3724 = vmatprep.subr.bf16.mxu0 %v3661
        %3725 = vmatpush1.bf16.msra.mxu0 %v3660
        %3726 = vmatprep.subr.bf16.mxu0 %v3663
        %3727 = vmatpush1.bf16.msra.mxu0 %v3662
        %3728 = vmatprep.subr.bf16.mxu0 %v3665
        %3729 = vmatpush1.bf16.msra.mxu0 %v3664
        %3730 = vmatprep.mubr.bf16.mxu0 %v3217
        %3731 = vmatmul.mubr.bf16.gmra.mrb[0].mxu0 %v3216
        %v3732 = vpop.f32.mrb[0].mxu0
        %v3733 = vadd.f32 0.0, %v3732
        %v3734 = vpop.f32.mrb[0].mxu0
        %v3735 = vadd.f32 0.0, %v3734
        %v3736 = vpop.f32.mrb[0].mxu0
        %v3737 = vadd.f32 0.0, %v3736
        %v3738 = vpop.f32.mrb[0].mxu0
        %v3739 = vadd.f32 0.0, %v3738
        %3740 = vdwg.mxu0
        %v3741 = vadd.f32 %v3498, %v3733
        %v3742 = vadd.f32 %v3500, %v3735
        %v3743 = vadd.f32 %v3502, %v3737
        %v3744 = vadd.f32 %v3504, %v3739
        %v3745 = vld [vmem:[%s19] sm:$0x3]
        %v3747 = vlaneseq
        %v3748 = vshrl.u32 %v3747, 7
        %v3749 = vsub.s32 0, %v3748
        %v3750 = vrot.slane %v3745, %v3749
        %v3751 = vlaneseq
        %v3752 = vshrl.u32 %v3751, 7
        %v3753 = vsub.s32 1, %v3752
        %v3754 = vrot.slane %v3745, %v3753
        %v3757 = vadd.f32 %v3741, %v3750
        %v3758 = vadd.f32 %v3742, %v3754
        %v3759 = vadd.f32 %v3743, %v3750
        %v3760 = vadd.f32 %v3744, %v3754
        %3761 = vst [vmem:[%s720] sm:$0xff] %v3757
        %3762 = vst [vmem:[%s720 + $0x8] sm:$0xff] %v3758
        %3763 = vst [vmem:[%s720 + $0x10] sm:$0xff] %v3759
        %3764 = vst [vmem:[%s720 + $0x18] sm:$0xff] %v3760
        %s3765 = sand.u32 %s471, 1
        %s3766 = scalar_lea.sflag [#allocation4], %s3765
        %s3767 = sand.u32 %s471, 1
        %s3768 = smul.addr %s3767, 32
        %s3769 = scalar_lea.vmem [#allocation14], %s3768
        // Predicated region
        $region129: #{tpu_custom_call.1} parent=99 // pred_check
          %p3770 = pneg %p481
        $region130: #{tpu_custom_call.1} parent=99 // pred_check_branch
          %3772 = sbr.rel (%p3770) target = $region132
        $region131: #{tpu_custom_call.1} parent=99 // pred_region
          %s3774 = ssub.s32 512, 512
          %3775 = vsyncadd %s3766, %s3774
          %s3776 = smul.addr %s38, 4
          %s3777 = smul.addr %s3776, 128
          %s3778 = scalar_lea.hbm %s20, %s3777
          %s3779 = sshll.u32 %s3769, 4
          %s3780 = int_to_ptr.vmem [resolvable:$true] %s3779
          %3785 = dma.vmem_to_hbm [thread:$0]  %s3780, 512, %s3778, %s3766, 256, 256, 16
        $region132: #{tpu_custom_call.1} parent=99 // pred_fallthru
          _
      $region100: #{tpu_custom_call.1} parent=5 // pred_fallthru
        _
      %p3786 = scmp.le.s32.totalorder 2, %s33
      // Predicated region
      $region133: #{tpu_custom_call.1} parent=5 // pred_check
        %p3787 = pneg %p3786
      $region134: #{tpu_custom_call.1} parent=5 // pred_check_branch
        %3789 = sbr.rel (%p3787) target = $region136
      $region135: #{tpu_custom_call.1} parent=5 // pred_region
        %s3790 = ssub.s32 %s33, 2
        // Predicated region
        $region137: #{tpu_custom_call.1} parent=135 // pred_check
          %p3791 = pneg %p487
        $region138: #{tpu_custom_call.1} parent=135 // pred_check_branch
          %3793 = sbr.rel (%p3791) target = $region140
        $region139: #{tpu_custom_call.1} parent=135 // pred_region
          %s3794 = sand.u32 %s472, 1
          %s3795 = scalar_lea.sflag [#allocation4], %s3794
          %s3796 = sand.u32 %s472, 1
          %s3797 = smul.addr %s3796, 32
          %s3798 = scalar_lea.vmem [#allocation14], %s3797
          %3799 = dma.done %s3795, 512
        $region140: #{tpu_custom_call.1} parent=135 // pred_fallthru
          _
      $region136: #{tpu_custom_call.1} parent=5 // pred_fallthru
        _
    $region6: #{tpu_custom_call.1} parent=1 // loop_footer
      %s37 = sadd.s32 1, %s33
    $region7: #{tpu_custom_call.1} parent=1 // loop_footer_branch
      %32 = sbr.rel target = $region3
    $region8: #{tpu_custom_call.1} parent=1 // loop_exit
      _
    %3800 = vsyncpa [#allocation3], 1
    %s3801 = scalar_lea.sflag [#allocation3], 1
    %3802 = vsyncpa %s3801, 1
    %3803 = vsyncpa [#allocation6], 1
    %3804 = vsyncpa [#allocation9], 1
    %3805 = vsyncpa [#allocation12], 1
    %3806 = vsyncpa [#allocation4], 1
    %s3807 = scalar_lea.sflag [#allocation4], 1
    %3808 = vsyncpa %s3807, 1

// kernel: tpu_custom_call.1
$region0: #{tpu_custom_call.1}
  #allocation0 [shape = 'u32[]', space=smem, size = 0x4, offset = 0x4, fixed_abs, tag = 'smem constant byte address 0x4 - core index']
  #allocation1 [shape = 'u32[144,128]{1,0:T(1,128)}', space=vmem, size = 0x12000, scoped, tag = 'internal scratch']
  %s0 = inlined_call_operand.vmem [shape: f32[2,16,256], index: 0, kind: input, shape index: {}]
  %s1 = inlined_call_operand.vmem [shape: bf16[256,16], index: 1, kind: input, shape index: {}]
  %s2 = inlined_call_operand.hbm [shape: bf16[16,256], index: 2, kind: input, shape index: {}]
  %s3 = inlined_call_operand.vmem [shape: f32[1,256], index: 3, kind: input, shape index: {}]
  %s4 = inlined_call_operand.hbm [shape: f32[1,256], index: 4, kind: input, shape index: {}]
  %s5 = inlined_call_operand.hbm [shape: f32[4,256], index: 5, kind: input, shape index: {}]
  %s6 = inlined_call_operand.vmem [shape: f32[9,256], index: 6, kind: input, shape index: {}]
  %s7 = inlined_call_operand.vmem [shape: f32[1,256], index: 7, kind: input, shape index: {}]
  %s8 = inlined_call_operand.hbm [shape: bf16[256,256], index: 8, kind: input, shape index: {}]
  %s9 = inlined_call_operand.hbm [shape: bf16[256,256], index: 9, kind: input, shape index: {}]
  %s10 = inlined_call_operand.vmem [shape: f32[1,256], index: 10, kind: input, shape index: {}]
  %s11 = inlined_call_operand.vmem [shape: f32[9,256], index: 11, kind: input, shape index: {}]
  %s12 = inlined_call_operand.vmem [shape: f32[1,256], index: 12, kind: input, shape index: {}]
  %s13 = inlined_call_operand.vmem [shape: f32[1,256], index: 13, kind: input, shape index: {}]
  %s14 = inlined_call_operand.vmem [shape: f32[1,256], index: 14, kind: input, shape index: {}]
  %s15 = inlined_call_operand.vmem [shape: f32[9,256], index: 15, kind: input, shape index: {}]
  %s16 = inlined_call_operand.vmem [shape: f32[1,256], index: 16, kind: input, shape index: {}]
  %s17 = inlined_call_operand.hbm [shape: bf16[256,256], index: 17, kind: input, shape index: {}]
  %s18 = inlined_call_operand.hbm [shape: bf16[256,256], index: 18, kind: input, shape index: {}]
  %s19 = inlined_call_operand.vmem [shape: f32[1,256], index: 19, kind: input, shape index: {}]
  %s20 = inlined_call_operand.hbm [shape: f32[2,16,256], index: 20, kind: output, shape index: {}]
  %s21 = sld [smem:[#allocation0]]
  $region141: #{tpu_custom_call.1} parent=0
    _
  %s23 = ssub.s32 1, %s21
  %s24 = scalar_select 0, %s23, %s21
  $region1: #{tpu_custom_call.1} parent=0
    #allocation2 [shape = 'u8[8192]{0}', space=vmem, size = 0x2000, scoped, tag = 'input window, operand 2, single buffered']
    #allocation3 [shape = 's32[2]{0}', space=sflag, size = 0x8, scoped, tag = 'scoped memory for tpu_custom_call.1']
    #allocation4 [shape = 's32[2]{0}', space=sflag, size = 0x8, scoped, tag = 'scoped memory for tpu_custom_call.1']
    #allocation5 [shape = 'u8[1024]{0}', space=vmem, size = 0x400, scoped, tag = 'input window, operand 4, single buffered']
    #allocation6 [shape = 's32[1]{0}', space=sflag, size = 0x4, scoped, tag = 'scoped memory for tpu_custom_call.1']
    #allocation7 [shape = 'u8[4096]{0}', space=vmem, size = 0x1000, scoped, tag = 'input window, operand 5, single buffered']
    #allocation8 [shape = 'u8[131072]{0}', space=vmem, size = 0x20000, scoped, tag = 'input window, operand 8, single buffered']
    #allocation9 [shape = 's32[1]{0}', space=sflag, size = 0x4, scoped, tag = 'scoped memory for tpu_custom_call.1']
    #allocation10 [shape = 'u8[131072]{0}', space=vmem, size = 0x20000, scoped, tag = 'input window, operand 9, single buffered']
    #allocation11 [shape = 'u8[131072]{0}', space=vmem, size = 0x20000, scoped, tag = 'input window, operand 17, single buffered']
    #allocation12 [shape = 's32[1]{0}', space=sflag, size = 0x4, scoped, tag = 'scoped memory for tpu_custom_call.1']
    #allocation13 [shape = 'u8[131072]{0}', space=vmem, size = 0x20000, scoped, tag = 'input window, operand 18, single buffered']
    #allocation14 [shape = 'u8[32768]{0}', space=vmem, size = 0x8000, scoped, tag = 'output window, operand 0']
    %25 = vsyncpa [#allocation3], 0
    %26 = vsyncpa [#allocation6], 0
    %27 = vsyncpa [#allocation9], 0
    %28 = vsyncpa [#allocation12], 0
    %29 = vsyncpa [#allocation4], 0
    %s30 = scalar_lea.sflag [#allocation4], 1
    %31 = vsyncpa %s30, 0
    loop: start=0, step=1, limit=4
    $region2: #{tpu_custom_call.1} parent=1 // loop_pre_header
      _
    $region3: #{tpu_custom_call.1} parent=1 // loop_header
      %s33 = sphi 0, %s37
      %p34 = scmp.ge.s32.totalorder %s33, 4
      %s43 = sphi 0, %s45
      %s46 = sphi 0, %s43
      %s47 = sphi 0, %s46
      %s63 = sphi 0, %s47
      %s67 = sphi 0, %s67
      %s69 = sphi 0, %s67
      %s70 = sphi 0, %s69
      %s84 = sphi 0, %s70
      %s88 = sphi 0, %s88
      %s90 = sphi 0, %s88
      %s91 = sphi 0, %s90
      %s105 = sphi 0, %s91
      %s109 = sphi 0, %s109
      %s111 = sphi 0, %s109
      %s112 = sphi 0, %s111
      %s126 = sphi 0, %s112
      %s130 = sphi 0, %s130
      %s132 = sphi 0, %s130
      %s133 = sphi 0, %s132
      %s147 = sphi 0, %s133
      %s151 = sphi 0, %s151
      %s153 = sphi 0, %s151
      %s154 = sphi 0, %s153
      %s168 = sphi 0, %s154
      %s172 = sphi 0, %s172
      %s174 = sphi 0, %s172
      %s175 = sphi 0, %s174
      %s189 = sphi 0, %s175
      %s193 = sphi 0, %s193
      %s195 = sphi 0, %s193
      %s196 = sphi 0, %s195
      %s210 = sphi 0, %s196
      %s214 = sphi 0, %s214
      %s216 = sphi 0, %s214
      %s217 = sphi 0, %s216
      %s231 = sphi 0, %s217
      %s235 = sphi 0, %s235
      %s237 = sphi 0, %s235
      %s238 = sphi 0, %s237
      %s252 = sphi 0, %s238
      %s256 = sphi 0, %s256
      %s258 = sphi 0, %s256
      %s259 = sphi 0, %s258
      %s273 = sphi 0, %s259
      %s277 = sphi 0, %s277
      %s279 = sphi 0, %s277
      %s280 = sphi 0, %s279
      %s294 = sphi 0, %s280
      %s298 = sphi 0, %s298
      %s300 = sphi 0, %s298
      %s301 = sphi 0, %s300
      %s315 = sphi 0, %s301
      %s319 = sphi 0, %s319
      %s321 = sphi 0, %s319
      %s322 = sphi 0, %s321
      %s336 = sphi 0, %s322
      %s340 = sphi 0, %s340
      %s342 = sphi 0, %s340
      %s343 = sphi 0, %s342
      %s357 = sphi 0, %s343
      %s361 = sphi 0, %s361
      %s363 = sphi 0, %s361
      %s364 = sphi 0, %s363
      %s378 = sphi 0, %s364
      %s382 = sphi 0, %s382
      %s384 = sphi 0, %s382
      %s385 = sphi 0, %s384
      %s399 = sphi 0, %s385
      %s403 = sphi 0, %s403
      %s405 = sphi 0, %s403
      %s406 = sphi 0, %s405
      %s420 = sphi 0, %s406
      %s424 = sphi 0, %s424
      %s426 = sphi 0, %s424
      %s427 = sphi 0, %s426
      %s441 = sphi 0, %s427
      %s445 = sphi 0, %s445
      %s447 = sphi 0, %s445
      %s448 = sphi 0, %s447
      %s462 = sphi 0, %s448
      %s468 = sphi 0, %s470
      %s471 = sphi 0, %s468
      %s472 = sphi 0, %s471
      %s488 = sphi 0, %s472
    $region4: #{tpu_custom_call.1} parent=1 // loop_header_branch
      %36 = sbr.rel (%p34) target = $region8
    $region5: #{tpu_custom_call.1} parent=1 // loop_body
      %s38 = ssub.s32 %s33, 1
      %s39 = ssub.s32 %s33, 2
      %s40 = sadd.s32 %s33, 1
      %s41 = ssub.s32 %s33, %s40
      %p42 = scmp.eq.s32.totalorder %s41, 0
      %s44 = sadd.s32 %s43, 1
      %s45 = scalar_select %p42, %s43, %s44
      %p48 = pneg %p42
      %p49 = scmp.eq.s32.totalorder %s33, 1
      %p50 = por %p48, %p49
      %p51 = scmp.ne.s32.totalorder %s43, %s46
      %p52 = scmp.eq.s32.totalorder %s33, 0
      %p53 = por %p51, %p52
      %p54 = scmp.ne.s32.totalorder %s43, %s46
      %p55 = scmp.eq.s32.totalorder %s38, 1
      %p56 = por %p54, %p55
      %p57 = scmp.ne.s32.totalorder %s46, %s47
      %p58 = scmp.eq.s32.totalorder %s38, 0
      %p59 = por %p57, %p58
      %p60 = scmp.ne.s32.totalorder %s46, %s47
      %p61 = scmp.eq.s32.totalorder %s39, 1
      %p62 = por %p60, %p61
      %p64 = scmp.ne.s32.totalorder %s47, %s63
      %p65 = scmp.eq.s32.totalorder %s39, 0
      %p66 = por %p64, %p65
      %s68 = sadd.s32 %s67, 1
      %p71 = scmp.eq.s32.totalorder %s33, 1
      %p72 = scmp.ne.s32.totalorder %s67, %s69
      %p73 = scmp.eq.s32.totalorder %s33, 0
      %p74 = por %p72, %p73
      %p75 = scmp.ne.s32.totalorder %s67, %s69
      %p76 = scmp.eq.s32.totalorder %s38, 1
      %p77 = por %p75, %p76
      %p78 = scmp.ne.s32.totalorder %s69, %s70
      %p79 = scmp.eq.s32.totalorder %s38, 0
      %p80 = por %p78, %p79
      %p81 = scmp.ne.s32.totalorder %s69, %s70
      %p82 = scmp.eq.s32.totalorder %s39, 1
      %p83 = por %p81, %p82
      %p85 = scmp.ne.s32.totalorder %s70, %s84
      %p86 = scmp.eq.s32.totalorder %s39, 0
      %p87 = por %p85, %p86
      %s89 = sadd.s32 %s88, 1
      %p92 = scmp.eq.s32.totalorder %s33, 1
      %p93 = scmp.ne.s32.totalorder %s88, %s90
      %p94 = scmp.eq.s32.totalorder %s33, 0
      %p95 = por %p93, %p94
      %p96 = scmp.ne.s32.totalorder %s88, %s90
      %p97 = scmp.eq.s32.totalorder %s38, 1
      %p98 = por %p96, %p97
      %p99 = scmp.ne.s32.totalorder %s90, %s91
      %p100 = scmp.eq.s32.totalorder %s38, 0
      %p101 = por %p99, %p100
      %p102 = scmp.ne.s32.totalorder %s90, %s91
      %p103 = scmp.eq.s32.totalorder %s39, 1
      %p104 = por %p102, %p103
      %p106 = scmp.ne.s32.totalorder %s91, %s105
      %p107 = scmp.eq.s32.totalorder %s39, 0
      %p108 = por %p106, %p107
      %s110 = sadd.s32 %s109, 1
      %p113 = scmp.eq.s32.totalorder %s33, 1
      %p114 = scmp.ne.s32.totalorder %s109, %s111
      %p115 = scmp.eq.s32.totalorder %s33, 0
      %p116 = por %p114, %p115
      %p117 = scmp.ne.s32.totalorder %s109, %s111
      %p118 = scmp.eq.s32.totalorder %s38, 1
      %p119 = por %p117, %p118
      %p120 = scmp.ne.s32.totalorder %s111, %s112
      %p121 = scmp.eq.s32.totalorder %s38, 0
      %p122 = por %p120, %p121
      %p123 = scmp.ne.s32.totalorder %s111, %s112
      %p124 = scmp.eq.s32.totalorder %s39, 1
      %p125 = por %p123, %p124
      %p127 = scmp.ne.s32.totalorder %s112, %s126
      %p128 = scmp.eq.s32.totalorder %s39, 0
      %p129 = por %p127, %p128
      %s131 = sadd.s32 %s130, 1
      %p134 = scmp.eq.s32.totalorder %s33, 1
      %p135 = scmp.ne.s32.totalorder %s130, %s132
      %p136 = scmp.eq.s32.totalorder %s33, 0
      %p137 = por %p135, %p136
      %p138 = scmp.ne.s32.totalorder %s130, %s132
      %p139 = scmp.eq.s32.totalorder %s38, 1
      %p140 = por %p138, %p139
      %p141 = scmp.ne.s32.totalorder %s132, %s133
      %p142 = scmp.eq.s32.totalorder %s38, 0
      %p143 = por %p141, %p142
      %p144 = scmp.ne.s32.totalorder %s132, %s133
      %p145 = scmp.eq.s32.totalorder %s39, 1
      %p146 = por %p144, %p145
      %p148 = scmp.ne.s32.totalorder %s133, %s147
      %p149 = scmp.eq.s32.totalorder %s39, 0
      %p150 = por %p148, %p149
      %s152 = sadd.s32 %s151, 1
      %p155 = scmp.eq.s32.totalorder %s33, 1
      %p156 = scmp.ne.s32.totalorder %s151, %s153
      %p157 = scmp.eq.s32.totalorder %s33, 0
      %p158 = por %p156, %p157
      %p159 = scmp.ne.s32.totalorder %s151, %s153
      %p160 = scmp.eq.s32.totalorder %s38, 1
      %p161 = por %p159, %p160
      %p162 = scmp.ne.s32.totalorder %s153, %s154
      %p163 = scmp.eq.s32.totalorder %s38, 0
      %p164 = por %p162, %p163
      %p165 = scmp.ne.s32.totalorder %s153, %s154
      %p166 = scmp.eq.s32.totalorder %s39, 1
      %p167 = por %p165, %p166
      %p169 = scmp.ne.s32.totalorder %s154, %s168
      %p170 = scmp.eq.s32.totalorder %s39, 0
      %p171 = por %p169, %p170
      %s173 = sadd.s32 %s172, 1
      %p176 = scmp.eq.s32.totalorder %s33, 1
      %p177 = scmp.ne.s32.totalorder %s172, %s174
      %p178 = scmp.eq.s32.totalorder %s33, 0
      %p179 = por %p177, %p178
      %p180 = scmp.ne.s32.totalorder %s172, %s174
      %p181 = scmp.eq.s32.totalorder %s38, 1
      %p182 = por %p180, %p181
      %p183 = scmp.ne.s32.totalorder %s174, %s175
      %p184 = scmp.eq.s32.totalorder %s38, 0
      %p185 = por %p183, %p184
      %p186 = scmp.ne.s32.totalorder %s174, %s175
      %p187 = scmp.eq.s32.totalorder %s39, 1
      %p188 = por %p186, %p187
      %p190 = scmp.ne.s32.totalorder %s175, %s189
      %p191 = scmp.eq.s32.totalorder %s39, 0
      %p192 = por %p190, %p191
      %s194 = sadd.s32 %s193, 1
      %p197 = scmp.eq.s32.totalorder %s33, 1
      %p198 = scmp.ne.s32.totalorder %s193, %s195
      %p199 = scmp.eq.s32.totalorder %s33, 0
      %p200 = por %p198, %p199
      %p201 = scmp.ne.s32.totalorder %s193, %s195
      %p202 = scmp.eq.s32.totalorder %s38, 1
      %p203 = por %p201, %p202
      %p204 = scmp.ne.s32.totalorder %s195, %s196
      %p205 = scmp.eq.s32.totalorder %s38, 0
      %p206 = por %p204, %p205
      %p207 = scmp.ne.s32.totalorder %s195, %s196
      %p208 = scmp.eq.s32.totalorder %s39, 1
      %p209 = por %p207, %p208
      %p211 = scmp.ne.s32.totalorder %s196, %s210
      %p212 = scmp.eq.s32.totalorder %s39, 0
      %p213 = por %p211, %p212
      %s215 = sadd.s32 %s214, 1
      %p218 = scmp.eq.s32.totalorder %s33, 1
      %p219 = scmp.ne.s32.totalorder %s214, %s216
      %p220 = scmp.eq.s32.totalorder %s33, 0
      %p221 = por %p219, %p220
      %p222 = scmp.ne.s32.totalorder %s214, %s216
      %p223 = scmp.eq.s32.totalorder %s38, 1
      %p224 = por %p222, %p223
      %p225 = scmp.ne.s32.totalorder %s216, %s217
      %p226 = scmp.eq.s32.totalorder %s38, 0
      %p227 = por %p225, %p226
      %p228 = scmp.ne.s32.totalorder %s216, %s217
      %p229 = scmp.eq.s32.totalorder %s39, 1
      %p230 = por %p228, %p229
      %p232 = scmp.ne.s32.totalorder %s217, %s231
      %p233 = scmp.eq.s32.totalorder %s39, 0
      %p234 = por %p232, %p233
      %s236 = sadd.s32 %s235, 1
      %p239 = scmp.eq.s32.totalorder %s33, 1
      %p240 = scmp.ne.s32.totalorder %s235, %s237
      %p241 = scmp.eq.s32.totalorder %s33, 0
      %p242 = por %p240, %p241
      %p243 = scmp.ne.s32.totalorder %s235, %s237
      %p244 = scmp.eq.s32.totalorder %s38, 1
      %p245 = por %p243, %p244
      %p246 = scmp.ne.s32.totalorder %s237, %s238
      %p247 = scmp.eq.s32.totalorder %s38, 0
      %p248 = por %p246, %p247
      %p249 = scmp.ne.s32.totalorder %s237, %s238
      %p250 = scmp.eq.s32.totalorder %s39, 1
      %p251 = por %p249, %p250
      %p253 = scmp.ne.s32.totalorder %s238, %s252
      %p254 = scmp.eq.s32.totalorder %s39, 0
      %p255 = por %p253, %p254
      %s257 = sadd.s32 %s256, 1
      %p260 = scmp.eq.s32.totalorder %s33, 1
      %p261 = scmp.ne.s32.totalorder %s256, %s258
      %p262 = scmp.eq.s32.totalorder %s33, 0
      %p263 = por %p261, %p262
      %p264 = scmp.ne.s32.totalorder %s256, %s258
      %p265 = scmp.eq.s32.totalorder %s38, 1
      %p266 = por %p264, %p265
      %p267 = scmp.ne.s32.totalorder %s258, %s259
      %p268 = scmp.eq.s32.totalorder %s38, 0
      %p269 = por %p267, %p268
      %p270 = scmp.ne.s32.totalorder %s258, %s259
      %p271 = scmp.eq.s32.totalorder %s39, 1
      %p272 = por %p270, %p271
      %p274 = scmp.ne.s32.totalorder %s259, %s273
      %p275 = scmp.eq.s32.totalorder %s39, 0
      %p276 = por %p274, %p275
      %s278 = sadd.s32 %s277, 1
      %p281 = scmp.eq.s32.totalorder %s33, 1
      %p282 = scmp.ne.s32.totalorder %s277, %s279
      %p283 = scmp.eq.s32.totalorder %s33, 0
      %p284 = por %p282, %p283
      %p285 = scmp.ne.s32.totalorder %s277, %s279
      %p286 = scmp.eq.s32.totalorder %s38, 1
      %p287 = por %p285, %p286
      %p288 = scmp.ne.s32.totalorder %s279, %s280
      %p289 = scmp.eq.s32.totalorder %s38, 0
      %p290 = por %p288, %p289
      %p291 = scmp.ne.s32.totalorder %s279, %s280
      %p292 = scmp.eq.s32.totalorder %s39, 1
      %p293 = por %p291, %p292
      %p295 = scmp.ne.s32.totalorder %s280, %s294
      %p296 = scmp.eq.s32.totalorder %s39, 0
      %p297 = por %p295, %p296
      %s299 = sadd.s32 %s298, 1
      %p302 = scmp.eq.s32.totalorder %s33, 1
      %p303 = scmp.ne.s32.totalorder %s298, %s300
      %p304 = scmp.eq.s32.totalorder %s33, 0
      %p305 = por %p303, %p304
      %p306 = scmp.ne.s32.totalorder %s298, %s300
      %p307 = scmp.eq.s32.totalorder %s38, 1
      %p308 = por %p306, %p307
      %p309 = scmp.ne.s32.totalorder %s300, %s301
      %p310 = scmp.eq.s32.totalorder %s38, 0
      %p311 = por %p309, %p310
      %p312 = scmp.ne.s32.totalorder %s300, %s301
      %p313 = scmp.eq.s32.totalorder %s39, 1
      %p314 = por %p312, %p313
      %p316 = scmp.ne.s32.totalorder %s301, %s315
      %p317 = scmp.eq.s32.totalorder %s39, 0
      %p318 = por %p316, %p317
      %s320 = sadd.s32 %s319, 1
      %p323 = scmp.eq.s32.totalorder %s33, 1
      %p324 = scmp.ne.s32.totalorder %s319, %s321
      %p325 = scmp.eq.s32.totalorder %s33, 0
      %p326 = por %p324, %p325
      %p327 = scmp.ne.s32.totalorder %s319, %s321
      %p328 = scmp.eq.s32.totalorder %s38, 1
      %p329 = por %p327, %p328
      %p330 = scmp.ne.s32.totalorder %s321, %s322
      %p331 = scmp.eq.s32.totalorder %s38, 0
      %p332 = por %p330, %p331
      %p333 = scmp.ne.s32.totalorder %s321, %s322
      %p334 = scmp.eq.s32.totalorder %s39, 1
      %p335 = por %p333, %p334
      %p337 = scmp.ne.s32.totalorder %s322, %s336
      %p338 = scmp.eq.s32.totalorder %s39, 0
      %p339 = por %p337, %p338
      %s341 = sadd.s32 %s340, 1
      %p344 = scmp.eq.s32.totalorder %s33, 1
      %p345 = scmp.ne.s32.totalorder %s340, %s342
      %p346 = scmp.eq.s32.totalorder %s33, 0
      %p347 = por %p345, %p346
      %p348 = scmp.ne.s32.totalorder %s340, %s342
      %p349 = scmp.eq.s32.totalorder %s38, 1
      %p350 = por %p348, %p349
      %p351 = scmp.ne.s32.totalorder %s342, %s343
      %p352 = scmp.eq.s32.totalorder %s38, 0
      %p353 = por %p351, %p352
      %p354 = scmp.ne.s32.totalorder %s342, %s343
      %p355 = scmp.eq.s32.totalorder %s39, 1
      %p356 = por %p354, %p355
      %p358 = scmp.ne.s32.totalorder %s343, %s357
      %p359 = scmp.eq.s32.totalorder %s39, 0
      %p360 = por %p358, %p359
      %s362 = sadd.s32 %s361, 1
      %p365 = scmp.eq.s32.totalorder %s33, 1
      %p366 = scmp.ne.s32.totalorder %s361, %s363
      %p367 = scmp.eq.s32.totalorder %s33, 0
      %p368 = por %p366, %p367
      %p369 = scmp.ne.s32.totalorder %s361, %s363
      %p370 = scmp.eq.s32.totalorder %s38, 1
      %p371 = por %p369, %p370
      %p372 = scmp.ne.s32.totalorder %s363, %s364
      %p373 = scmp.eq.s32.totalorder %s38, 0
      %p374 = por %p372, %p373
      %p375 = scmp.ne.s32.totalorder %s363, %s364
      %p376 = scmp.eq.s32.totalorder %s39, 1
      %p377 = por %p375, %p376
      %p379 = scmp.ne.s32.totalorder %s364, %s378
      %p380 = scmp.eq.s32.totalorder %s39, 0
      %p381 = por %p379, %p380
      %s383 = sadd.s32 %s382, 1
      %p386 = scmp.eq.s32.totalorder %s33, 1
      %p387 = scmp.ne.s32.totalorder %s382, %s384
      %p388 = scmp.eq.s32.totalorder %s33, 0
      %p389 = por %p387, %p388
      %p390 = scmp.ne.s32.totalorder %s382, %s384
      %p391 = scmp.eq.s32.totalorder %s38, 1
      %p392 = por %p390, %p391
      %p393 = scmp.ne.s32.totalorder %s384, %s385
      %p394 = scmp.eq.s32.totalorder %s38, 0
      %p395 = por %p393, %p394
      %p396 = scmp.ne.s32.totalorder %s384, %s385
      %p397 = scmp.eq.s32.totalorder %s39, 1
      %p398 = por %p396, %p397
      %p400 = scmp.ne.s32.totalorder %s385, %s399
      %p401 = scmp.eq.s32.totalorder %s39, 0
      %p402 = por %p400, %p401
      %s404 = sadd.s32 %s403, 1
      %p407 = scmp.eq.s32.totalorder %s33, 1
      %p408 = scmp.ne.s32.totalorder %s403, %s405
      %p409 = scmp.eq.s32.totalorder %s33, 0
      %p410 = por %p408, %p409
      %p411 = scmp.ne.s32.totalorder %s403, %s405
      %p412 = scmp.eq.s32.totalorder %s38, 1
      %p413 = por %p411, %p412
      %p414 = scmp.ne.s32.totalorder %s405, %s406
      %p415 = scmp.eq.s32.totalorder %s38, 0
      %p416 = por %p414, %p415
      %p417 = scmp.ne.s32.totalorder %s405, %s406
      %p418 = scmp.eq.s32.totalorder %s39, 1
      %p419 = por %p417, %p418
      %p421 = scmp.ne.s32.totalorder %s406, %s420
      %p422 = scmp.eq.s32.totalorder %s39, 0
      %p423 = por %p421, %p422
      %s425 = sadd.s32 %s424, 1
      %p428 = scmp.eq.s32.totalorder %s33, 1
      %p429 = scmp.ne.s32.totalorder %s424, %s426
      %p430 = scmp.eq.s32.totalorder %s33, 0
      %p431 = por %p429, %p430
      %p432 = scmp.ne.s32.totalorder %s424, %s426
      %p433 = scmp.eq.s32.totalorder %s38, 1
      %p434 = por %p432, %p433
      %p435 = scmp.ne.s32.totalorder %s426, %s427
      %p436 = scmp.eq.s32.totalorder %s38, 0
      %p437 = por %p435, %p436
      %p438 = scmp.ne.s32.totalorder %s426, %s427
      %p439 = scmp.eq.s32.totalorder %s39, 1
      %p440 = por %p438, %p439
      %p442 = scmp.ne.s32.totalorder %s427, %s441
      %p443 = scmp.eq.s32.totalorder %s39, 0
      %p444 = por %p442, %p443
      %s446 = sadd.s32 %s445, 1
      %p449 = scmp.eq.s32.totalorder %s33, 1
      %p450 = scmp.ne.s32.totalorder %s445, %s447
      %p451 = scmp.eq.s32.totalorder %s33, 0
      %p452 = por %p450, %p451
      %p453 = scmp.ne.s32.totalorder %s445, %s447
      %p454 = scmp.eq.s32.totalorder %s38, 1
      %p455 = por %p453, %p454
      %p456 = scmp.ne.s32.totalorder %s447, %s448
      %p457 = scmp.eq.s32.totalorder %s38, 0
      %p458 = por %p456, %p457
      %p459 = scmp.ne.s32.totalorder %s447, %s448
      %p460 = scmp.eq.s32.totalorder %s39, 1
      %p461 = por %p459, %p460
      %p463 = scmp.ne.s32.totalorder %s448, %s462
      %p464 = scmp.eq.s32.totalorder %s39, 0
      %p465 = por %p463, %p464
      %s466 = ssub.s32 %s33, %s40
      %p467 = scmp.eq.s32.totalorder %s466, 0
      %s469 = sadd.s32 %s468, 1
      %s470 = scalar_select %p467, %s468, %s469
      %p473 = pneg %p467
      %p474 = scmp.eq.s32.totalorder %s33, 1
      %p475 = por %p473, %p474
      %p476 = scmp.ne.s32.totalorder %s468, %s471
      %p477 = scmp.eq.s32.totalorder %s33, 0
      %p478 = por %p476, %p477
      %p479 = scmp.ne.s32.totalorder %s468, %s471
      %p480 = scmp.eq.s32.totalorder %s38, 1
      %p481 = por %p479, %p480
      %p482 = scmp.ne.s32.totalorder %s471, %s472
      %p483 = scmp.eq.s32.totalorder %s38, 0
      %p484 = por %p482, %p483
      %p485 = scmp.ne.s32.totalorder %s471, %s472
      %p486 = scmp.eq.s32.totalorder %s39, 1
      %p487 = por %p485, %p486
      %p489 = scmp.ne.s32.totalorder %s472, %s488
      %p490 = scmp.eq.s32.totalorder %s39, 0
      %p491 = por %p489, %p490
      %p492 = scmp.le.s32.totalorder 1, %s33
      %p493 = scmp.lt.s32.totalorder %s33, 3
      %p494 = pnand %p492, %p493
      %p495 = pneg %p494
      // Predicated region
      $region9: #{tpu_custom_call.1} parent=5 // pred_check
        _
      $region10: #{tpu_custom_call.1} parent=5 // pred_check_branch
        %497 = sbr.rel (%p494) target = $region12
      $region11: #{tpu_custom_call.1} parent=5 // pred_region
        %s498 = ssub.s32 %s33, 1
        // Predicated region
        $region13: #{tpu_custom_call.1} parent=11 // pred_check
          %p499 = pneg %p80
        $region14: #{tpu_custom_call.1} parent=11 // pred_check_branch
          %501 = sbr.rel (%p499) target = $region16
        $region15: #{tpu_custom_call.1} parent=11 // pred_region
          _
        $region16: #{tpu_custom_call.1} parent=11 // pred_fallthru
          _
        // Predicated region
        $region17: #{tpu_custom_call.1} parent=11 // pred_check
          %p502 = pneg %p101
        $region18: #{tpu_custom_call.1} parent=11 // pred_check_branch
          %504 = sbr.rel (%p502) target = $region20
        $region19: #{tpu_custom_call.1} parent=11 // pred_region
          %s506 = ssub.s32 256, 256
          %507 = vsyncadd [#allocation3], %s506
          %s508 = sshll.u32 [#allocation2], 4
          %s509 = int_to_ptr.vmem [resolvable:$true] %s508
          %514 = dma.hbm_to_vmem [thread:$0]  %s2, 256, %s509, [#allocation3], 128, 128, 8
        $region20: #{tpu_custom_call.1} parent=11 // pred_fallthru
          _
        // Predicated region
        $region21: #{tpu_custom_call.1} parent=11 // pred_check
          %p515 = pneg %p122
        $region22: #{tpu_custom_call.1} parent=11 // pred_check_branch
          %517 = sbr.rel (%p515) target = $region24
        $region23: #{tpu_custom_call.1} parent=11 // pred_region
          _
        $region24: #{tpu_custom_call.1} parent=11 // pred_fallthru
          _
        // Predicated region
        $region25: #{tpu_custom_call.1} parent=11 // pred_check
          %p518 = pneg %p143
        $region26: #{tpu_custom_call.1} parent=11 // pred_check_branch
          %520 = sbr.rel (%p518) target = $region28
        $region27: #{tpu_custom_call.1} parent=11 // pred_region
          %s522 = ssub.s32 32, 32
          %523 = vsyncadd [#allocation6], %s522
          %s525 = sshll.u32 [#allocation5], 4
          %s526 = int_to_ptr.vmem [resolvable:$true] %s525
          %528 = dma.hbm_to_vmem [thread:$0]  %s4, 32, %s526, [#allocation6]
        $region28: #{tpu_custom_call.1} parent=11 // pred_fallthru
          _
        // Predicated region
        $region29: #{tpu_custom_call.1} parent=11 // pred_check
          %p529 = pneg %p164
        $region30: #{tpu_custom_call.1} parent=11 // pred_check_branch
          %531 = sbr.rel (%p529) target = $region32
        $region31: #{tpu_custom_call.1} parent=11 // pred_region
          %s533 = ssub.s32 128, 128
          %534 = vsyncadd [#allocation6], %s533
          %s536 = sshll.u32 [#allocation7], 4
          %s537 = int_to_ptr.vmem [resolvable:$true] %s536
          %539 = dma.hbm_to_vmem [thread:$0]  %s5, 128, %s537, [#allocation6]
        $region32: #{tpu_custom_call.1} parent=11 // pred_fallthru
          _
        // Predicated region
        $region33: #{tpu_custom_call.1} parent=11 // pred_check
          %p540 = pneg %p185
        $region34: #{tpu_custom_call.1} parent=11 // pred_check_branch
          %542 = sbr.rel (%p540) target = $region36
        $region35: #{tpu_custom_call.1} parent=11 // pred_region
          _
        $region36: #{tpu_custom_call.1} parent=11 // pred_fallthru
          _
        // Predicated region
        $region37: #{tpu_custom_call.1} parent=11 // pred_check
          %p543 = pneg %p206
        $region38: #{tpu_custom_call.1} parent=11 // pred_check_branch
          %545 = sbr.rel (%p543) target = $region40
        $region39: #{tpu_custom_call.1} parent=11 // pred_region
          _
        $region40: #{tpu_custom_call.1} parent=11 // pred_fallthru
          _
        // Predicated region
        $region41: #{tpu_custom_call.1} parent=11 // pred_check
          %p546 = pneg %p227
        $region42: #{tpu_custom_call.1} parent=11 // pred_check_branch
          %548 = sbr.rel (%p546) target = $region44
        $region43: #{tpu_custom_call.1} parent=11 // pred_region
          %s550 = ssub.s32 4096, 4096
          %551 = vsyncadd [#allocation9], %s550
          %s552 = sshll.u32 [#allocation8], 4
          %s553 = int_to_ptr.vmem [resolvable:$true] %s552
          %558 = dma.hbm_to_vmem [thread:$0]  %s8, 4096, %s553, [#allocation9], 128, 128, 8
        $region44: #{tpu_custom_call.1} parent=11 // pred_fallthru
          _
        // Predicated region
        $region45: #{tpu_custom_call.1} parent=11 // pred_check
          %p559 = pneg %p248
        $region46: #{tpu_custom_call.1} parent=11 // pred_check_branch
          %561 = sbr.rel (%p559) target = $region48
        $region47: #{tpu_custom_call.1} parent=11 // pred_region
          %s563 = ssub.s32 4096, 4096
          %564 = vsyncadd [#allocation9], %s563
          %s565 = sshll.u32 [#allocation10], 4
          %s566 = int_to_ptr.vmem [resolvable:$true] %s565
          %571 = dma.hbm_to_vmem [thread:$0]  %s9, 4096, %s566, [#allocation9], 128, 128, 8
        $region48: #{tpu_custom_call.1} parent=11 // pred_fallthru
          _
        // Predicated region
        $region49: #{tpu_custom_call.1} parent=11 // pred_check
          %p572 = pneg %p269
        $region50: #{tpu_custom_call.1} parent=11 // pred_check_branch
          %574 = sbr.rel (%p572) target = $region52
        $region51: #{tpu_custom_call.1} parent=11 // pred_region
          _
        $region52: #{tpu_custom_call.1} parent=11 // pred_fallthru
          _
        // Predicated region
        $region53: #{tpu_custom_call.1} parent=11 // pred_check
          %p575 = pneg %p290
        $region54: #{tpu_custom_call.1} parent=11 // pred_check_branch
          %577 = sbr.rel (%p575) target = $region56
        $region55: #{tpu_custom_call.1} parent=11 // pred_region
          _
        $region56: #{tpu_custom_call.1} parent=11 // pred_fallthru
          _
        // Predicated region
        $region57: #{tpu_custom_call.1} parent=11 // pred_check
          %p578 = pneg %p311
        $region58: #{tpu_custom_call.1} parent=11 // pred_check_branch
          %580 = sbr.rel (%p578) target = $region60
        $region59: #{tpu_custom_call.1} parent=11 // pred_region
          _
        $region60: #{tpu_custom_call.1} parent=11 // pred_fallthru
          _
        // Predicated region
        $region61: #{tpu_custom_call.1} parent=11 // pred_check
          %p581 = pneg %p332
        $region62: #{tpu_custom_call.1} parent=11 // pred_check_branch
          %583 = sbr.rel (%p581) target = $region64
        $region63: #{tpu_custom_call.1} parent=11 // pred_region
          _
        $region64: #{tpu_custom_call.1} parent=11 // pred_fallthru
          _
        // Predicated region
        $region65: #{tpu_custom_call.1} parent=11 // pred_check
          %p584 = pneg %p353
        $region66: #{tpu_custom_call.1} parent=11 // pred_check_branch
          %586 = sbr.rel (%p584) target = $region68
        $region67: #{tpu_custom_call.1} parent=11 // pred_region
          _
        $region68: #{tpu_custom_call.1} parent=11 // pred_fallthru
          _
        // Predicated region
        $region69: #{tpu_custom_call.1} parent=11 // pred_check
          %p587 = pneg %p374
        $region70: #{tpu_custom_call.1} parent=11 // pred_check_branch
          %589 = sbr.rel (%p587) target = $region72
        $region71: #{tpu_custom_call.1} parent=11 // pred_region
          _
        $region72: #{tpu_custom_call.1} parent=11 // pred_fallthru
          _
        // Predicated region
        $region73: #{tpu_custom_call.1} parent=11 // pred_check
          %p590 = pneg %p395
        $region74: #{tpu_custom_call.1} parent=11 // pred_check_branch
          %592 = sbr.rel (%p590) target = $region76
        $region75: #{tpu_custom_call.1} parent=11 // pred_region
          _
        $region76: #{tpu_custom_call.1} parent=11 // pred_fallthru
          _
        // Predicated region
        $region77: #{tpu_custom_call.1} parent=11 // pred_check
          %p593 = pneg %p416
        $region78: #{tpu_custom_call.1} parent=11 // pred_check_branch
          %595 = sbr.rel (%p593) target = $region80
        $region79: #{tpu_custom_call.1} parent=11 // pred_region
          %s597 = ssub.s32 4096, 4096
          %598 = vsyncadd [#allocation12], %s597
          %s599 = sshll.u32 [#allocation11], 4
          %s600 = int_to_ptr.vmem [resolvable:$true] %s599
          %605 = dma.hbm_to_vmem [thread:$0]  %s17, 4096, %s600, [#allocation12], 128, 128, 8
        $region80: #{tpu_custom_call.1} parent=11 // pred_fallthru
          _
        // Predicated region
        $region81: #{tpu_custom_call.1} parent=11 // pred_check
          %p606 = pneg %p437
        $region82: #{tpu_custom_call.1} parent=11 // pred_check_branch
          %608 = sbr.rel (%p606) target = $region84
        $region83: #{tpu_custom_call.1} parent=11 // pred_region
          %s610 = ssub.s32 4096, 4096
          %611 = vsyncadd [#allocation12], %s610
          %s612 = sshll.u32 [#allocation13], 4
          %s613 = int_to_ptr.vmem [resolvable:$true] %s612
          %618 = dma.hbm_to_vmem [thread:$0]  %s18, 4096, %s613, [#allocation12], 128, 128, 8
        $region84: #{tpu_custom_call.1} parent=11 // pred_fallthru
          _
        // Predicated region
        $region85: #{tpu_custom_call.1} parent=11 // pred_check
          %p619 = pneg %p458
        $region86: #{tpu_custom_call.1} parent=11 // pred_check_branch
          %621 = sbr.rel (%p619) target = $region88
        $region87: #{tpu_custom_call.1} parent=11 // pred_region
          _
        $region88: #{tpu_custom_call.1} parent=11 // pred_fallthru
          _
      $region12: #{tpu_custom_call.1} parent=5 // pred_fallthru
        _
      %p622 = scmp.lt.s32.totalorder %s33, 2
      // Predicated region
      $region89: #{tpu_custom_call.1} parent=5 // pred_check
        %p623 = pneg %p622
      $region90: #{tpu_custom_call.1} parent=5 // pred_check_branch
        %625 = sbr.rel (%p623) target = $region92
      $region91: #{tpu_custom_call.1} parent=5 // pred_region
        // Predicated region
        $region93: #{tpu_custom_call.1} parent=91 // pred_check
          %p626 = pneg %p53
        $region94: #{tpu_custom_call.1} parent=91 // pred_check_branch
          %628 = sbr.rel (%p626) target = $region96
        $region95: #{tpu_custom_call.1} parent=91 // pred_region
          %p629 = scmp.lt.s32.totalorder %s33, 1
          %s630 = scalar_select %p629, %s33, 1
          %s631 = smul.addr %s630, 4
          %s632 = smul.addr %s631, 8
          %s633 = scalar_lea.vmem %s0, %s632
        $region96: #{tpu_custom_call.1} parent=91 // pred_fallthru
          _
      $region92: #{tpu_custom_call.1} parent=5 // pred_fallthru
        _
      %p634 = scmp.le.s32.totalorder 1, %s33
      %p635 = scmp.lt.s32.totalorder %s33, 3
      %p636 = pnand %p634, %p635
      %p637 = pneg %p636
      // Predicated region
      $region97: #{tpu_custom_call.1} parent=5 // pred_check
        _
      $region98: #{tpu_custom_call.1} parent=5 // pred_check_branch
        %639 = sbr.rel (%p636) target = $region100
      $region99: #{tpu_custom_call.1} parent=5 // pred_region
        %s640 = ssub.s32 %s33, 1
        // Predicated region
        $region101: #{tpu_custom_call.1} parent=99 // pred_check
          %p641 = pneg %p101
        $region102: #{tpu_custom_call.1} parent=99 // pred_check_branch
          %643 = sbr.rel (%p641) target = $region104
        $region103: #{tpu_custom_call.1} parent=99 // pred_region
          %644 = dma.done [#allocation3], 256
        $region104: #{tpu_custom_call.1} parent=99 // pred_fallthru
          _
        // Predicated region
        $region105: #{tpu_custom_call.1} parent=99 // pred_check
          %p645 = pneg %p143
        $region106: #{tpu_custom_call.1} parent=99 // pred_check_branch
          %647 = sbr.rel (%p645) target = $region108
        $region107: #{tpu_custom_call.1} parent=99 // pred_region
          %648 = dma.done [#allocation6], 32
        $region108: #{tpu_custom_call.1} parent=99 // pred_fallthru
          _
        // Predicated region
        $region109: #{tpu_custom_call.1} parent=99 // pred_check
          %p649 = pneg %p164
        $region110: #{tpu_custom_call.1} parent=99 // pred_check_branch
          %651 = sbr.rel (%p649) target = $region112
        $region111: #{tpu_custom_call.1} parent=99 // pred_region
          %652 = dma.done [#allocation6], 128
        $region112: #{tpu_custom_call.1} parent=99 // pred_fallthru
          _
        // Predicated region
        $region113: #{tpu_custom_call.1} parent=99 // pred_check
          %p653 = pneg %p227
        $region114: #{tpu_custom_call.1} parent=99 // pred_check_branch
          %655 = sbr.rel (%p653) target = $region116
        $region115: #{tpu_custom_call.1} parent=99 // pred_region
          %656 = dma.done [#allocation9], 4096
        $region116: #{tpu_custom_call.1} parent=99 // pred_fallthru
          _
        // Predicated region
        $region117: #{tpu_custom_call.1} parent=99 // pred_check
          %p657 = pneg %p248
        $region118: #{tpu_custom_call.1} parent=99 // pred_check_branch
          %659 = sbr.rel (%p657) target = $region120
        $region119: #{tpu_custom_call.1} parent=99 // pred_region
          %660 = dma.done [#allocation9], 4096
        $region120: #{tpu_custom_call.1} parent=99 // pred_fallthru
          _
        // Predicated region
        $region121: #{tpu_custom_call.1} parent=99 // pred_check
          %p661 = pneg %p416
        $region122: #{tpu_custom_call.1} parent=99 // pred_check_branch
          %663 = sbr.rel (%p661) target = $region124
        $region123: #{tpu_custom_call.1} parent=99 // pred_region
          %664 = dma.done [#allocation12], 4096
        $region124: #{tpu_custom_call.1} parent=99 // pred_fallthru
          _
        // Predicated region
        $region125: #{tpu_custom_call.1} parent=99 // pred_check
          %p665 = pneg %p437
        $region126: #{tpu_custom_call.1} parent=99 // pred_check_branch
          %667 = sbr.rel (%p665) target = $region128
        $region127: #{tpu_custom_call.1} parent=99 // pred_region
          %668 = dma.done [#allocation12], 4096
        $region128: #{tpu_custom_call.1} parent=99 // pred_fallthru
          _
        %p669 = scmp.lt.s32.totalorder %s38, 1
        %s670 = scalar_select %p669, %s38, 1
        %s671 = smul.addr %s670, 4
        %s672 = smul.addr %s671, 8
        %s673 = scalar_lea.vmem %s0, %s672
        %p674 = pneg %p59
        %p675 = pneg %p56
        %p676 = pneg %p80
        %p677 = pneg %p77
        %p678 = pneg %p101
        %p679 = pneg %p98
        %p680 = pneg %p122
        %p681 = pneg %p119
        %p682 = pneg %p143
        %p683 = pneg %p140
        %p684 = pneg %p164
        %p685 = pneg %p161
        %p686 = pneg %p185
        %p687 = pneg %p182
        %p688 = pneg %p206
        %p689 = pneg %p203
        %p690 = pneg %p227
        %p691 = pneg %p224
        %p692 = pneg %p248
        %p693 = pneg %p245
        %p694 = pneg %p269
        %p695 = pneg %p266
        %p696 = pneg %p290
        %p697 = pneg %p287
        %p698 = pneg %p311
        %p699 = pneg %p308
        %p700 = pneg %p332
        %p701 = pneg %p329
        %p702 = pneg %p353
        %p703 = pneg %p350
        %p704 = pneg %p374
        %p705 = pneg %p371
        %p706 = pneg %p395
        %p707 = pneg %p392
        %p708 = pneg %p416
        %p709 = pneg %p413
        %p710 = pneg %p437
        %p711 = pneg %p434
        %p712 = pneg %p458
        %p713 = pneg %p455
        %p714 = pneg %p484
        %p715 = pneg %p481
        %s716 = sand.u32 %s471, 1
        %s717 = scalar_lea.sflag [#allocation4], %s716
        %s718 = sand.u32 %s471, 1
        %s719 = smul.addr %s718, 32
        %s720 = scalar_lea.vmem [#allocation14], %s719
        %p721 = scmp.lt.s32.totalorder %s38, 1
        %s722 = scalar_select %p721, %s38, 1
        %s723 = smul.addr %s722, 4
        %s724 = smul.addr %s723, 8
        %s725 = scalar_lea.vmem %s0, %s724
        %v727 = vld [vmem:[%s725] sm:$0xff]
        %v728 = vld [vmem:[%s725 + $0x8] sm:$0xff]
        %v729 = vld [vmem:[%s725 + $0x10] sm:$0xff]
        %v730 = vld [vmem:[%s725 + $0x18] sm:$0xff]
        %v731 = vlaneseq
        %v732 = vshrl.u32 %v731, 7
        %v733 = vadd.s32 %v732, 8
        %vm734 = vcmp.ge.s32.totalorder %v732, 1
        %vm735 = vcmp.ge.s32.totalorder %v733, 1
        %v736 = vsel %vm734, 1, 0
        %v737 = vsel %vm735, 1, 0
        %v738 = vcvt.s32.f32 %v736
        %v739 = vcvt.s32.f32 %v737
        %vm740 = vcmp.le.s32.totalorder %v732, 14
        %vm741 = vcmp.le.s32.totalorder %v733, 14
        %v742 = vsel %vm740, 1, 0
        %v743 = vsel %vm741, 1, 0
        %v744 = vcvt.s32.f32 %v742
        %v745 = vcvt.s32.f32 %v743
        %v746 = vld [vmem:[%s3] sm:$0x3]
        %v747 = vld [vmem:[#allocation5] sm:$0x3]
        %v748 = vmul.f32 %v727, %v727
        %v749 = vmul.f32 %v728, %v728
        %v750 = vmul.f32 %v729, %v729
        %v751 = vmul.f32 %v730, %v730
        %v752 = vpack.c.bf16 %v729, %v727
        %v753 = vpack.c.bf16 %v730, %v728
        %v754 = vpack.c.bf16 %v750, %v748
        %v755 = vpack.c.bf16 %v751, %v749
        %v756 = vunpack.c.l.bf16 %v752
        %v757 = vunpack.c.l.bf16 %v753
        %v758 = vunpack.c.h.bf16 %v752
        %v759 = vunpack.c.h.bf16 %v753
        %v760 = vunpack.c.l.bf16 %v754
        %v761 = vunpack.c.l.bf16 %v755
        %v762 = vunpack.c.h.bf16 %v754
        %v763 = vunpack.c.h.bf16 %v755
        %v764 = vsub.f32 %v727, %v756
        %v765 = vsub.f32 %v728, %v757
        %v766 = vsub.f32 %v729, %v758
        %v767 = vsub.f32 %v730, %v759
        %v768 = vsub.f32 %v748, %v760
        %v769 = vsub.f32 %v749, %v761
        %v770 = vsub.f32 %v750, %v762
        %v771 = vsub.f32 %v751, %v763
        %v772 = vpack.c.bf16 %v766, %v764
        %v773 = vpack.c.bf16 %v767, %v765
        %v774 = vpack.c.bf16 %v770, %v768
        %v775 = vpack.c.bf16 %v771, %v769
        %v776 = vld [vmem:[%s1] sm:$0xf]
        %v777 = vld [vmem:[%s1 + $0x4] sm:$0xf]
        %v778 = vld [vmem:[%s1 + $0x8] sm:$0xf]
        %v779 = vld [vmem:[%s1 + $0xc] sm:$0xf]
        %v780 = vld [vmem:[%s1 + $0x10] sm:$0xf]
        %v781 = vld [vmem:[%s1 + $0x14] sm:$0xf]
        %v782 = vld [vmem:[%s1 + $0x18] sm:$0xf]
        %v783 = vld [vmem:[%s1 + $0x1c] sm:$0xf]
        %v784 = vld [vmem:[%s1 + $0x20] sm:$0xf]
        %v785 = vld [vmem:[%s1 + $0x24] sm:$0xf]
        %v786 = vld [vmem:[%s1 + $0x28] sm:$0xf]
        %v787 = vld [vmem:[%s1 + $0x2c] sm:$0xf]
        %v788 = vld [vmem:[%s1 + $0x30] sm:$0xf]
        %v789 = vld [vmem:[%s1 + $0x34] sm:$0xf]
        %v790 = vld [vmem:[%s1 + $0x38] sm:$0xf]
        %v791 = vld [vmem:[%s1 + $0x3c] sm:$0xf]
        %v792 = vld [vmem:[%s1 + $0x40] sm:$0xf]
        %v793 = vld [vmem:[%s1 + $0x44] sm:$0xf]
        %v794 = vld [vmem:[%s1 + $0x48] sm:$0xf]
        %v795 = vld [vmem:[%s1 + $0x4c] sm:$0xf]
        %v796 = vld [vmem:[%s1 + $0x50] sm:$0xf]
        %v797 = vld [vmem:[%s1 + $0x54] sm:$0xf]
        %v798 = vld [vmem:[%s1 + $0x58] sm:$0xf]
        %v799 = vld [vmem:[%s1 + $0x5c] sm:$0xf]
        %v800 = vld [vmem:[%s1 + $0x60] sm:$0xf]
        %v801 = vld [vmem:[%s1 + $0x64] sm:$0xf]
        %v802 = vld [vmem:[%s1 + $0x68] sm:$0xf]
        %v803 = vld [vmem:[%s1 + $0x6c] sm:$0xf]
        %v804 = vld [vmem:[%s1 + $0x70] sm:$0xf]
        %v805 = vld [vmem:[%s1 + $0x74] sm:$0xf]
        %v806 = vld [vmem:[%s1 + $0x78] sm:$0xf]
        %v807 = vld [vmem:[%s1 + $0x7c] sm:$0xf]
        %v840 = vunpack.c.l.b16 %v776
        %v841 = vunpack.c.l.b16 %v777
        %v842 = vunpack.c.l.b16 %v778
        %v843 = vunpack.c.l.b16 %v779
        %v844 = vunpack.c.l.b16 %v780
        %v845 = vunpack.c.l.b16 %v781
        %v846 = vunpack.c.l.b16 %v782
        %v847 = vunpack.c.l.b16 %v783
        %v848 = vunpack.c.l.b16 %v784
        %v849 = vunpack.c.l.b16 %v785
        %v850 = vunpack.c.l.b16 %v786
        %v851 = vunpack.c.l.b16 %v787
        %v852 = vunpack.c.l.b16 %v788
        %v853 = vunpack.c.l.b16 %v789
        %v854 = vunpack.c.l.b16 %v790
        %v855 = vunpack.c.l.b16 %v791
        %v856 = vunpack.c.l.b16 %v792
        %v857 = vunpack.c.l.b16 %v793
        %v858 = vunpack.c.l.b16 %v794
        %v859 = vunpack.c.l.b16 %v795
        %v860 = vunpack.c.l.b16 %v796
        %v861 = vunpack.c.l.b16 %v797
        %v862 = vunpack.c.l.b16 %v798
        %v863 = vunpack.c.l.b16 %v799
        %v864 = vunpack.c.l.b16 %v800
        %v865 = vunpack.c.l.b16 %v801
        %v866 = vunpack.c.l.b16 %v802
        %v867 = vunpack.c.l.b16 %v803
        %v868 = vunpack.c.l.b16 %v804
        %v869 = vunpack.c.l.b16 %v805
        %v870 = vunpack.c.l.b16 %v806
        %v871 = vunpack.c.l.b16 %v807
        %v872 = vpack.c.b16 %v841, %v840
        %v873 = vpack.c.b16 %v843, %v842
        %v874 = vpack.c.b16 %v845, %v844
        %v875 = vpack.c.b16 %v847, %v846
        %v876 = vpack.c.b16 %v849, %v848
        %v877 = vpack.c.b16 %v851, %v850
        %v878 = vpack.c.b16 %v853, %v852
        %v879 = vpack.c.b16 %v855, %v854
        %v880 = vpack.c.b16 %v857, %v856
        %v881 = vpack.c.b16 %v859, %v858
        %v882 = vpack.c.b16 %v861, %v860
        %v883 = vpack.c.b16 %v863, %v862
        %v884 = vpack.c.b16 %v865, %v864
        %v885 = vpack.c.b16 %v867, %v866
        %v886 = vpack.c.b16 %v869, %v868
        %v887 = vpack.c.b16 %v871, %v870
        %904 = vmatprep.subr.bf16.mxu0 0
        %905 = vmatpush1.bf16.msra.mxu0 %v872
        %906 = vmatprep.subr.bf16.mxu0 0
        %907 = vmatpush1.bf16.msra.mxu0 %v873
        %908 = vmatprep.subr.bf16.mxu0 0
        %909 = vmatpush1.bf16.msra.mxu0 %v874
        %910 = vmatprep.subr.bf16.mxu0 0
        %911 = vmatpush1.bf16.msra.mxu0 %v875
        %912 = vmatprep.subr.bf16.mxu0 0
        %913 = vmatpush1.bf16.msra.mxu0 %v876
        %914 = vmatprep.subr.bf16.mxu0 0
        %915 = vmatpush1.bf16.msra.mxu0 %v877
        %916 = vmatprep.subr.bf16.mxu0 0
        %917 = vmatpush1.bf16.msra.mxu0 %v878
        %918 = vmatprep.subr.bf16.mxu0 0
        %919 = vmatpush1.bf16.msra.mxu0 %v879
        %920 = vmatprep.subr.bf16.mxu0 0
        %921 = vmatpush1.bf16.msra.mxu0 %v880
        %922 = vmatprep.subr.bf16.mxu0 0
        %923 = vmatpush1.bf16.msra.mxu0 %v881
        %924 = vmatprep.subr.bf16.mxu0 0
        %925 = vmatpush1.bf16.msra.mxu0 %v882
        %926 = vmatprep.subr.bf16.mxu0 0
        %927 = vmatpush1.bf16.msra.mxu0 %v883
        %928 = vmatprep.subr.bf16.mxu0 0
        %929 = vmatpush1.bf16.msra.mxu0 %v884
        %930 = vmatprep.subr.bf16.mxu0 0
        %931 = vmatpush1.bf16.msra.mxu0 %v885
        %932 = vmatprep.subr.bf16.mxu0 0
        %933 = vmatpush1.bf16.msra.mxu0 %v886
        %934 = vmatprep.subr.bf16.mxu0 0
        %935 = vmatpush1.bf16.msra.mxu0 %v887
        %936 = vmatprep.mubr.bf16.mxu0 %v773
        %937 = vmatmul.mubr.bf16.gmra.mrb[0].mxu0 %v772
        %v938 = vpop.f32.mrb[0].mxu0
        %v939 = vadd.f32 0.0, %v938
        %v940 = vpop.f32.mrb[0].mxu0
        %v941 = vpop.f32.mrb[0].mxu0
        %v942 = vadd.f32 0.0, %v941
        %v943 = vpop.f32.mrb[0].mxu0
        %944 = vmatprep.mubr.bf16.mxu0 %v775
        %945 = vmatmul.mubr.bf16.gmra.mrb[0].mxu0 %v774
        %v946 = vpop.f32.mrb[0].mxu0
        %v947 = vadd.f32 0.0, %v946
        %v948 = vpop.f32.mrb[0].mxu0
        %v949 = vpop.f32.mrb[0].mxu0
        %v950 = vadd.f32 0.0, %v949
        %v951 = vpop.f32.mrb[0].mxu0
        %952 = vdwg.mxu0
        %953 = vmatprep.subr.bf16.mxu0 0
        %954 = vmatpush1.bf16.msra.mxu0 %v872
        %955 = vmatprep.subr.bf16.mxu0 0
        %956 = vmatpush1.bf16.msra.mxu0 %v873
        %957 = vmatprep.subr.bf16.mxu0 0
        %958 = vmatpush1.bf16.msra.mxu0 %v874
        %959 = vmatprep.subr.bf16.mxu0 0
        %960 = vmatpush1.bf16.msra.mxu0 %v875
        %961 = vmatprep.subr.bf16.mxu0 0
        %962 = vmatpush1.bf16.msra.mxu0 %v876
        %963 = vmatprep.subr.bf16.mxu0 0
        %964 = vmatpush1.bf16.msra.mxu0 %v877
        %965 = vmatprep.subr.bf16.mxu0 0
        %966 = vmatpush1.bf16.msra.mxu0 %v878
        %967 = vmatprep.subr.bf16.mxu0 0
        %968 = vmatpush1.bf16.msra.mxu0 %v879
        %969 = vmatprep.subr.bf16.mxu0 0
        %970 = vmatpush1.bf16.msra.mxu0 %v880
        %971 = vmatprep.subr.bf16.mxu0 0
        %972 = vmatpush1.bf16.msra.mxu0 %v881
        %973 = vmatprep.subr.bf16.mxu0 0
        %974 = vmatpush1.bf16.msra.mxu0 %v882
        %975 = vmatprep.subr.bf16.mxu0 0
        %976 = vmatpush1.bf16.msra.mxu0 %v883
        %977 = vmatprep.subr.bf16.mxu0 0
        %978 = vmatpush1.bf16.msra.mxu0 %v884
        %979 = vmatprep.subr.bf16.mxu0 0
        %980 = vmatpush1.bf16.msra.mxu0 %v885
        %981 = vmatprep.subr.bf16.mxu0 0
        %982 = vmatpush1.bf16.msra.mxu0 %v886
        %983 = vmatprep.subr.bf16.mxu0 0
        %984 = vmatpush1.bf16.msra.mxu0 %v887
        %985 = vmatprep.mubr.bf16.mxu0 %v753
        %986 = vmatmul.mubr.bf16.gmra.mrb[0].mxu0 %v752
        %v987 = vpop.f32.mrb[0].mxu0
        %v988 = vadd.f32 %v939, %v987
        %v989 = vpop.f32.mrb[0].mxu0
        %v990 = vpop.f32.mrb[0].mxu0
        %v991 = vadd.f32 %v942, %v990
        %v992 = vpop.f32.mrb[0].mxu0
        %993 = vmatprep.mubr.bf16.mxu0 %v755
        %994 = vmatmul.mubr.bf16.gmra.mrb[0].mxu0 %v754
        %v995 = vpop.f32.mrb[0].mxu0
        %v996 = vadd.f32 %v947, %v995
        %v997 = vpop.f32.mrb[0].mxu0
        %v998 = vpop.f32.mrb[0].mxu0
        %v999 = vadd.f32 %v950, %v998
        %v1000 = vpop.f32.mrb[0].mxu0
        %1001 = vdwg.mxu0
        %v1002 = vmul.f32 %v988, %v988
        %v1003 = vmul.f32 %v991, %v991
        %v1004 = vsub.f32 %v996, %v1002
        %v1005 = vsub.f32 %v999, %v1003
        %v1006 = vadd.f32 %v1004, 1e-06
        %v1007 = vadd.f32 %v1005, 1e-06
        %v1008 = vrsqrt.pop %v1006
        %v1009 = vmul.f32 %v1006, %v1008
        %vm1010 = vcmp.eq.f32.partialorder %v1006, inf
        %v1011 = vsel %vm1010, %v1006, %v1009
        %vm1012 = vcmp.eq.f32.partialorder %v1006, 0.0
        %v1013 = vand.u32 %v1006, 2147483648
        %v1014 = vsel %vm1012, %v1013, %v1011
        %v1015 = vrsqrt.pop %v1007
        %v1016 = vmul.f32 %v1007, %v1015
        %vm1017 = vcmp.eq.f32.partialorder %v1007, inf
        %v1018 = vsel %vm1017, %v1007, %v1016
        %vm1019 = vcmp.eq.f32.partialorder %v1007, 0.0
        %v1020 = vand.u32 %v1007, 2147483648
        %v1021 = vsel %vm1019, %v1020, %v1018
        %v1022 = vrcp.pop %v1014
        %v1023 = vmul.f32 1.0, %v1022
        %v1024 = vrcp.pop %v1021
        %v1025 = vmul.f32 1.0, %v1024
        %v1026 = vpack.c.bf16 %v991, %v988
        %v1027 = vpack.c.bf16 %v1025, %v1023
        %v1028 = vunpack.c.l.bf16 %v1026
        %v1029 = vunpack.c.h.bf16 %v1026
        %v1030 = vunpack.c.l.bf16 %v1027
        %v1031 = vunpack.c.h.bf16 %v1027
        %v1032 = vsub.f32 %v988, %v1028
        %v1033 = vsub.f32 %v991, %v1029
        %v1034 = vsub.f32 %v1023, %v1030
        %v1035 = vsub.f32 %v1025, %v1031
        %v1036 = vpack.c.bf16 %v1033, %v1032
        %v1037 = vpack.c.bf16 %v1035, %v1034
        %v1038 = vld [vmem:[#allocation2] sm:$0xff]
        %v1039 = vld [vmem:[#allocation2 + $0x8] sm:$0xff]
        %v1042 = vunpack.c.l.b16 %v1038
        %v1043 = vunpack.c.h.b16 %v1038
        %v1044 = vunpack.c.l.b16 %v1039
        %v1045 = vunpack.c.h.b16 %v1039
        %v1046 = vpack.c.b16 %v1044, %v1042
        %v1047 = vpack.c.b16 %v1045, %v1043
        %vm1050 = vcmask 130048
        %v1052 = vsel %vm1050, %v1036, 0
        %v1055 = vsel %vm1050, %v1037, 0
        %1057 = vmatprep.subr.bf16.mxu0 %v1047
        %1058 = vmatpush1.bf16.msra.mxu0 %v1046
        %1059 = vmatprep.subr.bf16.mxu0 0
        %1060 = vmatpush1.bf16.msra.mxu0 0
        %1061 = vmatprep.subr.bf16.mxu0 0
        %1062 = vmatpush1.bf16.msra.mxu0 0
        %1063 = vmatprep.subr.bf16.mxu0 0
        %1064 = vmatpush1.bf16.msra.mxu0 0
        %1065 = vmatprep.subr.bf16.mxu0 0
        %1066 = vmatpush1.bf16.msra.mxu0 0
        %1067 = vmatprep.subr.bf16.mxu0 0
        %1068 = vmatpush1.bf16.msra.mxu0 0
        %1069 = vmatprep.subr.bf16.mxu0 0
        %1070 = vmatpush1.bf16.msra.mxu0 0
        %1071 = vmatprep.subr.bf16.mxu0 0
        %1072 = vmatpush1.bf16.msra.mxu0 0
        %1073 = vmatprep.subr.bf16.mxu0 0
        %1074 = vmatpush1.bf16.msra.mxu0 0
        %1075 = vmatprep.subr.bf16.mxu0 0
        %1076 = vmatpush1.bf16.msra.mxu0 0
        %1077 = vmatprep.subr.bf16.mxu0 0
        %1078 = vmatpush1.bf16.msra.mxu0 0
        %1079 = vmatprep.subr.bf16.mxu0 0
        %1080 = vmatpush1.bf16.msra.mxu0 0
        %1081 = vmatprep.subr.bf16.mxu0 0
        %1082 = vmatpush1.bf16.msra.mxu0 0
        %1083 = vmatprep.subr.bf16.mxu0 0
        %1084 = vmatpush1.bf16.msra.mxu0 0
        %1085 = vmatprep.subr.bf16.mxu0 0
        %1086 = vmatpush1.bf16.msra.mxu0 0
        %1087 = vmatprep.subr.bf16.mxu0 0
        %1088 = vmatpush1.bf16.msra.mxu0 0
        %1089 = vmatprep.mubr.bf16.mxu0 0
        %1090 = vmatmul.mubr.bf16.gmra.mrb[0].mxu0 %v1052
        %v1091 = vpop.f32.mrb[0].mxu0
        %v1092 = vadd.f32 0.0, %v1091
        %v1093 = vpop.f32.mrb[0].mxu0
        %v1094 = vadd.f32 0.0, %v1093
        %v1095 = vpop.f32.mrb[0].mxu0
        %v1096 = vadd.f32 0.0, %v1095
        %v1097 = vpop.f32.mrb[0].mxu0
        %v1098 = vadd.f32 0.0, %v1097
        %1099 = vmatprep.mubr.bf16.mxu0 0
        %1100 = vmatmul.mubr.bf16.gmra.mrb[0].mxu0 %v1055
        %v1101 = vpop.f32.mrb[0].mxu0
        %v1102 = vadd.f32 0.0, %v1101
        %v1103 = vpop.f32.mrb[0].mxu0
        %v1104 = vadd.f32 0.0, %v1103
        %v1105 = vpop.f32.mrb[0].mxu0
        %v1106 = vadd.f32 0.0, %v1105
        %v1107 = vpop.f32.mrb[0].mxu0
        %v1108 = vadd.f32 0.0, %v1107
        %1109 = vdwg.mxu0
        %v1111 = vsel %vm1050, %v1026, 0
        %v1114 = vsel %vm1050, %v1027, 0
        %1116 = vmatprep.subr.bf16.mxu0 %v1047
        %1117 = vmatpush1.bf16.msra.mxu0 %v1046
        %1118 = vmatprep.subr.bf16.mxu0 0
        %1119 = vmatpush1.bf16.msra.mxu0 0
        %1120 = vmatprep.subr.bf16.mxu0 0
        %1121 = vmatpush1.bf16.msra.mxu0 0
        %1122 = vmatprep.subr.bf16.mxu0 0
        %1123 = vmatpush1.bf16.msra.mxu0 0
        %1124 = vmatprep.subr.bf16.mxu0 0
        %1125 = vmatpush1.bf16.msra.mxu0 0
        %1126 = vmatprep.subr.bf16.mxu0 0
        %1127 = vmatpush1.bf16.msra.mxu0 0
        %1128 = vmatprep.subr.bf16.mxu0 0
        %1129 = vmatpush1.bf16.msra.mxu0 0
        %1130 = vmatprep.subr.bf16.mxu0 0
        %1131 = vmatpush1.bf16.msra.mxu0 0
        %1132 = vmatprep.subr.bf16.mxu0 0
        %1133 = vmatpush1.bf16.msra.mxu0 0
        %1134 = vmatprep.subr.bf16.mxu0 0
        %1135 = vmatpush1.bf16.msra.mxu0 0
        %1136 = vmatprep.subr.bf16.mxu0 0
        %1137 = vmatpush1.bf16.msra.mxu0 0
        %1138 = vmatprep.subr.bf16.mxu0 0
        %1139 = vmatpush1.bf16.msra.mxu0 0
        %1140 = vmatprep.subr.bf16.mxu0 0
        %1141 = vmatpush1.bf16.msra.mxu0 0
        %1142 = vmatprep.subr.bf16.mxu0 0
        %1143 = vmatpush1.bf16.msra.mxu0 0
        %1144 = vmatprep.subr.bf16.mxu0 0
        %1145 = vmatpush1.bf16.msra.mxu0 0
        %1146 = vmatprep.subr.bf16.mxu0 0
        %1147 = vmatpush1.bf16.msra.mxu0 0
        %1148 = vmatprep.mubr.bf16.mxu0 0
        %1149 = vmatmul.mubr.bf16.gmra.mrb[0].mxu0 %v1111
        %v1150 = vpop.f32.mrb[0].mxu0
        %v1151 = vadd.f32 %v1092, %v1150
        %v1152 = vpop.f32.mrb[0].mxu0
        %v1153 = vadd.f32 %v1094, %v1152
        %v1154 = vpop.f32.mrb[0].mxu0
        %v1155 = vadd.f32 %v1096, %v1154
        %v1156 = vpop.f32.mrb[0].mxu0
        %v1157 = vadd.f32 %v1098, %v1156
        %1158 = vmatprep.mubr.bf16.mxu0 0
        %1159 = vmatmul.mubr.bf16.gmra.mrb[0].mxu0 %v1114
        %v1160 = vpop.f32.mrb[0].mxu0
        %v1161 = vadd.f32 %v1102, %v1160
        %v1162 = vpop.f32.mrb[0].mxu0
        %v1163 = vadd.f32 %v1104, %v1162
        %v1164 = vpop.f32.mrb[0].mxu0
        %v1165 = vadd.f32 %v1106, %v1164
        %v1166 = vpop.f32.mrb[0].mxu0
        %v1167 = vadd.f32 %v1108, %v1166
        %1168 = vdwg.mxu0
        %v1169 = vsub.f32 %v727, %v1151
        %v1170 = vsub.f32 %v728, %v1153
        %v1171 = vsub.f32 %v729, %v1155
        %v1172 = vsub.f32 %v730, %v1157
        %v1173 = vmul.f32 %v1169, %v1161
        %v1174 = vmul.f32 %v1170, %v1163
        %v1175 = vmul.f32 %v1171, %v1165
        %v1176 = vmul.f32 %v1172, %v1167
        %v1178 = vlaneseq
        %v1179 = vshrl.u32 %v1178, 7
        %v1180 = vsub.s32 0, %v1179
        %v1181 = vrot.slane %v746, %v1180
        %v1182 = vlaneseq
        %v1183 = vshrl.u32 %v1182, 7
        %v1184 = vsub.s32 1, %v1183
        %v1185 = vrot.slane %v746, %v1184
        %v1188 = vmul.f32 %v1173, %v1181
        %v1189 = vmul.f32 %v1174, %v1185
        %v1190 = vmul.f32 %v1175, %v1181
        %v1191 = vmul.f32 %v1176, %v1185
        %v1193 = vlaneseq
        %v1194 = vshrl.u32 %v1193, 7
        %v1195 = vsub.s32 0, %v1194
        %v1196 = vrot.slane %v747, %v1195
        %v1197 = vlaneseq
        %v1198 = vshrl.u32 %v1197, 7
        %v1199 = vsub.s32 1, %v1198
        %v1200 = vrot.slane %v747, %v1199
        %v1203 = vadd.f32 %v1188, %v1196
        %v1204 = vadd.f32 %v1189, %v1200
        %v1205 = vadd.f32 %v1190, %v1196
        %v1206 = vadd.f32 %v1191, %v1200
        %v1207 = vld [vmem:[#allocation7] sm:$0xff]
        %1208 = vrot.lane.b32.xlu0 %v1203, 16
        %v1209 = vpop.permute.xlu0 %1208
        %1210 = vrot.lane.b32.xlu0 %v1205, 16
        %v1211 = vpop.permute.xlu0 %1210
        %1212 = vrot.lane.b32.xlu0 %v1204, 16
        %v1213 = vpop.permute.xlu0 %1212
        %1214 = vrot.lane.b32.xlu0 %v1206, 16
        %v1215 = vpop.permute.xlu0 %1214
        %v1216 = vlaneseq
        %v1217 = vand.u32 %v1216, 127
        %vm1218 = vcmp.lt.s32.totalorder %v1217, 16
        %v1219 = vsel %vm1218, %v1209, %v1213
        %v1220 = vsel %vm1218, %v1211, %v1215
        %v1221 = vsel %vm1218, %v1213, %v1209
        %v1222 = vsel %vm1218, %v1215, %v1211
        %v1223 = vrot.slane %v1221, 7
        %v1224 = vrot.slane %v1219, 7
        %v1225 = vrot.slane %v1222, 7
        %v1226 = vrot.slane %v1220, 7
        %vm1227 = vcmp.lt.s32.totalorder %v732, 1
        %v1228 = vsel %vm1227, %v1223, %v1225
        %v1229 = vsel %vm1227, %v1224, %v1226
        %v1230 = vsel %vm1227, %v1225, %v1223
        %v1231 = vsel %vm1227, %v1226, %v1224
        %v1233 = vlaneseq
        %v1234 = vshrl.u32 %v1233, 7
        %v1235 = vsub.s32 0, %v1234
        %v1236 = vrot.slane %v1207, %v1235
        %v1237 = vlaneseq
        %v1238 = vshrl.u32 %v1237, 7
        %v1239 = vsub.s32 4, %v1238
        %v1240 = vrot.slane %v1207, %v1239
        %v1243 = vlaneseq
        %v1244 = vshrl.u32 %v1243, 7
        %v1245 = vsub.s32 0, %v1244
        %v1246 = vrot.slane %v1236, %v1245
        %v1247 = vlaneseq
        %v1248 = vshrl.u32 %v1247, 7
        %v1249 = vsub.s32 0, %v1248
        %v1250 = vrot.slane %v1240, %v1249
        %v1251 = vmul.f32 %v738, %v1246
        %v1252 = vmul.f32 %v738, %v1250
        %v1253 = vmul.f32 %v739, %v1246
        %v1254 = vmul.f32 %v739, %v1250
        %v1255 = vmul.f32 %v1230, %v1251
        %v1256 = vmul.f32 %v1231, %v1252
        %v1257 = vmul.f32 %v1228, %v1253
        %v1258 = vmul.f32 %v1229, %v1254
        %v1259 = vrot.slane %v1221, 1
        %v1260 = vrot.slane %v1219, 1
        %v1261 = vrot.slane %v1222, 1
        %v1262 = vrot.slane %v1220, 1
        %vm1263 = vcmp.lt.s32.totalorder %v732, 7
        %v1264 = vsel %vm1263, %v1259, %v1261
        %v1265 = vsel %vm1263, %v1260, %v1262
        %v1266 = vsel %vm1263, %v1261, %v1259
        %v1267 = vsel %vm1263, %v1262, %v1260
        %v1268 = vlaneseq
        %v1269 = vshrl.u32 %v1268, 7
        %v1270 = vsub.s32 1, %v1269
        %v1271 = vrot.slane %v1207, %v1270
        %v1272 = vlaneseq
        %v1273 = vshrl.u32 %v1272, 7
        %v1274 = vsub.s32 5, %v1273
        %v1275 = vrot.slane %v1207, %v1274
        %v1278 = vlaneseq
        %v1279 = vshrl.u32 %v1278, 7
        %v1280 = vsub.s32 1, %v1279
        %v1281 = vrot.slane %v1271, %v1280
        %v1282 = vlaneseq
        %v1283 = vshrl.u32 %v1282, 7
        %v1284 = vsub.s32 1, %v1283
        %v1285 = vrot.slane %v1275, %v1284
        %v1286 = vmul.f32 %v744, %v1281
        %v1287 = vmul.f32 %v744, %v1285
        %v1288 = vmul.f32 %v745, %v1281
        %v1289 = vmul.f32 %v745, %v1285
        %v1290 = vmul.f32 %v1264, %v1286
        %v1291 = vmul.f32 %v1265, %v1287
        %v1292 = vmul.f32 %v1266, %v1288
        %v1293 = vmul.f32 %v1267, %v1289
        %v1294 = vadd.f32 %v1255, %v1290
        %v1295 = vadd.f32 %v1256, %v1291
        %v1296 = vadd.f32 %v1257, %v1292
        %v1297 = vadd.f32 %v1258, %v1293
        %1298 = vrot.lane.b32.xlu0 %v1203, 112
        %v1299 = vpop.permute.xlu0 %1298
        %1300 = vrot.lane.b32.xlu0 %v1205, 112
        %v1301 = vpop.permute.xlu0 %1300
        %1302 = vrot.lane.b32.xlu0 %v1204, 112
        %v1303 = vpop.permute.xlu0 %1302
        %1304 = vrot.lane.b32.xlu0 %v1206, 112
        %v1305 = vpop.permute.xlu0 %1304
        %vm1306 = vcmp.lt.s32.totalorder %v1217, 112
        %v1307 = vsel %vm1306, %v1299, %v1303
        %v1308 = vsel %vm1306, %v1301, %v1305
        %v1309 = vsel %vm1306, %v1303, %v1299
        %v1310 = vsel %vm1306, %v1305, %v1301
        %v1311 = vrot.slane %v1307, 1
        %v1312 = vrot.slane %v1309, 1
        %v1313 = vrot.slane %v1308, 1
        %v1314 = vrot.slane %v1310, 1
        %v1315 = vsel %vm1263, %v1311, %v1313
        %v1316 = vsel %vm1263, %v1312, %v1314
        %v1317 = vsel %vm1263, %v1313, %v1311
        %v1318 = vsel %vm1263, %v1314, %v1312
        %v1319 = vlaneseq
        %v1320 = vshrl.u32 %v1319, 7
        %v1321 = vsub.s32 2, %v1320
        %v1322 = vrot.slane %v1207, %v1321
        %v1323 = vlaneseq
        %v1324 = vshrl.u32 %v1323, 7
        %v1325 = vsub.s32 6, %v1324
        %v1326 = vrot.slane %v1207, %v1325
        %v1329 = vlaneseq
        %v1330 = vshrl.u32 %v1329, 7
        %v1331 = vsub.s32 2, %v1330
        %v1332 = vrot.slane %v1322, %v1331
        %v1333 = vlaneseq
        %v1334 = vshrl.u32 %v1333, 7
        %v1335 = vsub.s32 2, %v1334
        %v1336 = vrot.slane %v1326, %v1335
        %v1337 = vmul.f32 %v744, %v1332
        %v1338 = vmul.f32 %v744, %v1336
        %v1339 = vmul.f32 %v745, %v1332
        %v1340 = vmul.f32 %v745, %v1336
        %v1341 = vmul.f32 %v1315, %v1337
        %v1342 = vmul.f32 %v1316, %v1338
        %v1343 = vmul.f32 %v1317, %v1339
        %v1344 = vmul.f32 %v1318, %v1340
        %v1345 = vadd.f32 %v1294, %v1341
        %v1346 = vadd.f32 %v1295, %v1342
        %v1347 = vadd.f32 %v1296, %v1343
        %v1348 = vadd.f32 %v1297, %v1344
        %v1349 = vrot.slane %v1307, 7
        %v1350 = vrot.slane %v1309, 7
        %v1351 = vrot.slane %v1308, 7
        %v1352 = vrot.slane %v1310, 7
        %v1353 = vsel %vm1227, %v1349, %v1351
        %v1354 = vsel %vm1227, %v1350, %v1352
        %v1355 = vsel %vm1227, %v1351, %v1349
        %v1356 = vsel %vm1227, %v1352, %v1350
        %v1357 = vlaneseq
        %v1358 = vshrl.u32 %v1357, 7
        %v1359 = vsub.s32 3, %v1358
        %v1360 = vrot.slane %v1207, %v1359
        %v1361 = vlaneseq
        %v1362 = vshrl.u32 %v1361, 7
        %v1363 = vsub.s32 7, %v1362
        %v1364 = vrot.slane %v1207, %v1363
        %v1367 = vlaneseq
        %v1368 = vshrl.u32 %v1367, 7
        %v1369 = vsub.s32 3, %v1368
        %v1370 = vrot.slane %v1360, %v1369
        %v1371 = vlaneseq
        %v1372 = vshrl.u32 %v1371, 7
        %v1373 = vsub.s32 3, %v1372
        %v1374 = vrot.slane %v1364, %v1373
        %v1375 = vmul.f32 %v738, %v1370
        %v1376 = vmul.f32 %v738, %v1374
        %v1377 = vmul.f32 %v739, %v1370
        %v1378 = vmul.f32 %v739, %v1374
        %v1379 = vmul.f32 %v1355, %v1375
        %v1380 = vmul.f32 %v1356, %v1376
        %v1381 = vmul.f32 %v1353, %v1377
        %v1382 = vmul.f32 %v1354, %v1378
        %v1383 = vadd.f32 %v1345, %v1379
        %v1384 = vadd.f32 %v1346, %v1380
        %v1385 = vadd.f32 %v1347, %v1381
        %v1386 = vadd.f32 %v1348, %v1382
        %v1387 = vld [vmem:[%s6] sm:$0xff]
        %v1388 = vld [vmem:[%s6 + $0x8] sm:$0xff]
        %v1389 = vld [vmem:[%s6 + $0x10] sm:$0x1]
        %v1390 = vld [vmem:[%s6 + $0x18] sm:$0x1]
        %v1391 = vrot.slane %v1383, 7
        %v1392 = vrot.slane %v1384, 7
        %v1393 = vrot.slane %v1385, 7
        %v1394 = vrot.slane %v1386, 7
        %v1395 = vsel %vm1227, %v1391, %v1393
        %v1396 = vsel %vm1227, %v1392, %v1394
        %v1397 = vsel %vm1227, %v1393, %v1391
        %v1398 = vsel %vm1227, %v1394, %v1392
        %v1399 = vmul.f32 %v1397, %v738
        %v1400 = vmul.f32 %v1398, %v738
        %v1401 = vmul.f32 %v1395, %v739
        %v1402 = vmul.f32 %v1396, %v739
        %v1403 = vrot.slane %v1383, 1
        %v1404 = vrot.slane %v1384, 1
        %v1405 = vrot.slane %v1385, 1
        %v1406 = vrot.slane %v1386, 1
        %v1407 = vsel %vm1263, %v1403, %v1405
        %v1408 = vsel %vm1263, %v1404, %v1406
        %v1409 = vsel %vm1263, %v1405, %v1403
        %v1410 = vsel %vm1263, %v1406, %v1404
        %v1411 = vmul.f32 %v1407, %v744
        %v1412 = vmul.f32 %v1408, %v744
        %v1413 = vmul.f32 %v1409, %v745
        %v1414 = vmul.f32 %v1410, %v745
        %1415 = vrot.lane.b32.xlu0 %v1399, 16
        %v1416 = vpop.permute.xlu0 %1415
        %1417 = vrot.lane.b32.xlu0 %v1401, 16
        %v1418 = vpop.permute.xlu0 %1417
        %1419 = vrot.lane.b32.xlu0 %v1400, 16
        %v1420 = vpop.permute.xlu0 %1419
        %1421 = vrot.lane.b32.xlu0 %v1402, 16
        %v1422 = vpop.permute.xlu0 %1421
        %v1423 = vsel %vm1218, %v1416, %v1420
        %v1424 = vsel %vm1218, %v1418, %v1422
        %v1425 = vsel %vm1218, %v1420, %v1416
        %v1426 = vsel %vm1218, %v1422, %v1418
        %v1427 = vlaneseq
        %v1428 = vshrl.u32 %v1427, 7
        %v1429 = vsub.s32 0, %v1428
        %v1430 = vrot.slane %v1387, %v1429
        %v1431 = vlaneseq
        %v1432 = vshrl.u32 %v1431, 7
        %v1433 = vsub.s32 0, %v1432
        %v1434 = vrot.slane %v1388, %v1433
        %v1435 = vmul.f32 %v1425, %v1430
        %v1436 = vmul.f32 %v1423, %v1434
        %v1437 = vmul.f32 %v1426, %v1430
        %v1438 = vmul.f32 %v1424, %v1434
        %v1439 = vlaneseq
        %v1440 = vshrl.u32 %v1439, 7
        %v1441 = vsub.s32 1, %v1440
        %v1442 = vrot.slane %v1387, %v1441
        %v1443 = vlaneseq
        %v1444 = vshrl.u32 %v1443, 7
        %v1445 = vsub.s32 1, %v1444
        %v1446 = vrot.slane %v1388, %v1445
        %v1447 = vmul.f32 %v1399, %v1442
        %v1448 = vmul.f32 %v1400, %v1446
        %v1449 = vmul.f32 %v1401, %v1442
        %v1450 = vmul.f32 %v1402, %v1446
        %v1451 = vadd.f32 %v1435, %v1447
        %v1452 = vadd.f32 %v1436, %v1448
        %v1453 = vadd.f32 %v1437, %v1449
        %v1454 = vadd.f32 %v1438, %v1450
        %1455 = vrot.lane.b32.xlu0 %v1399, 112
        %v1456 = vpop.permute.xlu0 %1455
        %1457 = vrot.lane.b32.xlu0 %v1401, 112
        %v1458 = vpop.permute.xlu0 %1457
        %1459 = vrot.lane.b32.xlu0 %v1400, 112
        %v1460 = vpop.permute.xlu0 %1459
        %1461 = vrot.lane.b32.xlu0 %v1402, 112
        %v1462 = vpop.permute.xlu0 %1461
        %v1463 = vsel %vm1306, %v1456, %v1460
        %v1464 = vsel %vm1306, %v1458, %v1462
        %v1465 = vsel %vm1306, %v1460, %v1456
        %v1466 = vsel %vm1306, %v1462, %v1458
        %v1467 = vlaneseq
        %v1468 = vshrl.u32 %v1467, 7
        %v1469 = vsub.s32 2, %v1468
        %v1470 = vrot.slane %v1387, %v1469
        %v1471 = vlaneseq
        %v1472 = vshrl.u32 %v1471, 7
        %v1473 = vsub.s32 2, %v1472
        %v1474 = vrot.slane %v1388, %v1473
        %v1475 = vmul.f32 %v1463, %v1470
        %v1476 = vmul.f32 %v1465, %v1474
        %v1477 = vmul.f32 %v1464, %v1470
        %v1478 = vmul.f32 %v1466, %v1474
        %v1479 = vadd.f32 %v1451, %v1475
        %v1480 = vadd.f32 %v1452, %v1476
        %v1481 = vadd.f32 %v1453, %v1477
        %v1482 = vadd.f32 %v1454, %v1478
        %1483 = vrot.lane.b32.xlu0 %v1383, 16
        %v1484 = vpop.permute.xlu0 %1483
        %1485 = vrot.lane.b32.xlu0 %v1385, 16
        %v1486 = vpop.permute.xlu0 %1485
        %1487 = vrot.lane.b32.xlu0 %v1384, 16
        %v1488 = vpop.permute.xlu0 %1487
        %1489 = vrot.lane.b32.xlu0 %v1386, 16
        %v1490 = vpop.permute.xlu0 %1489
        %v1491 = vsel %vm1218, %v1484, %v1488
        %v1492 = vsel %vm1218, %v1486, %v1490
        %v1493 = vsel %vm1218, %v1488, %v1484
        %v1494 = vsel %vm1218, %v1490, %v1486
        %v1495 = vlaneseq
        %v1496 = vshrl.u32 %v1495, 7
        %v1497 = vsub.s32 3, %v1496
        %v1498 = vrot.slane %v1387, %v1497
        %v1499 = vlaneseq
        %v1500 = vshrl.u32 %v1499, 7
        %v1501 = vsub.s32 3, %v1500
        %v1502 = vrot.slane %v1388, %v1501
        %v1503 = vmul.f32 %v1493, %v1498
        %v1504 = vmul.f32 %v1491, %v1502
        %v1505 = vmul.f32 %v1494, %v1498
        %v1506 = vmul.f32 %v1492, %v1502
        %v1507 = vadd.f32 %v1479, %v1503
        %v1508 = vadd.f32 %v1480, %v1504
        %v1509 = vadd.f32 %v1481, %v1505
        %v1510 = vadd.f32 %v1482, %v1506
        %v1511 = vlaneseq
        %v1512 = vshrl.u32 %v1511, 7
        %v1513 = vsub.s32 4, %v1512
        %v1514 = vrot.slane %v1387, %v1513
        %v1515 = vlaneseq
        %v1516 = vshrl.u32 %v1515, 7
        %v1517 = vsub.s32 4, %v1516
        %v1518 = vrot.slane %v1388, %v1517
        %v1519 = vmul.f32 %v1383, %v1514
        %v1520 = vmul.f32 %v1384, %v1518
        %v1521 = vmul.f32 %v1385, %v1514
        %v1522 = vmul.f32 %v1386, %v1518
        %v1523 = vadd.f32 %v1507, %v1519
        %v1524 = vadd.f32 %v1508, %v1520
        %v1525 = vadd.f32 %v1509, %v1521
        %v1526 = vadd.f32 %v1510, %v1522
        %1527 = vrot.lane.b32.xlu0 %v1383, 112
        %v1528 = vpop.permute.xlu0 %1527
        %1529 = vrot.lane.b32.xlu0 %v1385, 112
        %v1530 = vpop.permute.xlu0 %1529
        %1531 = vrot.lane.b32.xlu0 %v1384, 112
        %v1532 = vpop.permute.xlu0 %1531
        %1533 = vrot.lane.b32.xlu0 %v1386, 112
        %v1534 = vpop.permute.xlu0 %1533
        %v1535 = vsel %vm1306, %v1528, %v1532
        %v1536 = vsel %vm1306, %v1530, %v1534
        %v1537 = vsel %vm1306, %v1532, %v1528
        %v1538 = vsel %vm1306, %v1534, %v1530
        %v1539 = vlaneseq
        %v1540 = vshrl.u32 %v1539, 7
        %v1541 = vsub.s32 5, %v1540
        %v1542 = vrot.slane %v1387, %v1541
        %v1543 = vlaneseq
        %v1544 = vshrl.u32 %v1543, 7
        %v1545 = vsub.s32 5, %v1544
        %v1546 = vrot.slane %v1388, %v1545
        %v1547 = vmul.f32 %v1535, %v1542
        %v1548 = vmul.f32 %v1537, %v1546
        %v1549 = vmul.f32 %v1536, %v1542
        %v1550 = vmul.f32 %v1538, %v1546
        %v1551 = vadd.f32 %v1523, %v1547
        %v1552 = vadd.f32 %v1524, %v1548
        %v1553 = vadd.f32 %v1525, %v1549
        %v1554 = vadd.f32 %v1526, %v1550
        %1555 = vrot.lane.b32.xlu0 %v1411, 16
        %v1556 = vpop.permute.xlu0 %1555
        %1557 = vrot.lane.b32.xlu0 %v1413, 16
        %v1558 = vpop.permute.xlu0 %1557
        %1559 = vrot.lane.b32.xlu0 %v1412, 16
        %v1560 = vpop.permute.xlu0 %1559
        %1561 = vrot.lane.b32.xlu0 %v1414, 16
        %v1562 = vpop.permute.xlu0 %1561
        %v1563 = vsel %vm1218, %v1556, %v1560
        %v1564 = vsel %vm1218, %v1558, %v1562
        %v1565 = vsel %vm1218, %v1560, %v1556
        %v1566 = vsel %vm1218, %v1562, %v1558
        %v1567 = vlaneseq
        %v1568 = vshrl.u32 %v1567, 7
        %v1569 = vsub.s32 6, %v1568
        %v1570 = vrot.slane %v1387, %v1569
        %v1571 = vlaneseq
        %v1572 = vshrl.u32 %v1571, 7
        %v1573 = vsub.s32 6, %v1572
        %v1574 = vrot.slane %v1388, %v1573
        %v1575 = vmul.f32 %v1565, %v1570
        %v1576 = vmul.f32 %v1563, %v1574
        %v1577 = vmul.f32 %v1566, %v1570
        %v1578 = vmul.f32 %v1564, %v1574
        %v1579 = vadd.f32 %v1551, %v1575
        %v1580 = vadd.f32 %v1552, %v1576
        %v1581 = vadd.f32 %v1553, %v1577
        %v1582 = vadd.f32 %v1554, %v1578
        %v1583 = vlaneseq
        %v1584 = vshrl.u32 %v1583, 7
        %v1585 = vsub.s32 7, %v1584
        %v1586 = vrot.slane %v1387, %v1585
        %v1587 = vlaneseq
        %v1588 = vshrl.u32 %v1587, 7
        %v1589 = vsub.s32 7, %v1588
        %v1590 = vrot.slane %v1388, %v1589
        %v1591 = vmul.f32 %v1411, %v1586
        %v1592 = vmul.f32 %v1412, %v1590
        %v1593 = vmul.f32 %v1413, %v1586
        %v1594 = vmul.f32 %v1414, %v1590
        %v1595 = vadd.f32 %v1579, %v1591
        %v1596 = vadd.f32 %v1580, %v1592
        %v1597 = vadd.f32 %v1581, %v1593
        %v1598 = vadd.f32 %v1582, %v1594
        %1599 = vrot.lane.b32.xlu0 %v1411, 112
        %v1600 = vpop.permute.xlu0 %1599
        %1601 = vrot.lane.b32.xlu0 %v1413, 112
        %v1602 = vpop.permute.xlu0 %1601
        %1603 = vrot.lane.b32.xlu0 %v1412, 112
        %v1604 = vpop.permute.xlu0 %1603
        %1605 = vrot.lane.b32.xlu0 %v1414, 112
        %v1606 = vpop.permute.xlu0 %1605
        %v1607 = vsel %vm1306, %v1600, %v1604
        %v1608 = vsel %vm1306, %v1602, %v1606
        %v1609 = vsel %vm1306, %v1604, %v1600
        %v1610 = vsel %vm1306, %v1606, %v1602
        %v1611 = vlaneseq
        %v1612 = vshrl.u32 %v1611, 7
        %v1613 = vsub.s32 0, %v1612
        %v1614 = vrot.slane %v1389, %v1613
        %v1615 = vlaneseq
        %v1616 = vshrl.u32 %v1615, 7
        %v1617 = vsub.s32 0, %v1616
        %v1618 = vrot.slane %v1390, %v1617
        %v1619 = vmul.f32 %v1607, %v1614
        %v1620 = vmul.f32 %v1609, %v1618
        %v1621 = vmul.f32 %v1608, %v1614
        %v1622 = vmul.f32 %v1610, %v1618
        %v1623 = vadd.f32 %v1595, %v1619
        %v1624 = vadd.f32 %v1596, %v1620
        %v1625 = vadd.f32 %v1597, %v1621
        %v1626 = vadd.f32 %v1598, %v1622
        %v1627 = vld [vmem:[%s7] sm:$0x3]
        %v1629 = vlaneseq
        %v1630 = vshrl.u32 %v1629, 7
        %v1631 = vsub.s32 0, %v1630
        %v1632 = vrot.slane %v1627, %v1631
        %v1633 = vlaneseq
        %v1634 = vshrl.u32 %v1633, 7
        %v1635 = vsub.s32 1, %v1634
        %v1636 = vrot.slane %v1627, %v1635
        %v1639 = vadd.f32 %v1623, %v1632
        %v1640 = vadd.f32 %v1624, %v1636
        %v1641 = vadd.f32 %v1625, %v1632
        %v1642 = vadd.f32 %v1626, %v1636
        %v1643 = vmul.f32 %v1639, 0.5
        %v1644 = vmul.f32 %v1640, 0.5
        %v1645 = vmul.f32 %v1641, 0.5
        %v1646 = vmul.f32 %v1642, 0.5
        %v1647 = vmul.f32 %v1639, 0.70710677
        %v1648 = vmul.f32 %v1640, 0.70710677
        %v1649 = vmul.f32 %v1641, 0.70710677
        %v1650 = vmul.f32 %v1642, 0.70710677
        %v1651 = vand.u32 2147483647, %v1647
        %v1652 = vand.u32 2147483647, %v1648
        %v1653 = vand.u32 2147483647, %v1649
        %v1654 = vand.u32 2147483647, %v1650
        %v1655 = vmul.f32 %v1651, 0.3275911
        %v1656 = vmul.f32 %v1652, 0.3275911
        %v1657 = vmul.f32 %v1653, 0.3275911
        %v1658 = vmul.f32 %v1654, 0.3275911
        %v1659 = vadd.f32 %v1655, 1.0
        %v1660 = vadd.f32 %v1656, 1.0
        %v1661 = vadd.f32 %v1657, 1.0
        %v1662 = vadd.f32 %v1658, 1.0
        %v1663 = vrcp.pop %v1659
        %v1664 = vmul.f32 1.0, %v1663
        %v1665 = vrcp.pop %v1660
        %v1666 = vmul.f32 1.0, %v1665
        %v1667 = vrcp.pop %v1661
        %v1668 = vmul.f32 1.0, %v1667
        %v1669 = vrcp.pop %v1662
        %v1670 = vmul.f32 1.0, %v1669
        %v1671 = vmul.f32 %v1664, 1.0614054
        %v1672 = vmul.f32 %v1666, 1.0614054
        %v1673 = vmul.f32 %v1668, 1.0614054
        %v1674 = vmul.f32 %v1670, 1.0614054
        %v1675 = vadd.f32 %v1671, -1.4531521
        %v1676 = vadd.f32 %v1672, -1.4531521
        %v1677 = vadd.f32 %v1673, -1.4531521
        %v1678 = vadd.f32 %v1674, -1.4531521
        %v1679 = vmul.f32 %v1664, %v1675
        %v1680 = vmul.f32 %v1666, %v1676
        %v1681 = vmul.f32 %v1668, %v1677
        %v1682 = vmul.f32 %v1670, %v1678
        %v1683 = vadd.f32 %v1679, 1.4214138
        %v1684 = vadd.f32 %v1680, 1.4214138
        %v1685 = vadd.f32 %v1681, 1.4214138
        %v1686 = vadd.f32 %v1682, 1.4214138
        %v1687 = vmul.f32 %v1664, %v1683
        %v1688 = vmul.f32 %v1666, %v1684
        %v1689 = vmul.f32 %v1668, %v1685
        %v1690 = vmul.f32 %v1670, %v1686
        %v1691 = vadd.f32 %v1687, -0.28449672
        %v1692 = vadd.f32 %v1688, -0.28449672
        %v1693 = vadd.f32 %v1689, -0.28449672
        %v1694 = vadd.f32 %v1690, -0.28449672
        %v1695 = vmul.f32 %v1664, %v1691
        %v1696 = vmul.f32 %v1666, %v1692
        %v1697 = vmul.f32 %v1668, %v1693
        %v1698 = vmul.f32 %v1670, %v1694
        %v1699 = vadd.f32 %v1695, 0.2548296
        %v1700 = vadd.f32 %v1696, 0.2548296
        %v1701 = vadd.f32 %v1697, 0.2548296
        %v1702 = vadd.f32 %v1698, 0.2548296
        %v1703 = vmul.f32 %v1664, %v1699
        %v1704 = vmul.f32 %v1666, %v1700
        %v1705 = vmul.f32 %v1668, %v1701
        %v1706 = vmul.f32 %v1670, %v1702
        %v1707 = vsub.f32 0.0, %v1651
        %v1708 = vsub.f32 0.0, %v1652
        %v1709 = vsub.f32 0.0, %v1653
        %v1710 = vsub.f32 0.0, %v1654
        %v1711 = vmul.f32 %v1707, %v1651
        %v1712 = vmul.f32 %v1708, %v1652
        %v1713 = vmul.f32 %v1709, %v1653
        %v1714 = vmul.f32 %v1710, %v1654
        %v1715 = vmul.f32 %v1711, 1.442695
        %v1716 = vpow.pop %v1715
        %v1717 = vmul.f32 %v1712, 1.442695
        %v1718 = vpow.pop %v1717
        %v1719 = vmul.f32 %v1713, 1.442695
        %v1720 = vpow.pop %v1719
        %v1721 = vmul.f32 %v1714, 1.442695
        %v1722 = vpow.pop %v1721
        %v1723 = vmul.f32 %v1703, %v1716
        %v1724 = vmul.f32 %v1704, %v1718
        %v1725 = vmul.f32 %v1705, %v1720
        %v1726 = vmul.f32 %v1706, %v1722
        %v1727 = vsub.f32 1.0, %v1723
        %v1728 = vsub.f32 1.0, %v1724
        %v1729 = vsub.f32 1.0, %v1725
        %v1730 = vsub.f32 1.0, %v1726
        %vm1731 = vcmp.lt.f32.partialorder %v1647, 0.0
        %vm1732 = vcmp.lt.f32.partialorder %v1648, 0.0
        %vm1733 = vcmp.lt.f32.partialorder %v1649, 0.0
        %vm1734 = vcmp.lt.f32.partialorder %v1650, 0.0
        %v1735 = vsub.f32 0.0, %v1727
        %v1736 = vsub.f32 0.0, %v1728
        %v1737 = vsub.f32 0.0, %v1729
        %v1738 = vsub.f32 0.0, %v1730
        %v1739 = vsel %vm1731, %v1735, %v1727
        %v1740 = vsel %vm1732, %v1736, %v1728
        %v1741 = vsel %vm1733, %v1737, %v1729
        %v1742 = vsel %vm1734, %v1738, %v1730
        %v1743 = vadd.f32 %v1739, 1.0
        %v1744 = vadd.f32 %v1740, 1.0
        %v1745 = vadd.f32 %v1741, 1.0
        %v1746 = vadd.f32 %v1742, 1.0
        %v1747 = vmul.f32 %v1643, %v1743
        %v1748 = vmul.f32 %v1644, %v1744
        %v1749 = vmul.f32 %v1645, %v1745
        %v1750 = vmul.f32 %v1646, %v1746
        %v1751 = vpack.c.bf16 %v1749, %v1747
        %v1752 = vpack.c.bf16 %v1750, %v1748
        %v1753 = vunpack.c.l.bf16 %v1751
        %v1754 = vunpack.c.l.bf16 %v1752
        %v1755 = vunpack.c.h.bf16 %v1751
        %v1756 = vunpack.c.h.bf16 %v1752
        %v1757 = vsub.f32 %v1747, %v1753
        %v1758 = vsub.f32 %v1748, %v1754
        %v1759 = vsub.f32 %v1749, %v1755
        %v1760 = vsub.f32 %v1750, %v1756
        %v1761 = vpack.c.bf16 %v1759, %v1757
        %v1762 = vpack.c.bf16 %v1760, %v1758
        %v1763 = vld [vmem:[#allocation8] sm:$0xff]
        %v1764 = vld [vmem:[#allocation8 + $0x8] sm:$0xff]
        %v1765 = vld [vmem:[#allocation8 + $0x10] sm:$0xff]
        %v1766 = vld [vmem:[#allocation8 + $0x18] sm:$0xff]
        %v1767 = vld [vmem:[#allocation8 + $0x20] sm:$0xff]
        %v1768 = vld [vmem:[#allocation8 + $0x28] sm:$0xff]
        %v1769 = vld [vmem:[#allocation8 + $0x30] sm:$0xff]
        %v1770 = vld [vmem:[#allocation8 + $0x38] sm:$0xff]
        %v1771 = vld [vmem:[#allocation8 + $0x40] sm:$0xff]
        %v1772 = vld [vmem:[#allocation8 + $0x48] sm:$0xff]
        %v1773 = vld [vmem:[#allocation8 + $0x50] sm:$0xff]
        %v1774 = vld [vmem:[#allocation8 + $0x58] sm:$0xff]
        %v1775 = vld [vmem:[#allocation8 + $0x60] sm:$0xff]
        %v1776 = vld [vmem:[#allocation8 + $0x68] sm:$0xff]
        %v1777 = vld [vmem:[#allocation8 + $0x70] sm:$0xff]
        %v1778 = vld [vmem:[#allocation8 + $0x78] sm:$0xff]
        %v1779 = vld [vmem:[#allocation8 + $0x80] sm:$0xff]
        %v1780 = vld [vmem:[#allocation8 + $0x88] sm:$0xff]
        %v1781 = vld [vmem:[#allocation8 + $0x90] sm:$0xff]
        %v1782 = vld [vmem:[#allocation8 + $0x98] sm:$0xff]
        %v1783 = vld [vmem:[#allocation8 + $0xa0] sm:$0xff]
        %v1784 = vld [vmem:[#allocation8 + $0xa8] sm:$0xff]
        %v1785 = vld [vmem:[#allocation8 + $0xb0] sm:$0xff]
        %v1786 = vld [vmem:[#allocation8 + $0xb8] sm:$0xff]
        %v1787 = vld [vmem:[#allocation8 + $0xc0] sm:$0xff]
        %v1788 = vld [vmem:[#allocation8 + $0xc8] sm:$0xff]
        %v1789 = vld [vmem:[#allocation8 + $0xd0] sm:$0xff]
        %v1790 = vld [vmem:[#allocation8 + $0xd8] sm:$0xff]
        %v1791 = vld [vmem:[#allocation8 + $0xe0] sm:$0xff]
        %v1792 = vld [vmem:[#allocation8 + $0xe8] sm:$0xff]
        %v1793 = vld [vmem:[#allocation8 + $0xf0] sm:$0xff]
        %v1794 = vld [vmem:[#allocation8 + $0xf8] sm:$0xff]
        %v1827 = vunpack.c.l.b16 %v1763
        %v1828 = vunpack.c.h.b16 %v1763
        %v1829 = vunpack.c.l.b16 %v1764
        %v1830 = vunpack.c.h.b16 %v1764
        %v1831 = vunpack.c.l.b16 %v1765
        %v1832 = vunpack.c.h.b16 %v1765
        %v1833 = vunpack.c.l.b16 %v1766
        %v1834 = vunpack.c.h.b16 %v1766
        %v1835 = vunpack.c.l.b16 %v1767
        %v1836 = vunpack.c.h.b16 %v1767
        %v1837 = vunpack.c.l.b16 %v1768
        %v1838 = vunpack.c.h.b16 %v1768
        %v1839 = vunpack.c.l.b16 %v1769
        %v1840 = vunpack.c.h.b16 %v1769
        %v1841 = vunpack.c.l.b16 %v1770
        %v1842 = vunpack.c.h.b16 %v1770
        %v1843 = vunpack.c.l.b16 %v1771
        %v1844 = vunpack.c.h.b16 %v1771
        %v1845 = vunpack.c.l.b16 %v1772
        %v1846 = vunpack.c.h.b16 %v1772
        %v1847 = vunpack.c.l.b16 %v1773
        %v1848 = vunpack.c.h.b16 %v1773
        %v1849 = vunpack.c.l.b16 %v1774
        %v1850 = vunpack.c.h.b16 %v1774
        %v1851 = vunpack.c.l.b16 %v1775
        %v1852 = vunpack.c.h.b16 %v1775
        %v1853 = vunpack.c.l.b16 %v1776
        %v1854 = vunpack.c.h.b16 %v1776
        %v1855 = vunpack.c.l.b16 %v1777
        %v1856 = vunpack.c.h.b16 %v1777
        %v1857 = vunpack.c.l.b16 %v1778
        %v1858 = vunpack.c.h.b16 %v1778
        %v1859 = vunpack.c.l.b16 %v1779
        %v1860 = vunpack.c.h.b16 %v1779
        %v1861 = vunpack.c.l.b16 %v1780
        %v1862 = vunpack.c.h.b16 %v1780
        %v1863 = vunpack.c.l.b16 %v1781
        %v1864 = vunpack.c.h.b16 %v1781
        %v1865 = vunpack.c.l.b16 %v1782
        %v1866 = vunpack.c.h.b16 %v1782
        %v1867 = vunpack.c.l.b16 %v1783
        %v1868 = vunpack.c.h.b16 %v1783
        %v1869 = vunpack.c.l.b16 %v1784
        %v1870 = vunpack.c.h.b16 %v1784
        %v1871 = vunpack.c.l.b16 %v1785
        %v1872 = vunpack.c.h.b16 %v1785
        %v1873 = vunpack.c.l.b16 %v1786
        %v1874 = vunpack.c.h.b16 %v1786
        %v1875 = vunpack.c.l.b16 %v1787
        %v1876 = vunpack.c.h.b16 %v1787
        %v1877 = vunpack.c.l.b16 %v1788
        %v1878 = vunpack.c.h.b16 %v1788
        %v1879 = vunpack.c.l.b16 %v1789
        %v1880 = vunpack.c.h.b16 %v1789
        %v1881 = vunpack.c.l.b16 %v1790
        %v1882 = vunpack.c.h.b16 %v1790
        %v1883 = vunpack.c.l.b16 %v1791
        %v1884 = vunpack.c.h.b16 %v1791
        %v1885 = vunpack.c.l.b16 %v1792
        %v1886 = vunpack.c.h.b16 %v1792
        %v1887 = vunpack.c.l.b16 %v1793
        %v1888 = vunpack.c.h.b16 %v1793
        %v1889 = vunpack.c.l.b16 %v1794
        %v1890 = vunpack.c.h.b16 %v1794
        %v1891 = vpack.c.b16 %v1829, %v1827
        %v1892 = vpack.c.b16 %v1830, %v1828
        %v1893 = vpack.c.b16 %v1833, %v1831
        %v1894 = vpack.c.b16 %v1834, %v1832
        %v1895 = vpack.c.b16 %v1837, %v1835
        %v1896 = vpack.c.b16 %v1838, %v1836
        %v1897 = vpack.c.b16 %v1841, %v1839
        %v1898 = vpack.c.b16 %v1842, %v1840
        %v1899 = vpack.c.b16 %v1845, %v1843
        %v1900 = vpack.c.b16 %v1846, %v1844
        %v1901 = vpack.c.b16 %v1849, %v1847
        %v1902 = vpack.c.b16 %v1850, %v1848
        %v1903 = vpack.c.b16 %v1853, %v1851
        %v1904 = vpack.c.b16 %v1854, %v1852
        %v1905 = vpack.c.b16 %v1857, %v1855
        %v1906 = vpack.c.b16 %v1858, %v1856
        %v1907 = vpack.c.b16 %v1861, %v1859
        %v1908 = vpack.c.b16 %v1862, %v1860
        %v1909 = vpack.c.b16 %v1865, %v1863
        %v1910 = vpack.c.b16 %v1866, %v1864
        %v1911 = vpack.c.b16 %v1869, %v1867
        %v1912 = vpack.c.b16 %v1870, %v1868
        %v1913 = vpack.c.b16 %v1873, %v1871
        %v1914 = vpack.c.b16 %v1874, %v1872
        %v1915 = vpack.c.b16 %v1877, %v1875
        %v1916 = vpack.c.b16 %v1878, %v1876
        %v1917 = vpack.c.b16 %v1881, %v1879
        %v1918 = vpack.c.b16 %v1882, %v1880
        %v1919 = vpack.c.b16 %v1885, %v1883
        %v1920 = vpack.c.b16 %v1886, %v1884
        %v1921 = vpack.c.b16 %v1889, %v1887
        %v1922 = vpack.c.b16 %v1890, %v1888
        %1955 = vmatprep.subr.bf16.mxu0 %v1892
        %1956 = vmatpush1.bf16.msra.mxu0 %v1891
        %1957 = vmatprep.subr.bf16.mxu0 %v1894
        %1958 = vmatpush1.bf16.msra.mxu0 %v1893
        %1959 = vmatprep.subr.bf16.mxu0 %v1896
        %1960 = vmatpush1.bf16.msra.mxu0 %v1895
        %1961 = vmatprep.subr.bf16.mxu0 %v1898
        %1962 = vmatpush1.bf16.msra.mxu0 %v1897
        %1963 = vmatprep.subr.bf16.mxu0 %v1900
        %1964 = vmatpush1.bf16.msra.mxu0 %v1899
        %1965 = vmatprep.subr.bf16.mxu0 %v1902
        %1966 = vmatpush1.bf16.msra.mxu0 %v1901
        %1967 = vmatprep.subr.bf16.mxu0 %v1904
        %1968 = vmatpush1.bf16.msra.mxu0 %v1903
        %1969 = vmatprep.subr.bf16.mxu0 %v1906
        %1970 = vmatpush1.bf16.msra.mxu0 %v1905
        %1971 = vmatprep.subr.bf16.mxu0 %v1908
        %1972 = vmatpush1.bf16.msra.mxu0 %v1907
        %1973 = vmatprep.subr.bf16.mxu0 %v1910
        %1974 = vmatpush1.bf16.msra.mxu0 %v1909
        %1975 = vmatprep.subr.bf16.mxu0 %v1912
        %1976 = vmatpush1.bf16.msra.mxu0 %v1911
        %1977 = vmatprep.subr.bf16.mxu0 %v1914
        %1978 = vmatpush1.bf16.msra.mxu0 %v1913
        %1979 = vmatprep.subr.bf16.mxu0 %v1916
        %1980 = vmatpush1.bf16.msra.mxu0 %v1915
        %1981 = vmatprep.subr.bf16.mxu0 %v1918
        %1982 = vmatpush1.bf16.msra.mxu0 %v1917
        %1983 = vmatprep.subr.bf16.mxu0 %v1920
        %1984 = vmatpush1.bf16.msra.mxu0 %v1919
        %1985 = vmatprep.subr.bf16.mxu0 %v1922
        %1986 = vmatpush1.bf16.msra.mxu0 %v1921
        %1987 = vmatprep.mubr.bf16.mxu0 %v1762
        %1988 = vmatmul.mubr.bf16.gmra.mrb[0].mxu0 %v1761
        %v1989 = vpop.f32.mrb[0].mxu0
        %v1990 = vadd.f32 0.0, %v1989
        %v1991 = vpop.f32.mrb[0].mxu0
        %v1992 = vadd.f32 0.0, %v1991
        %v1993 = vpop.f32.mrb[0].mxu0
        %v1994 = vadd.f32 0.0, %v1993
        %v1995 = vpop.f32.mrb[0].mxu0
        %v1996 = vadd.f32 0.0, %v1995
        %1997 = vdwg.mxu0
        %1998 = vmatprep.subr.bf16.mxu0 %v1892
        %1999 = vmatpush1.bf16.msra.mxu0 %v1891
        %2000 = vmatprep.subr.bf16.mxu0 %v1894
        %2001 = vmatpush1.bf16.msra.mxu0 %v1893
        %2002 = vmatprep.subr.bf16.mxu0 %v1896
        %2003 = vmatpush1.bf16.msra.mxu0 %v1895
        %2004 = vmatprep.subr.bf16.mxu0 %v1898
        %2005 = vmatpush1.bf16.msra.mxu0 %v1897
        %2006 = vmatprep.subr.bf16.mxu0 %v1900
        %2007 = vmatpush1.bf16.msra.mxu0 %v1899
        %2008 = vmatprep.subr.bf16.mxu0 %v1902
        %2009 = vmatpush1.bf16.msra.mxu0 %v1901
        %2010 = vmatprep.subr.bf16.mxu0 %v1904
        %2011 = vmatpush1.bf16.msra.mxu0 %v1903
        %2012 = vmatprep.subr.bf16.mxu0 %v1906
        %2013 = vmatpush1.bf16.msra.mxu0 %v1905
        %2014 = vmatprep.subr.bf16.mxu0 %v1908
        %2015 = vmatpush1.bf16.msra.mxu0 %v1907
        %2016 = vmatprep.subr.bf16.mxu0 %v1910
        %2017 = vmatpush1.bf16.msra.mxu0 %v1909
        %2018 = vmatprep.subr.bf16.mxu0 %v1912
        %2019 = vmatpush1.bf16.msra.mxu0 %v1911
        %2020 = vmatprep.subr.bf16.mxu0 %v1914
        %2021 = vmatpush1.bf16.msra.mxu0 %v1913
        %2022 = vmatprep.subr.bf16.mxu0 %v1916
        %2023 = vmatpush1.bf16.msra.mxu0 %v1915
        %2024 = vmatprep.subr.bf16.mxu0 %v1918
        %2025 = vmatpush1.bf16.msra.mxu0 %v1917
        %2026 = vmatprep.subr.bf16.mxu0 %v1920
        %2027 = vmatpush1.bf16.msra.mxu0 %v1919
        %2028 = vmatprep.subr.bf16.mxu0 %v1922
        %2029 = vmatpush1.bf16.msra.mxu0 %v1921
        %2030 = vmatprep.mubr.bf16.mxu0 %v1752
        %2031 = vmatmul.mubr.bf16.gmra.mrb[0].mxu0 %v1751
        %v2032 = vpop.f32.mrb[0].mxu0
        %v2033 = vadd.f32 %v1990, %v2032
        %v2034 = vpop.f32.mrb[0].mxu0
        %v2035 = vadd.f32 %v1992, %v2034
        %v2036 = vpop.f32.mrb[0].mxu0
        %v2037 = vadd.f32 %v1994, %v2036
        %v2038 = vpop.f32.mrb[0].mxu0
        %v2039 = vadd.f32 %v1996, %v2038
        %2040 = vdwg.mxu0
        %v2041 = vld [vmem:[#allocation10] sm:$0xff]
        %v2042 = vld [vmem:[#allocation10 + $0x8] sm:$0xff]
        %v2043 = vld [vmem:[#allocation10 + $0x10] sm:$0xff]
        %v2044 = vld [vmem:[#allocation10 + $0x18] sm:$0xff]
        %v2045 = vld [vmem:[#allocation10 + $0x20] sm:$0xff]
        %v2046 = vld [vmem:[#allocation10 + $0x28] sm:$0xff]
        %v2047 = vld [vmem:[#allocation10 + $0x30] sm:$0xff]
        %v2048 = vld [vmem:[#allocation10 + $0x38] sm:$0xff]
        %v2049 = vld [vmem:[#allocation10 + $0x40] sm:$0xff]
        %v2050 = vld [vmem:[#allocation10 + $0x48] sm:$0xff]
        %v2051 = vld [vmem:[#allocation10 + $0x50] sm:$0xff]
        %v2052 = vld [vmem:[#allocation10 + $0x58] sm:$0xff]
        %v2053 = vld [vmem:[#allocation10 + $0x60] sm:$0xff]
        %v2054 = vld [vmem:[#allocation10 + $0x68] sm:$0xff]
        %v2055 = vld [vmem:[#allocation10 + $0x70] sm:$0xff]
        %v2056 = vld [vmem:[#allocation10 + $0x78] sm:$0xff]
        %v2057 = vld [vmem:[#allocation10 + $0x80] sm:$0xff]
        %v2058 = vld [vmem:[#allocation10 + $0x88] sm:$0xff]
        %v2059 = vld [vmem:[#allocation10 + $0x90] sm:$0xff]
        %v2060 = vld [vmem:[#allocation10 + $0x98] sm:$0xff]
        %v2061 = vld [vmem:[#allocation10 + $0xa0] sm:$0xff]
        %v2062 = vld [vmem:[#allocation10 + $0xa8] sm:$0xff]
        %v2063 = vld [vmem:[#allocation10 + $0xb0] sm:$0xff]
        %v2064 = vld [vmem:[#allocation10 + $0xb8] sm:$0xff]
        %v2065 = vld [vmem:[#allocation10 + $0xc0] sm:$0xff]
        %v2066 = vld [vmem:[#allocation10 + $0xc8] sm:$0xff]
        %v2067 = vld [vmem:[#allocation10 + $0xd0] sm:$0xff]
        %v2068 = vld [vmem:[#allocation10 + $0xd8] sm:$0xff]
        %v2069 = vld [vmem:[#allocation10 + $0xe0] sm:$0xff]
        %v2070 = vld [vmem:[#allocation10 + $0xe8] sm:$0xff]
        %v2071 = vld [vmem:[#allocation10 + $0xf0] sm:$0xff]
        %v2072 = vld [vmem:[#allocation10 + $0xf8] sm:$0xff]
        %v2105 = vunpack.c.l.b16 %v2041
        %v2106 = vunpack.c.h.b16 %v2041
        %v2107 = vunpack.c.l.b16 %v2042
        %v2108 = vunpack.c.h.b16 %v2042
        %v2109 = vunpack.c.l.b16 %v2043
        %v2110 = vunpack.c.h.b16 %v2043
        %v2111 = vunpack.c.l.b16 %v2044
        %v2112 = vunpack.c.h.b16 %v2044
        %v2113 = vunpack.c.l.b16 %v2045
        %v2114 = vunpack.c.h.b16 %v2045
        %v2115 = vunpack.c.l.b16 %v2046
        %v2116 = vunpack.c.h.b16 %v2046
        %v2117 = vunpack.c.l.b16 %v2047
        %v2118 = vunpack.c.h.b16 %v2047
        %v2119 = vunpack.c.l.b16 %v2048
        %v2120 = vunpack.c.h.b16 %v2048
        %v2121 = vunpack.c.l.b16 %v2049
        %v2122 = vunpack.c.h.b16 %v2049
        %v2123 = vunpack.c.l.b16 %v2050
        %v2124 = vunpack.c.h.b16 %v2050
        %v2125 = vunpack.c.l.b16 %v2051
        %v2126 = vunpack.c.h.b16 %v2051
        %v2127 = vunpack.c.l.b16 %v2052
        %v2128 = vunpack.c.h.b16 %v2052
        %v2129 = vunpack.c.l.b16 %v2053
        %v2130 = vunpack.c.h.b16 %v2053
        %v2131 = vunpack.c.l.b16 %v2054
        %v2132 = vunpack.c.h.b16 %v2054
        %v2133 = vunpack.c.l.b16 %v2055
        %v2134 = vunpack.c.h.b16 %v2055
        %v2135 = vunpack.c.l.b16 %v2056
        %v2136 = vunpack.c.h.b16 %v2056
        %v2137 = vunpack.c.l.b16 %v2057
        %v2138 = vunpack.c.h.b16 %v2057
        %v2139 = vunpack.c.l.b16 %v2058
        %v2140 = vunpack.c.h.b16 %v2058
        %v2141 = vunpack.c.l.b16 %v2059
        %v2142 = vunpack.c.h.b16 %v2059
        %v2143 = vunpack.c.l.b16 %v2060
        %v2144 = vunpack.c.h.b16 %v2060
        %v2145 = vunpack.c.l.b16 %v2061
        %v2146 = vunpack.c.h.b16 %v2061
        %v2147 = vunpack.c.l.b16 %v2062
        %v2148 = vunpack.c.h.b16 %v2062
        %v2149 = vunpack.c.l.b16 %v2063
        %v2150 = vunpack.c.h.b16 %v2063
        %v2151 = vunpack.c.l.b16 %v2064
        %v2152 = vunpack.c.h.b16 %v2064
        %v2153 = vunpack.c.l.b16 %v2065
        %v2154 = vunpack.c.h.b16 %v2065
        %v2155 = vunpack.c.l.b16 %v2066
        %v2156 = vunpack.c.h.b16 %v2066
        %v2157 = vunpack.c.l.b16 %v2067
        %v2158 = vunpack.c.h.b16 %v2067
        %v2159 = vunpack.c.l.b16 %v2068
        %v2160 = vunpack.c.h.b16 %v2068
        %v2161 = vunpack.c.l.b16 %v2069
        %v2162 = vunpack.c.h.b16 %v2069
        %v2163 = vunpack.c.l.b16 %v2070
        %v2164 = vunpack.c.h.b16 %v2070
        %v2165 = vunpack.c.l.b16 %v2071
        %v2166 = vunpack.c.h.b16 %v2071
        %v2167 = vunpack.c.l.b16 %v2072
        %v2168 = vunpack.c.h.b16 %v2072
        %v2169 = vpack.c.b16 %v2107, %v2105
        %v2170 = vpack.c.b16 %v2108, %v2106
        %v2171 = vpack.c.b16 %v2111, %v2109
        %v2172 = vpack.c.b16 %v2112, %v2110
        %v2173 = vpack.c.b16 %v2115, %v2113
        %v2174 = vpack.c.b16 %v2116, %v2114
        %v2175 = vpack.c.b16 %v2119, %v2117
        %v2176 = vpack.c.b16 %v2120, %v2118
        %v2177 = vpack.c.b16 %v2123, %v2121
        %v2178 = vpack.c.b16 %v2124, %v2122
        %v2179 = vpack.c.b16 %v2127, %v2125
        %v2180 = vpack.c.b16 %v2128, %v2126
        %v2181 = vpack.c.b16 %v2131, %v2129
        %v2182 = vpack.c.b16 %v2132, %v2130
        %v2183 = vpack.c.b16 %v2135, %v2133
        %v2184 = vpack.c.b16 %v2136, %v2134
        %v2185 = vpack.c.b16 %v2139, %v2137
        %v2186 = vpack.c.b16 %v2140, %v2138
        %v2187 = vpack.c.b16 %v2143, %v2141
        %v2188 = vpack.c.b16 %v2144, %v2142
        %v2189 = vpack.c.b16 %v2147, %v2145
        %v2190 = vpack.c.b16 %v2148, %v2146
        %v2191 = vpack.c.b16 %v2151, %v2149
        %v2192 = vpack.c.b16 %v2152, %v2150
        %v2193 = vpack.c.b16 %v2155, %v2153
        %v2194 = vpack.c.b16 %v2156, %v2154
        %v2195 = vpack.c.b16 %v2159, %v2157
        %v2196 = vpack.c.b16 %v2160, %v2158
        %v2197 = vpack.c.b16 %v2163, %v2161
        %v2198 = vpack.c.b16 %v2164, %v2162
        %v2199 = vpack.c.b16 %v2167, %v2165
        %v2200 = vpack.c.b16 %v2168, %v2166
        %2233 = vmatprep.subr.bf16.mxu0 %v2170
        %2234 = vmatpush1.bf16.msra.mxu0 %v2169
        %2235 = vmatprep.subr.bf16.mxu0 %v2172
        %2236 = vmatpush1.bf16.msra.mxu0 %v2171
        %2237 = vmatprep.subr.bf16.mxu0 %v2174
        %2238 = vmatpush1.bf16.msra.mxu0 %v2173
        %2239 = vmatprep.subr.bf16.mxu0 %v2176
        %2240 = vmatpush1.bf16.msra.mxu0 %v2175
        %2241 = vmatprep.subr.bf16.mxu0 %v2178
        %2242 = vmatpush1.bf16.msra.mxu0 %v2177
        %2243 = vmatprep.subr.bf16.mxu0 %v2180
        %2244 = vmatpush1.bf16.msra.mxu0 %v2179
        %2245 = vmatprep.subr.bf16.mxu0 %v2182
        %2246 = vmatpush1.bf16.msra.mxu0 %v2181
        %2247 = vmatprep.subr.bf16.mxu0 %v2184
        %2248 = vmatpush1.bf16.msra.mxu0 %v2183
        %2249 = vmatprep.subr.bf16.mxu0 %v2186
        %2250 = vmatpush1.bf16.msra.mxu0 %v2185
        %2251 = vmatprep.subr.bf16.mxu0 %v2188
        %2252 = vmatpush1.bf16.msra.mxu0 %v2187
        %2253 = vmatprep.subr.bf16.mxu0 %v2190
        %2254 = vmatpush1.bf16.msra.mxu0 %v2189
        %2255 = vmatprep.subr.bf16.mxu0 %v2192
        %2256 = vmatpush1.bf16.msra.mxu0 %v2191
        %2257 = vmatprep.subr.bf16.mxu0 %v2194
        %2258 = vmatpush1.bf16.msra.mxu0 %v2193
        %2259 = vmatprep.subr.bf16.mxu0 %v2196
        %2260 = vmatpush1.bf16.msra.mxu0 %v2195
        %2261 = vmatprep.subr.bf16.mxu0 %v2198
        %2262 = vmatpush1.bf16.msra.mxu0 %v2197
        %2263 = vmatprep.subr.bf16.mxu0 %v2200
        %2264 = vmatpush1.bf16.msra.mxu0 %v2199
        %2265 = vmatprep.mubr.bf16.mxu0 %v1752
        %2266 = vmatmul.mubr.bf16.gmra.mrb[0].mxu0 %v1751
        %v2267 = vpop.f32.mrb[0].mxu0
        %v2268 = vadd.f32 0.0, %v2267
        %v2269 = vpop.f32.mrb[0].mxu0
        %v2270 = vadd.f32 0.0, %v2269
        %v2271 = vpop.f32.mrb[0].mxu0
        %v2272 = vadd.f32 0.0, %v2271
        %v2273 = vpop.f32.mrb[0].mxu0
        %v2274 = vadd.f32 0.0, %v2273
        %2275 = vdwg.mxu0
        %v2276 = vadd.f32 %v2033, %v2268
        %v2277 = vadd.f32 %v2035, %v2270
        %v2278 = vadd.f32 %v2037, %v2272
        %v2279 = vadd.f32 %v2039, %v2274
        %v2280 = vld [vmem:[%s10] sm:$0x3]
        %v2282 = vlaneseq
        %v2283 = vshrl.u32 %v2282, 7
        %v2284 = vsub.s32 0, %v2283
        %v2285 = vrot.slane %v2280, %v2284
        %v2286 = vlaneseq
        %v2287 = vshrl.u32 %v2286, 7
        %v2288 = vsub.s32 1, %v2287
        %v2289 = vrot.slane %v2280, %v2288
        %v2292 = vadd.f32 %v2276, %v2285
        %v2293 = vadd.f32 %v2277, %v2289
        %v2294 = vadd.f32 %v2278, %v2285
        %v2295 = vadd.f32 %v2279, %v2289
        %v2296 = vld [vmem:[%s11] sm:$0xff]
        %v2297 = vld [vmem:[%s11 + $0x8] sm:$0xff]
        %v2298 = vld [vmem:[%s11 + $0x10] sm:$0x1]
        %v2299 = vld [vmem:[%s11 + $0x18] sm:$0x1]
        %v2300 = vrot.slane %v1203, 7
        %v2301 = vrot.slane %v1204, 7
        %v2302 = vrot.slane %v1205, 7
        %v2303 = vrot.slane %v1206, 7
        %v2304 = vsel %vm1227, %v2300, %v2302
        %v2305 = vsel %vm1227, %v2301, %v2303
        %v2306 = vsel %vm1227, %v2302, %v2300
        %v2307 = vsel %vm1227, %v2303, %v2301
        %v2308 = vmul.f32 %v2306, %v738
        %v2309 = vmul.f32 %v2307, %v738
        %v2310 = vmul.f32 %v2304, %v739
        %v2311 = vmul.f32 %v2305, %v739
        %v2312 = vrot.slane %v1203, 1
        %v2313 = vrot.slane %v1204, 1
        %v2314 = vrot.slane %v1205, 1
        %v2315 = vrot.slane %v1206, 1
        %v2316 = vsel %vm1263, %v2312, %v2314
        %v2317 = vsel %vm1263, %v2313, %v2315
        %v2318 = vsel %vm1263, %v2314, %v2312
        %v2319 = vsel %vm1263, %v2315, %v2313
        %v2320 = vmul.f32 %v2316, %v744
        %v2321 = vmul.f32 %v2317, %v744
        %v2322 = vmul.f32 %v2318, %v745
        %v2323 = vmul.f32 %v2319, %v745
        %2324 = vrot.lane.b32.xlu0 %v2308, 16
        %v2325 = vpop.permute.xlu0 %2324
        %2326 = vrot.lane.b32.xlu0 %v2310, 16
        %v2327 = vpop.permute.xlu0 %2326
        %2328 = vrot.lane.b32.xlu0 %v2309, 16
        %v2329 = vpop.permute.xlu0 %2328
        %2330 = vrot.lane.b32.xlu0 %v2311, 16
        %v2331 = vpop.permute.xlu0 %2330
        %v2332 = vsel %vm1218, %v2325, %v2329
        %v2333 = vsel %vm1218, %v2327, %v2331
        %v2334 = vsel %vm1218, %v2329, %v2325
        %v2335 = vsel %vm1218, %v2331, %v2327
        %v2336 = vlaneseq
        %v2337 = vshrl.u32 %v2336, 7
        %v2338 = vsub.s32 0, %v2337
        %v2339 = vrot.slane %v2296, %v2338
        %v2340 = vlaneseq
        %v2341 = vshrl.u32 %v2340, 7
        %v2342 = vsub.s32 0, %v2341
        %v2343 = vrot.slane %v2297, %v2342
        %v2344 = vmul.f32 %v2334, %v2339
        %v2345 = vmul.f32 %v2332, %v2343
        %v2346 = vmul.f32 %v2335, %v2339
        %v2347 = vmul.f32 %v2333, %v2343
        %v2348 = vlaneseq
        %v2349 = vshrl.u32 %v2348, 7
        %v2350 = vsub.s32 1, %v2349
        %v2351 = vrot.slane %v2296, %v2350
        %v2352 = vlaneseq
        %v2353 = vshrl.u32 %v2352, 7
        %v2354 = vsub.s32 1, %v2353
        %v2355 = vrot.slane %v2297, %v2354
        %v2356 = vmul.f32 %v2308, %v2351
        %v2357 = vmul.f32 %v2309, %v2355
        %v2358 = vmul.f32 %v2310, %v2351
        %v2359 = vmul.f32 %v2311, %v2355
        %v2360 = vadd.f32 %v2344, %v2356
        %v2361 = vadd.f32 %v2345, %v2357
        %v2362 = vadd.f32 %v2346, %v2358
        %v2363 = vadd.f32 %v2347, %v2359
        %2364 = vrot.lane.b32.xlu0 %v2308, 112
        %v2365 = vpop.permute.xlu0 %2364
        %2366 = vrot.lane.b32.xlu0 %v2310, 112
        %v2367 = vpop.permute.xlu0 %2366
        %2368 = vrot.lane.b32.xlu0 %v2309, 112
        %v2369 = vpop.permute.xlu0 %2368
        %2370 = vrot.lane.b32.xlu0 %v2311, 112
        %v2371 = vpop.permute.xlu0 %2370
        %v2372 = vsel %vm1306, %v2365, %v2369
        %v2373 = vsel %vm1306, %v2367, %v2371
        %v2374 = vsel %vm1306, %v2369, %v2365
        %v2375 = vsel %vm1306, %v2371, %v2367
        %v2376 = vlaneseq
        %v2377 = vshrl.u32 %v2376, 7
        %v2378 = vsub.s32 2, %v2377
        %v2379 = vrot.slane %v2296, %v2378
        %v2380 = vlaneseq
        %v2381 = vshrl.u32 %v2380, 7
        %v2382 = vsub.s32 2, %v2381
        %v2383 = vrot.slane %v2297, %v2382
        %v2384 = vmul.f32 %v2372, %v2379
        %v2385 = vmul.f32 %v2374, %v2383
        %v2386 = vmul.f32 %v2373, %v2379
        %v2387 = vmul.f32 %v2375, %v2383
        %v2388 = vadd.f32 %v2360, %v2384
        %v2389 = vadd.f32 %v2361, %v2385
        %v2390 = vadd.f32 %v2362, %v2386
        %v2391 = vadd.f32 %v2363, %v2387
        %v2392 = vlaneseq
        %v2393 = vshrl.u32 %v2392, 7
        %v2394 = vsub.s32 3, %v2393
        %v2395 = vrot.slane %v2296, %v2394
        %v2396 = vlaneseq
        %v2397 = vshrl.u32 %v2396, 7
        %v2398 = vsub.s32 3, %v2397
        %v2399 = vrot.slane %v2297, %v2398
        %v2400 = vmul.f32 %v1221, %v2395
        %v2401 = vmul.f32 %v1219, %v2399
        %v2402 = vmul.f32 %v1222, %v2395
        %v2403 = vmul.f32 %v1220, %v2399
        %v2404 = vadd.f32 %v2388, %v2400
        %v2405 = vadd.f32 %v2389, %v2401
        %v2406 = vadd.f32 %v2390, %v2402
        %v2407 = vadd.f32 %v2391, %v2403
        %v2408 = vlaneseq
        %v2409 = vshrl.u32 %v2408, 7
        %v2410 = vsub.s32 4, %v2409
        %v2411 = vrot.slane %v2296, %v2410
        %v2412 = vlaneseq
        %v2413 = vshrl.u32 %v2412, 7
        %v2414 = vsub.s32 4, %v2413
        %v2415 = vrot.slane %v2297, %v2414
        %v2416 = vmul.f32 %v1203, %v2411
        %v2417 = vmul.f32 %v1204, %v2415
        %v2418 = vmul.f32 %v1205, %v2411
        %v2419 = vmul.f32 %v1206, %v2415
        %v2420 = vadd.f32 %v2404, %v2416
        %v2421 = vadd.f32 %v2405, %v2417
        %v2422 = vadd.f32 %v2406, %v2418
        %v2423 = vadd.f32 %v2407, %v2419
        %v2424 = vlaneseq
        %v2425 = vshrl.u32 %v2424, 7
        %v2426 = vsub.s32 5, %v2425
        %v2427 = vrot.slane %v2296, %v2426
        %v2428 = vlaneseq
        %v2429 = vshrl.u32 %v2428, 7
        %v2430 = vsub.s32 5, %v2429
        %v2431 = vrot.slane %v2297, %v2430
        %v2432 = vmul.f32 %v1307, %v2427
        %v2433 = vmul.f32 %v1309, %v2431
        %v2434 = vmul.f32 %v1308, %v2427
        %v2435 = vmul.f32 %v1310, %v2431
        %v2436 = vadd.f32 %v2420, %v2432
        %v2437 = vadd.f32 %v2421, %v2433
        %v2438 = vadd.f32 %v2422, %v2434
        %v2439 = vadd.f32 %v2423, %v2435
        %2440 = vrot.lane.b32.xlu0 %v2320, 16
        %v2441 = vpop.permute.xlu0 %2440
        %2442 = vrot.lane.b32.xlu0 %v2322, 16
        %v2443 = vpop.permute.xlu0 %2442
        %2444 = vrot.lane.b32.xlu0 %v2321, 16
        %v2445 = vpop.permute.xlu0 %2444
        %2446 = vrot.lane.b32.xlu0 %v2323, 16
        %v2447 = vpop.permute.xlu0 %2446
        %v2448 = vsel %vm1218, %v2441, %v2445
        %v2449 = vsel %vm1218, %v2443, %v2447
        %v2450 = vsel %vm1218, %v2445, %v2441
        %v2451 = vsel %vm1218, %v2447, %v2443
        %v2452 = vlaneseq
        %v2453 = vshrl.u32 %v2452, 7
        %v2454 = vsub.s32 6, %v2453
        %v2455 = vrot.slane %v2296, %v2454
        %v2456 = vlaneseq
        %v2457 = vshrl.u32 %v2456, 7
        %v2458 = vsub.s32 6, %v2457
        %v2459 = vrot.slane %v2297, %v2458
        %v2460 = vmul.f32 %v2450, %v2455
        %v2461 = vmul.f32 %v2448, %v2459
        %v2462 = vmul.f32 %v2451, %v2455
        %v2463 = vmul.f32 %v2449, %v2459
        %v2464 = vadd.f32 %v2436, %v2460
        %v2465 = vadd.f32 %v2437, %v2461
        %v2466 = vadd.f32 %v2438, %v2462
        %v2467 = vadd.f32 %v2439, %v2463
        %v2468 = vlaneseq
        %v2469 = vshrl.u32 %v2468, 7
        %v2470 = vsub.s32 7, %v2469
        %v2471 = vrot.slane %v2296, %v2470
        %v2472 = vlaneseq
        %v2473 = vshrl.u32 %v2472, 7
        %v2474 = vsub.s32 7, %v2473
        %v2475 = vrot.slane %v2297, %v2474
        %v2476 = vmul.f32 %v2320, %v2471
        %v2477 = vmul.f32 %v2321, %v2475
        %v2478 = vmul.f32 %v2322, %v2471
        %v2479 = vmul.f32 %v2323, %v2475
        %v2480 = vadd.f32 %v2464, %v2476
        %v2481 = vadd.f32 %v2465, %v2477
        %v2482 = vadd.f32 %v2466, %v2478
        %v2483 = vadd.f32 %v2467, %v2479
        %2484 = vrot.lane.b32.xlu0 %v2320, 112
        %v2485 = vpop.permute.xlu0 %2484
        %2486 = vrot.lane.b32.xlu0 %v2322, 112
        %v2487 = vpop.permute.xlu0 %2486
        %2488 = vrot.lane.b32.xlu0 %v2321, 112
        %v2489 = vpop.permute.xlu0 %2488
        %2490 = vrot.lane.b32.xlu0 %v2323, 112
        %v2491 = vpop.permute.xlu0 %2490
        %v2492 = vsel %vm1306, %v2485, %v2489
        %v2493 = vsel %vm1306, %v2487, %v2491
        %v2494 = vsel %vm1306, %v2489, %v2485
        %v2495 = vsel %vm1306, %v2491, %v2487
        %v2496 = vlaneseq
        %v2497 = vshrl.u32 %v2496, 7
        %v2498 = vsub.s32 0, %v2497
        %v2499 = vrot.slane %v2298, %v2498
        %v2500 = vlaneseq
        %v2501 = vshrl.u32 %v2500, 7
        %v2502 = vsub.s32 0, %v2501
        %v2503 = vrot.slane %v2299, %v2502
        %v2504 = vmul.f32 %v2492, %v2499
        %v2505 = vmul.f32 %v2494, %v2503
        %v2506 = vmul.f32 %v2493, %v2499
        %v2507 = vmul.f32 %v2495, %v2503
        %v2508 = vadd.f32 %v2480, %v2504
        %v2509 = vadd.f32 %v2481, %v2505
        %v2510 = vadd.f32 %v2482, %v2506
        %v2511 = vadd.f32 %v2483, %v2507
        %v2512 = vld [vmem:[%s12] sm:$0x3]
        %v2514 = vlaneseq
        %v2515 = vshrl.u32 %v2514, 7
        %v2516 = vsub.s32 0, %v2515
        %v2517 = vrot.slane %v2512, %v2516
        %v2518 = vlaneseq
        %v2519 = vshrl.u32 %v2518, 7
        %v2520 = vsub.s32 1, %v2519
        %v2521 = vrot.slane %v2512, %v2520
        %v2524 = vadd.f32 %v2508, %v2517
        %v2525 = vadd.f32 %v2509, %v2521
        %v2526 = vadd.f32 %v2510, %v2517
        %v2527 = vadd.f32 %v2511, %v2521
        %v2528 = vadd.f32 %v2292, %v2524
        %v2529 = vadd.f32 %v2293, %v2525
        %v2530 = vadd.f32 %v2294, %v2526
        %v2531 = vadd.f32 %v2295, %v2527
        %v2532 = vld [vmem:[%s13] sm:$0x3]
        %v2533 = vld [vmem:[%s14] sm:$0x3]
        %v2534 = vmul.f32 %v2528, %v2528
        %v2535 = vmul.f32 %v2529, %v2529
        %v2536 = vmul.f32 %v2530, %v2530
        %v2537 = vmul.f32 %v2531, %v2531
        %v2538 = vpack.c.bf16 %v2530, %v2528
        %v2539 = vpack.c.bf16 %v2531, %v2529
        %v2540 = vpack.c.bf16 %v2536, %v2534
        %v2541 = vpack.c.bf16 %v2537, %v2535
        %v2542 = vunpack.c.l.bf16 %v2538
        %v2543 = vunpack.c.l.bf16 %v2539
        %v2544 = vunpack.c.h.bf16 %v2538
        %v2545 = vunpack.c.h.bf16 %v2539
        %v2546 = vunpack.c.l.bf16 %v2540
        %v2547 = vunpack.c.l.bf16 %v2541
        %v2548 = vunpack.c.h.bf16 %v2540
        %v2549 = vunpack.c.h.bf16 %v2541
        %v2550 = vsub.f32 %v2528, %v2542
        %v2551 = vsub.f32 %v2529, %v2543
        %v2552 = vsub.f32 %v2530, %v2544
        %v2553 = vsub.f32 %v2531, %v2545
        %v2554 = vsub.f32 %v2534, %v2546
        %v2555 = vsub.f32 %v2535, %v2547
        %v2556 = vsub.f32 %v2536, %v2548
        %v2557 = vsub.f32 %v2537, %v2549
        %v2558 = vpack.c.bf16 %v2552, %v2550
        %v2559 = vpack.c.bf16 %v2553, %v2551
        %v2560 = vpack.c.bf16 %v2556, %v2554
        %v2561 = vpack.c.bf16 %v2557, %v2555
        %2562 = vmatprep.subr.bf16.mxu0 0
        %2563 = vmatpush1.bf16.msra.mxu0 %v872
        %2564 = vmatprep.subr.bf16.mxu0 0
        %2565 = vmatpush1.bf16.msra.mxu0 %v873
        %2566 = vmatprep.subr.bf16.mxu0 0
        %2567 = vmatpush1.bf16.msra.mxu0 %v874
        %2568 = vmatprep.subr.bf16.mxu0 0
        %2569 = vmatpush1.bf16.msra.mxu0 %v875
        %2570 = vmatprep.subr.bf16.mxu0 0
        %2571 = vmatpush1.bf16.msra.mxu0 %v876
        %2572 = vmatprep.subr.bf16.mxu0 0
        %2573 = vmatpush1.bf16.msra.mxu0 %v877
        %2574 = vmatprep.subr.bf16.mxu0 0
        %2575 = vmatpush1.bf16.msra.mxu0 %v878
        %2576 = vmatprep.subr.bf16.mxu0 0
        %2577 = vmatpush1.bf16.msra.mxu0 %v879
        %2578 = vmatprep.subr.bf16.mxu0 0
        %2579 = vmatpush1.bf16.msra.mxu0 %v880
        %2580 = vmatprep.subr.bf16.mxu0 0
        %2581 = vmatpush1.bf16.msra.mxu0 %v881
        %2582 = vmatprep.subr.bf16.mxu0 0
        %2583 = vmatpush1.bf16.msra.mxu0 %v882
        %2584 = vmatprep.subr.bf16.mxu0 0
        %2585 = vmatpush1.bf16.msra.mxu0 %v883
        %2586 = vmatprep.subr.bf16.mxu0 0
        %2587 = vmatpush1.bf16.msra.mxu0 %v884
        %2588 = vmatprep.subr.bf16.mxu0 0
        %2589 = vmatpush1.bf16.msra.mxu0 %v885
        %2590 = vmatprep.subr.bf16.mxu0 0
        %2591 = vmatpush1.bf16.msra.mxu0 %v886
        %2592 = vmatprep.subr.bf16.mxu0 0
        %2593 = vmatpush1.bf16.msra.mxu0 %v887
        %2594 = vmatprep.mubr.bf16.mxu0 %v2559
        %2595 = vmatmul.mubr.bf16.gmra.mrb[0].mxu0 %v2558
        %v2596 = vpop.f32.mrb[0].mxu0
        %v2597 = vadd.f32 0.0, %v2596
        %v2598 = vpop.f32.mrb[0].mxu0
        %v2599 = vpop.f32.mrb[0].mxu0
        %v2600 = vadd.f32 0.0, %v2599
        %v2601 = vpop.f32.mrb[0].mxu0
        %2602 = vmatprep.mubr.bf16.mxu0 %v2561
        %2603 = vmatmul.mubr.bf16.gmra.mrb[0].mxu0 %v2560
        %v2604 = vpop.f32.mrb[0].mxu0
        %v2605 = vadd.f32 0.0, %v2604
        %v2606 = vpop.f32.mrb[0].mxu0
        %v2607 = vpop.f32.mrb[0].mxu0
        %v2608 = vadd.f32 0.0, %v2607
        %v2609 = vpop.f32.mrb[0].mxu0
        %2610 = vdwg.mxu0
        %2611 = vmatprep.subr.bf16.mxu0 0
        %2612 = vmatpush1.bf16.msra.mxu0 %v872
        %2613 = vmatprep.subr.bf16.mxu0 0
        %2614 = vmatpush1.bf16.msra.mxu0 %v873
        %2615 = vmatprep.subr.bf16.mxu0 0
        %2616 = vmatpush1.bf16.msra.mxu0 %v874
        %2617 = vmatprep.subr.bf16.mxu0 0
        %2618 = vmatpush1.bf16.msra.mxu0 %v875
        %2619 = vmatprep.subr.bf16.mxu0 0
        %2620 = vmatpush1.bf16.msra.mxu0 %v876
        %2621 = vmatprep.subr.bf16.mxu0 0
        %2622 = vmatpush1.bf16.msra.mxu0 %v877
        %2623 = vmatprep.subr.bf16.mxu0 0
        %2624 = vmatpush1.bf16.msra.mxu0 %v878
        %2625 = vmatprep.subr.bf16.mxu0 0
        %2626 = vmatpush1.bf16.msra.mxu0 %v879
        %2627 = vmatprep.subr.bf16.mxu0 0
        %2628 = vmatpush1.bf16.msra.mxu0 %v880
        %2629 = vmatprep.subr.bf16.mxu0 0
        %2630 = vmatpush1.bf16.msra.mxu0 %v881
        %2631 = vmatprep.subr.bf16.mxu0 0
        %2632 = vmatpush1.bf16.msra.mxu0 %v882
        %2633 = vmatprep.subr.bf16.mxu0 0
        %2634 = vmatpush1.bf16.msra.mxu0 %v883
        %2635 = vmatprep.subr.bf16.mxu0 0
        %2636 = vmatpush1.bf16.msra.mxu0 %v884
        %2637 = vmatprep.subr.bf16.mxu0 0
        %2638 = vmatpush1.bf16.msra.mxu0 %v885
        %2639 = vmatprep.subr.bf16.mxu0 0
        %2640 = vmatpush1.bf16.msra.mxu0 %v886
        %2641 = vmatprep.subr.bf16.mxu0 0
        %2642 = vmatpush1.bf16.msra.mxu0 %v887
        %2643 = vmatprep.mubr.bf16.mxu0 %v2539
        %2644 = vmatmul.mubr.bf16.gmra.mrb[0].mxu0 %v2538
        %v2645 = vpop.f32.mrb[0].mxu0
        %v2646 = vadd.f32 %v2597, %v2645
        %v2647 = vpop.f32.mrb[0].mxu0
        %v2648 = vpop.f32.mrb[0].mxu0
        %v2649 = vadd.f32 %v2600, %v2648
        %v2650 = vpop.f32.mrb[0].mxu0
        %2651 = vmatprep.mubr.bf16.mxu0 %v2541
        %2652 = vmatmul.mubr.bf16.gmra.mrb[0].mxu0 %v2540
        %v2653 = vpop.f32.mrb[0].mxu0
        %v2654 = vadd.f32 %v2605, %v2653
        %v2655 = vpop.f32.mrb[0].mxu0
        %v2656 = vpop.f32.mrb[0].mxu0
        %v2657 = vadd.f32 %v2608, %v2656
        %v2658 = vpop.f32.mrb[0].mxu0
        %2659 = vdwg.mxu0
        %v2660 = vmul.f32 %v2646, %v2646
        %v2661 = vmul.f32 %v2649, %v2649
        %v2662 = vsub.f32 %v2654, %v2660
        %v2663 = vsub.f32 %v2657, %v2661
        %v2664 = vadd.f32 %v2662, 1e-06
        %v2665 = vadd.f32 %v2663, 1e-06
        %v2666 = vrsqrt.pop %v2664
        %v2667 = vmul.f32 %v2664, %v2666
        %vm2668 = vcmp.eq.f32.partialorder %v2664, inf
        %v2669 = vsel %vm2668, %v2664, %v2667
        %vm2670 = vcmp.eq.f32.partialorder %v2664, 0.0
        %v2671 = vand.u32 %v2664, 2147483648
        %v2672 = vsel %vm2670, %v2671, %v2669
        %v2673 = vrsqrt.pop %v2665
        %v2674 = vmul.f32 %v2665, %v2673
        %vm2675 = vcmp.eq.f32.partialorder %v2665, inf
        %v2676 = vsel %vm2675, %v2665, %v2674
        %vm2677 = vcmp.eq.f32.partialorder %v2665, 0.0
        %v2678 = vand.u32 %v2665, 2147483648
        %v2679 = vsel %vm2677, %v2678, %v2676
        %v2680 = vrcp.pop %v2672
        %v2681 = vmul.f32 1.0, %v2680
        %v2682 = vrcp.pop %v2679
        %v2683 = vmul.f32 1.0, %v2682
        %v2684 = vpack.c.bf16 %v2649, %v2646
        %v2685 = vpack.c.bf16 %v2683, %v2681
        %v2686 = vunpack.c.l.bf16 %v2684
        %v2687 = vunpack.c.h.bf16 %v2684
        %v2688 = vunpack.c.l.bf16 %v2685
        %v2689 = vunpack.c.h.bf16 %v2685
        %v2690 = vsub.f32 %v2646, %v2686
        %v2691 = vsub.f32 %v2649, %v2687
        %v2692 = vsub.f32 %v2681, %v2688
        %v2693 = vsub.f32 %v2683, %v2689
        %v2694 = vpack.c.bf16 %v2691, %v2690
        %v2695 = vpack.c.bf16 %v2693, %v2692
        %v2697 = vsel %vm1050, %v2694, 0
        %v2700 = vsel %vm1050, %v2695, 0
        %2702 = vmatprep.subr.bf16.mxu0 %v1047
        %2703 = vmatpush1.bf16.msra.mxu0 %v1046
        %2704 = vmatprep.subr.bf16.mxu0 0
        %2705 = vmatpush1.bf16.msra.mxu0 0
        %2706 = vmatprep.subr.bf16.mxu0 0
        %2707 = vmatpush1.bf16.msra.mxu0 0
        %2708 = vmatprep.subr.bf16.mxu0 0
        %2709 = vmatpush1.bf16.msra.mxu0 0
        %2710 = vmatprep.subr.bf16.mxu0 0
        %2711 = vmatpush1.bf16.msra.mxu0 0
        %2712 = vmatprep.subr.bf16.mxu0 0
        %2713 = vmatpush1.bf16.msra.mxu0 0
        %2714 = vmatprep.subr.bf16.mxu0 0
        %2715 = vmatpush1.bf16.msra.mxu0 0
        %2716 = vmatprep.subr.bf16.mxu0 0
        %2717 = vmatpush1.bf16.msra.mxu0 0
        %2718 = vmatprep.subr.bf16.mxu0 0
        %2719 = vmatpush1.bf16.msra.mxu0 0
        %2720 = vmatprep.subr.bf16.mxu0 0
        %2721 = vmatpush1.bf16.msra.mxu0 0
        %2722 = vmatprep.subr.bf16.mxu0 0
        %2723 = vmatpush1.bf16.msra.mxu0 0
        %2724 = vmatprep.subr.bf16.mxu0 0
        %2725 = vmatpush1.bf16.msra.mxu0 0
        %2726 = vmatprep.subr.bf16.mxu0 0
        %2727 = vmatpush1.bf16.msra.mxu0 0
        %2728 = vmatprep.subr.bf16.mxu0 0
        %2729 = vmatpush1.bf16.msra.mxu0 0
        %2730 = vmatprep.subr.bf16.mxu0 0
        %2731 = vmatpush1.bf16.msra.mxu0 0
        %2732 = vmatprep.subr.bf16.mxu0 0
        %2733 = vmatpush1.bf16.msra.mxu0 0
        %2734 = vmatprep.mubr.bf16.mxu0 0
        %2735 = vmatmul.mubr.bf16.gmra.mrb[0].mxu0 %v2697
        %v2736 = vpop.f32.mrb[0].mxu0
        %v2737 = vadd.f32 0.0, %v2736
        %v2738 = vpop.f32.mrb[0].mxu0
        %v2739 = vadd.f32 0.0, %v2738
        %v2740 = vpop.f32.mrb[0].mxu0
        %v2741 = vadd.f32 0.0, %v2740
        %v2742 = vpop.f32.mrb[0].mxu0
        %v2743 = vadd.f32 0.0, %v2742
        %2744 = vmatprep.mubr.bf16.mxu0 0
        %2745 = vmatmul.mubr.bf16.gmra.mrb[0].mxu0 %v2700
        %v2746 = vpop.f32.mrb[0].mxu0
        %v2747 = vadd.f32 0.0, %v2746
        %v2748 = vpop.f32.mrb[0].mxu0
        %v2749 = vadd.f32 0.0, %v2748
        %v2750 = vpop.f32.mrb[0].mxu0
        %v2751 = vadd.f32 0.0, %v2750
        %v2752 = vpop.f32.mrb[0].mxu0
        %v2753 = vadd.f32 0.0, %v2752
        %2754 = vdwg.mxu0
        %v2756 = vsel %vm1050, %v2684, 0
        %v2759 = vsel %vm1050, %v2685, 0
        %2761 = vmatprep.subr.bf16.mxu0 %v1047
        %2762 = vmatpush1.bf16.msra.mxu0 %v1046
        %2763 = vmatprep.subr.bf16.mxu0 0
        %2764 = vmatpush1.bf16.msra.mxu0 0
        %2765 = vmatprep.subr.bf16.mxu0 0
        %2766 = vmatpush1.bf16.msra.mxu0 0
        %2767 = vmatprep.subr.bf16.mxu0 0
        %2768 = vmatpush1.bf16.msra.mxu0 0
        %2769 = vmatprep.subr.bf16.mxu0 0
        %2770 = vmatpush1.bf16.msra.mxu0 0
        %2771 = vmatprep.subr.bf16.mxu0 0
        %2772 = vmatpush1.bf16.msra.mxu0 0
        %2773 = vmatprep.subr.bf16.mxu0 0
        %2774 = vmatpush1.bf16.msra.mxu0 0
        %2775 = vmatprep.subr.bf16.mxu0 0
        %2776 = vmatpush1.bf16.msra.mxu0 0
        %2777 = vmatprep.subr.bf16.mxu0 0
        %2778 = vmatpush1.bf16.msra.mxu0 0
        %2779 = vmatprep.subr.bf16.mxu0 0
        %2780 = vmatpush1.bf16.msra.mxu0 0
        %2781 = vmatprep.subr.bf16.mxu0 0
        %2782 = vmatpush1.bf16.msra.mxu0 0
        %2783 = vmatprep.subr.bf16.mxu0 0
        %2784 = vmatpush1.bf16.msra.mxu0 0
        %2785 = vmatprep.subr.bf16.mxu0 0
        %2786 = vmatpush1.bf16.msra.mxu0 0
        %2787 = vmatprep.subr.bf16.mxu0 0
        %2788 = vmatpush1.bf16.msra.mxu0 0
        %2789 = vmatprep.subr.bf16.mxu0 0
        %2790 = vmatpush1.bf16.msra.mxu0 0
        %2791 = vmatprep.subr.bf16.mxu0 0
        %2792 = vmatpush1.bf16.msra.mxu0 0
        %2793 = vmatprep.mubr.bf16.mxu0 0
        %2794 = vmatmul.mubr.bf16.gmra.mrb[0].mxu0 %v2756
        %v2795 = vpop.f32.mrb[0].mxu0
        %v2796 = vadd.f32 %v2737, %v2795
        %v2797 = vpop.f32.mrb[0].mxu0
        %v2798 = vadd.f32 %v2739, %v2797
        %v2799 = vpop.f32.mrb[0].mxu0
        %v2800 = vadd.f32 %v2741, %v2799
        %v2801 = vpop.f32.mrb[0].mxu0
        %v2802 = vadd.f32 %v2743, %v2801
        %2803 = vmatprep.mubr.bf16.mxu0 0
        %2804 = vmatmul.mubr.bf16.gmra.mrb[0].mxu0 %v2759
        %v2805 = vpop.f32.mrb[0].mxu0
        %v2806 = vadd.f32 %v2747, %v2805
        %v2807 = vpop.f32.mrb[0].mxu0
        %v2808 = vadd.f32 %v2749, %v2807
        %v2809 = vpop.f32.mrb[0].mxu0
        %v2810 = vadd.f32 %v2751, %v2809
        %v2811 = vpop.f32.mrb[0].mxu0
        %v2812 = vadd.f32 %v2753, %v2811
        %2813 = vdwg.mxu0
        %v2814 = vsub.f32 %v2528, %v2796
        %v2815 = vsub.f32 %v2529, %v2798
        %v2816 = vsub.f32 %v2530, %v2800
        %v2817 = vsub.f32 %v2531, %v2802
        %v2818 = vmul.f32 %v2814, %v2806
        %v2819 = vmul.f32 %v2815, %v2808
        %v2820 = vmul.f32 %v2816, %v2810
        %v2821 = vmul.f32 %v2817, %v2812
        %v2823 = vlaneseq
        %v2824 = vshrl.u32 %v2823, 7
        %v2825 = vsub.s32 0, %v2824
        %v2826 = vrot.slane %v2532, %v2825
        %v2827 = vlaneseq
        %v2828 = vshrl.u32 %v2827, 7
        %v2829 = vsub.s32 1, %v2828
        %v2830 = vrot.slane %v2532, %v2829
        %v2833 = vmul.f32 %v2818, %v2826
        %v2834 = vmul.f32 %v2819, %v2830
        %v2835 = vmul.f32 %v2820, %v2826
        %v2836 = vmul.f32 %v2821, %v2830
        %v2838 = vlaneseq
        %v2839 = vshrl.u32 %v2838, 7
        %v2840 = vsub.s32 0, %v2839
        %v2841 = vrot.slane %v2533, %v2840
        %v2842 = vlaneseq
        %v2843 = vshrl.u32 %v2842, 7
        %v2844 = vsub.s32 1, %v2843
        %v2845 = vrot.slane %v2533, %v2844
        %v2848 = vadd.f32 %v2833, %v2841
        %v2849 = vadd.f32 %v2834, %v2845
        %v2850 = vadd.f32 %v2835, %v2841
        %v2851 = vadd.f32 %v2836, %v2845
        %v2852 = vld [vmem:[%s15] sm:$0xff]
        %v2853 = vld [vmem:[%s15 + $0x8] sm:$0xff]
        %v2854 = vld [vmem:[%s15 + $0x10] sm:$0x1]
        %v2855 = vld [vmem:[%s15 + $0x18] sm:$0x1]
        %v2856 = vrot.slane %v2848, 7
        %v2857 = vrot.slane %v2849, 7
        %v2858 = vrot.slane %v2850, 7
        %v2859 = vrot.slane %v2851, 7
        %v2860 = vsel %vm1227, %v2856, %v2858
        %v2861 = vsel %vm1227, %v2857, %v2859
        %v2862 = vsel %vm1227, %v2858, %v2856
        %v2863 = vsel %vm1227, %v2859, %v2857
        %v2864 = vmul.f32 %v2862, %v738
        %v2865 = vmul.f32 %v2863, %v738
        %v2866 = vmul.f32 %v2860, %v739
        %v2867 = vmul.f32 %v2861, %v739
        %v2868 = vrot.slane %v2848, 1
        %v2869 = vrot.slane %v2849, 1
        %v2870 = vrot.slane %v2850, 1
        %v2871 = vrot.slane %v2851, 1
        %v2872 = vsel %vm1263, %v2868, %v2870
        %v2873 = vsel %vm1263, %v2869, %v2871
        %v2874 = vsel %vm1263, %v2870, %v2868
        %v2875 = vsel %vm1263, %v2871, %v2869
        %v2876 = vmul.f32 %v2872, %v744
        %v2877 = vmul.f32 %v2873, %v744
        %v2878 = vmul.f32 %v2874, %v745
        %v2879 = vmul.f32 %v2875, %v745
        %2880 = vrot.lane.b32.xlu0 %v2864, 16
        %v2881 = vpop.permute.xlu0 %2880
        %2882 = vrot.lane.b32.xlu0 %v2866, 16
        %v2883 = vpop.permute.xlu0 %2882
        %2884 = vrot.lane.b32.xlu0 %v2865, 16
        %v2885 = vpop.permute.xlu0 %2884
        %2886 = vrot.lane.b32.xlu0 %v2867, 16
        %v2887 = vpop.permute.xlu0 %2886
        %v2888 = vsel %vm1218, %v2881, %v2885
        %v2889 = vsel %vm1218, %v2883, %v2887
        %v2890 = vsel %vm1218, %v2885, %v2881
        %v2891 = vsel %vm1218, %v2887, %v2883
        %v2892 = vlaneseq
        %v2893 = vshrl.u32 %v2892, 7
        %v2894 = vsub.s32 0, %v2893
        %v2895 = vrot.slane %v2852, %v2894
        %v2896 = vlaneseq
        %v2897 = vshrl.u32 %v2896, 7
        %v2898 = vsub.s32 0, %v2897
        %v2899 = vrot.slane %v2853, %v2898
        %v2900 = vmul.f32 %v2890, %v2895
        %v2901 = vmul.f32 %v2888, %v2899
        %v2902 = vmul.f32 %v2891, %v2895
        %v2903 = vmul.f32 %v2889, %v2899
        %v2904 = vlaneseq
        %v2905 = vshrl.u32 %v2904, 7
        %v2906 = vsub.s32 1, %v2905
        %v2907 = vrot.slane %v2852, %v2906
        %v2908 = vlaneseq
        %v2909 = vshrl.u32 %v2908, 7
        %v2910 = vsub.s32 1, %v2909
        %v2911 = vrot.slane %v2853, %v2910
        %v2912 = vmul.f32 %v2864, %v2907
        %v2913 = vmul.f32 %v2865, %v2911
        %v2914 = vmul.f32 %v2866, %v2907
        %v2915 = vmul.f32 %v2867, %v2911
        %v2916 = vadd.f32 %v2900, %v2912
        %v2917 = vadd.f32 %v2901, %v2913
        %v2918 = vadd.f32 %v2902, %v2914
        %v2919 = vadd.f32 %v2903, %v2915
        %2920 = vrot.lane.b32.xlu0 %v2864, 112
        %v2921 = vpop.permute.xlu0 %2920
        %2922 = vrot.lane.b32.xlu0 %v2866, 112
        %v2923 = vpop.permute.xlu0 %2922
        %2924 = vrot.lane.b32.xlu0 %v2865, 112
        %v2925 = vpop.permute.xlu0 %2924
        %2926 = vrot.lane.b32.xlu0 %v2867, 112
        %v2927 = vpop.permute.xlu0 %2926
        %v2928 = vsel %vm1306, %v2921, %v2925
        %v2929 = vsel %vm1306, %v2923, %v2927
        %v2930 = vsel %vm1306, %v2925, %v2921
        %v2931 = vsel %vm1306, %v2927, %v2923
        %v2932 = vlaneseq
        %v2933 = vshrl.u32 %v2932, 7
        %v2934 = vsub.s32 2, %v2933
        %v2935 = vrot.slane %v2852, %v2934
        %v2936 = vlaneseq
        %v2937 = vshrl.u32 %v2936, 7
        %v2938 = vsub.s32 2, %v2937
        %v2939 = vrot.slane %v2853, %v2938
        %v2940 = vmul.f32 %v2928, %v2935
        %v2941 = vmul.f32 %v2930, %v2939
        %v2942 = vmul.f32 %v2929, %v2935
        %v2943 = vmul.f32 %v2931, %v2939
        %v2944 = vadd.f32 %v2916, %v2940
        %v2945 = vadd.f32 %v2917, %v2941
        %v2946 = vadd.f32 %v2918, %v2942
        %v2947 = vadd.f32 %v2919, %v2943
        %2948 = vrot.lane.b32.xlu0 %v2848, 16
        %v2949 = vpop.permute.xlu0 %2948
        %2950 = vrot.lane.b32.xlu0 %v2850, 16
        %v2951 = vpop.permute.xlu0 %2950
        %2952 = vrot.lane.b32.xlu0 %v2849, 16
        %v2953 = vpop.permute.xlu0 %2952
        %2954 = vrot.lane.b32.xlu0 %v2851, 16
        %v2955 = vpop.permute.xlu0 %2954
        %v2956 = vsel %vm1218, %v2949, %v2953
        %v2957 = vsel %vm1218, %v2951, %v2955
        %v2958 = vsel %vm1218, %v2953, %v2949
        %v2959 = vsel %vm1218, %v2955, %v2951
        %v2960 = vlaneseq
        %v2961 = vshrl.u32 %v2960, 7
        %v2962 = vsub.s32 3, %v2961
        %v2963 = vrot.slane %v2852, %v2962
        %v2964 = vlaneseq
        %v2965 = vshrl.u32 %v2964, 7
        %v2966 = vsub.s32 3, %v2965
        %v2967 = vrot.slane %v2853, %v2966
        %v2968 = vmul.f32 %v2958, %v2963
        %v2969 = vmul.f32 %v2956, %v2967
        %v2970 = vmul.f32 %v2959, %v2963
        %v2971 = vmul.f32 %v2957, %v2967
        %v2972 = vadd.f32 %v2944, %v2968
        %v2973 = vadd.f32 %v2945, %v2969
        %v2974 = vadd.f32 %v2946, %v2970
        %v2975 = vadd.f32 %v2947, %v2971
        %v2976 = vlaneseq
        %v2977 = vshrl.u32 %v2976, 7
        %v2978 = vsub.s32 4, %v2977
        %v2979 = vrot.slane %v2852, %v2978
        %v2980 = vlaneseq
        %v2981 = vshrl.u32 %v2980, 7
        %v2982 = vsub.s32 4, %v2981
        %v2983 = vrot.slane %v2853, %v2982
        %v2984 = vmul.f32 %v2848, %v2979
        %v2985 = vmul.f32 %v2849, %v2983
        %v2986 = vmul.f32 %v2850, %v2979
        %v2987 = vmul.f32 %v2851, %v2983
        %v2988 = vadd.f32 %v2972, %v2984
        %v2989 = vadd.f32 %v2973, %v2985
        %v2990 = vadd.f32 %v2974, %v2986
        %v2991 = vadd.f32 %v2975, %v2987
        %2992 = vrot.lane.b32.xlu0 %v2848, 112
        %v2993 = vpop.permute.xlu0 %2992
        %2994 = vrot.lane.b32.xlu0 %v2850, 112
        %v2995 = vpop.permute.xlu0 %2994
        %2996 = vrot.lane.b32.xlu0 %v2849, 112
        %v2997 = vpop.permute.xlu0 %2996
        %2998 = vrot.lane.b32.xlu0 %v2851, 112
        %v2999 = vpop.permute.xlu0 %2998
        %v3000 = vsel %vm1306, %v2993, %v2997
        %v3001 = vsel %vm1306, %v2995, %v2999
        %v3002 = vsel %vm1306, %v2997, %v2993
        %v3003 = vsel %vm1306, %v2999, %v2995
        %v3004 = vlaneseq
        %v3005 = vshrl.u32 %v3004, 7
        %v3006 = vsub.s32 5, %v3005
        %v3007 = vrot.slane %v2852, %v3006
        %v3008 = vlaneseq
        %v3009 = vshrl.u32 %v3008, 7
        %v3010 = vsub.s32 5, %v3009
        %v3011 = vrot.slane %v2853, %v3010
        %v3012 = vmul.f32 %v3000, %v3007
        %v3013 = vmul.f32 %v3002, %v3011
        %v3014 = vmul.f32 %v3001, %v3007
        %v3015 = vmul.f32 %v3003, %v3011
        %v3016 = vadd.f32 %v2988, %v3012
        %v3017 = vadd.f32 %v2989, %v3013
        %v3018 = vadd.f32 %v2990, %v3014
        %v3019 = vadd.f32 %v2991, %v3015
        %3020 = vrot.lane.b32.xlu0 %v2876, 16
        %v3021 = vpop.permute.xlu0 %3020
        %3022 = vrot.lane.b32.xlu0 %v2878, 16
        %v3023 = vpop.permute.xlu0 %3022
        %3024 = vrot.lane.b32.xlu0 %v2877, 16
        %v3025 = vpop.permute.xlu0 %3024
        %3026 = vrot.lane.b32.xlu0 %v2879, 16
        %v3027 = vpop.permute.xlu0 %3026
        %v3028 = vsel %vm1218, %v3021, %v3025
        %v3029 = vsel %vm1218, %v3023, %v3027
        %v3030 = vsel %vm1218, %v3025, %v3021
        %v3031 = vsel %vm1218, %v3027, %v3023
        %v3032 = vlaneseq
        %v3033 = vshrl.u32 %v3032, 7
        %v3034 = vsub.s32 6, %v3033
        %v3035 = vrot.slane %v2852, %v3034
        %v3036 = vlaneseq
        %v3037 = vshrl.u32 %v3036, 7
        %v3038 = vsub.s32 6, %v3037
        %v3039 = vrot.slane %v2853, %v3038
        %v3040 = vmul.f32 %v3030, %v3035
        %v3041 = vmul.f32 %v3028, %v3039
        %v3042 = vmul.f32 %v3031, %v3035
        %v3043 = vmul.f32 %v3029, %v3039
        %v3044 = vadd.f32 %v3016, %v3040
        %v3045 = vadd.f32 %v3017, %v3041
        %v3046 = vadd.f32 %v3018, %v3042
        %v3047 = vadd.f32 %v3019, %v3043
        %v3048 = vlaneseq
        %v3049 = vshrl.u32 %v3048, 7
        %v3050 = vsub.s32 7, %v3049
        %v3051 = vrot.slane %v2852, %v3050
        %v3052 = vlaneseq
        %v3053 = vshrl.u32 %v3052, 7
        %v3054 = vsub.s32 7, %v3053
        %v3055 = vrot.slane %v2853, %v3054
        %v3056 = vmul.f32 %v2876, %v3051
        %v3057 = vmul.f32 %v2877, %v3055
        %v3058 = vmul.f32 %v2878, %v3051
        %v3059 = vmul.f32 %v2879, %v3055
        %v3060 = vadd.f32 %v3044, %v3056
        %v3061 = vadd.f32 %v3045, %v3057
        %v3062 = vadd.f32 %v3046, %v3058
        %v3063 = vadd.f32 %v3047, %v3059
        %3064 = vrot.lane.b32.xlu0 %v2876, 112
        %v3065 = vpop.permute.xlu0 %3064
        %3066 = vrot.lane.b32.xlu0 %v2878, 112
        %v3067 = vpop.permute.xlu0 %3066
        %3068 = vrot.lane.b32.xlu0 %v2877, 112
        %v3069 = vpop.permute.xlu0 %3068
        %3070 = vrot.lane.b32.xlu0 %v2879, 112
        %v3071 = vpop.permute.xlu0 %3070
        %v3072 = vsel %vm1306, %v3065, %v3069
        %v3073 = vsel %vm1306, %v3067, %v3071
        %v3074 = vsel %vm1306, %v3069, %v3065
        %v3075 = vsel %vm1306, %v3071, %v3067
        %v3076 = vlaneseq
        %v3077 = vshrl.u32 %v3076, 7
        %v3078 = vsub.s32 0, %v3077
        %v3079 = vrot.slane %v2854, %v3078
        %v3080 = vlaneseq
        %v3081 = vshrl.u32 %v3080, 7
        %v3082 = vsub.s32 0, %v3081
        %v3083 = vrot.slane %v2855, %v3082
        %v3084 = vmul.f32 %v3072, %v3079
        %v3085 = vmul.f32 %v3074, %v3083
        %v3086 = vmul.f32 %v3073, %v3079
        %v3087 = vmul.f32 %v3075, %v3083
        %v3088 = vadd.f32 %v3060, %v3084
        %v3089 = vadd.f32 %v3061, %v3085
        %v3090 = vadd.f32 %v3062, %v3086
        %v3091 = vadd.f32 %v3063, %v3087
        %v3092 = vld [vmem:[%s16] sm:$0x3]
        %v3094 = vlaneseq
        %v3095 = vshrl.u32 %v3094, 7
        %v3096 = vsub.s32 0, %v3095
        %v3097 = vrot.slane %v3092, %v3096
        %v3098 = vlaneseq
        %v3099 = vshrl.u32 %v3098, 7
        %v3100 = vsub.s32 1, %v3099
        %v3101 = vrot.slane %v3092, %v3100
        %v3104 = vadd.f32 %v3088, %v3097
        %v3105 = vadd.f32 %v3089, %v3101
        %v3106 = vadd.f32 %v3090, %v3097
        %v3107 = vadd.f32 %v3091, %v3101
        %v3108 = vmul.f32 %v3104, 0.5
        %v3109 = vmul.f32 %v3105, 0.5
        %v3110 = vmul.f32 %v3106, 0.5
        %v3111 = vmul.f32 %v3107, 0.5
        %v3112 = vmul.f32 %v3104, 0.70710677
        %v3113 = vmul.f32 %v3105, 0.70710677
        %v3114 = vmul.f32 %v3106, 0.70710677
        %v3115 = vmul.f32 %v3107, 0.70710677
        %v3116 = vand.u32 2147483647, %v3112
        %v3117 = vand.u32 2147483647, %v3113
        %v3118 = vand.u32 2147483647, %v3114
        %v3119 = vand.u32 2147483647, %v3115
        %v3120 = vmul.f32 %v3116, 0.3275911
        %v3121 = vmul.f32 %v3117, 0.3275911
        %v3122 = vmul.f32 %v3118, 0.3275911
        %v3123 = vmul.f32 %v3119, 0.3275911
        %v3124 = vadd.f32 %v3120, 1.0
        %v3125 = vadd.f32 %v3121, 1.0
        %v3126 = vadd.f32 %v3122, 1.0
        %v3127 = vadd.f32 %v3123, 1.0
        %v3128 = vrcp.pop %v3124
        %v3129 = vmul.f32 1.0, %v3128
        %v3130 = vrcp.pop %v3125
        %v3131 = vmul.f32 1.0, %v3130
        %v3132 = vrcp.pop %v3126
        %v3133 = vmul.f32 1.0, %v3132
        %v3134 = vrcp.pop %v3127
        %v3135 = vmul.f32 1.0, %v3134
        %v3136 = vmul.f32 %v3129, 1.0614054
        %v3137 = vmul.f32 %v3131, 1.0614054
        %v3138 = vmul.f32 %v3133, 1.0614054
        %v3139 = vmul.f32 %v3135, 1.0614054
        %v3140 = vadd.f32 %v3136, -1.4531521
        %v3141 = vadd.f32 %v3137, -1.4531521
        %v3142 = vadd.f32 %v3138, -1.4531521
        %v3143 = vadd.f32 %v3139, -1.4531521
        %v3144 = vmul.f32 %v3129, %v3140
        %v3145 = vmul.f32 %v3131, %v3141
        %v3146 = vmul.f32 %v3133, %v3142
        %v3147 = vmul.f32 %v3135, %v3143
        %v3148 = vadd.f32 %v3144, 1.4214138
        %v3149 = vadd.f32 %v3145, 1.4214138
        %v3150 = vadd.f32 %v3146, 1.4214138
        %v3151 = vadd.f32 %v3147, 1.4214138
        %v3152 = vmul.f32 %v3129, %v3148
        %v3153 = vmul.f32 %v3131, %v3149
        %v3154 = vmul.f32 %v3133, %v3150
        %v3155 = vmul.f32 %v3135, %v3151
        %v3156 = vadd.f32 %v3152, -0.28449672
        %v3157 = vadd.f32 %v3153, -0.28449672
        %v3158 = vadd.f32 %v3154, -0.28449672
        %v3159 = vadd.f32 %v3155, -0.28449672
        %v3160 = vmul.f32 %v3129, %v3156
        %v3161 = vmul.f32 %v3131, %v3157
        %v3162 = vmul.f32 %v3133, %v3158
        %v3163 = vmul.f32 %v3135, %v3159
        %v3164 = vadd.f32 %v3160, 0.2548296
        %v3165 = vadd.f32 %v3161, 0.2548296
        %v3166 = vadd.f32 %v3162, 0.2548296
        %v3167 = vadd.f32 %v3163, 0.2548296
        %v3168 = vmul.f32 %v3129, %v3164
        %v3169 = vmul.f32 %v3131, %v3165
        %v3170 = vmul.f32 %v3133, %v3166
        %v3171 = vmul.f32 %v3135, %v3167
        %v3172 = vsub.f32 0.0, %v3116
        %v3173 = vsub.f32 0.0, %v3117
        %v3174 = vsub.f32 0.0, %v3118
        %v3175 = vsub.f32 0.0, %v3119
        %v3176 = vmul.f32 %v3172, %v3116
        %v3177 = vmul.f32 %v3173, %v3117
        %v3178 = vmul.f32 %v3174, %v3118
        %v3179 = vmul.f32 %v3175, %v3119
        %v3180 = vmul.f32 %v3176, 1.442695
        %v3181 = vpow.pop %v3180
        %v3182 = vmul.f32 %v3177, 1.442695
        %v3183 = vpow.pop %v3182
        %v3184 = vmul.f32 %v3178, 1.442695
        %v3185 = vpow.pop %v3184
        %v3186 = vmul.f32 %v3179, 1.442695
        %v3187 = vpow.pop %v3186
        %v3188 = vmul.f32 %v3168, %v3181
        %v3189 = vmul.f32 %v3169, %v3183
        %v3190 = vmul.f32 %v3170, %v3185
        %v3191 = vmul.f32 %v3171, %v3187
        %v3192 = vsub.f32 1.0, %v3188
        %v3193 = vsub.f32 1.0, %v3189
        %v3194 = vsub.f32 1.0, %v3190
        %v3195 = vsub.f32 1.0, %v3191
        %vm3196 = vcmp.lt.f32.partialorder %v3112, 0.0
        %vm3197 = vcmp.lt.f32.partialorder %v3113, 0.0
        %vm3198 = vcmp.lt.f32.partialorder %v3114, 0.0
        %vm3199 = vcmp.lt.f32.partialorder %v3115, 0.0
        %v3200 = vsub.f32 0.0, %v3192
        %v3201 = vsub.f32 0.0, %v3193
        %v3202 = vsub.f32 0.0, %v3194
        %v3203 = vsub.f32 0.0, %v3195
        %v3204 = vsel %vm3196, %v3200, %v3192
        %v3205 = vsel %vm3197, %v3201, %v3193
        %v3206 = vsel %vm3198, %v3202, %v3194
        %v3207 = vsel %vm3199, %v3203, %v3195
        %v3208 = vadd.f32 %v3204, 1.0
        %v3209 = vadd.f32 %v3205, 1.0
        %v3210 = vadd.f32 %v3206, 1.0
        %v3211 = vadd.f32 %v3207, 1.0
        %v3212 = vmul.f32 %v3108, %v3208
        %v3213 = vmul.f32 %v3109, %v3209
        %v3214 = vmul.f32 %v3110, %v3210
        %v3215 = vmul.f32 %v3111, %v3211
        %v3216 = vpack.c.bf16 %v3214, %v3212
        %v3217 = vpack.c.bf16 %v3215, %v3213
        %v3218 = vunpack.c.l.bf16 %v3216
        %v3219 = vunpack.c.l.bf16 %v3217
        %v3220 = vunpack.c.h.bf16 %v3216
        %v3221 = vunpack.c.h.bf16 %v3217
        %v3222 = vsub.f32 %v3212, %v3218
        %v3223 = vsub.f32 %v3213, %v3219
        %v3224 = vsub.f32 %v3214, %v3220
        %v3225 = vsub.f32 %v3215, %v3221
        %v3226 = vpack.c.bf16 %v3224, %v3222
        %v3227 = vpack.c.bf16 %v3225, %v3223
        %v3228 = vld [vmem:[#allocation11] sm:$0xff]
        %v3229 = vld [vmem:[#allocation11 + $0x8] sm:$0xff]
        %v3230 = vld [vmem:[#allocation11 + $0x10] sm:$0xff]
        %v3231 = vld [vmem:[#allocation11 + $0x18] sm:$0xff]
        %v3232 = vld [vmem:[#allocation11 + $0x20] sm:$0xff]
        %v3233 = vld [vmem:[#allocation11 + $0x28] sm:$0xff]
        %v3234 = vld [vmem:[#allocation11 + $0x30] sm:$0xff]
        %v3235 = vld [vmem:[#allocation11 + $0x38] sm:$0xff]
        %v3236 = vld [vmem:[#allocation11 + $0x40] sm:$0xff]
        %v3237 = vld [vmem:[#allocation11 + $0x48] sm:$0xff]
        %v3238 = vld [vmem:[#allocation11 + $0x50] sm:$0xff]
        %v3239 = vld [vmem:[#allocation11 + $0x58] sm:$0xff]
        %v3240 = vld [vmem:[#allocation11 + $0x60] sm:$0xff]
        %v3241 = vld [vmem:[#allocation11 + $0x68] sm:$0xff]
        %v3242 = vld [vmem:[#allocation11 + $0x70] sm:$0xff]
        %v3243 = vld [vmem:[#allocation11 + $0x78] sm:$0xff]
        %v3244 = vld [vmem:[#allocation11 + $0x80] sm:$0xff]
        %v3245 = vld [vmem:[#allocation11 + $0x88] sm:$0xff]
        %v3246 = vld [vmem:[#allocation11 + $0x90] sm:$0xff]
        %v3247 = vld [vmem:[#allocation11 + $0x98] sm:$0xff]
        %v3248 = vld [vmem:[#allocation11 + $0xa0] sm:$0xff]
        %v3249 = vld [vmem:[#allocation11 + $0xa8] sm:$0xff]
        %v3250 = vld [vmem:[#allocation11 + $0xb0] sm:$0xff]
        %v3251 = vld [vmem:[#allocation11 + $0xb8] sm:$0xff]
        %v3252 = vld [vmem:[#allocation11 + $0xc0] sm:$0xff]
        %v3253 = vld [vmem:[#allocation11 + $0xc8] sm:$0xff]
        %v3254 = vld [vmem:[#allocation11 + $0xd0] sm:$0xff]
        %v3255 = vld [vmem:[#allocation11 + $0xd8] sm:$0xff]
        %v3256 = vld [vmem:[#allocation11 + $0xe0] sm:$0xff]
        %v3257 = vld [vmem:[#allocation11 + $0xe8] sm:$0xff]
        %v3258 = vld [vmem:[#allocation11 + $0xf0] sm:$0xff]
        %v3259 = vld [vmem:[#allocation11 + $0xf8] sm:$0xff]
        %v3292 = vunpack.c.l.b16 %v3228
        %v3293 = vunpack.c.h.b16 %v3228
        %v3294 = vunpack.c.l.b16 %v3229
        %v3295 = vunpack.c.h.b16 %v3229
        %v3296 = vunpack.c.l.b16 %v3230
        %v3297 = vunpack.c.h.b16 %v3230
        %v3298 = vunpack.c.l.b16 %v3231
        %v3299 = vunpack.c.h.b16 %v3231
        %v3300 = vunpack.c.l.b16 %v3232
        %v3301 = vunpack.c.h.b16 %v3232
        %v3302 = vunpack.c.l.b16 %v3233
        %v3303 = vunpack.c.h.b16 %v3233
        %v3304 = vunpack.c.l.b16 %v3234
        %v3305 = vunpack.c.h.b16 %v3234
        %v3306 = vunpack.c.l.b16 %v3235
        %v3307 = vunpack.c.h.b16 %v3235
        %v3308 = vunpack.c.l.b16 %v3236
        %v3309 = vunpack.c.h.b16 %v3236
        %v3310 = vunpack.c.l.b16 %v3237
        %v3311 = vunpack.c.h.b16 %v3237
        %v3312 = vunpack.c.l.b16 %v3238
        %v3313 = vunpack.c.h.b16 %v3238
        %v3314 = vunpack.c.l.b16 %v3239
        %v3315 = vunpack.c.h.b16 %v3239
        %v3316 = vunpack.c.l.b16 %v3240
        %v3317 = vunpack.c.h.b16 %v3240
        %v3318 = vunpack.c.l.b16 %v3241
        %v3319 = vunpack.c.h.b16 %v3241
        %v3320 = vunpack.c.l.b16 %v3242
        %v3321 = vunpack.c.h.b16 %v3242
        %v3322 = vunpack.c.l.b16 %v3243
        %v3323 = vunpack.c.h.b16 %v3243
        %v3324 = vunpack.c.l.b16 %v3244
        %v3325 = vunpack.c.h.b16 %v3244
        %v3326 = vunpack.c.l.b16 %v3245
        %v3327 = vunpack.c.h.b16 %v3245
        %v3328 = vunpack.c.l.b16 %v3246
        %v3329 = vunpack.c.h.b16 %v3246
        %v3330 = vunpack.c.l.b16 %v3247
        %v3331 = vunpack.c.h.b16 %v3247
        %v3332 = vunpack.c.l.b16 %v3248
        %v3333 = vunpack.c.h.b16 %v3248
        %v3334 = vunpack.c.l.b16 %v3249
        %v3335 = vunpack.c.h.b16 %v3249
        %v3336 = vunpack.c.l.b16 %v3250
        %v3337 = vunpack.c.h.b16 %v3250
        %v3338 = vunpack.c.l.b16 %v3251
        %v3339 = vunpack.c.h.b16 %v3251
        %v3340 = vunpack.c.l.b16 %v3252
        %v3341 = vunpack.c.h.b16 %v3252
        %v3342 = vunpack.c.l.b16 %v3253
        %v3343 = vunpack.c.h.b16 %v3253
        %v3344 = vunpack.c.l.b16 %v3254
        %v3345 = vunpack.c.h.b16 %v3254
        %v3346 = vunpack.c.l.b16 %v3255
        %v3347 = vunpack.c.h.b16 %v3255
        %v3348 = vunpack.c.l.b16 %v3256
        %v3349 = vunpack.c.h.b16 %v3256
        %v3350 = vunpack.c.l.b16 %v3257
        %v3351 = vunpack.c.h.b16 %v3257
        %v3352 = vunpack.c.l.b16 %v3258
        %v3353 = vunpack.c.h.b16 %v3258
        %v3354 = vunpack.c.l.b16 %v3259
        %v3355 = vunpack.c.h.b16 %v3259
        %v3356 = vpack.c.b16 %v3294, %v3292
        %v3357 = vpack.c.b16 %v3295, %v3293
        %v3358 = vpack.c.b16 %v3298, %v3296
        %v3359 = vpack.c.b16 %v3299, %v3297
        %v3360 = vpack.c.b16 %v3302, %v3300
        %v3361 = vpack.c.b16 %v3303, %v3301
        %v3362 = vpack.c.b16 %v3306, %v3304
        %v3363 = vpack.c.b16 %v3307, %v3305
        %v3364 = vpack.c.b16 %v3310, %v3308
        %v3365 = vpack.c.b16 %v3311, %v3309
        %v3366 = vpack.c.b16 %v3314, %v3312
        %v3367 = vpack.c.b16 %v3315, %v3313
        %v3368 = vpack.c.b16 %v3318, %v3316
        %v3369 = vpack.c.b16 %v3319, %v3317
        %v3370 = vpack.c.b16 %v3322, %v3320
        %v3371 = vpack.c.b16 %v3323, %v3321
        %v3372 = vpack.c.b16 %v3326, %v3324
        %v3373 = vpack.c.b16 %v3327, %v3325
        %v3374 = vpack.c.b16 %v3330, %v3328
        %v3375 = vpack.c.b16 %v3331, %v3329
        %v3376 = vpack.c.b16 %v3334, %v3332
        %v3377 = vpack.c.b16 %v3335, %v3333
        %v3378 = vpack.c.b16 %v3338, %v3336
        %v3379 = vpack.c.b16 %v3339, %v3337
        %v3380 = vpack.c.b16 %v3342, %v3340
        %v3381 = vpack.c.b16 %v3343, %v3341
        %v3382 = vpack.c.b16 %v3346, %v3344
        %v3383 = vpack.c.b16 %v3347, %v3345
        %v3384 = vpack.c.b16 %v3350, %v3348
        %v3385 = vpack.c.b16 %v3351, %v3349
        %v3386 = vpack.c.b16 %v3354, %v3352
        %v3387 = vpack.c.b16 %v3355, %v3353
        %3420 = vmatprep.subr.bf16.mxu0 %v3357
        %3421 = vmatpush1.bf16.msra.mxu0 %v3356
        %3422 = vmatprep.subr.bf16.mxu0 %v3359
        %3423 = vmatpush1.bf16.msra.mxu0 %v3358
        %3424 = vmatprep.subr.bf16.mxu0 %v3361
        %3425 = vmatpush1.bf16.msra.mxu0 %v3360
        %3426 = vmatprep.subr.bf16.mxu0 %v3363
        %3427 = vmatpush1.bf16.msra.mxu0 %v3362
        %3428 = vmatprep.subr.bf16.mxu0 %v3365
        %3429 = vmatpush1.bf16.msra.mxu0 %v3364
        %3430 = vmatprep.subr.bf16.mxu0 %v3367
        %3431 = vmatpush1.bf16.msra.mxu0 %v3366
        %3432 = vmatprep.subr.bf16.mxu0 %v3369
        %3433 = vmatpush1.bf16.msra.mxu0 %v3368
        %3434 = vmatprep.subr.bf16.mxu0 %v3371
        %3435 = vmatpush1.bf16.msra.mxu0 %v3370
        %3436 = vmatprep.subr.bf16.mxu0 %v3373
        %3437 = vmatpush1.bf16.msra.mxu0 %v3372
        %3438 = vmatprep.subr.bf16.mxu0 %v3375
        %3439 = vmatpush1.bf16.msra.mxu0 %v3374
        %3440 = vmatprep.subr.bf16.mxu0 %v3377
        %3441 = vmatpush1.bf16.msra.mxu0 %v3376
        %3442 = vmatprep.subr.bf16.mxu0 %v3379
        %3443 = vmatpush1.bf16.msra.mxu0 %v3378
        %3444 = vmatprep.subr.bf16.mxu0 %v3381
        %3445 = vmatpush1.bf16.msra.mxu0 %v3380
        %3446 = vmatprep.subr.bf16.mxu0 %v3383
        %3447 = vmatpush1.bf16.msra.mxu0 %v3382
        %3448 = vmatprep.subr.bf16.mxu0 %v3385
        %3449 = vmatpush1.bf16.msra.mxu0 %v3384
        %3450 = vmatprep.subr.bf16.mxu0 %v3387
        %3451 = vmatpush1.bf16.msra.mxu0 %v3386
        %3452 = vmatprep.mubr.bf16.mxu0 %v3227
        %3453 = vmatmul.mubr.bf16.gmra.mrb[0].mxu0 %v3226
        %v3454 = vpop.f32.mrb[0].mxu0
        %v3455 = vadd.f32 0.0, %v3454
        %v3456 = vpop.f32.mrb[0].mxu0
        %v3457 = vadd.f32 0.0, %v3456
        %v3458 = vpop.f32.mrb[0].mxu0
        %v3459 = vadd.f32 0.0, %v3458
        %v3460 = vpop.f32.mrb[0].mxu0
        %v3461 = vadd.f32 0.0, %v3460
        %3462 = vdwg.mxu0
        %3463 = vmatprep.subr.bf16.mxu0 %v3357
        %3464 = vmatpush1.bf16.msra.mxu0 %v3356
        %3465 = vmatprep.subr.bf16.mxu0 %v3359
        %3466 = vmatpush1.bf16.msra.mxu0 %v3358
        %3467 = vmatprep.subr.bf16.mxu0 %v3361
        %3468 = vmatpush1.bf16.msra.mxu0 %v3360
        %3469 = vmatprep.subr.bf16.mxu0 %v3363
        %3470 = vmatpush1.bf16.msra.mxu0 %v3362
        %3471 = vmatprep.subr.bf16.mxu0 %v3365
        %3472 = vmatpush1.bf16.msra.mxu0 %v3364
        %3473 = vmatprep.subr.bf16.mxu0 %v3367
        %3474 = vmatpush1.bf16.msra.mxu0 %v3366
        %3475 = vmatprep.subr.bf16.mxu0 %v3369
        %3476 = vmatpush1.bf16.msra.mxu0 %v3368
        %3477 = vmatprep.subr.bf16.mxu0 %v3371
        %3478 = vmatpush1.bf16.msra.mxu0 %v3370
        %3479 = vmatprep.subr.bf16.mxu0 %v3373
        %3480 = vmatpush1.bf16.msra.mxu0 %v3372
        %3481 = vmatprep.subr.bf16.mxu0 %v3375
        %3482 = vmatpush1.bf16.msra.mxu0 %v3374
        %3483 = vmatprep.subr.bf16.mxu0 %v3377
        %3484 = vmatpush1.bf16.msra.mxu0 %v3376
        %3485 = vmatprep.subr.bf16.mxu0 %v3379
        %3486 = vmatpush1.bf16.msra.mxu0 %v3378
        %3487 = vmatprep.subr.bf16.mxu0 %v3381
        %3488 = vmatpush1.bf16.msra.mxu0 %v3380
        %3489 = vmatprep.subr.bf16.mxu0 %v3383
        %3490 = vmatpush1.bf16.msra.mxu0 %v3382
        %3491 = vmatprep.subr.bf16.mxu0 %v3385
        %3492 = vmatpush1.bf16.msra.mxu0 %v3384
        %3493 = vmatprep.subr.bf16.mxu0 %v3387
        %3494 = vmatpush1.bf16.msra.mxu0 %v3386
        %3495 = vmatprep.mubr.bf16.mxu0 %v3217
        %3496 = vmatmul.mubr.bf16.gmra.mrb[0].mxu0 %v3216
        %v3497 = vpop.f32.mrb[0].mxu0
        %v3498 = vadd.f32 %v3455, %v3497
        %v3499 = vpop.f32.mrb[0].mxu0
        %v3500 = vadd.f32 %v3457, %v3499
        %v3501 = vpop.f32.mrb[0].mxu0
        %v3502 = vadd.f32 %v3459, %v3501
        %v3503 = vpop.f32.mrb[0].mxu0
        %v3504 = vadd.f32 %v3461, %v3503
        %3505 = vdwg.mxu0
        %v3506 = vld [vmem:[#allocation13] sm:$0xff]
        %v3507 = vld [vmem:[#allocation13 + $0x8] sm:$0xff]
        %v3508 = vld [vmem:[#allocation13 + $0x10] sm:$0xff]
        %v3509 = vld [vmem:[#allocation13 + $0x18] sm:$0xff]
        %v3510 = vld [vmem:[#allocation13 + $0x20] sm:$0xff]
        %v3511 = vld [vmem:[#allocation13 + $0x28] sm:$0xff]
        %v3512 = vld [vmem:[#allocation13 + $0x30] sm:$0xff]
        %v3513 = vld [vmem:[#allocation13 + $0x38] sm:$0xff]
        %v3514 = vld [vmem:[#allocation13 + $0x40] sm:$0xff]
        %v3515 = vld [vmem:[#allocation13 + $0x48] sm:$0xff]
        %v3516 = vld [vmem:[#allocation13 + $0x50] sm:$0xff]
        %v3517 = vld [vmem:[#allocation13 + $0x58] sm:$0xff]
        %v3518 = vld [vmem:[#allocation13 + $0x60] sm:$0xff]
        %v3519 = vld [vmem:[#allocation13 + $0x68] sm:$0xff]
        %v3520 = vld [vmem:[#allocation13 + $0x70] sm:$0xff]
        %v3521 = vld [vmem:[#allocation13 + $0x78] sm:$0xff]
        %v3522 = vld [vmem:[#allocation13 + $0x80] sm:$0xff]
        %v3523 = vld [vmem:[#allocation13 + $0x88] sm:$0xff]
        %v3524 = vld [vmem:[#allocation13 + $0x90] sm:$0xff]
        %v3525 = vld [vmem:[#allocation13 + $0x98] sm:$0xff]
        %v3526 = vld [vmem:[#allocation13 + $0xa0] sm:$0xff]
        %v3527 = vld [vmem:[#allocation13 + $0xa8] sm:$0xff]
        %v3528 = vld [vmem:[#allocation13 + $0xb0] sm:$0xff]
        %v3529 = vld [vmem:[#allocation13 + $0xb8] sm:$0xff]
        %v3530 = vld [vmem:[#allocation13 + $0xc0] sm:$0xff]
        %v3531 = vld [vmem:[#allocation13 + $0xc8] sm:$0xff]
        %v3532 = vld [vmem:[#allocation13 + $0xd0] sm:$0xff]
        %v3533 = vld [vmem:[#allocation13 + $0xd8] sm:$0xff]
        %v3534 = vld [vmem:[#allocation13 + $0xe0] sm:$0xff]
        %v3535 = vld [vmem:[#allocation13 + $0xe8] sm:$0xff]
        %v3536 = vld [vmem:[#allocation13 + $0xf0] sm:$0xff]
        %v3537 = vld [vmem:[#allocation13 + $0xf8] sm:$0xff]
        %v3570 = vunpack.c.l.b16 %v3506
        %v3571 = vunpack.c.h.b16 %v3506
        %v3572 = vunpack.c.l.b16 %v3507
        %v3573 = vunpack.c.h.b16 %v3507
        %v3574 = vunpack.c.l.b16 %v3508
        %v3575 = vunpack.c.h.b16 %v3508
        %v3576 = vunpack.c.l.b16 %v3509
        %v3577 = vunpack.c.h.b16 %v3509
        %v3578 = vunpack.c.l.b16 %v3510
        %v3579 = vunpack.c.h.b16 %v3510
        %v3580 = vunpack.c.l.b16 %v3511
        %v3581 = vunpack.c.h.b16 %v3511
        %v3582 = vunpack.c.l.b16 %v3512
        %v3583 = vunpack.c.h.b16 %v3512
        %v3584 = vunpack.c.l.b16 %v3513
        %v3585 = vunpack.c.h.b16 %v3513
        %v3586 = vunpack.c.l.b16 %v3514
        %v3587 = vunpack.c.h.b16 %v3514
        %v3588 = vunpack.c.l.b16 %v3515
        %v3589 = vunpack.c.h.b16 %v3515
        %v3590 = vunpack.c.l.b16 %v3516
        %v3591 = vunpack.c.h.b16 %v3516
        %v3592 = vunpack.c.l.b16 %v3517
        %v3593 = vunpack.c.h.b16 %v3517
        %v3594 = vunpack.c.l.b16 %v3518
        %v3595 = vunpack.c.h.b16 %v3518
        %v3596 = vunpack.c.l.b16 %v3519
        %v3597 = vunpack.c.h.b16 %v3519
        %v3598 = vunpack.c.l.b16 %v3520
        %v3599 = vunpack.c.h.b16 %v3520
        %v3600 = vunpack.c.l.b16 %v3521
        %v3601 = vunpack.c.h.b16 %v3521
        %v3602 = vunpack.c.l.b16 %v3522
        %v3603 = vunpack.c.h.b16 %v3522
        %v3604 = vunpack.c.l.b16 %v3523
        %v3605 = vunpack.c.h.b16 %v3523
        %v3606 = vunpack.c.l.b16 %v3524
        %v3607 = vunpack.c.h.b16 %v3524
        %v3608 = vunpack.c.l.b16 %v3525
        %v3609 = vunpack.c.h.b16 %v3525
        %v3610 = vunpack.c.l.b16 %v3526
        %v3611 = vunpack.c.h.b16 %v3526
        %v3612 = vunpack.c.l.b16 %v3527
        %v3613 = vunpack.c.h.b16 %v3527
        %v3614 = vunpack.c.l.b16 %v3528
        %v3615 = vunpack.c.h.b16 %v3528
        %v3616 = vunpack.c.l.b16 %v3529
        %v3617 = vunpack.c.h.b16 %v3529
        %v3618 = vunpack.c.l.b16 %v3530
        %v3619 = vunpack.c.h.b16 %v3530
        %v3620 = vunpack.c.l.b16 %v3531
        %v3621 = vunpack.c.h.b16 %v3531
        %v3622 = vunpack.c.l.b16 %v3532
        %v3623 = vunpack.c.h.b16 %v3532
        %v3624 = vunpack.c.l.b16 %v3533
        %v3625 = vunpack.c.h.b16 %v3533
        %v3626 = vunpack.c.l.b16 %v3534
        %v3627 = vunpack.c.h.b16 %v3534
        %v3628 = vunpack.c.l.b16 %v3535
        %v3629 = vunpack.c.h.b16 %v3535
        %v3630 = vunpack.c.l.b16 %v3536
        %v3631 = vunpack.c.h.b16 %v3536
        %v3632 = vunpack.c.l.b16 %v3537
        %v3633 = vunpack.c.h.b16 %v3537
        %v3634 = vpack.c.b16 %v3572, %v3570
        %v3635 = vpack.c.b16 %v3573, %v3571
        %v3636 = vpack.c.b16 %v3576, %v3574
        %v3637 = vpack.c.b16 %v3577, %v3575
        %v3638 = vpack.c.b16 %v3580, %v3578
        %v3639 = vpack.c.b16 %v3581, %v3579
        %v3640 = vpack.c.b16 %v3584, %v3582
        %v3641 = vpack.c.b16 %v3585, %v3583
        %v3642 = vpack.c.b16 %v3588, %v3586
        %v3643 = vpack.c.b16 %v3589, %v3587
        %v3644 = vpack.c.b16 %v3592, %v3590
        %v3645 = vpack.c.b16 %v3593, %v3591
        %v3646 = vpack.c.b16 %v3596, %v3594
        %v3647 = vpack.c.b16 %v3597, %v3595
        %v3648 = vpack.c.b16 %v3600, %v3598
        %v3649 = vpack.c.b16 %v3601, %v3599
        %v3650 = vpack.c.b16 %v3604, %v3602
        %v3651 = vpack.c.b16 %v3605, %v3603
        %v3652 = vpack.c.b16 %v3608, %v3606
        %v3653 = vpack.c.b16 %v3609, %v3607
        %v3654 = vpack.c.b16 %v3612, %v3610
        %v3655 = vpack.c.b16 %v3613, %v3611
        %v3656 = vpack.c.b16 %v3616, %v3614
        %v3657 = vpack.c.b16 %v3617, %v3615
        %v3658 = vpack.c.b16 %v3620, %v3618
        %v3659 = vpack.c.b16 %v3621, %v3619
        %v3660 = vpack.c.b16 %v3624, %v3622
        %v3661 = vpack.c.b16 %v3625, %v3623
        %v3662 = vpack.c.b16 %v3628, %v3626
        %v3663 = vpack.c.b16 %v3629, %v3627
        %v3664 = vpack.c.b16 %v3632, %v3630
        %v3665 = vpack.c.b16 %v3633, %v3631
        %3698 = vmatprep.subr.bf16.mxu0 %v3635
        %3699 = vmatpush1.bf16.msra.mxu0 %v3634
        %3700 = vmatprep.subr.bf16.mxu0 %v3637
        %3701 = vmatpush1.bf16.msra.mxu0 %v3636
        %3702 = vmatprep.subr.bf16.mxu0 %v3639
        %3703 = vmatpush1.bf16.msra.mxu0 %v3638
        %3704 = vmatprep.subr.bf16.mxu0 %v3641
        %3705 = vmatpush1.bf16.msra.mxu0 %v3640
        %3706 = vmatprep.subr.bf16.mxu0 %v3643
        %3707 = vmatpush1.bf16.msra.mxu0 %v3642
        %3708 = vmatprep.subr.bf16.mxu0 %v3645
        %3709 = vmatpush1.bf16.msra.mxu0 %v3644
        %3710 = vmatprep.subr.bf16.mxu0 %v3647
        %3711 = vmatpush1.bf16.msra.mxu0 %v3646
        %3712 = vmatprep.subr.bf16.mxu0 %v3649
        %3713 = vmatpush1.bf16.msra.mxu0 %v3648
        %3714 = vmatprep.subr.bf16.mxu0 %v3651
        %3715 = vmatpush1.bf16.msra.mxu0 %v3650
        %3716 = vmatprep.subr.bf16.mxu0 %v3653
        %3717 = vmatpush1.bf16.msra.mxu0 %v3652
        %3718 = vmatprep.subr.bf16.mxu0 %v3655
        %3719 = vmatpush1.bf16.msra.mxu0 %v3654
        %3720 = vmatprep.subr.bf16.mxu0 %v3657
        %3721 = vmatpush1.bf16.msra.mxu0 %v3656
        %3722 = vmatprep.subr.bf16.mxu0 %v3659
        %3723 = vmatpush1.bf16.msra.mxu0 %v3658
        %3724 = vmatprep.subr.bf16.mxu0 %v3661
        %3725 = vmatpush1.bf16.msra.mxu0 %v3660
        %3726 = vmatprep.subr.bf16.mxu0 %v3663
        %3727 = vmatpush1.bf16.msra.mxu0 %v3662
        %3728 = vmatprep.subr.bf16.mxu0 %v3665
        %3729 = vmatpush1.bf16.msra.mxu0 %v3664
        %3730 = vmatprep.mubr.bf16.mxu0 %v3217
        %3731 = vmatmul.mubr.bf16.gmra.mrb[0].mxu0 %v3216
        %v3732 = vpop.f32.mrb[0].mxu0
        %v3733 = vadd.f32 0.0, %v3732
        %v3734 = vpop.f32.mrb[0].mxu0
        %v3735 = vadd.f32 0.0, %v3734
        %v3736 = vpop.f32.mrb[0].mxu0
        %v3737 = vadd.f32 0.0, %v3736
        %v3738 = vpop.f32.mrb[0].mxu0
        %v3739 = vadd.f32 0.0, %v3738
        %3740 = vdwg.mxu0
        %v3741 = vadd.f32 %v3498, %v3733
        %v3742 = vadd.f32 %v3500, %v3735
        %v3743 = vadd.f32 %v3502, %v3737
        %v3744 = vadd.f32 %v3504, %v3739
        %v3745 = vld [vmem:[%s19] sm:$0x3]
        %v3747 = vlaneseq
        %v3748 = vshrl.u32 %v3747, 7
        %v3749 = vsub.s32 0, %v3748
        %v3750 = vrot.slane %v3745, %v3749
        %v3751 = vlaneseq
        %v3752 = vshrl.u32 %v3751, 7
        %v3753 = vsub.s32 1, %v3752
        %v3754 = vrot.slane %v3745, %v3753
        %v3757 = vadd.f32 %v3741, %v3750
        %v3758 = vadd.f32 %v3742, %v3754
        %v3759 = vadd.f32 %v3743, %v3750
        %v3760 = vadd.f32 %v3744, %v3754
        %3761 = vst [vmem:[%s720] sm:$0xff] %v3757
        %3762 = vst [vmem:[%s720 + $0x8] sm:$0xff] %v3758
        %3763 = vst [vmem:[%s720 + $0x10] sm:$0xff] %v3759
        %3764 = vst [vmem:[%s720 + $0x18] sm:$0xff] %v3760
        %s3765 = sand.u32 %s471, 1
        %s3766 = scalar_lea.sflag [#allocation4], %s3765
        %s3767 = sand.u32 %s471, 1
        %s3768 = smul.addr %s3767, 32
        %s3769 = scalar_lea.vmem [#allocation14], %s3768
        // Predicated region
        $region129: #{tpu_custom_call.1} parent=99 // pred_check
          %p3770 = pneg %p481
        $region130: #{tpu_custom_call.1} parent=99 // pred_check_branch
          %3772 = sbr.rel (%p3770) target = $region132
        $region131: #{tpu_custom_call.1} parent=99 // pred_region
          %s3774 = ssub.s32 512, 512
          %3775 = vsyncadd %s3766, %s3774
          %s3776 = smul.addr %s38, 4
          %s3777 = smul.addr %s3776, 128
          %s3778 = scalar_lea.hbm %s20, %s3777
          %s3779 = sshll.u32 %s3769, 4
          %s3780 = int_to_ptr.vmem [resolvable:$true] %s3779
          %3785 = dma.vmem_to_hbm [thread:$0]  %s3780, 512, %s3778, %s3766, 256, 256, 16
        $region132: #{tpu_custom_call.1} parent=99 // pred_fallthru
          _
      $region100: #{tpu_custom_call.1} parent=5 // pred_fallthru
        _
      %p3786 = scmp.le.s32.totalorder 2, %s33
      // Predicated region
      $region133: #{tpu_custom_call.1} parent=5 // pred_check
        %p3787 = pneg %p3786
      $region134: #{tpu_custom_call.1} parent=5 // pred_check_branch
        %3789 = sbr.rel (%p3787) target = $region136
      $region135: #{tpu_custom_call.1} parent=5 // pred_region
        %s3790 = ssub.s32 %s33, 2
        // Predicated region
        $region137: #{tpu_custom_call.1} parent=135 // pred_check
          %p3791 = pneg %p487
        $region138: #{tpu_custom_call.1} parent=135 // pred_check_branch
          %3793 = sbr.rel (%p3791) target = $region140
        $region139: #{tpu_custom_call.1} parent=135 // pred_region
          %s3794 = sand.u32 %s472, 1
          %s3795 = scalar_lea.sflag [#allocation4], %s3794
          %s3796 = sand.u32 %s472, 1
          %s3797 = smul.addr %s3796, 32
          %s3798 = scalar_lea.vmem [#allocation14], %s3797
          %3799 = dma.done %s3795, 512
        $region140: #{tpu_custom_call.1} parent=135 // pred_fallthru
          _
      $region136: #{tpu_custom_call.1} parent=5 // pred_fallthru
        _
    $region6: #{tpu_custom_call.1} parent=1 // loop_footer
      %s37 = sadd.s32 1, %s33
    $region7: #{tpu_custom_call.1} parent=1 // loop_footer_branch
      %32 = sbr.rel target = $region3
    $region8: #{tpu_custom_call.1} parent=1 // loop_exit
      _
    %3800 = vsyncpa [#allocation3], 1
    %s3801 = scalar_lea.sflag [#allocation3], 1
    %3802 = vsyncpa %s3801, 1
    %3803 = vsyncpa [#allocation6], 1
    %3804 = vsyncpa [#allocation9], 1
    %3805 = vsyncpa [#allocation12], 1
    %3806 = vsyncpa [#allocation4], 1
    %s3807 = scalar_lea.sflag [#allocation4], 1
    %3808 = vsyncpa %s3807, 1

</llo_original>
